<compile_context>
chip_gen: v6e
topology: v6e:2x2x1
jax: 0.10.0
libtpu: 0.0.40
codegen_flags: <defaults>
</compile_context>

<pallas_src>
import functools

import jax
import jax.numpy as jnp
from jax.experimental import pallas as pl
from jax.experimental.pallas import tpu as pltpu

PAD = 3   # halo of the largest conv (7x7, padding=3)
K = 7


# ----------------------------------------------------------------------------
# Kernel
# ----------------------------------------------------------------------------
def msab_kernel(x_ref, w0bd_ref, b0_ref, alpha_ref,
                T_ref, bbig_ref,
                wc1_ref, bc1_ref, wc2_ref, bc2_ref,
                Ts_ref, bs_ref,
                out_ref, *, Nb, H, W, C):
    C4 = 4 * C
    WC = W * C
    WC4 = W * C4
    M = Nb * H          # matmul M dim: all rows of all Nb images in this step

    def banded_conv(img3, bands_ref):
        # img3: (Nb, H, L) f32 lane-dense.  bands_ref: (7, L, Lout).
        # Returns sum_dy rowshift(img, dy-3) @ bands[dy]  ->  (M, Lout) f32.
        # dx taps + x-boundary zeros live inside the band matrices, so no
        # lane-sparse im2col assembly is needed; only 7 sublane shifts.
        L = img3.shape[-1]
        Lout = bands_ref.shape[-1]
        zr = jnp.zeros((Nb, PAD, L), jnp.float32)
        sp = jnp.concatenate([zr, img3, zr], axis=1)          # (Nb, H+6, L)
        sp = sp.astype(bands_ref.dtype)                       # bf16 when enabled
        acc = jnp.zeros((M, Lout), jnp.float32)
        for dy in range(K):        # dy-accumulation: no (HW, 49C) patch buffer
            slab = sp[:, dy:dy + H, :].reshape(M, L)
            acc = acc + jnp.dot(slab, bands_ref[dy],
                                preferred_element_type=jnp.float32)
        return acc

    # ---- stem: 1x1 conv as a block-diagonal lane-space matmul + PReLU -------
    xin = x_ref[...].reshape(M, WC)                           # lane-dense, free
    s = jnp.dot(xin.astype(w0bd_ref.dtype), w0bd_ref[...],
                preferred_element_type=jnp.float32) + b0_ref[...]
    alpha = alpha_ref[0]                                      # SMEM scalar
    s = jnp.maximum(s, 0.0) + alpha * jnp.minimum(s, 0.0)

    # ---- fused 1x1/3x3/5x5/7x7 branches: 7 banded matmuls over dy ------------
    c = banded_conv(s.reshape(Nb, H, WC), T_ref) + bbig_ref[...]   # (M, W*4C)

    # ---- CBAM channel attention (shared MLP on [avg; max] pooled rows) ------
    c3 = c.reshape(Nb, H, WC4)
    sum_h = jnp.sum(c3, axis=1)                               # (Nb, WC4)
    max_h = jnp.max(c3, axis=1)
    gap = jnp.sum(sum_h.reshape(Nb, W, C4), axis=1) * (1.0 / (H * W))  # (Nb,C4)
    gmp = jnp.max(max_h.reshape(Nb, W, C4), axis=1)                    # (Nb,C4)
    pooled = jnp.concatenate([gap, gmp], axis=0)              # (2*Nb, C4)
    hmid = jnp.maximum(
        jnp.dot(pooled, wc1_ref[...], preferred_element_type=jnp.float32)
        + bc1_ref[...], 0.0)
    mo = (jnp.dot(hmid, wc2_ref[...], preferred_element_type=jnp.float32)
          + bc2_ref[...])
    ca = jax.nn.sigmoid(mo[:Nb] + mo[Nb:])                    # (Nb, C4)
    c3 = c3 * jnp.tile(ca, (1, W))[:, None, :]                # lane-dense bcast

    # ---- CBAM spatial attention ----------------------------------------------
    c_px = c3.reshape(M, W, C4)                               # small relayout
    avg_hw = jnp.mean(c_px, axis=-1)                          # (M, W)
    max_hw = jnp.max(c_px, axis=-1)                           # (M, W)
    sm = jnp.concatenate([avg_hw, max_hw], axis=-1).reshape(Nb, H, 2 * W)
    # banded 7x7 conv, band pre-broadcast over the 4C output lanes -> the
    # logits already have the final (M, W*4C) layout, no repeat needed.
    logit = banded_conv(sm, Ts_ref) + bs_ref[0]
    sa = jax.nn.sigmoid(logit)

    out = c3.reshape(M, WC4) * sa
    out_ref[...] = out.reshape(Nb, H, WC4).astype(out_ref.dtype)


# ----------------------------------------------------------------------------
# Wrapper-side weight preprocessing (plain JAX, runs once under jit/XLA)
# ----------------------------------------------------------------------------
def build_fused_conv_weight(p, C):
    """(7, 7, C, 4C): zero-pad the 1/3/5 kernels to 7x7, concat along cout."""
    w1 = jnp.pad(p['w1'].reshape(1, 1, C, C), ((3, 3), (3, 3), (0, 0), (0, 0)))
    w3 = jnp.pad(p['w3'], ((2, 2), (2, 2), (0, 0), (0, 0)))
    w5 = jnp.pad(p['w5'], ((1, 1), (1, 1), (0, 0), (0, 0)))
    return jnp.concatenate([w1, w3, w5, p['w7']], axis=-1)    # (7,7,C,4C)


def build_band_matrices(Wb, W):
    """Wb (7,7,C,C4) -> T (7, W*C, W*C4):
       T[dy, xs*C+cin, x*C4+co] = Wb[dy, xs-x+3, cin, co] (zero off the band)."""
    K_, _, C, C4 = Wb.shape
    xs = jnp.arange(W)[:, None]
    xo = jnp.arange(W)[None, :]
    dx = xs - xo + PAD
    valid = (dx >= 0) & (dx < K_)
    dxc = jnp.clip(dx, 0, K_ - 1)
    Tg = Wb[:, dxc, :, :]                          # (7, W, W, C, C4)
    Tg = Tg * valid[None, :, :, None, None]
    return Tg.transpose(0, 1, 3, 2, 4).reshape(K_, W * C, W * C4)


def build_sa_band_matrices(ws7, W, C4):
    """ws7 (7,7,2) -> Ts (7, 2W, W*C4):
       Ts[dy, ch*W+xs, x*C4+co] = ws7[dy, xs-x+3, ch] (broadcast over co)."""
    xs = jnp.arange(W)[:, None]
    xo = jnp.arange(W)[None, :]
    dx = xs - xo + PAD
    valid = (dx >= 0) & (dx < K)
    dxc = jnp.clip(dx, 0, K - 1)
    g = ws7[:, dxc, :] * valid[None, :, :, None]   # (7, xs, x, 2)
    g = g.transpose(0, 3, 1, 2)                    # (7, 2, xs, x)
    g = jnp.broadcast_to(g[..., None], (K, 2, W, W, C4))
    return g.reshape(K, 2 * W, W * C4).astype(jnp.float32)


def pick_nb(N, H, W, C, budget_bytes=8 * 1024 * 1024):
    """Images per grid step: biggest divisor of N whose live data fits budget."""
    per_img = 4 * H * W * C * 16      # rough: input + padded stem + c/out copies
    nb = max(1, min(N, budget_bytes // max(per_img, 1)))
    while N % nb:
        nb -= 1
    return nb


def pick_vmem_limit():
    """Raise the scoped VMEM limit (review: don't sit at the 32 MiB default),
    but respect v7x's smaller 64 MiB physical VMEM."""
    try:
        cap = int(pltpu.get_tpu_info().vmem_capacity_bytes)
    except Exception:
        cap = 64 * 1024 * 1024
    return min((cap * 3) // 4, 100 * 1024 * 1024)


def msab_pallas(x_nchw, p, matmul_dtype=jnp.bfloat16, nb=None):
    N, C, H, W = x_nchw.shape
    C4 = 4 * C
    WC, WC4 = W * C, W * C4

    if nb is None:
        nb = pick_nb(N, H, W, C)
    assert N % nb == 0

    # NCHW -> lane-dense (N, H, W*C)
    x = jnp.transpose(x_nchw, (0, 2, 3, 1)).reshape(N, H, WC)

    # stem 1x1 conv as a block-diagonal lane-space matrix
    w0bd = jnp.kron(jnp.eye(W, dtype=jnp.float32), p['w0']).astype(matmul_dtype)
    b0_ld = jnp.tile(p['b0'], (1, W))                                  # (1, WC)

    # fused multi-scale branch weights -> banded lane-space matrices (per dy)
    Wb = build_fused_conv_weight(p, C)                                 # (7,7,C,4C)
    T = build_band_matrices(Wb, W).astype(matmul_dtype)                # (7,WC,WC4)
    bbig = jnp.concatenate([p['b1'], p['b3'], p['b5'], p['b7']], axis=-1)
    bbig_ld = jnp.tile(bbig, (1, W))                                   # (1, WC4)

    # spatial-attention 7x7 conv -> banded matrices (kept f32: tiny matmul)
    Ts = build_sa_band_matrices(p['ws'].reshape(K, K, 2), W, C4)       # (7,2W,WC4)

    alpha = p['alpha'].reshape(1).astype(jnp.float32)                  # SMEM
    bs = p['bs'].reshape(1).astype(jnp.float32)                        # SMEM

    args = [x, w0bd, b0_ld, alpha, T, bbig_ld,
            p['wc1'], p['bc1'], p['wc2'], p['bc2'], Ts, bs]

    def vmem_full(a):
        nd = a.ndim
        return pl.BlockSpec(a.shape, lambda n, _nd=nd: (0,) * _nd)

    def smem_spec():
        return pl.BlockSpec(memory_space=pltpu.MemorySpace.SMEM)

    in_specs = [pl.BlockSpec((nb, H, WC), lambda n: (n, 0, 0)),
                vmem_full(w0bd), vmem_full(b0_ld), smem_spec(),
                vmem_full(T), vmem_full(bbig_ld),
                vmem_full(p['wc1']), vmem_full(p['bc1']),
                vmem_full(p['wc2']), vmem_full(p['bc2']),
                vmem_full(Ts), smem_spec()]

    kernel = functools.partial(msab_kernel, Nb=nb, H=H, W=W, C=C)

    out = pl.pallas_call(
        kernel,
        out_shape=jax.ShapeDtypeStruct((N, H, WC4), jnp.float32),
        grid=(N // nb,),
        in_specs=in_specs,
        out_specs=pl.BlockSpec((nb, H, WC4), lambda n: (n, 0, 0)),
        compiler_params=pltpu.CompilerParams(
            dimension_semantics=("parallel",),
            vmem_limit_bytes=pick_vmem_limit()),
    )(*args)

    # (N, H, W*4C) -> NCHW
    out = out.reshape(N, H, W, C4)
    return jnp.transpose(out, (0, 3, 1, 2))


# ----------------------------------------------------------------------------
# Params + pure-JAX reference
# ----------------------------------------------------------------------------
def init_params(key, C, hidden):
    C4 = 4 * C
    ks = jax.random.split(key, 16)

    def w(k, shape, scale=0.1):
        return (scale * jax.random.normal(k, shape)).astype(jnp.float32)

    return dict(
        w0=w(ks[0], (C, C)),        b0=w(ks[1], (1, C), 0.01),
        alpha=jnp.full((1, 1), 0.25, jnp.float32),        # PReLU default init
        w1=w(ks[2], (C, C)),        b1=w(ks[3], (1, C), 0.01),
        w3=w(ks[4], (3, 3, C, C)),  b3=w(ks[5], (1, C), 0.01),
        w5=w(ks[6], (5, 5, C, C)),  b5=w(ks[7], (1, C), 0.01),
        w7=w(ks[8], (7, 7, C, C)),  b7=w(ks[9], (1, C), 0.01),
        wc1=w(ks[10], (C4, hidden)), bc1=w(ks[11], (1, hidden), 0.01),
        wc2=w(ks[12], (hidden, C4)), bc2=w(ks[13], (1, C4), 0.01),
        ws=w(ks[14], (49, 2)),       bs=w(ks[15], (1, 1), 0.01),
    )


def msab_reference(x_nchw, p):
    """Pure-JAX (XLA) reference, NHWC convs, same parameterization."""
    x = jnp.transpose(x_nchw, (0, 2, 3, 1))
    C = x.shape[-1]
    dn = ('NHWC', 'HWIO', 'NHWC')

    def conv(inp, w, b, pad):
        y = jax.lax.conv_general_dilated(inp, w, (1, 1), [(pad, pad), (pad, pad)],
                                         dimension_numbers=dn)
        return y + b.reshape(1, 1, 1, -1)

    s = conv(x, p['w0'].reshape(1, 1, C, C), p['b0'], 0)
    s = jnp.maximum(s, 0.0) + p['alpha'][0, 0] * jnp.minimum(s, 0.0)
    x1 = conv(s, p['w1'].reshape(1, 1, C, C), p['b1'], 0)
    x3 = conv(s, p['w3'], p['b3'], 1)
    x5 = conv(s, p['w5'], p['b5'], 2)
    x7 = conv(s, p['w7'], p['b7'], 3)
    c = jnp.concatenate([x1, x3, x5, x7], axis=-1)

    gap = jnp.mean(c, axis=(1, 2))
    gmp = jnp.max(c, axis=(1, 2))

    def mlp(v):
        return jnp.maximum(v @ p['wc1'] + p['bc1'], 0.0) @ p['wc2'] + p['bc2']

    ca = jax.nn.sigmoid(mlp(gap) + mlp(gmp))
    c = c * ca[:, None, None, :]

    avg_c = jnp.mean(c, axis=-1, keepdims=True)
    max_c = jnp.max(c, axis=-1, keepdims=True)
    sa_in = jnp.concatenate([avg_c, max_c], axis=-1)
    sa = jax.nn.sigmoid(conv(sa_in, p['ws'].reshape(7, 7, 2, 1), p['bs'], 3))
    out = c * sa
    return jnp.transpose(out, (0, 3, 1, 2))


if __name__ == "__main__":
    N, C, H, W = 2, 8, 16, 16     # x: (batch, in_channels, H, W) like the PyTorch module
    hidden = 8                     # CBAM channel-attention bottleneck (4C // 4)

    key = jax.random.PRNGKey(0)
    kx, kp = jax.random.split(key)
    x = jax.random.normal(kx, (N, C, H, W), jnp.float32)
    params = init_params(kp, C, hidden)

    ref = msab_reference(x, params)

    # Strict correctness check with f32 matmul operands.
    out32 = jax.block_until_ready(msab_pallas(x, params, matmul_dtype=jnp.float32))
    assert out32.shape == (N, 4 * C, H, W), out32.shape
    err32 = float(jnp.max(jnp.abs(out32 - ref)))
    assert jnp.allclose(out32, ref, atol=3e-4, rtol=3e-4), f"f32 max_err={err32}"

    # Performance default: bf16 matmul operands, f32 accumulation/elementwise.
    outbf = jax.block_until_ready(msab_pallas(x, params, matmul_dtype=jnp.bfloat16))
    errbf = float(jnp.max(jnp.abs(outbf - ref)))
    assert errbf < 0.1, f"bf16 max_err={errbf}"

    print("KERNEL_OK")
</pallas_src>

<mosaic_0001>
module attributes {stable_mosaic.version = 11 : i64} {
  func.func @msab_kernel(%arg0: i32, %arg1: memref<2x16x128xf32, #tpu.memory_space<vmem>>, %arg2: memref<128x128xf32, #tpu.memory_space<vmem>>, %arg3: memref<1x128xf32, #tpu.memory_space<vmem>>, %arg4: memref<1xf32, #tpu.memory_space<smem>>, %arg5: memref<7x128x512xf32, #tpu.memory_space<vmem>>, %arg6: memref<1x512xf32, #tpu.memory_space<vmem>>, %arg7: memref<32x8xf32, #tpu.memory_space<vmem>>, %arg8: memref<1x8xf32, #tpu.memory_space<vmem>>, %arg9: memref<8x32xf32, #tpu.memory_space<vmem>>, %arg10: memref<1x32xf32, #tpu.memory_space<vmem>>, %arg11: memref<7x32x512xf32, #tpu.memory_space<vmem>>, %arg12: memref<1xf32, #tpu.memory_space<smem>>, %arg13: memref<2x16x512xf32, #tpu.memory_space<vmem>>) attributes {dimension_semantics = [#tpu.dimension_semantics<parallel>], iteration_bounds = array<i64: 1>, scalar_prefetch = 0 : i64, scratch_operands = 0 : i64, tpu.core_type = #tpu.core_type<tc>, window_params = [{transform_indices = @transform_0, window_bounds = array<i64: 2, 16, 128>}, {pipeline_mode = #tpu.pipeline_mode<synchronous>, transform_indices = @transform_1, window_bounds = array<i64: 128, 128>}, {pipeline_mode = #tpu.pipeline_mode<synchronous>, transform_indices = @transform_2, window_bounds = array<i64: 1, 128>}, {transform_indices = @transform_3, window_bounds = array<i64: 1>}, {pipeline_mode = #tpu.pipeline_mode<synchronous>, transform_indices = @transform_4, window_bounds = array<i64: 7, 128, 512>}, {pipeline_mode = #tpu.pipeline_mode<synchronous>, transform_indices = @transform_5, window_bounds = array<i64: 1, 512>}, {pipeline_mode = #tpu.pipeline_mode<synchronous>, transform_indices = @transform_6, window_bounds = array<i64: 32, 8>}, {pipeline_mode = #tpu.pipeline_mode<synchronous>, transform_indices = @transform_7, window_bounds = array<i64: 1, 8>}, {pipeline_mode = #tpu.pipeline_mode<synchronous>, transform_indices = @transform_8, window_bounds = array<i64: 8, 32>}, {pipeline_mode = #tpu.pipeline_mode<synchronous>, transform_indices = @transform_9, window_bounds = array<i64: 1, 32>}, {pipeline_mode = #tpu.pipeline_mode<synchronous>, transform_indices = @transform_10, window_bounds = array<i64: 7, 32, 512>}, {transform_indices = @transform_11, window_bounds = array<i64: 1>}, {transform_indices = @transform_12, window_bounds = array<i64: 2, 16, 512>}]} {
    %c0 = arith.constant 0 : index
    %c0_0 = arith.constant 0 : index
    %c0_1 = arith.constant 0 : index
    %0 = vector.load %arg1[%c0, %c0_0, %c0_1] : memref<2x16x128xf32, #tpu.memory_space<vmem>>, vector<2x16x128xf32>
    %1 = vector.shape_cast %0 : vector<2x16x128xf32> to vector<32x128xf32>
    %c0_2 = arith.constant 0 : index
    %c0_3 = arith.constant 0 : index
    %2 = vector.load %arg2[%c0_2, %c0_3] : memref<128x128xf32, #tpu.memory_space<vmem>>, vector<128x128xf32>
    %cst = arith.constant dense<0.000000e+00> : vector<32x128xf32>
    %3 = tpu.matmul %1, %2, %cst {dimension_numbers = #tpu.dot_dimension_numbers<[1], [0], [0], [1], [0, 0, 1, 1], [], []>} : vector<32x128xf32>, vector<128x128xf32>, vector<32x128xf32> -> vector<32x128xf32>
    %c0_4 = arith.constant 0 : index
    %c0_5 = arith.constant 0 : index
    %4 = vector.load %arg3[%c0_4, %c0_5] : memref<1x128xf32, #tpu.memory_space<vmem>>, vector<1x128xf32>
    %5 = vector.broadcast %4 : vector<1x128xf32> to vector<32x128xf32>
    %6 = arith.addf %3, %5 : vector<32x128xf32>
    %c0_6 = arith.constant 0 : index
    %7 = memref.load %arg4[%c0_6] : memref<1xf32, #tpu.memory_space<smem>>
    %cst_7 = arith.constant 0.000000e+00 : f32
    %8 = vector.broadcast %cst_7 : f32 to vector<32x128xf32>
    %9 = arith.maximumf %6, %8 : vector<32x128xf32>
    %cst_8 = arith.constant 0.000000e+00 : f32
    %10 = vector.broadcast %cst_8 : f32 to vector<32x128xf32>
    %11 = arith.minimumf %6, %10 : vector<32x128xf32>
    %12 = vector.broadcast %7 : f32 to vector<32x128xf32>
    %13 = arith.mulf %12, %11 : vector<32x128xf32>
    %14 = arith.addf %9, %13 : vector<32x128xf32>
    %15 = vector.shape_cast %14 : vector<32x128xf32> to vector<2x16x128xf32>
    %cst_9 = arith.constant 0.000000e+00 : f32
    %16 = vector.broadcast %cst_9 : f32 to vector<2x3x128xf32>
    %17 = tpu.concatenate %16, %15, %16 in 1 : vector<2x3x128xf32>, vector<2x16x128xf32>, vector<2x3x128xf32> -> vector<2x22x128xf32>
    %cst_10 = arith.constant 0.000000e+00 : f32
    %18 = vector.broadcast %cst_10 : f32 to vector<32x512xf32>
    %19 = vector.extract_strided_slice %17 {offsets = [0, 0, 0], sizes = [2, 16, 128], strides = [1, 1, 1]} : vector<2x22x128xf32> to vector<2x16x128xf32>
    %20 = vector.shape_cast %19 : vector<2x16x128xf32> to vector<32x128xf32>
    %c0_11 = arith.constant 0 : index
    %c0_12 = arith.constant 0 : index
    %c0_13 = arith.constant 0 : index
    %21 = vector.load %arg5[%c0_11, %c0_12, %c0_13] : memref<7x128x512xf32, #tpu.memory_space<vmem>>, vector<1x128x512xf32>
    %22 = vector.shape_cast %21 : vector<1x128x512xf32> to vector<128x512xf32>
    %cst_14 = arith.constant dense<0.000000e+00> : vector<32x512xf32>
    %23 = tpu.matmul %20, %22, %cst_14 {dimension_numbers = #tpu.dot_dimension_numbers<[1], [0], [0], [1], [0, 0, 1, 1], [], []>} : vector<32x128xf32>, vector<128x512xf32>, vector<32x512xf32> -> vector<32x512xf32>
    %24 = arith.addf %18, %23 : vector<32x512xf32>
    %25 = vector.extract_strided_slice %17 {offsets = [0, 1, 0], sizes = [2, 16, 128], strides = [1, 1, 1]} : vector<2x22x128xf32> to vector<2x16x128xf32>
    %26 = vector.shape_cast %25 : vector<2x16x128xf32> to vector<32x128xf32>
    %c1 = arith.constant 1 : index
    %c0_15 = arith.constant 0 : index
    %c0_16 = arith.constant 0 : index
    %27 = vector.load %arg5[%c1, %c0_15, %c0_16] : memref<7x128x512xf32, #tpu.memory_space<vmem>>, vector<1x128x512xf32>
    %28 = vector.shape_cast %27 : vector<1x128x512xf32> to vector<128x512xf32>
    %cst_17 = arith.constant dense<0.000000e+00> : vector<32x512xf32>
    %29 = tpu.matmul %26, %28, %cst_17 {dimension_numbers = #tpu.dot_dimension_numbers<[1], [0], [0], [1], [0, 0, 1, 1], [], []>} : vector<32x128xf32>, vector<128x512xf32>, vector<32x512xf32> -> vector<32x512xf32>
    %30 = arith.addf %24, %29 : vector<32x512xf32>
    %31 = vector.extract_strided_slice %17 {offsets = [0, 2, 0], sizes = [2, 16, 128], strides = [1, 1, 1]} : vector<2x22x128xf32> to vector<2x16x128xf32>
    %32 = vector.shape_cast %31 : vector<2x16x128xf32> to vector<32x128xf32>
    %c2 = arith.constant 2 : index
    %c0_18 = arith.constant 0 : index
    %c0_19 = arith.constant 0 : index
    %33 = vector.load %arg5[%c2, %c0_18, %c0_19] : memref<7x128x512xf32, #tpu.memory_space<vmem>>, vector<1x128x512xf32>
    %34 = vector.shape_cast %33 : vector<1x128x512xf32> to vector<128x512xf32>
    %cst_20 = arith.constant dense<0.000000e+00> : vector<32x512xf32>
    %35 = tpu.matmul %32, %34, %cst_20 {dimension_numbers = #tpu.dot_dimension_numbers<[1], [0], [0], [1], [0, 0, 1, 1], [], []>} : vector<32x128xf32>, vector<128x512xf32>, vector<32x512xf32> -> vector<32x512xf32>
    %36 = arith.addf %30, %35 : vector<32x512xf32>
    %37 = vector.extract_strided_slice %17 {offsets = [0, 3, 0], sizes = [2, 16, 128], strides = [1, 1, 1]} : vector<2x22x128xf32> to vector<2x16x128xf32>
    %38 = vector.shape_cast %37 : vector<2x16x128xf32> to vector<32x128xf32>
    %c3 = arith.constant 3 : index
    %c0_21 = arith.constant 0 : index
    %c0_22 = arith.constant 0 : index
    %39 = vector.load %arg5[%c3, %c0_21, %c0_22] : memref<7x128x512xf32, #tpu.memory_space<vmem>>, vector<1x128x512xf32>
    %40 = vector.shape_cast %39 : vector<1x128x512xf32> to vector<128x512xf32>
    %cst_23 = arith.constant dense<0.000000e+00> : vector<32x512xf32>
    %41 = tpu.matmul %38, %40, %cst_23 {dimension_numbers = #tpu.dot_dimension_numbers<[1], [0], [0], [1], [0, 0, 1, 1], [], []>} : vector<32x128xf32>, vector<128x512xf32>, vector<32x512xf32> -> vector<32x512xf32>
    %42 = arith.addf %36, %41 : vector<32x512xf32>
    %43 = vector.extract_strided_slice %17 {offsets = [0, 4, 0], sizes = [2, 16, 128], strides = [1, 1, 1]} : vector<2x22x128xf32> to vector<2x16x128xf32>
    %44 = vector.shape_cast %43 : vector<2x16x128xf32> to vector<32x128xf32>
    %c4 = arith.constant 4 : index
    %c0_24 = arith.constant 0 : index
    %c0_25 = arith.constant 0 : index
    %45 = vector.load %arg5[%c4, %c0_24, %c0_25] : memref<7x128x512xf32, #tpu.memory_space<vmem>>, vector<1x128x512xf32>
    %46 = vector.shape_cast %45 : vector<1x128x512xf32> to vector<128x512xf32>
    %cst_26 = arith.constant dense<0.000000e+00> : vector<32x512xf32>
    %47 = tpu.matmul %44, %46, %cst_26 {dimension_numbers = #tpu.dot_dimension_numbers<[1], [0], [0], [1], [0, 0, 1, 1], [], []>} : vector<32x128xf32>, vector<128x512xf32>, vector<32x512xf32> -> vector<32x512xf32>
    %48 = arith.addf %42, %47 : vector<32x512xf32>
    %49 = vector.extract_strided_slice %17 {offsets = [0, 5, 0], sizes = [2, 16, 128], strides = [1, 1, 1]} : vector<2x22x128xf32> to vector<2x16x128xf32>
    %50 = vector.shape_cast %49 : vector<2x16x128xf32> to vector<32x128xf32>
    %c5 = arith.constant 5 : index
    %c0_27 = arith.constant 0 : index
    %c0_28 = arith.constant 0 : index
    %51 = vector.load %arg5[%c5, %c0_27, %c0_28] : memref<7x128x512xf32, #tpu.memory_space<vmem>>, vector<1x128x512xf32>
    %52 = vector.shape_cast %51 : vector<1x128x512xf32> to vector<128x512xf32>
    %cst_29 = arith.constant dense<0.000000e+00> : vector<32x512xf32>
    %53 = tpu.matmul %50, %52, %cst_29 {dimension_numbers = #tpu.dot_dimension_numbers<[1], [0], [0], [1], [0, 0, 1, 1], [], []>} : vector<32x128xf32>, vector<128x512xf32>, vector<32x512xf32> -> vector<32x512xf32>
    %54 = arith.addf %48, %53 : vector<32x512xf32>
    %55 = vector.extract_strided_slice %17 {offsets = [0, 6, 0], sizes = [2, 16, 128], strides = [1, 1, 1]} : vector<2x22x128xf32> to vector<2x16x128xf32>
    %56 = vector.shape_cast %55 : vector<2x16x128xf32> to vector<32x128xf32>
    %c6 = arith.constant 6 : index
    %c0_30 = arith.constant 0 : index
    %c0_31 = arith.constant 0 : index
    %57 = vector.load %arg5[%c6, %c0_30, %c0_31] : memref<7x128x512xf32, #tpu.memory_space<vmem>>, vector<1x128x512xf32>
    %58 = vector.shape_cast %57 : vector<1x128x512xf32> to vector<128x512xf32>
    %cst_32 = arith.constant dense<0.000000e+00> : vector<32x512xf32>
    %59 = tpu.matmul %56, %58, %cst_32 {dimension_numbers = #tpu.dot_dimension_numbers<[1], [0], [0], [1], [0, 0, 1, 1], [], []>} : vector<32x128xf32>, vector<128x512xf32>, vector<32x512xf32> -> vector<32x512xf32>
    %60 = arith.addf %54, %59 : vector<32x512xf32>
    %c0_33 = arith.constant 0 : index
    %c0_34 = arith.constant 0 : index
    %61 = vector.load %arg6[%c0_33, %c0_34] : memref<1x512xf32, #tpu.memory_space<vmem>>, vector<1x512xf32>
    %62 = vector.broadcast %61 : vector<1x512xf32> to vector<32x512xf32>
    %63 = arith.addf %60, %62 : vector<32x512xf32>
    %64 = vector.shape_cast %63 : vector<32x512xf32> to vector<2x16x512xf32>
    %cst_35 = arith.constant dense<0.000000e+00> : vector<2x512xf32>
    %65 = vector.multi_reduction <add>, %64, %cst_35 [1] : vector<2x16x512xf32> to vector<2x512xf32>
    %cst_36 = arith.constant dense<0xFF800000> : vector<2x512xf32>
    %66 = vector.multi_reduction <maximumf>, %64, %cst_36 [1] : vector<2x16x512xf32> to vector<2x512xf32>
    %67 = vector.shape_cast %65 : vector<2x512xf32> to vector<2x16x32xf32>
    %cst_37 = arith.constant dense<0.000000e+00> : vector<2x32xf32>
    %68 = vector.multi_reduction <add>, %67, %cst_37 [1] : vector<2x16x32xf32> to vector<2x32xf32>
    %cst_38 = arith.constant 3.906250e-03 : f32
    %69 = vector.broadcast %cst_38 : f32 to vector<2x32xf32>
    %70 = arith.mulf %68, %69 : vector<2x32xf32>
    %71 = vector.shape_cast %66 : vector<2x512xf32> to vector<2x16x32xf32>
    %cst_39 = arith.constant dense<0xFF800000> : vector<2x32xf32>
    %72 = vector.multi_reduction <maximumf>, %71, %cst_39 [1] : vector<2x16x32xf32> to vector<2x32xf32>
    %73 = tpu.concatenate %70, %72 in 0 : vector<2x32xf32>, vector<2x32xf32> -> vector<4x32xf32>
    %c0_40 = arith.constant 0 : index
    %c0_41 = arith.constant 0 : index
    %74 = vector.load %arg7[%c0_40, %c0_41] : memref<32x8xf32, #tpu.memory_space<vmem>>, vector<32x8xf32>
    %cst_42 = arith.constant dense<0.000000e+00> : vector<4x8xf32>
    %75 = tpu.matmul %73, %74, %cst_42 {dimension_numbers = #tpu.dot_dimension_numbers<[1], [0], [0], [1], [0, 0, 1, 1], [], []>} : vector<4x32xf32>, vector<32x8xf32>, vector<4x8xf32> -> vector<4x8xf32>
    %c0_43 = arith.constant 0 : index
    %c0_44 = arith.constant 0 : index
    %76 = vector.load %arg8[%c0_43, %c0_44] : memref<1x8xf32, #tpu.memory_space<vmem>>, vector<1x8xf32>
    %77 = vector.broadcast %76 : vector<1x8xf32> to vector<4x8xf32>
    %78 = arith.addf %75, %77 : vector<4x8xf32>
    %cst_45 = arith.constant 0.000000e+00 : f32
    %79 = vector.broadcast %cst_45 : f32 to vector<4x8xf32>
    %80 = arith.maximumf %78, %79 : vector<4x8xf32>
    %c0_46 = arith.constant 0 : index
    %c0_47 = arith.constant 0 : index
    %81 = vector.load %arg9[%c0_46, %c0_47] : memref<8x32xf32, #tpu.memory_space<vmem>>, vector<8x32xf32>
    %cst_48 = arith.constant dense<0.000000e+00> : vector<4x32xf32>
    %82 = tpu.matmul %80, %81, %cst_48 {dimension_numbers = #tpu.dot_dimension_numbers<[1], [0], [0], [1], [0, 0, 1, 1], [], []>} : vector<4x8xf32>, vector<8x32xf32>, vector<4x32xf32> -> vector<4x32xf32>
    %c0_49 = arith.constant 0 : index
    %c0_50 = arith.constant 0 : index
    %83 = vector.load %arg10[%c0_49, %c0_50] : memref<1x32xf32, #tpu.memory_space<vmem>>, vector<1x32xf32>
    %84 = vector.broadcast %83 : vector<1x32xf32> to vector<4x32xf32>
    %85 = arith.addf %82, %84 : vector<4x32xf32>
    %86 = vector.extract_strided_slice %85 {offsets = [0, 0], sizes = [2, 32], strides = [1, 1]} : vector<4x32xf32> to vector<2x32xf32>
    %87 = vector.extract_strided_slice %85 {offsets = [2, 0], sizes = [2, 32], strides = [1, 1]} : vector<4x32xf32> to vector<2x32xf32>
    %88 = arith.addf %86, %87 : vector<2x32xf32>
    %89 = arith.negf %88 : vector<2x32xf32>
    %90 = math.exp %89 : vector<2x32xf32>
    %cst_51 = arith.constant 1.000000e+00 : f32
    %91 = vector.broadcast %cst_51 : f32 to vector<2x32xf32>
    %92 = arith.addf %91, %90 : vector<2x32xf32>
    %93 = arith.divf %91, %92 : vector<2x32xf32>
    %94 = tpu.concatenate %93, %93, %93, %93, %93, %93, %93, %93, %93, %93, %93, %93, %93, %93, %93, %93 in 1 : vector<2x32xf32>, vector<2x32xf32>, vector<2x32xf32>, vector<2x32xf32>, vector<2x32xf32>, vector<2x32xf32>, vector<2x32xf32>, vector<2x32xf32>, vector<2x32xf32>, vector<2x32xf32>, vector<2x32xf32>, vector<2x32xf32>, vector<2x32xf32>, vector<2x32xf32>, vector<2x32xf32>, vector<2x32xf32> -> vector<2x512xf32>
    %95 = vector.shape_cast %94 : vector<2x512xf32> to vector<2x1x512xf32>
    %96 = vector.broadcast %95 : vector<2x1x512xf32> to vector<2x16x512xf32>
    %97 = arith.mulf %64, %96 : vector<2x16x512xf32>
    %98 = vector.shape_cast %97 : vector<2x16x512xf32> to vector<32x16x32xf32>
    %cst_52 = arith.constant dense<0.000000e+00> : vector<32x16xf32>
    %99 = vector.multi_reduction <add>, %98, %cst_52 [2] : vector<32x16x32xf32> to vector<32x16xf32>
    %cst_53 = arith.constant 3.200000e+01 : f32
    %100 = vector.broadcast %cst_53 : f32 to vector<32x16xf32>
    %101 = arith.divf %99, %100 : vector<32x16xf32>
    %cst_54 = arith.constant dense<0xFF800000> : vector<32x16xf32>
    %102 = vector.multi_reduction <maximumf>, %98, %cst_54 [2] : vector<32x16x32xf32> to vector<32x16xf32>
    %103 = tpu.concatenate %101, %102 in 1 : vector<32x16xf32>, vector<32x16xf32> -> vector<32x32xf32>
    %104 = vector.shape_cast %103 : vector<32x32xf32> to vector<2x16x32xf32>
    %cst_55 = arith.constant 0.000000e+00 : f32
    %105 = vector.broadcast %cst_55 : f32 to vector<2x3x32xf32>
    %106 = tpu.concatenate %105, %104, %105 in 1 : vector<2x3x32xf32>, vector<2x16x32xf32>, vector<2x3x32xf32> -> vector<2x22x32xf32>
    %cst_56 = arith.constant 0.000000e+00 : f32
    %107 = vector.broadcast %cst_56 : f32 to vector<32x512xf32>
    %108 = vector.extract_strided_slice %106 {offsets = [0, 0, 0], sizes = [2, 16, 32], strides = [1, 1, 1]} : vector<2x22x32xf32> to vector<2x16x32xf32>
    %109 = vector.shape_cast %108 : vector<2x16x32xf32> to vector<32x32xf32>
    %c0_57 = arith.constant 0 : index
    %c0_58 = arith.constant 0 : index
    %c0_59 = arith.constant 0 : index
    %110 = vector.load %arg11[%c0_57, %c0_58, %c0_59] : memref<7x32x512xf32, #tpu.memory_space<vmem>>, vector<1x32x512xf32>
    %111 = vector.shape_cast %110 : vector<1x32x512xf32> to vector<32x512xf32>
    %cst_60 = arith.constant dense<0.000000e+00> : vector<32x512xf32>
    %112 = tpu.matmul %109, %111, %cst_60 {dimension_numbers = #tpu.dot_dimension_numbers<[1], [0], [0], [1], [0, 0, 1, 1], [], []>} : vector<32x32xf32>, vector<32x512xf32>, vector<32x512xf32> -> vector<32x512xf32>
    %113 = arith.addf %107, %112 : vector<32x512xf32>
    %114 = vector.extract_strided_slice %106 {offsets = [0, 1, 0], sizes = [2, 16, 32], strides = [1, 1, 1]} : vector<2x22x32xf32> to vector<2x16x32xf32>
    %115 = vector.shape_cast %114 : vector<2x16x32xf32> to vector<32x32xf32>
    %c1_61 = arith.constant 1 : index
    %c0_62 = arith.constant 0 : index
    %c0_63 = arith.constant 0 : index
    %116 = vector.load %arg11[%c1_61, %c0_62, %c0_63] : memref<7x32x512xf32, #tpu.memory_space<vmem>>, vector<1x32x512xf32>
    %117 = vector.shape_cast %116 : vector<1x32x512xf32> to vector<32x512xf32>
    %cst_64 = arith.constant dense<0.000000e+00> : vector<32x512xf32>
    %118 = tpu.matmul %115, %117, %cst_64 {dimension_numbers = #tpu.dot_dimension_numbers<[1], [0], [0], [1], [0, 0, 1, 1], [], []>} : vector<32x32xf32>, vector<32x512xf32>, vector<32x512xf32> -> vector<32x512xf32>
    %119 = arith.addf %113, %118 : vector<32x512xf32>
    %120 = vector.extract_strided_slice %106 {offsets = [0, 2, 0], sizes = [2, 16, 32], strides = [1, 1, 1]} : vector<2x22x32xf32> to vector<2x16x32xf32>
    %121 = vector.shape_cast %120 : vector<2x16x32xf32> to vector<32x32xf32>
    %c2_65 = arith.constant 2 : index
    %c0_66 = arith.constant 0 : index
    %c0_67 = arith.constant 0 : index
    %122 = vector.load %arg11[%c2_65, %c0_66, %c0_67] : memref<7x32x512xf32, #tpu.memory_space<vmem>>, vector<1x32x512xf32>
    %123 = vector.shape_cast %122 : vector<1x32x512xf32> to vector<32x512xf32>
    %cst_68 = arith.constant dense<0.000000e+00> : vector<32x512xf32>
    %124 = tpu.matmul %121, %123, %cst_68 {dimension_numbers = #tpu.dot_dimension_numbers<[1], [0], [0], [1], [0, 0, 1, 1], [], []>} : vector<32x32xf32>, vector<32x512xf32>, vector<32x512xf32> -> vector<32x512xf32>
    %125 = arith.addf %119, %124 : vector<32x512xf32>
    %126 = vector.extract_strided_slice %106 {offsets = [0, 3, 0], sizes = [2, 16, 32], strides = [1, 1, 1]} : vector<2x22x32xf32> to vector<2x16x32xf32>
    %127 = vector.shape_cast %126 : vector<2x16x32xf32> to vector<32x32xf32>
    %c3_69 = arith.constant 3 : index
    %c0_70 = arith.constant 0 : index
    %c0_71 = arith.constant 0 : index
    %128 = vector.load %arg11[%c3_69, %c0_70, %c0_71] : memref<7x32x512xf32, #tpu.memory_space<vmem>>, vector<1x32x512xf32>
    %129 = vector.shape_cast %128 : vector<1x32x512xf32> to vector<32x512xf32>
    %cst_72 = arith.constant dense<0.000000e+00> : vector<32x512xf32>
    %130 = tpu.matmul %127, %129, %cst_72 {dimension_numbers = #tpu.dot_dimension_numbers<[1], [0], [0], [1], [0, 0, 1, 1], [], []>} : vector<32x32xf32>, vector<32x512xf32>, vector<32x512xf32> -> vector<32x512xf32>
    %131 = arith.addf %125, %130 : vector<32x512xf32>
    %132 = vector.extract_strided_slice %106 {offsets = [0, 4, 0], sizes = [2, 16, 32], strides = [1, 1, 1]} : vector<2x22x32xf32> to vector<2x16x32xf32>
    %133 = vector.shape_cast %132 : vector<2x16x32xf32> to vector<32x32xf32>
    %c4_73 = arith.constant 4 : index
    %c0_74 = arith.constant 0 : index
    %c0_75 = arith.constant 0 : index
    %134 = vector.load %arg11[%c4_73, %c0_74, %c0_75] : memref<7x32x512xf32, #tpu.memory_space<vmem>>, vector<1x32x512xf32>
    %135 = vector.shape_cast %134 : vector<1x32x512xf32> to vector<32x512xf32>
    %cst_76 = arith.constant dense<0.000000e+00> : vector<32x512xf32>
    %136 = tpu.matmul %133, %135, %cst_76 {dimension_numbers = #tpu.dot_dimension_numbers<[1], [0], [0], [1], [0, 0, 1, 1], [], []>} : vector<32x32xf32>, vector<32x512xf32>, vector<32x512xf32> -> vector<32x512xf32>
    %137 = arith.addf %131, %136 : vector<32x512xf32>
    %138 = vector.extract_strided_slice %106 {offsets = [0, 5, 0], sizes = [2, 16, 32], strides = [1, 1, 1]} : vector<2x22x32xf32> to vector<2x16x32xf32>
    %139 = vector.shape_cast %138 : vector<2x16x32xf32> to vector<32x32xf32>
    %c5_77 = arith.constant 5 : index
    %c0_78 = arith.constant 0 : index
    %c0_79 = arith.constant 0 : index
    %140 = vector.load %arg11[%c5_77, %c0_78, %c0_79] : memref<7x32x512xf32, #tpu.memory_space<vmem>>, vector<1x32x512xf32>
    %141 = vector.shape_cast %140 : vector<1x32x512xf32> to vector<32x512xf32>
    %cst_80 = arith.constant dense<0.000000e+00> : vector<32x512xf32>
    %142 = tpu.matmul %139, %141, %cst_80 {dimension_numbers = #tpu.dot_dimension_numbers<[1], [0], [0], [1], [0, 0, 1, 1], [], []>} : vector<32x32xf32>, vector<32x512xf32>, vector<32x512xf32> -> vector<32x512xf32>
    %143 = arith.addf %137, %142 : vector<32x512xf32>
    %144 = vector.extract_strided_slice %106 {offsets = [0, 6, 0], sizes = [2, 16, 32], strides = [1, 1, 1]} : vector<2x22x32xf32> to vector<2x16x32xf32>
    %145 = vector.shape_cast %144 : vector<2x16x32xf32> to vector<32x32xf32>
    %c6_81 = arith.constant 6 : index
    %c0_82 = arith.constant 0 : index
    %c0_83 = arith.constant 0 : index
    %146 = vector.load %arg11[%c6_81, %c0_82, %c0_83] : memref<7x32x512xf32, #tpu.memory_space<vmem>>, vector<1x32x512xf32>
    %147 = vector.shape_cast %146 : vector<1x32x512xf32> to vector<32x512xf32>
    %cst_84 = arith.constant dense<0.000000e+00> : vector<32x512xf32>
    %148 = tpu.matmul %145, %147, %cst_84 {dimension_numbers = #tpu.dot_dimension_numbers<[1], [0], [0], [1], [0, 0, 1, 1], [], []>} : vector<32x32xf32>, vector<32x512xf32>, vector<32x512xf32> -> vector<32x512xf32>
    %149 = arith.addf %143, %148 : vector<32x512xf32>
    %c0_85 = arith.constant 0 : index
    %150 = memref.load %arg12[%c0_85] : memref<1xf32, #tpu.memory_space<smem>>
    %151 = vector.broadcast %150 : f32 to vector<32x512xf32>
    %152 = arith.addf %149, %151 : vector<32x512xf32>
    %153 = arith.negf %152 : vector<32x512xf32>
    %154 = math.exp %153 : vector<32x512xf32>
    %cst_86 = arith.constant 1.000000e+00 : f32
    %155 = vector.broadcast %cst_86 : f32 to vector<32x512xf32>
    %156 = arith.addf %155, %154 : vector<32x512xf32>
    %157 = arith.divf %155, %156 : vector<32x512xf32>
    %158 = vector.shape_cast %97 : vector<2x16x512xf32> to vector<32x512xf32>
    %159 = arith.mulf %158, %157 : vector<32x512xf32>
    %160 = vector.shape_cast %159 : vector<32x512xf32> to vector<2x16x512xf32>
    %c0_87 = arith.constant 0 : index
    %c0_88 = arith.constant 0 : index
    %c0_89 = arith.constant 0 : index
    %161 = vector.load %arg13[%c0_87, %c0_88, %c0_89] : memref<2x16x512xf32, #tpu.memory_space<vmem>>, vector<2x16x512xf32>
    tpu.vector_store %arg13[%c0_87, %c0_88, %c0_89], %160 {strides = array<i32>} : memref<2x16x512xf32, #tpu.memory_space<vmem>>, vector<2x16x512xf32>,
    return
  }
  func.func @transform_0(%arg0: i32) -> (i32, i32, i32) {
    %c0_i32 = arith.constant 0 : i32
    %c0_i32_0 = arith.constant 0 : i32
    %c0_i32_1 = arith.constant 0 : i32
    return %arg0, %c0_i32, %c0_i32_0 : i32, i32, i32
  }
  func.func @transform_1(%arg0: i32) -> (i32, i32) {
    %c0_i32 = arith.constant 0 : i32
    %c0_i32_0 = arith.constant 0 : i32
    %c0_i32_1 = arith.constant 0 : i32
    return %c0_i32, %c0_i32_0 : i32, i32
  }
  func.func @transform_2(%arg0: i32) -> (i32, i32) {
    %c0_i32 = arith.constant 0 : i32
    %c0_i32_0 = arith.constant 0 : i32
    %c0_i32_1 = arith.constant 0 : i32
    return %c0_i32, %c0_i32_0 : i32, i32
  }
  func.func @transform_3(%arg0: i32) -> i32 {
    %c0_i32 = arith.constant 0 : i32
    %c0_i32_0 = arith.constant 0 : i32
    return %c0_i32 : i32
  }
  func.func @transform_4(%arg0: i32) -> (i32, i32, i32) {
    %c0_i32 = arith.constant 0 : i32
    %c0_i32_0 = arith.constant 0 : i32
    %c0_i32_1 = arith.constant 0 : i32
    %c0_i32_2 = arith.constant 0 : i32
    return %c0_i32, %c0_i32_0, %c0_i32_1 : i32, i32, i32
  }
  func.func @transform_5(%arg0: i32) -> (i32, i32) {
    %c0_i32 = arith.constant 0 : i32
    %c0_i32_0 = arith.constant 0 : i32
    %c0_i32_1 = arith.constant 0 : i32
    return %c0_i32, %c0_i32_0 : i32, i32
  }
  func.func @transform_6(%arg0: i32) -> (i32, i32) {
    %c0_i32 = arith.constant 0 : i32
    %c0_i32_0 = arith.constant 0 : i32
    %c0_i32_1 = arith.constant 0 : i32
    return %c0_i32, %c0_i32_0 : i32, i32
  }
  func.func @transform_7(%arg0: i32) -> (i32, i32) {
    %c0_i32 = arith.constant 0 : i32
    %c0_i32_0 = arith.constant 0 : i32
    %c0_i32_1 = arith.constant 0 : i32
    return %c0_i32, %c0_i32_0 : i32, i32
  }
  func.func @transform_8(%arg0: i32) -> (i32, i32) {
    %c0_i32 = arith.constant 0 : i32
    %c0_i32_0 = arith.constant 0 : i32
    %c0_i32_1 = arith.constant 0 : i32
    return %c0_i32, %c0_i32_0 : i32, i32
  }
  func.func @transform_9(%arg0: i32) -> (i32, i32) {
    %c0_i32 = arith.constant 0 : i32
    %c0_i32_0 = arith.constant 0 : i32
    %c0_i32_1 = arith.constant 0 : i32
    return %c0_i32, %c0_i32_0 : i32, i32
  }
  func.func @transform_10(%arg0: i32) -> (i32, i32, i32) {
    %c0_i32 = arith.constant 0 : i32
    %c0_i32_0 = arith.constant 0 : i32
    %c0_i32_1 = arith.constant 0 : i32
    %c0_i32_2 = arith.constant 0 : i32
    return %c0_i32, %c0_i32_0, %c0_i32_1 : i32, i32, i32
  }
  func.func @transform_11(%arg0: i32) -> i32 {
    %c0_i32 = arith.constant 0 : i32
    %c0_i32_0 = arith.constant 0 : i32
    return %c0_i32 : i32
  }
  func.func @transform_12(%arg0: i32) -> (i32, i32, i32) {
    %c0_i32 = arith.constant 0 : i32
    %c0_i32_0 = arith.constant 0 : i32
    %c0_i32_1 = arith.constant 0 : i32
    return %arg0, %c0_i32, %c0_i32_0 : i32, i32, i32
  }
}

</mosaic_0001>

<llo_original>
// kernel: tpu_custom_call.1
$region0: #{tpu_custom_call.1}
  #allocation0 [shape = 'u32[]', space=smem, size = 0x4, offset = 0x4, fixed_abs, tag = 'smem constant byte address 0x4 - core index']
  #allocation1 [shape = 'u32[144,128]{1,0:T(1,128)}', space=vmem, size = 0x12000, scoped, tag = 'internal scratch']
  #allocation2 [shape = 'f32[1]{0:T(128)S(6)}', space=smem, size = 0x200, scoped, tag = 'scoped memory for tpu_custom_call.1']
  #allocation3 [shape = 'f32[1]{0:T(128)S(6)}', space=smem, size = 0x200, scoped, tag = 'scoped memory for tpu_custom_call.1']
  %s0 = inlined_call_operand.hbm [shape: f32[2,16,128], index: 0, kind: input, shape index: {}]
  %s1 = inlined_call_operand.hbm [shape: f32[128,128], index: 1, kind: input, shape index: {}]
  %s2 = inlined_call_operand.hbm [shape: f32[1,128], index: 2, kind: input, shape index: {}]
  %s3 = inlined_call_operand.<no memory space> [shape: f32[1], index: 3, kind: input, shape index: {}]
  %s4 = inlined_call_operand.hbm [shape: f32[7,128,512], index: 4, kind: input, shape index: {}]
  %s5 = inlined_call_operand.hbm [shape: f32[1,512], index: 5, kind: input, shape index: {}]
  %s6 = inlined_call_operand.vmem [shape: f32[32,8], index: 6, kind: input, shape index: {}]
  %s7 = inlined_call_operand.hbm [shape: f32[1,8], index: 7, kind: input, shape index: {}]
  %s8 = inlined_call_operand.hbm [shape: f32[8,32], index: 8, kind: input, shape index: {}]
  %s9 = inlined_call_operand.hbm [shape: f32[1,32], index: 9, kind: input, shape index: {}]
  %s10 = inlined_call_operand.hbm [shape: f32[7,32,512], index: 10, kind: input, shape index: {}]
  %s11 = inlined_call_operand.<no memory space> [shape: f32[1], index: 11, kind: input, shape index: {}]
  %s12 = inlined_call_operand.hbm [shape: f32[2,16,512], index: 12, kind: output, shape index: {}]
  %s13 = sld [smem:[#allocation0]]
  $region94: #{tpu_custom_call.1} parent=0
    _
  %s15 = ssub.s32 1, %s13
  %s16 = scalar_select 0, %s15, %s13
  %17 = sst [smem:[#allocation2]] %s3
  %18 = sst [smem:[#allocation3]] %s11
  $region1: #{tpu_custom_call.1} parent=0
    #allocation4 [shape = 'u8[16384]{0}', space=vmem, size = 0x4000, scoped, tag = 'input window, operand 0, single buffered']
    #allocation5 [shape = 's32[1]{0}', space=sflag, size = 0x4, scoped, tag = 'scoped memory for tpu_custom_call.1']
    #allocation6 [shape = 's32[1]{0}', space=sflag, size = 0x4, scoped, tag = 'scoped memory for tpu_custom_call.1']
    #allocation7 [shape = 'u8[65536]{0}', space=vmem, size = 0x10000, scoped, tag = 'input window, operand 1, single buffered']
    #allocation8 [shape = 's32[1]{0}', space=sflag, size = 0x4, scoped, tag = 'scoped memory for tpu_custom_call.1']
    #allocation9 [shape = 'u8[512]{0}', space=vmem, size = 0x400, scoped, tag = 'input window, operand 2, single buffered']
    #allocation10 [shape = 'u8[1835008]{0}', space=vmem, size = 0x1c0000, scoped, tag = 'input window, operand 4, single buffered']
    #allocation11 [shape = 's32[1]{0}', space=sflag, size = 0x4, scoped, tag = 'scoped memory for tpu_custom_call.1']
    #allocation12 [shape = 'u8[2048]{0}', space=vmem, size = 0x800, scoped, tag = 'input window, operand 5, single buffered']
    #allocation13 [shape = 'u8[512]{0}', space=vmem, size = 0x400, scoped, tag = 'input window, operand 7, single buffered']
    #allocation14 [shape = 's32[1]{0}', space=sflag, size = 0x4, scoped, tag = 'scoped memory for tpu_custom_call.1']
    #allocation15 [shape = 'u8[4096]{0}', space=vmem, size = 0x1000, scoped, tag = 'input window, operand 8, single buffered']
    #allocation16 [shape = 'u8[512]{0}', space=vmem, size = 0x400, scoped, tag = 'input window, operand 9, single buffered']
    #allocation17 [shape = 's32[1]{0}', space=sflag, size = 0x4, scoped, tag = 'scoped memory for tpu_custom_call.1']
    #allocation18 [shape = 'u8[458752]{0}', space=vmem, size = 0x70000, scoped, tag = 'input window, operand 10, single buffered']
    #allocation19 [shape = 'u8[65536]{0}', space=vmem, size = 0x10000, scoped, tag = 'output window, operand 0, single buffered']
    %19 = vsyncpa [#allocation5], 0
    %20 = vsyncpa [#allocation8], 0
    %21 = vsyncpa [#allocation11], 0
    %22 = vsyncpa [#allocation14], 0
    %23 = vsyncpa [#allocation17], 0
    %24 = vsyncpa [#allocation6], 0
    // Predicated region
    $region2: #{tpu_custom_call.1} parent=1 // pred_check
      _
    $region3: #{tpu_custom_call.1} parent=1 // pred_check_branch
      %26 = sbr.rel (0) target = $region5
    $region4: #{tpu_custom_call.1} parent=1 // pred_region
      %s28 = ssub.s32 512, 512
      %29 = vsyncadd [#allocation5], %s28
      %s30 = sshll.u32 [#allocation4], 4
      %s31 = int_to_ptr.vmem [resolvable:$true] %s30
      %36 = dma.hbm_to_vmem [thread:$0]  %s0, 512, %s31, [#allocation5], 128, 128, 8
    $region5: #{tpu_custom_call.1} parent=1 // pred_fallthru
      _
    // Predicated region
    $region6: #{tpu_custom_call.1} parent=1 // pred_check
      _
    $region7: #{tpu_custom_call.1} parent=1 // pred_check_branch
      %38 = sbr.rel (0) target = $region9
    $region8: #{tpu_custom_call.1} parent=1 // pred_region
      %s40 = ssub.s32 2048, 2048
      %41 = vsyncadd [#allocation8], %s40
      %s42 = sshll.u32 [#allocation7], 4
      %s43 = int_to_ptr.vmem [resolvable:$true] %s42
      %48 = dma.hbm_to_vmem [thread:$0]  %s1, 2048, %s43, [#allocation8], 128, 128, 8
    $region9: #{tpu_custom_call.1} parent=1 // pred_fallthru
      _
    // Predicated region
    $region10: #{tpu_custom_call.1} parent=1 // pred_check
      _
    $region11: #{tpu_custom_call.1} parent=1 // pred_check_branch
      %50 = sbr.rel (0) target = $region13
    $region12: #{tpu_custom_call.1} parent=1 // pred_region
      %s52 = ssub.s32 16, 16
      %53 = vsyncadd [#allocation8], %s52
      %s55 = sshll.u32 [#allocation9], 4
      %s56 = int_to_ptr.vmem [resolvable:$true] %s55
      %58 = dma.hbm_to_vmem [thread:$0]  %s2, 16, %s56, [#allocation8]
    $region13: #{tpu_custom_call.1} parent=1 // pred_fallthru
      _
    // Predicated region
    $region14: #{tpu_custom_call.1} parent=1 // pred_check
      _
    $region15: #{tpu_custom_call.1} parent=1 // pred_check_branch
      %60 = sbr.rel (0) target = $region17
    $region16: #{tpu_custom_call.1} parent=1 // pred_region
      _
    $region17: #{tpu_custom_call.1} parent=1 // pred_fallthru
      _
    // Predicated region
    $region18: #{tpu_custom_call.1} parent=1 // pred_check
      _
    $region19: #{tpu_custom_call.1} parent=1 // pred_check_branch
      %62 = sbr.rel (0) target = $region21
    $region20: #{tpu_custom_call.1} parent=1 // pred_region
      %s64 = ssub.s32 57344, 57344
      %65 = vsyncadd [#allocation11], %s64
      %s66 = sshll.u32 [#allocation10], 4
      %s67 = int_to_ptr.vmem [resolvable:$true] %s66
      %72 = dma.hbm_to_vmem [thread:$0]  %s4, 57344, %s67, [#allocation11], 512, 512, 32
    $region21: #{tpu_custom_call.1} parent=1 // pred_fallthru
      _
    // Predicated region
    $region22: #{tpu_custom_call.1} parent=1 // pred_check
      _
    $region23: #{tpu_custom_call.1} parent=1 // pred_check_branch
      %74 = sbr.rel (0) target = $region25
    $region24: #{tpu_custom_call.1} parent=1 // pred_region
      %s76 = ssub.s32 64, 64
      %77 = vsyncadd [#allocation11], %s76
      %s79 = sshll.u32 [#allocation12], 4
      %s80 = int_to_ptr.vmem [resolvable:$true] %s79
      %82 = dma.hbm_to_vmem [thread:$0]  %s5, 64, %s80, [#allocation11]
    $region25: #{tpu_custom_call.1} parent=1 // pred_fallthru
      _
    // Predicated region
    $region26: #{tpu_custom_call.1} parent=1 // pred_check
      _
    $region27: #{tpu_custom_call.1} parent=1 // pred_check_branch
      %84 = sbr.rel (0) target = $region29
    $region28: #{tpu_custom_call.1} parent=1 // pred_region
      _
    $region29: #{tpu_custom_call.1} parent=1 // pred_fallthru
      _
    // Predicated region
    $region30: #{tpu_custom_call.1} parent=1 // pred_check
      _
    $region31: #{tpu_custom_call.1} parent=1 // pred_check_branch
      %86 = sbr.rel (0) target = $region33
    $region32: #{tpu_custom_call.1} parent=1 // pred_region
      %s88 = ssub.s32 16, 16
      %89 = vsyncadd [#allocation14], %s88
      %s91 = sshll.u32 [#allocation13], 4
      %s92 = int_to_ptr.vmem [resolvable:$true] %s91
      %94 = dma.hbm_to_vmem [thread:$0]  %s7, 16, %s92, [#allocation14]
    $region33: #{tpu_custom_call.1} parent=1 // pred_fallthru
      _
    // Predicated region
    $region34: #{tpu_custom_call.1} parent=1 // pred_check
      _
    $region35: #{tpu_custom_call.1} parent=1 // pred_check_branch
      %96 = sbr.rel (0) target = $region37
    $region36: #{tpu_custom_call.1} parent=1 // pred_region
      %s98 = ssub.s32 128, 128
      %99 = vsyncadd [#allocation14], %s98
      %s101 = sshll.u32 [#allocation15], 4
      %s102 = int_to_ptr.vmem [resolvable:$true] %s101
      %104 = dma.hbm_to_vmem [thread:$0]  %s8, 128, %s102, [#allocation14]
    $region37: #{tpu_custom_call.1} parent=1 // pred_fallthru
      _
    // Predicated region
    $region38: #{tpu_custom_call.1} parent=1 // pred_check
      _
    $region39: #{tpu_custom_call.1} parent=1 // pred_check_branch
      %106 = sbr.rel (0) target = $region41
    $region40: #{tpu_custom_call.1} parent=1 // pred_region
      %s108 = ssub.s32 16, 16
      %109 = vsyncadd [#allocation17], %s108
      %s111 = sshll.u32 [#allocation16], 4
      %s112 = int_to_ptr.vmem [resolvable:$true] %s111
      %114 = dma.hbm_to_vmem [thread:$0]  %s9, 16, %s112, [#allocation17]
    $region41: #{tpu_custom_call.1} parent=1 // pred_fallthru
      _
    // Predicated region
    $region42: #{tpu_custom_call.1} parent=1 // pred_check
      _
    $region43: #{tpu_custom_call.1} parent=1 // pred_check_branch
      %116 = sbr.rel (0) target = $region45
    $region44: #{tpu_custom_call.1} parent=1 // pred_region
      %s118 = ssub.s32 14336, 14336
      %119 = vsyncadd [#allocation17], %s118
      %s120 = sshll.u32 [#allocation18], 4
      %s121 = int_to_ptr.vmem [resolvable:$true] %s120
      %126 = dma.hbm_to_vmem [thread:$0]  %s10, 14336, %s121, [#allocation17], 512, 512, 32
    $region45: #{tpu_custom_call.1} parent=1 // pred_fallthru
      _
    // Predicated region
    $region46: #{tpu_custom_call.1} parent=1 // pred_check
      _
    $region47: #{tpu_custom_call.1} parent=1 // pred_check_branch
      %128 = sbr.rel (0) target = $region49
    $region48: #{tpu_custom_call.1} parent=1 // pred_region
      _
    $region49: #{tpu_custom_call.1} parent=1 // pred_fallthru
      _
    // Predicated region
    $region50: #{tpu_custom_call.1} parent=1 // pred_check
      _
    $region51: #{tpu_custom_call.1} parent=1 // pred_check_branch
      %130 = sbr.rel (0) target = $region53
    $region52: #{tpu_custom_call.1} parent=1 // pred_region
      %131 = dma.done [#allocation5], 512
    $region53: #{tpu_custom_call.1} parent=1 // pred_fallthru
      _
    // Predicated region
    $region54: #{tpu_custom_call.1} parent=1 // pred_check
      _
    $region55: #{tpu_custom_call.1} parent=1 // pred_check_branch
      %133 = sbr.rel (0) target = $region57
    $region56: #{tpu_custom_call.1} parent=1 // pred_region
      %134 = dma.done [#allocation8], 2048
    $region57: #{tpu_custom_call.1} parent=1 // pred_fallthru
      _
    // Predicated region
    $region58: #{tpu_custom_call.1} parent=1 // pred_check
      _
    $region59: #{tpu_custom_call.1} parent=1 // pred_check_branch
      %136 = sbr.rel (0) target = $region61
    $region60: #{tpu_custom_call.1} parent=1 // pred_region
      %137 = dma.done [#allocation8], 16
    $region61: #{tpu_custom_call.1} parent=1 // pred_fallthru
      _
    // Predicated region
    $region62: #{tpu_custom_call.1} parent=1 // pred_check
      _
    $region63: #{tpu_custom_call.1} parent=1 // pred_check_branch
      %139 = sbr.rel (0) target = $region65
    $region64: #{tpu_custom_call.1} parent=1 // pred_region
      %140 = dma.done [#allocation11], 57344
    $region65: #{tpu_custom_call.1} parent=1 // pred_fallthru
      _
    // Predicated region
    $region66: #{tpu_custom_call.1} parent=1 // pred_check
      _
    $region67: #{tpu_custom_call.1} parent=1 // pred_check_branch
      %142 = sbr.rel (0) target = $region69
    $region68: #{tpu_custom_call.1} parent=1 // pred_region
      %143 = dma.done [#allocation11], 64
    $region69: #{tpu_custom_call.1} parent=1 // pred_fallthru
      _
    // Predicated region
    $region70: #{tpu_custom_call.1} parent=1 // pred_check
      _
    $region71: #{tpu_custom_call.1} parent=1 // pred_check_branch
      %145 = sbr.rel (0) target = $region73
    $region72: #{tpu_custom_call.1} parent=1 // pred_region
      %146 = dma.done [#allocation14], 16
    $region73: #{tpu_custom_call.1} parent=1 // pred_fallthru
      _
    // Predicated region
    $region74: #{tpu_custom_call.1} parent=1 // pred_check
      _
    $region75: #{tpu_custom_call.1} parent=1 // pred_check_branch
      %148 = sbr.rel (0) target = $region77
    $region76: #{tpu_custom_call.1} parent=1 // pred_region
      %149 = dma.done [#allocation14], 128
    $region77: #{tpu_custom_call.1} parent=1 // pred_fallthru
      _
    // Predicated region
    $region78: #{tpu_custom_call.1} parent=1 // pred_check
      _
    $region79: #{tpu_custom_call.1} parent=1 // pred_check_branch
      %151 = sbr.rel (0) target = $region81
    $region80: #{tpu_custom_call.1} parent=1 // pred_region
      %152 = dma.done [#allocation17], 16
    $region81: #{tpu_custom_call.1} parent=1 // pred_fallthru
      _
    // Predicated region
    $region82: #{tpu_custom_call.1} parent=1 // pred_check
      _
    $region83: #{tpu_custom_call.1} parent=1 // pred_check_branch
      %154 = sbr.rel (0) target = $region85
    $region84: #{tpu_custom_call.1} parent=1 // pred_region
      %155 = dma.done [#allocation17], 14336
    $region85: #{tpu_custom_call.1} parent=1 // pred_fallthru
      _
    %v156 = vld [vmem:[#allocation4] sm:$0xff]
    %v157 = vld [vmem:[#allocation4 + $0x8] sm:$0xff]
    %v158 = vld [vmem:[#allocation4 + $0x10] sm:$0xff]
    %v159 = vld [vmem:[#allocation4 + $0x18] sm:$0xff]
    %v160 = vld [vmem:[#allocation7] sm:$0xff]
    %v161 = vld [vmem:[#allocation7 + $0x8] sm:$0xff]
    %v162 = vld [vmem:[#allocation7 + $0x10] sm:$0xff]
    %v163 = vld [vmem:[#allocation7 + $0x18] sm:$0xff]
    %v164 = vld [vmem:[#allocation7 + $0x20] sm:$0xff]
    %v165 = vld [vmem:[#allocation7 + $0x28] sm:$0xff]
    %v166 = vld [vmem:[#allocation7 + $0x30] sm:$0xff]
    %v167 = vld [vmem:[#allocation7 + $0x38] sm:$0xff]
    %v168 = vld [vmem:[#allocation7 + $0x40] sm:$0xff]
    %v169 = vld [vmem:[#allocation7 + $0x48] sm:$0xff]
    %v170 = vld [vmem:[#allocation7 + $0x50] sm:$0xff]
    %v171 = vld [vmem:[#allocation7 + $0x58] sm:$0xff]
    %v172 = vld [vmem:[#allocation7 + $0x60] sm:$0xff]
    %v173 = vld [vmem:[#allocation7 + $0x68] sm:$0xff]
    %v174 = vld [vmem:[#allocation7 + $0x70] sm:$0xff]
    %v175 = vld [vmem:[#allocation7 + $0x78] sm:$0xff]
    %v176 = vld [vmem:[#allocation9] sm:$0x1]
    %v178 = vlaneseq
    %v179 = vshrl.u32 %v178, 7
    %v180 = vsub.s32 0, %v179
    %v181 = vrot.slane %v176, %v180
    %183 = vmatprep.subr.mxu0 0.0
    %184 = vmatpush1.msra.mxu0 %v175
    %185 = vmatprep.subr.mxu0 0.0
    %186 = vmatpush1.msra.mxu0 %v174
    %187 = vmatprep.subr.mxu0 0.0
    %188 = vmatpush1.msra.mxu0 %v173
    %189 = vmatprep.subr.mxu0 0.0
    %190 = vmatpush1.msra.mxu0 %v172
    %191 = vmatprep.subr.mxu0 0.0
    %192 = vmatpush1.msra.mxu0 %v171
    %193 = vmatprep.subr.mxu0 0.0
    %194 = vmatpush1.msra.mxu0 %v170
    %195 = vmatprep.subr.mxu0 0.0
    %196 = vmatpush1.msra.mxu0 %v169
    %197 = vmatprep.subr.mxu0 0.0
    %198 = vmatpush1.msra.mxu0 %v168
    %199 = vmatprep.subr.mxu0 0.0
    %200 = vmatpush1.msra.mxu0 %v167
    %201 = vmatprep.subr.mxu0 0.0
    %202 = vmatpush1.msra.mxu0 %v166
    %203 = vmatprep.subr.mxu0 0.0
    %204 = vmatpush1.msra.mxu0 %v165
    %205 = vmatprep.subr.mxu0 0.0
    %206 = vmatpush1.msra.mxu0 %v164
    %207 = vmatprep.subr.mxu0 0.0
    %208 = vmatpush1.msra.mxu0 %v163
    %209 = vmatprep.subr.mxu0 0.0
    %210 = vmatpush1.msra.mxu0 %v162
    %211 = vmatprep.subr.mxu0 0.0
    %212 = vmatpush1.msra.mxu0 %v161
    %213 = vmatprep.subr.mxu0 0.0
    %214 = vmatpush1.msra.mxu0 %v160
    %215 = vmatprep.subr.mxu0 0.0
    %216 = vmatpush2.msra.mxu0 0.0
    %217 = vmatprep.subr.mxu0 0.0
    %218 = vmatpush2.msra.mxu0 0.0
    %219 = vmatprep.subr.mxu0 0.0
    %220 = vmatpush2.msra.mxu0 0.0
    %221 = vmatprep.subr.mxu0 0.0
    %222 = vmatpush2.msra.mxu0 0.0
    %223 = vmatprep.subr.mxu0 0.0
    %224 = vmatpush2.msra.mxu0 0.0
    %225 = vmatprep.subr.mxu0 0.0
    %226 = vmatpush2.msra.mxu0 0.0
    %227 = vmatprep.subr.mxu0 0.0
    %228 = vmatpush2.msra.mxu0 0.0
    %229 = vmatprep.subr.mxu0 0.0
    %230 = vmatpush2.msra.mxu0 0.0
    %231 = vmatprep.subr.mxu0 0.0
    %232 = vmatpush2.msra.mxu0 0.0
    %233 = vmatprep.subr.mxu0 0.0
    %234 = vmatpush2.msra.mxu0 0.0
    %235 = vmatprep.subr.mxu0 0.0
    %236 = vmatpush2.msra.mxu0 0.0
    %237 = vmatprep.subr.mxu0 0.0
    %238 = vmatpush2.msra.mxu0 0.0
    %239 = vmatprep.subr.mxu0 0.0
    %240 = vmatpush2.msra.mxu0 0.0
    %241 = vmatprep.subr.mxu0 0.0
    %242 = vmatpush2.msra.mxu0 0.0
    %243 = vmatprep.subr.mxu0 0.0
    %244 = vmatpush2.msra.mxu0 0.0
    %245 = vmatprep.subr.mxu0 0.0
    %246 = vmatpush2.msra.mxu0 0.0
    %247 = vmatprep.mubr.f32.mxu0 0.0
    %248 = vmatmul.mubr.f32.gmra.mxu0 %v156
    %v249 = vpop.f32.mrf.mxu0
    %v250 = vadd.f32 %v181, %v249
    %v251 = vpop.f32.mrf.mxu0
    %252 = vmatprep.mubr.f32.mxu0 0.0
    %253 = vmatmul.mubr.f32.gmra.mxu0 %v157
    %v254 = vpop.f32.mrf.mxu0
    %v255 = vadd.f32 %v181, %v254
    %v256 = vpop.f32.mrf.mxu0
    %257 = vmatprep.mubr.f32.mxu0 0.0
    %258 = vmatmul.mubr.f32.gmra.mxu0 %v158
    %v259 = vpop.f32.mrf.mxu0
    %v260 = vadd.f32 %v181, %v259
    %v261 = vpop.f32.mrf.mxu0
    %262 = vmatprep.mubr.f32.mxu0 0.0
    %263 = vmatmul.mubr.f32.gmra.mxu0 %v159
    %v264 = vpop.f32.mrf.mxu0
    %v265 = vadd.f32 %v181, %v264
    %v266 = vpop.f32.mrf.mxu0
    %267 = vdwg.mxu0
    %s268 = sld [smem:[#allocation2]]
    %v269 = vmax.f32 %v250, 0.0
    %v270 = vmax.f32 %v255, 0.0
    %v271 = vmax.f32 %v260, 0.0
    %v272 = vmax.f32 %v265, 0.0
    %v273 = vmin.f32 %v250, 0.0
    %v274 = vmin.f32 %v255, 0.0
    %v275 = vmin.f32 %v260, 0.0
    %v276 = vmin.f32 %v265, 0.0
    %v277 = vstv %s268
    %v278 = vmul.f32 %v277, %v273
    %v279 = vmul.f32 %v277, %v274
    %v280 = vmul.f32 %v277, %v275
    %v281 = vmul.f32 %v277, %v276
    %v282 = vadd.f32 %v269, %v278
    %v283 = vadd.f32 %v270, %v279
    %v284 = vadd.f32 %v271, %v280
    %v285 = vadd.f32 %v272, %v281
    %vm290 = vcmask 1042432
    %v291 = vrot.slane %v282, 5
    %v292 = vrot.slane %v283, 5
    %v293 = vsel %vm290, %v291, %v292
    %v294 = vrot.slane %v284, 5
    %v295 = vrot.slane %v285, 5
    %v296 = vsel %vm290, %v294, %v295
    %v303 = vsel %vm290, 0.0, %v291
    %v304 = vsel %vm290, 0.0, %v294
    %v305 = vsel %vm290, %v292, 0.0
    %v306 = vsel %vm290, %v295, 0.0
    %v307 = vld [vmem:[#allocation10] sm:$0xff]
    %v308 = vld [vmem:[#allocation10 + $0x8] sm:$0xff]
    %v309 = vld [vmem:[#allocation10 + $0x10] sm:$0xff]
    %v310 = vld [vmem:[#allocation10 + $0x18] sm:$0xff]
    %v311 = vld [vmem:[#allocation10 + $0x20] sm:$0xff]
    %v312 = vld [vmem:[#allocation10 + $0x28] sm:$0xff]
    %v313 = vld [vmem:[#allocation10 + $0x30] sm:$0xff]
    %v314 = vld [vmem:[#allocation10 + $0x38] sm:$0xff]
    %v315 = vld [vmem:[#allocation10 + $0x40] sm:$0xff]
    %v316 = vld [vmem:[#allocation10 + $0x48] sm:$0xff]
    %v317 = vld [vmem:[#allocation10 + $0x50] sm:$0xff]
    %v318 = vld [vmem:[#allocation10 + $0x58] sm:$0xff]
    %v319 = vld [vmem:[#allocation10 + $0x60] sm:$0xff]
    %v320 = vld [vmem:[#allocation10 + $0x68] sm:$0xff]
    %v321 = vld [vmem:[#allocation10 + $0x70] sm:$0xff]
    %v322 = vld [vmem:[#allocation10 + $0x78] sm:$0xff]
    %v323 = vld [vmem:[#allocation10 + $0x80] sm:$0xff]
    %v324 = vld [vmem:[#allocation10 + $0x88] sm:$0xff]
    %v325 = vld [vmem:[#allocation10 + $0x90] sm:$0xff]
    %v326 = vld [vmem:[#allocation10 + $0x98] sm:$0xff]
    %v327 = vld [vmem:[#allocation10 + $0xa0] sm:$0xff]
    %v328 = vld [vmem:[#allocation10 + $0xa8] sm:$0xff]
    %v329 = vld [vmem:[#allocation10 + $0xb0] sm:$0xff]
    %v330 = vld [vmem:[#allocation10 + $0xb8] sm:$0xff]
    %v331 = vld [vmem:[#allocation10 + $0xc0] sm:$0xff]
    %v332 = vld [vmem:[#allocation10 + $0xc8] sm:$0xff]
    %v333 = vld [vmem:[#allocation10 + $0xd0] sm:$0xff]
    %v334 = vld [vmem:[#allocation10 + $0xd8] sm:$0xff]
    %v335 = vld [vmem:[#allocation10 + $0xe0] sm:$0xff]
    %v336 = vld [vmem:[#allocation10 + $0xe8] sm:$0xff]
    %v337 = vld [vmem:[#allocation10 + $0xf0] sm:$0xff]
    %v338 = vld [vmem:[#allocation10 + $0xf8] sm:$0xff]
    %v339 = vld [vmem:[#allocation10 + $0x100] sm:$0xff]
    %v340 = vld [vmem:[#allocation10 + $0x108] sm:$0xff]
    %v341 = vld [vmem:[#allocation10 + $0x110] sm:$0xff]
    %v342 = vld [vmem:[#allocation10 + $0x118] sm:$0xff]
    %v343 = vld [vmem:[#allocation10 + $0x120] sm:$0xff]
    %v344 = vld [vmem:[#allocation10 + $0x128] sm:$0xff]
    %v345 = vld [vmem:[#allocation10 + $0x130] sm:$0xff]
    %v346 = vld [vmem:[#allocation10 + $0x138] sm:$0xff]
    %v347 = vld [vmem:[#allocation10 + $0x140] sm:$0xff]
    %v348 = vld [vmem:[#allocation10 + $0x148] sm:$0xff]
    %v349 = vld [vmem:[#allocation10 + $0x150] sm:$0xff]
    %v350 = vld [vmem:[#allocation10 + $0x158] sm:$0xff]
    %v351 = vld [vmem:[#allocation10 + $0x160] sm:$0xff]
    %v352 = vld [vmem:[#allocation10 + $0x168] sm:$0xff]
    %v353 = vld [vmem:[#allocation10 + $0x170] sm:$0xff]
    %v354 = vld [vmem:[#allocation10 + $0x178] sm:$0xff]
    %v355 = vld [vmem:[#allocation10 + $0x180] sm:$0xff]
    %v356 = vld [vmem:[#allocation10 + $0x188] sm:$0xff]
    %v357 = vld [vmem:[#allocation10 + $0x190] sm:$0xff]
    %v358 = vld [vmem:[#allocation10 + $0x198] sm:$0xff]
    %v359 = vld [vmem:[#allocation10 + $0x1a0] sm:$0xff]
    %v360 = vld [vmem:[#allocation10 + $0x1a8] sm:$0xff]
    %v361 = vld [vmem:[#allocation10 + $0x1b0] sm:$0xff]
    %v362 = vld [vmem:[#allocation10 + $0x1b8] sm:$0xff]
    %v363 = vld [vmem:[#allocation10 + $0x1c0] sm:$0xff]
    %v364 = vld [vmem:[#allocation10 + $0x1c8] sm:$0xff]
    %v365 = vld [vmem:[#allocation10 + $0x1d0] sm:$0xff]
    %v366 = vld [vmem:[#allocation10 + $0x1d8] sm:$0xff]
    %v367 = vld [vmem:[#allocation10 + $0x1e0] sm:$0xff]
    %v368 = vld [vmem:[#allocation10 + $0x1e8] sm:$0xff]
    %v369 = vld [vmem:[#allocation10 + $0x1f0] sm:$0xff]
    %v370 = vld [vmem:[#allocation10 + $0x1f8] sm:$0xff]
    %vm375 = vcmask 1046528
    %v376 = vrot.slane %v303, 1
    %v377 = vrot.slane %v293, 1
    %v378 = vsel %vm375, %v376, %v377
    %v379 = vrot.slane %v305, 1
    %v380 = vsel %vm375, %v377, %v379
    %v381 = vrot.slane %v304, 1
    %v382 = vrot.slane %v296, 1
    %v383 = vsel %vm375, %v381, %v382
    %v384 = vrot.slane %v306, 1
    %v385 = vsel %vm375, %v382, %v384
    %s390 = scalar_lea.vmem [#allocation10], 512
    %v391 = vld [vmem:[%s390] sm:$0xff]
    %v392 = vld [vmem:[%s390 + $0x8] sm:$0xff]
    %v393 = vld [vmem:[%s390 + $0x10] sm:$0xff]
    %v394 = vld [vmem:[%s390 + $0x18] sm:$0xff]
    %v395 = vld [vmem:[%s390 + $0x20] sm:$0xff]
    %v396 = vld [vmem:[%s390 + $0x28] sm:$0xff]
    %v397 = vld [vmem:[%s390 + $0x30] sm:$0xff]
    %v398 = vld [vmem:[%s390 + $0x38] sm:$0xff]
    %v399 = vld [vmem:[%s390 + $0x40] sm:$0xff]
    %v400 = vld [vmem:[%s390 + $0x48] sm:$0xff]
    %v401 = vld [vmem:[%s390 + $0x50] sm:$0xff]
    %v402 = vld [vmem:[%s390 + $0x58] sm:$0xff]
    %v403 = vld [vmem:[%s390 + $0x60] sm:$0xff]
    %v404 = vld [vmem:[%s390 + $0x68] sm:$0xff]
    %v405 = vld [vmem:[%s390 + $0x70] sm:$0xff]
    %v406 = vld [vmem:[%s390 + $0x78] sm:$0xff]
    %v407 = vld [vmem:[%s390 + $0x80] sm:$0xff]
    %v408 = vld [vmem:[%s390 + $0x88] sm:$0xff]
    %v409 = vld [vmem:[%s390 + $0x90] sm:$0xff]
    %v410 = vld [vmem:[%s390 + $0x98] sm:$0xff]
    %v411 = vld [vmem:[%s390 + $0xa0] sm:$0xff]
    %v412 = vld [vmem:[%s390 + $0xa8] sm:$0xff]
    %v413 = vld [vmem:[%s390 + $0xb0] sm:$0xff]
    %v414 = vld [vmem:[%s390 + $0xb8] sm:$0xff]
    %v415 = vld [vmem:[%s390 + $0xc0] sm:$0xff]
    %v416 = vld [vmem:[%s390 + $0xc8] sm:$0xff]
    %v417 = vld [vmem:[%s390 + $0xd0] sm:$0xff]
    %v418 = vld [vmem:[%s390 + $0xd8] sm:$0xff]
    %v419 = vld [vmem:[%s390 + $0xe0] sm:$0xff]
    %v420 = vld [vmem:[%s390 + $0xe8] sm:$0xff]
    %v421 = vld [vmem:[%s390 + $0xf0] sm:$0xff]
    %v422 = vld [vmem:[%s390 + $0xf8] sm:$0xff]
    %v423 = vld [vmem:[%s390 + $0x100] sm:$0xff]
    %v424 = vld [vmem:[%s390 + $0x108] sm:$0xff]
    %v425 = vld [vmem:[%s390 + $0x110] sm:$0xff]
    %v426 = vld [vmem:[%s390 + $0x118] sm:$0xff]
    %v427 = vld [vmem:[%s390 + $0x120] sm:$0xff]
    %v428 = vld [vmem:[%s390 + $0x128] sm:$0xff]
    %v429 = vld [vmem:[%s390 + $0x130] sm:$0xff]
    %v430 = vld [vmem:[%s390 + $0x138] sm:$0xff]
    %v431 = vld [vmem:[%s390 + $0x140] sm:$0xff]
    %v432 = vld [vmem:[%s390 + $0x148] sm:$0xff]
    %v433 = vld [vmem:[%s390 + $0x150] sm:$0xff]
    %v434 = vld [vmem:[%s390 + $0x158] sm:$0xff]
    %v435 = vld [vmem:[%s390 + $0x160] sm:$0xff]
    %v436 = vld [vmem:[%s390 + $0x168] sm:$0xff]
    %v437 = vld [vmem:[%s390 + $0x170] sm:$0xff]
    %v438 = vld [vmem:[%s390 + $0x178] sm:$0xff]
    %v439 = vld [vmem:[%s390 + $0x180] sm:$0xff]
    %v440 = vld [vmem:[%s390 + $0x188] sm:$0xff]
    %v441 = vld [vmem:[%s390 + $0x190] sm:$0xff]
    %v442 = vld [vmem:[%s390 + $0x198] sm:$0xff]
    %v443 = vld [vmem:[%s390 + $0x1a0] sm:$0xff]
    %v444 = vld [vmem:[%s390 + $0x1a8] sm:$0xff]
    %v445 = vld [vmem:[%s390 + $0x1b0] sm:$0xff]
    %v446 = vld [vmem:[%s390 + $0x1b8] sm:$0xff]
    %v447 = vld [vmem:[%s390 + $0x1c0] sm:$0xff]
    %v448 = vld [vmem:[%s390 + $0x1c8] sm:$0xff]
    %v449 = vld [vmem:[%s390 + $0x1d0] sm:$0xff]
    %v450 = vld [vmem:[%s390 + $0x1d8] sm:$0xff]
    %v451 = vld [vmem:[%s390 + $0x1e0] sm:$0xff]
    %v452 = vld [vmem:[%s390 + $0x1e8] sm:$0xff]
    %v453 = vld [vmem:[%s390 + $0x1f0] sm:$0xff]
    %v454 = vld [vmem:[%s390 + $0x1f8] sm:$0xff]
    %455 = vmatprep.subr.mxu0 %v452
    %456 = vmatpush1.msra.mxu0 %v451
    %457 = vmatprep.subr.mxu0 %v448
    %458 = vmatpush1.msra.mxu0 %v447
    %459 = vmatprep.subr.mxu0 %v444
    %460 = vmatpush1.msra.mxu0 %v443
    %461 = vmatprep.subr.mxu0 %v440
    %462 = vmatpush1.msra.mxu0 %v439
    %463 = vmatprep.subr.mxu0 %v436
    %464 = vmatpush1.msra.mxu0 %v435
    %465 = vmatprep.subr.mxu0 %v432
    %466 = vmatpush1.msra.mxu0 %v431
    %467 = vmatprep.subr.mxu0 %v428
    %468 = vmatpush1.msra.mxu0 %v427
    %469 = vmatprep.subr.mxu0 %v424
    %470 = vmatpush1.msra.mxu0 %v423
    %471 = vmatprep.subr.mxu0 %v420
    %472 = vmatpush1.msra.mxu0 %v419
    %473 = vmatprep.subr.mxu0 %v416
    %474 = vmatpush1.msra.mxu0 %v415
    %475 = vmatprep.subr.mxu0 %v412
    %476 = vmatpush1.msra.mxu0 %v411
    %477 = vmatprep.subr.mxu0 %v408
    %478 = vmatpush1.msra.mxu0 %v407
    %479 = vmatprep.subr.mxu0 %v404
    %480 = vmatpush1.msra.mxu0 %v403
    %481 = vmatprep.subr.mxu0 %v400
    %482 = vmatpush1.msra.mxu0 %v399
    %483 = vmatprep.subr.mxu0 %v396
    %484 = vmatpush1.msra.mxu0 %v395
    %485 = vmatprep.subr.mxu0 %v392
    %486 = vmatpush1.msra.mxu0 %v391
    %487 = vmatprep.subr.mxu0 0.0
    %488 = vmatpush2.msra.mxu0 0.0
    %489 = vmatprep.subr.mxu0 0.0
    %490 = vmatpush2.msra.mxu0 0.0
    %491 = vmatprep.subr.mxu0 0.0
    %492 = vmatpush2.msra.mxu0 0.0
    %493 = vmatprep.subr.mxu0 0.0
    %494 = vmatpush2.msra.mxu0 0.0
    %495 = vmatprep.subr.mxu0 0.0
    %496 = vmatpush2.msra.mxu0 0.0
    %497 = vmatprep.subr.mxu0 0.0
    %498 = vmatpush2.msra.mxu0 0.0
    %499 = vmatprep.subr.mxu0 0.0
    %500 = vmatpush2.msra.mxu0 0.0
    %501 = vmatprep.subr.mxu0 0.0
    %502 = vmatpush2.msra.mxu0 0.0
    %503 = vmatprep.subr.mxu0 0.0
    %504 = vmatpush2.msra.mxu0 0.0
    %505 = vmatprep.subr.mxu0 0.0
    %506 = vmatpush2.msra.mxu0 0.0
    %507 = vmatprep.subr.mxu0 0.0
    %508 = vmatpush2.msra.mxu0 0.0
    %509 = vmatprep.subr.mxu0 0.0
    %510 = vmatpush2.msra.mxu0 0.0
    %511 = vmatprep.subr.mxu0 0.0
    %512 = vmatpush2.msra.mxu0 0.0
    %513 = vmatprep.subr.mxu0 0.0
    %514 = vmatpush2.msra.mxu0 0.0
    %515 = vmatprep.subr.mxu0 0.0
    %516 = vmatpush2.msra.mxu0 0.0
    %517 = vmatprep.subr.mxu0 0.0
    %518 = vmatpush2.msra.mxu0 0.0
    %519 = vmatprep.mubr.f32.mxu0 0.0
    %520 = vmatmul.mubr.f32.gmra.mxu0 %v378
    %v521 = vpop.f32.mrf.mxu0
    %v522 = vadd.f32 0.0, %v521
    %v523 = vpop.f32.mrf.mxu0
    %v524 = vadd.f32 0.0, %v523
    %525 = vmatprep.mubr.f32.mxu0 0.0
    %526 = vmatmul.mubr.f32.gmra.mxu0 %v380
    %v527 = vpop.f32.mrf.mxu0
    %v528 = vadd.f32 0.0, %v527
    %v529 = vpop.f32.mrf.mxu0
    %v530 = vadd.f32 0.0, %v529
    %531 = vmatprep.mubr.f32.mxu0 0.0
    %532 = vmatmul.mubr.f32.gmra.mxu0 %v383
    %v533 = vpop.f32.mrf.mxu0
    %v534 = vadd.f32 0.0, %v533
    %v535 = vpop.f32.mrf.mxu0
    %v536 = vadd.f32 0.0, %v535
    %537 = vmatprep.mubr.f32.mxu0 0.0
    %538 = vmatmul.mubr.f32.gmra.mxu0 %v385
    %v539 = vpop.f32.mrf.mxu0
    %v540 = vadd.f32 0.0, %v539
    %v541 = vpop.f32.mrf.mxu0
    %v542 = vadd.f32 0.0, %v541
    %543 = vdwg.mxu0
    %544 = vmatprep.subr.mxu0 %v454
    %545 = vmatpush1.msra.mxu0 %v453
    %546 = vmatprep.subr.mxu0 %v450
    %547 = vmatpush1.msra.mxu0 %v449
    %548 = vmatprep.subr.mxu0 %v446
    %549 = vmatpush1.msra.mxu0 %v445
    %550 = vmatprep.subr.mxu0 %v442
    %551 = vmatpush1.msra.mxu0 %v441
    %552 = vmatprep.subr.mxu0 %v438
    %553 = vmatpush1.msra.mxu0 %v437
    %554 = vmatprep.subr.mxu0 %v434
    %555 = vmatpush1.msra.mxu0 %v433
    %556 = vmatprep.subr.mxu0 %v430
    %557 = vmatpush1.msra.mxu0 %v429
    %558 = vmatprep.subr.mxu0 %v426
    %559 = vmatpush1.msra.mxu0 %v425
    %560 = vmatprep.subr.mxu0 %v422
    %561 = vmatpush1.msra.mxu0 %v421
    %562 = vmatprep.subr.mxu0 %v418
    %563 = vmatpush1.msra.mxu0 %v417
    %564 = vmatprep.subr.mxu0 %v414
    %565 = vmatpush1.msra.mxu0 %v413
    %566 = vmatprep.subr.mxu0 %v410
    %567 = vmatpush1.msra.mxu0 %v409
    %568 = vmatprep.subr.mxu0 %v406
    %569 = vmatpush1.msra.mxu0 %v405
    %570 = vmatprep.subr.mxu0 %v402
    %571 = vmatpush1.msra.mxu0 %v401
    %572 = vmatprep.subr.mxu0 %v398
    %573 = vmatpush1.msra.mxu0 %v397
    %574 = vmatprep.subr.mxu0 %v394
    %575 = vmatpush1.msra.mxu0 %v393
    %576 = vmatprep.subr.mxu0 0.0
    %577 = vmatpush2.msra.mxu0 0.0
    %578 = vmatprep.subr.mxu0 0.0
    %579 = vmatpush2.msra.mxu0 0.0
    %580 = vmatprep.subr.mxu0 0.0
    %581 = vmatpush2.msra.mxu0 0.0
    %582 = vmatprep.subr.mxu0 0.0
    %583 = vmatpush2.msra.mxu0 0.0
    %584 = vmatprep.subr.mxu0 0.0
    %585 = vmatpush2.msra.mxu0 0.0
    %586 = vmatprep.subr.mxu0 0.0
    %587 = vmatpush2.msra.mxu0 0.0
    %588 = vmatprep.subr.mxu0 0.0
    %589 = vmatpush2.msra.mxu0 0.0
    %590 = vmatprep.subr.mxu0 0.0
    %591 = vmatpush2.msra.mxu0 0.0
    %592 = vmatprep.subr.mxu0 0.0
    %593 = vmatpush2.msra.mxu0 0.0
    %594 = vmatprep.subr.mxu0 0.0
    %595 = vmatpush2.msra.mxu0 0.0
    %596 = vmatprep.subr.mxu0 0.0
    %597 = vmatpush2.msra.mxu0 0.0
    %598 = vmatprep.subr.mxu0 0.0
    %599 = vmatpush2.msra.mxu0 0.0
    %600 = vmatprep.subr.mxu0 0.0
    %601 = vmatpush2.msra.mxu0 0.0
    %602 = vmatprep.subr.mxu0 0.0
    %603 = vmatpush2.msra.mxu0 0.0
    %604 = vmatprep.subr.mxu0 0.0
    %605 = vmatpush2.msra.mxu0 0.0
    %606 = vmatprep.subr.mxu0 0.0
    %607 = vmatpush2.msra.mxu0 0.0
    %608 = vmatprep.mubr.f32.mxu0 0.0
    %609 = vmatmul.mubr.f32.gmra.mxu0 %v378
    %v610 = vpop.f32.mrf.mxu0
    %v611 = vadd.f32 0.0, %v610
    %v612 = vpop.f32.mrf.mxu0
    %v613 = vadd.f32 0.0, %v612
    %614 = vmatprep.mubr.f32.mxu0 0.0
    %615 = vmatmul.mubr.f32.gmra.mxu0 %v380
    %v616 = vpop.f32.mrf.mxu0
    %v617 = vadd.f32 0.0, %v616
    %v618 = vpop.f32.mrf.mxu0
    %v619 = vadd.f32 0.0, %v618
    %620 = vmatprep.mubr.f32.mxu0 0.0
    %621 = vmatmul.mubr.f32.gmra.mxu0 %v383
    %v622 = vpop.f32.mrf.mxu0
    %v623 = vadd.f32 0.0, %v622
    %v624 = vpop.f32.mrf.mxu0
    %v625 = vadd.f32 0.0, %v624
    %626 = vmatprep.mubr.f32.mxu0 0.0
    %627 = vmatmul.mubr.f32.gmra.mxu0 %v385
    %v628 = vpop.f32.mrf.mxu0
    %v629 = vadd.f32 0.0, %v628
    %v630 = vpop.f32.mrf.mxu0
    %v631 = vadd.f32 0.0, %v630
    %632 = vdwg.mxu0
    %633 = vmatprep.subr.mxu0 %v368
    %634 = vmatpush1.msra.mxu0 %v367
    %635 = vmatprep.subr.mxu0 %v364
    %636 = vmatpush1.msra.mxu0 %v363
    %637 = vmatprep.subr.mxu0 %v360
    %638 = vmatpush1.msra.mxu0 %v359
    %639 = vmatprep.subr.mxu0 %v356
    %640 = vmatpush1.msra.mxu0 %v355
    %641 = vmatprep.subr.mxu0 %v352
    %642 = vmatpush1.msra.mxu0 %v351
    %643 = vmatprep.subr.mxu0 %v348
    %644 = vmatpush1.msra.mxu0 %v347
    %645 = vmatprep.subr.mxu0 %v344
    %646 = vmatpush1.msra.mxu0 %v343
    %647 = vmatprep.subr.mxu0 %v340
    %648 = vmatpush1.msra.mxu0 %v339
    %649 = vmatprep.subr.mxu0 %v336
    %650 = vmatpush1.msra.mxu0 %v335
    %651 = vmatprep.subr.mxu0 %v332
    %652 = vmatpush1.msra.mxu0 %v331
    %653 = vmatprep.subr.mxu0 %v328
    %654 = vmatpush1.msra.mxu0 %v327
    %655 = vmatprep.subr.mxu0 %v324
    %656 = vmatpush1.msra.mxu0 %v323
    %657 = vmatprep.subr.mxu0 %v320
    %658 = vmatpush1.msra.mxu0 %v319
    %659 = vmatprep.subr.mxu0 %v316
    %660 = vmatpush1.msra.mxu0 %v315
    %661 = vmatprep.subr.mxu0 %v312
    %662 = vmatpush1.msra.mxu0 %v311
    %663 = vmatprep.subr.mxu0 %v308
    %664 = vmatpush1.msra.mxu0 %v307
    %665 = vmatprep.subr.mxu0 0.0
    %666 = vmatpush2.msra.mxu0 0.0
    %667 = vmatprep.subr.mxu0 0.0
    %668 = vmatpush2.msra.mxu0 0.0
    %669 = vmatprep.subr.mxu0 0.0
    %670 = vmatpush2.msra.mxu0 0.0
    %671 = vmatprep.subr.mxu0 0.0
    %672 = vmatpush2.msra.mxu0 0.0
    %673 = vmatprep.subr.mxu0 0.0
    %674 = vmatpush2.msra.mxu0 0.0
    %675 = vmatprep.subr.mxu0 0.0
    %676 = vmatpush2.msra.mxu0 0.0
    %677 = vmatprep.subr.mxu0 0.0
    %678 = vmatpush2.msra.mxu0 0.0
    %679 = vmatprep.subr.mxu0 0.0
    %680 = vmatpush2.msra.mxu0 0.0
    %681 = vmatprep.subr.mxu0 0.0
    %682 = vmatpush2.msra.mxu0 0.0
    %683 = vmatprep.subr.mxu0 0.0
    %684 = vmatpush2.msra.mxu0 0.0
    %685 = vmatprep.subr.mxu0 0.0
    %686 = vmatpush2.msra.mxu0 0.0
    %687 = vmatprep.subr.mxu0 0.0
    %688 = vmatpush2.msra.mxu0 0.0
    %689 = vmatprep.subr.mxu0 0.0
    %690 = vmatpush2.msra.mxu0 0.0
    %691 = vmatprep.subr.mxu0 0.0
    %692 = vmatpush2.msra.mxu0 0.0
    %693 = vmatprep.subr.mxu0 0.0
    %694 = vmatpush2.msra.mxu0 0.0
    %695 = vmatprep.subr.mxu0 0.0
    %696 = vmatpush2.msra.mxu0 0.0
    %697 = vmatprep.mubr.f32.mxu0 0.0
    %698 = vmatmul.mubr.f32.gmra.mxu0 %v303
    %v699 = vpop.f32.mrf.mxu0
    %v700 = vadd.f32 %v522, %v699
    %v701 = vpop.f32.mrf.mxu0
    %v702 = vadd.f32 %v524, %v701
    %703 = vmatprep.mubr.f32.mxu0 0.0
    %704 = vmatmul.mubr.f32.gmra.mxu0 %v293
    %v705 = vpop.f32.mrf.mxu0
    %v706 = vadd.f32 %v528, %v705
    %v707 = vpop.f32.mrf.mxu0
    %v708 = vadd.f32 %v530, %v707
    %709 = vmatprep.mubr.f32.mxu0 0.0
    %710 = vmatmul.mubr.f32.gmra.mxu0 %v304
    %v711 = vpop.f32.mrf.mxu0
    %v712 = vadd.f32 %v534, %v711
    %v713 = vpop.f32.mrf.mxu0
    %v714 = vadd.f32 %v536, %v713
    %715 = vmatprep.mubr.f32.mxu0 0.0
    %716 = vmatmul.mubr.f32.gmra.mxu0 %v296
    %v717 = vpop.f32.mrf.mxu0
    %v718 = vadd.f32 %v540, %v717
    %v719 = vpop.f32.mrf.mxu0
    %v720 = vadd.f32 %v542, %v719
    %721 = vdwg.mxu0
    %722 = vmatprep.subr.mxu0 %v370
    %723 = vmatpush1.msra.mxu0 %v369
    %724 = vmatprep.subr.mxu0 %v366
    %725 = vmatpush1.msra.mxu0 %v365
    %726 = vmatprep.subr.mxu0 %v362
    %727 = vmatpush1.msra.mxu0 %v361
    %728 = vmatprep.subr.mxu0 %v358
    %729 = vmatpush1.msra.mxu0 %v357
    %730 = vmatprep.subr.mxu0 %v354
    %731 = vmatpush1.msra.mxu0 %v353
    %732 = vmatprep.subr.mxu0 %v350
    %733 = vmatpush1.msra.mxu0 %v349
    %734 = vmatprep.subr.mxu0 %v346
    %735 = vmatpush1.msra.mxu0 %v345
    %736 = vmatprep.subr.mxu0 %v342
    %737 = vmatpush1.msra.mxu0 %v341
    %738 = vmatprep.subr.mxu0 %v338
    %739 = vmatpush1.msra.mxu0 %v337
    %740 = vmatprep.subr.mxu0 %v334
    %741 = vmatpush1.msra.mxu0 %v333
    %742 = vmatprep.subr.mxu0 %v330
    %743 = vmatpush1.msra.mxu0 %v329
    %744 = vmatprep.subr.mxu0 %v326
    %745 = vmatpush1.msra.mxu0 %v325
    %746 = vmatprep.subr.mxu0 %v322
    %747 = vmatpush1.msra.mxu0 %v321
    %748 = vmatprep.subr.mxu0 %v318
    %749 = vmatpush1.msra.mxu0 %v317
    %750 = vmatprep.subr.mxu0 %v314
    %751 = vmatpush1.msra.mxu0 %v313
    %752 = vmatprep.subr.mxu0 %v310
    %753 = vmatpush1.msra.mxu0 %v309
    %754 = vmatprep.subr.mxu0 0.0
    %755 = vmatpush2.msra.mxu0 0.0
    %756 = vmatprep.subr.mxu0 0.0
    %757 = vmatpush2.msra.mxu0 0.0
    %758 = vmatprep.subr.mxu0 0.0
    %759 = vmatpush2.msra.mxu0 0.0
    %760 = vmatprep.subr.mxu0 0.0
    %761 = vmatpush2.msra.mxu0 0.0
    %762 = vmatprep.subr.mxu0 0.0
    %763 = vmatpush2.msra.mxu0 0.0
    %764 = vmatprep.subr.mxu0 0.0
    %765 = vmatpush2.msra.mxu0 0.0
    %766 = vmatprep.subr.mxu0 0.0
    %767 = vmatpush2.msra.mxu0 0.0
    %768 = vmatprep.subr.mxu0 0.0
    %769 = vmatpush2.msra.mxu0 0.0
    %770 = vmatprep.subr.mxu0 0.0
    %771 = vmatpush2.msra.mxu0 0.0
    %772 = vmatprep.subr.mxu0 0.0
    %773 = vmatpush2.msra.mxu0 0.0
    %774 = vmatprep.subr.mxu0 0.0
    %775 = vmatpush2.msra.mxu0 0.0
    %776 = vmatprep.subr.mxu0 0.0
    %777 = vmatpush2.msra.mxu0 0.0
    %778 = vmatprep.subr.mxu0 0.0
    %779 = vmatpush2.msra.mxu0 0.0
    %780 = vmatprep.subr.mxu0 0.0
    %781 = vmatpush2.msra.mxu0 0.0
    %782 = vmatprep.subr.mxu0 0.0
    %783 = vmatpush2.msra.mxu0 0.0
    %784 = vmatprep.subr.mxu0 0.0
    %785 = vmatpush2.msra.mxu0 0.0
    %786 = vmatprep.mubr.f32.mxu0 0.0
    %787 = vmatmul.mubr.f32.gmra.mxu0 %v303
    %v788 = vpop.f32.mrf.mxu0
    %v789 = vadd.f32 %v611, %v788
    %v790 = vpop.f32.mrf.mxu0
    %v791 = vadd.f32 %v613, %v790
    %792 = vmatprep.mubr.f32.mxu0 0.0
    %793 = vmatmul.mubr.f32.gmra.mxu0 %v293
    %v794 = vpop.f32.mrf.mxu0
    %v795 = vadd.f32 %v617, %v794
    %v796 = vpop.f32.mrf.mxu0
    %v797 = vadd.f32 %v619, %v796
    %798 = vmatprep.mubr.f32.mxu0 0.0
    %799 = vmatmul.mubr.f32.gmra.mxu0 %v304
    %v800 = vpop.f32.mrf.mxu0
    %v801 = vadd.f32 %v623, %v800
    %v802 = vpop.f32.mrf.mxu0
    %v803 = vadd.f32 %v625, %v802
    %804 = vmatprep.mubr.f32.mxu0 0.0
    %805 = vmatmul.mubr.f32.gmra.mxu0 %v296
    %v806 = vpop.f32.mrf.mxu0
    %v807 = vadd.f32 %v629, %v806
    %v808 = vpop.f32.mrf.mxu0
    %v809 = vadd.f32 %v631, %v808
    %810 = vdwg.mxu0
    %vm811 = vcmask 1045504
    %v812 = vrot.slane %v303, 2
    %v813 = vrot.slane %v293, 2
    %v814 = vsel %vm811, %v812, %v813
    %v815 = vrot.slane %v305, 2
    %v816 = vsel %vm811, %v813, %v815
    %v817 = vrot.slane %v304, 2
    %v818 = vrot.slane %v296, 2
    %v819 = vsel %vm811, %v817, %v818
    %v820 = vrot.slane %v306, 2
    %v821 = vsel %vm811, %v818, %v820
    %s826 = scalar_lea.vmem [#allocation10], 1024
    %v827 = vld [vmem:[%s826] sm:$0xff]
    %v828 = vld [vmem:[%s826 + $0x8] sm:$0xff]
    %v829 = vld [vmem:[%s826 + $0x10] sm:$0xff]
    %v830 = vld [vmem:[%s826 + $0x18] sm:$0xff]
    %v831 = vld [vmem:[%s826 + $0x20] sm:$0xff]
    %v832 = vld [vmem:[%s826 + $0x28] sm:$0xff]
    %v833 = vld [vmem:[%s826 + $0x30] sm:$0xff]
    %v834 = vld [vmem:[%s826 + $0x38] sm:$0xff]
    %v835 = vld [vmem:[%s826 + $0x40] sm:$0xff]
    %v836 = vld [vmem:[%s826 + $0x48] sm:$0xff]
    %v837 = vld [vmem:[%s826 + $0x50] sm:$0xff]
    %v838 = vld [vmem:[%s826 + $0x58] sm:$0xff]
    %v839 = vld [vmem:[%s826 + $0x60] sm:$0xff]
    %v840 = vld [vmem:[%s826 + $0x68] sm:$0xff]
    %v841 = vld [vmem:[%s826 + $0x70] sm:$0xff]
    %v842 = vld [vmem:[%s826 + $0x78] sm:$0xff]
    %v843 = vld [vmem:[%s826 + $0x80] sm:$0xff]
    %v844 = vld [vmem:[%s826 + $0x88] sm:$0xff]
    %v845 = vld [vmem:[%s826 + $0x90] sm:$0xff]
    %v846 = vld [vmem:[%s826 + $0x98] sm:$0xff]
    %v847 = vld [vmem:[%s826 + $0xa0] sm:$0xff]
    %v848 = vld [vmem:[%s826 + $0xa8] sm:$0xff]
    %v849 = vld [vmem:[%s826 + $0xb0] sm:$0xff]
    %v850 = vld [vmem:[%s826 + $0xb8] sm:$0xff]
    %v851 = vld [vmem:[%s826 + $0xc0] sm:$0xff]
    %v852 = vld [vmem:[%s826 + $0xc8] sm:$0xff]
    %v853 = vld [vmem:[%s826 + $0xd0] sm:$0xff]
    %v854 = vld [vmem:[%s826 + $0xd8] sm:$0xff]
    %v855 = vld [vmem:[%s826 + $0xe0] sm:$0xff]
    %v856 = vld [vmem:[%s826 + $0xe8] sm:$0xff]
    %v857 = vld [vmem:[%s826 + $0xf0] sm:$0xff]
    %v858 = vld [vmem:[%s826 + $0xf8] sm:$0xff]
    %v859 = vld [vmem:[%s826 + $0x100] sm:$0xff]
    %v860 = vld [vmem:[%s826 + $0x108] sm:$0xff]
    %v861 = vld [vmem:[%s826 + $0x110] sm:$0xff]
    %v862 = vld [vmem:[%s826 + $0x118] sm:$0xff]
    %v863 = vld [vmem:[%s826 + $0x120] sm:$0xff]
    %v864 = vld [vmem:[%s826 + $0x128] sm:$0xff]
    %v865 = vld [vmem:[%s826 + $0x130] sm:$0xff]
    %v866 = vld [vmem:[%s826 + $0x138] sm:$0xff]
    %v867 = vld [vmem:[%s826 + $0x140] sm:$0xff]
    %v868 = vld [vmem:[%s826 + $0x148] sm:$0xff]
    %v869 = vld [vmem:[%s826 + $0x150] sm:$0xff]
    %v870 = vld [vmem:[%s826 + $0x158] sm:$0xff]
    %v871 = vld [vmem:[%s826 + $0x160] sm:$0xff]
    %v872 = vld [vmem:[%s826 + $0x168] sm:$0xff]
    %v873 = vld [vmem:[%s826 + $0x170] sm:$0xff]
    %v874 = vld [vmem:[%s826 + $0x178] sm:$0xff]
    %v875 = vld [vmem:[%s826 + $0x180] sm:$0xff]
    %v876 = vld [vmem:[%s826 + $0x188] sm:$0xff]
    %v877 = vld [vmem:[%s826 + $0x190] sm:$0xff]
    %v878 = vld [vmem:[%s826 + $0x198] sm:$0xff]
    %v879 = vld [vmem:[%s826 + $0x1a0] sm:$0xff]
    %v880 = vld [vmem:[%s826 + $0x1a8] sm:$0xff]
    %v881 = vld [vmem:[%s826 + $0x1b0] sm:$0xff]
    %v882 = vld [vmem:[%s826 + $0x1b8] sm:$0xff]
    %v883 = vld [vmem:[%s826 + $0x1c0] sm:$0xff]
    %v884 = vld [vmem:[%s826 + $0x1c8] sm:$0xff]
    %v885 = vld [vmem:[%s826 + $0x1d0] sm:$0xff]
    %v886 = vld [vmem:[%s826 + $0x1d8] sm:$0xff]
    %v887 = vld [vmem:[%s826 + $0x1e0] sm:$0xff]
    %v888 = vld [vmem:[%s826 + $0x1e8] sm:$0xff]
    %v889 = vld [vmem:[%s826 + $0x1f0] sm:$0xff]
    %v890 = vld [vmem:[%s826 + $0x1f8] sm:$0xff]
    %891 = vmatprep.subr.mxu0 %v888
    %892 = vmatpush1.msra.mxu0 %v887
    %893 = vmatprep.subr.mxu0 %v884
    %894 = vmatpush1.msra.mxu0 %v883
    %895 = vmatprep.subr.mxu0 %v880
    %896 = vmatpush1.msra.mxu0 %v879
    %897 = vmatprep.subr.mxu0 %v876
    %898 = vmatpush1.msra.mxu0 %v875
    %899 = vmatprep.subr.mxu0 %v872
    %900 = vmatpush1.msra.mxu0 %v871
    %901 = vmatprep.subr.mxu0 %v868
    %902 = vmatpush1.msra.mxu0 %v867
    %903 = vmatprep.subr.mxu0 %v864
    %904 = vmatpush1.msra.mxu0 %v863
    %905 = vmatprep.subr.mxu0 %v860
    %906 = vmatpush1.msra.mxu0 %v859
    %907 = vmatprep.subr.mxu0 %v856
    %908 = vmatpush1.msra.mxu0 %v855
    %909 = vmatprep.subr.mxu0 %v852
    %910 = vmatpush1.msra.mxu0 %v851
    %911 = vmatprep.subr.mxu0 %v848
    %912 = vmatpush1.msra.mxu0 %v847
    %913 = vmatprep.subr.mxu0 %v844
    %914 = vmatpush1.msra.mxu0 %v843
    %915 = vmatprep.subr.mxu0 %v840
    %916 = vmatpush1.msra.mxu0 %v839
    %917 = vmatprep.subr.mxu0 %v836
    %918 = vmatpush1.msra.mxu0 %v835
    %919 = vmatprep.subr.mxu0 %v832
    %920 = vmatpush1.msra.mxu0 %v831
    %921 = vmatprep.subr.mxu0 %v828
    %922 = vmatpush1.msra.mxu0 %v827
    %923 = vmatprep.subr.mxu0 0.0
    %924 = vmatpush2.msra.mxu0 0.0
    %925 = vmatprep.subr.mxu0 0.0
    %926 = vmatpush2.msra.mxu0 0.0
    %927 = vmatprep.subr.mxu0 0.0
    %928 = vmatpush2.msra.mxu0 0.0
    %929 = vmatprep.subr.mxu0 0.0
    %930 = vmatpush2.msra.mxu0 0.0
    %931 = vmatprep.subr.mxu0 0.0
    %932 = vmatpush2.msra.mxu0 0.0
    %933 = vmatprep.subr.mxu0 0.0
    %934 = vmatpush2.msra.mxu0 0.0
    %935 = vmatprep.subr.mxu0 0.0
    %936 = vmatpush2.msra.mxu0 0.0
    %937 = vmatprep.subr.mxu0 0.0
    %938 = vmatpush2.msra.mxu0 0.0
    %939 = vmatprep.subr.mxu0 0.0
    %940 = vmatpush2.msra.mxu0 0.0
    %941 = vmatprep.subr.mxu0 0.0
    %942 = vmatpush2.msra.mxu0 0.0
    %943 = vmatprep.subr.mxu0 0.0
    %944 = vmatpush2.msra.mxu0 0.0
    %945 = vmatprep.subr.mxu0 0.0
    %946 = vmatpush2.msra.mxu0 0.0
    %947 = vmatprep.subr.mxu0 0.0
    %948 = vmatpush2.msra.mxu0 0.0
    %949 = vmatprep.subr.mxu0 0.0
    %950 = vmatpush2.msra.mxu0 0.0
    %951 = vmatprep.subr.mxu0 0.0
    %952 = vmatpush2.msra.mxu0 0.0
    %953 = vmatprep.subr.mxu0 0.0
    %954 = vmatpush2.msra.mxu0 0.0
    %955 = vmatprep.mubr.f32.mxu0 0.0
    %956 = vmatmul.mubr.f32.gmra.mxu0 %v814
    %v957 = vpop.f32.mrf.mxu0
    %v958 = vadd.f32 0.0, %v957
    %v959 = vpop.f32.mrf.mxu0
    %v960 = vadd.f32 0.0, %v959
    %961 = vmatprep.mubr.f32.mxu0 0.0
    %962 = vmatmul.mubr.f32.gmra.mxu0 %v816
    %v963 = vpop.f32.mrf.mxu0
    %v964 = vadd.f32 0.0, %v963
    %v965 = vpop.f32.mrf.mxu0
    %v966 = vadd.f32 0.0, %v965
    %967 = vmatprep.mubr.f32.mxu0 0.0
    %968 = vmatmul.mubr.f32.gmra.mxu0 %v819
    %v969 = vpop.f32.mrf.mxu0
    %v970 = vadd.f32 0.0, %v969
    %v971 = vpop.f32.mrf.mxu0
    %v972 = vadd.f32 0.0, %v971
    %973 = vmatprep.mubr.f32.mxu0 0.0
    %974 = vmatmul.mubr.f32.gmra.mxu0 %v821
    %v975 = vpop.f32.mrf.mxu0
    %v976 = vadd.f32 0.0, %v975
    %v977 = vpop.f32.mrf.mxu0
    %v978 = vadd.f32 0.0, %v977
    %979 = vdwg.mxu0
    %980 = vmatprep.subr.mxu0 %v890
    %981 = vmatpush1.msra.mxu0 %v889
    %982 = vmatprep.subr.mxu0 %v886
    %983 = vmatpush1.msra.mxu0 %v885
    %984 = vmatprep.subr.mxu0 %v882
    %985 = vmatpush1.msra.mxu0 %v881
    %986 = vmatprep.subr.mxu0 %v878
    %987 = vmatpush1.msra.mxu0 %v877
    %988 = vmatprep.subr.mxu0 %v874
    %989 = vmatpush1.msra.mxu0 %v873
    %990 = vmatprep.subr.mxu0 %v870
    %991 = vmatpush1.msra.mxu0 %v869
    %992 = vmatprep.subr.mxu0 %v866
    %993 = vmatpush1.msra.mxu0 %v865
    %994 = vmatprep.subr.mxu0 %v862
    %995 = vmatpush1.msra.mxu0 %v861
    %996 = vmatprep.subr.mxu0 %v858
    %997 = vmatpush1.msra.mxu0 %v857
    %998 = vmatprep.subr.mxu0 %v854
    %999 = vmatpush1.msra.mxu0 %v853
    %1000 = vmatprep.subr.mxu0 %v850
    %1001 = vmatpush1.msra.mxu0 %v849
    %1002 = vmatprep.subr.mxu0 %v846
    %1003 = vmatpush1.msra.mxu0 %v845
    %1004 = vmatprep.subr.mxu0 %v842
    %1005 = vmatpush1.msra.mxu0 %v841
    %1006 = vmatprep.subr.mxu0 %v838
    %1007 = vmatpush1.msra.mxu0 %v837
    %1008 = vmatprep.subr.mxu0 %v834
    %1009 = vmatpush1.msra.mxu0 %v833
    %1010 = vmatprep.subr.mxu0 %v830
    %1011 = vmatpush1.msra.mxu0 %v829
    %1012 = vmatprep.subr.mxu0 0.0
    %1013 = vmatpush2.msra.mxu0 0.0
    %1014 = vmatprep.subr.mxu0 0.0
    %1015 = vmatpush2.msra.mxu0 0.0
    %1016 = vmatprep.subr.mxu0 0.0
    %1017 = vmatpush2.msra.mxu0 0.0
    %1018 = vmatprep.subr.mxu0 0.0
    %1019 = vmatpush2.msra.mxu0 0.0
    %1020 = vmatprep.subr.mxu0 0.0
    %1021 = vmatpush2.msra.mxu0 0.0
    %1022 = vmatprep.subr.mxu0 0.0
    %1023 = vmatpush2.msra.mxu0 0.0
    %1024 = vmatprep.subr.mxu0 0.0
    %1025 = vmatpush2.msra.mxu0 0.0
    %1026 = vmatprep.subr.mxu0 0.0
    %1027 = vmatpush2.msra.mxu0 0.0
    %1028 = vmatprep.subr.mxu0 0.0
    %1029 = vmatpush2.msra.mxu0 0.0
    %1030 = vmatprep.subr.mxu0 0.0
    %1031 = vmatpush2.msra.mxu0 0.0
    %1032 = vmatprep.subr.mxu0 0.0
    %1033 = vmatpush2.msra.mxu0 0.0
    %1034 = vmatprep.subr.mxu0 0.0
    %1035 = vmatpush2.msra.mxu0 0.0
    %1036 = vmatprep.subr.mxu0 0.0
    %1037 = vmatpush2.msra.mxu0 0.0
    %1038 = vmatprep.subr.mxu0 0.0
    %1039 = vmatpush2.msra.mxu0 0.0
    %1040 = vmatprep.subr.mxu0 0.0
    %1041 = vmatpush2.msra.mxu0 0.0
    %1042 = vmatprep.subr.mxu0 0.0
    %1043 = vmatpush2.msra.mxu0 0.0
    %1044 = vmatprep.mubr.f32.mxu0 0.0
    %1045 = vmatmul.mubr.f32.gmra.mxu0 %v814
    %v1046 = vpop.f32.mrf.mxu0
    %v1047 = vadd.f32 0.0, %v1046
    %v1048 = vpop.f32.mrf.mxu0
    %v1049 = vadd.f32 0.0, %v1048
    %1050 = vmatprep.mubr.f32.mxu0 0.0
    %1051 = vmatmul.mubr.f32.gmra.mxu0 %v816
    %v1052 = vpop.f32.mrf.mxu0
    %v1053 = vadd.f32 0.0, %v1052
    %v1054 = vpop.f32.mrf.mxu0
    %v1055 = vadd.f32 0.0, %v1054
    %1056 = vmatprep.mubr.f32.mxu0 0.0
    %1057 = vmatmul.mubr.f32.gmra.mxu0 %v819
    %v1058 = vpop.f32.mrf.mxu0
    %v1059 = vadd.f32 0.0, %v1058
    %v1060 = vpop.f32.mrf.mxu0
    %v1061 = vadd.f32 0.0, %v1060
    %1062 = vmatprep.mubr.f32.mxu0 0.0
    %1063 = vmatmul.mubr.f32.gmra.mxu0 %v821
    %v1064 = vpop.f32.mrf.mxu0
    %v1065 = vadd.f32 0.0, %v1064
    %v1066 = vpop.f32.mrf.mxu0
    %v1067 = vadd.f32 0.0, %v1066
    %1068 = vdwg.mxu0
    %v1069 = vadd.f32 %v700, %v958
    %v1070 = vadd.f32 %v702, %v960
    %v1071 = vadd.f32 %v789, %v1047
    %v1072 = vadd.f32 %v791, %v1049
    %v1073 = vadd.f32 %v706, %v964
    %v1074 = vadd.f32 %v708, %v966
    %v1075 = vadd.f32 %v795, %v1053
    %v1076 = vadd.f32 %v797, %v1055
    %v1077 = vadd.f32 %v712, %v970
    %v1078 = vadd.f32 %v714, %v972
    %v1079 = vadd.f32 %v801, %v1059
    %v1080 = vadd.f32 %v803, %v1061
    %v1081 = vadd.f32 %v718, %v976
    %v1082 = vadd.f32 %v720, %v978
    %v1083 = vadd.f32 %v807, %v1065
    %v1084 = vadd.f32 %v809, %v1067
    %vm1085 = vcmask 1044480
    %v1086 = vrot.slane %v303, 3
    %v1087 = vrot.slane %v293, 3
    %v1088 = vsel %vm1085, %v1086, %v1087
    %v1089 = vrot.slane %v305, 3
    %v1090 = vsel %vm1085, %v1087, %v1089
    %v1091 = vrot.slane %v304, 3
    %v1092 = vrot.slane %v296, 3
    %v1093 = vsel %vm1085, %v1091, %v1092
    %v1094 = vrot.slane %v306, 3
    %v1095 = vsel %vm1085, %v1092, %v1094
    %s1100 = scalar_lea.vmem [#allocation10], 1536
    %v1101 = vld [vmem:[%s1100] sm:$0xff]
    %v1102 = vld [vmem:[%s1100 + $0x8] sm:$0xff]
    %v1103 = vld [vmem:[%s1100 + $0x10] sm:$0xff]
    %v1104 = vld [vmem:[%s1100 + $0x18] sm:$0xff]
    %v1105 = vld [vmem:[%s1100 + $0x20] sm:$0xff]
    %v1106 = vld [vmem:[%s1100 + $0x28] sm:$0xff]
    %v1107 = vld [vmem:[%s1100 + $0x30] sm:$0xff]
    %v1108 = vld [vmem:[%s1100 + $0x38] sm:$0xff]
    %v1109 = vld [vmem:[%s1100 + $0x40] sm:$0xff]
    %v1110 = vld [vmem:[%s1100 + $0x48] sm:$0xff]
    %v1111 = vld [vmem:[%s1100 + $0x50] sm:$0xff]
    %v1112 = vld [vmem:[%s1100 + $0x58] sm:$0xff]
    %v1113 = vld [vmem:[%s1100 + $0x60] sm:$0xff]
    %v1114 = vld [vmem:[%s1100 + $0x68] sm:$0xff]
    %v1115 = vld [vmem:[%s1100 + $0x70] sm:$0xff]
    %v1116 = vld [vmem:[%s1100 + $0x78] sm:$0xff]
    %v1117 = vld [vmem:[%s1100 + $0x80] sm:$0xff]
    %v1118 = vld [vmem:[%s1100 + $0x88] sm:$0xff]
    %v1119 = vld [vmem:[%s1100 + $0x90] sm:$0xff]
    %v1120 = vld [vmem:[%s1100 + $0x98] sm:$0xff]
    %v1121 = vld [vmem:[%s1100 + $0xa0] sm:$0xff]
    %v1122 = vld [vmem:[%s1100 + $0xa8] sm:$0xff]
    %v1123 = vld [vmem:[%s1100 + $0xb0] sm:$0xff]
    %v1124 = vld [vmem:[%s1100 + $0xb8] sm:$0xff]
    %v1125 = vld [vmem:[%s1100 + $0xc0] sm:$0xff]
    %v1126 = vld [vmem:[%s1100 + $0xc8] sm:$0xff]
    %v1127 = vld [vmem:[%s1100 + $0xd0] sm:$0xff]
    %v1128 = vld [vmem:[%s1100 + $0xd8] sm:$0xff]
    %v1129 = vld [vmem:[%s1100 + $0xe0] sm:$0xff]
    %v1130 = vld [vmem:[%s1100 + $0xe8] sm:$0xff]
    %v1131 = vld [vmem:[%s1100 + $0xf0] sm:$0xff]
    %v1132 = vld [vmem:[%s1100 + $0xf8] sm:$0xff]
    %v1133 = vld [vmem:[%s1100 + $0x100] sm:$0xff]
    %v1134 = vld [vmem:[%s1100 + $0x108] sm:$0xff]
    %v1135 = vld [vmem:[%s1100 + $0x110] sm:$0xff]
    %v1136 = vld [vmem:[%s1100 + $0x118] sm:$0xff]
    %v1137 = vld [vmem:[%s1100 + $0x120] sm:$0xff]
    %v1138 = vld [vmem:[%s1100 + $0x128] sm:$0xff]
    %v1139 = vld [vmem:[%s1100 + $0x130] sm:$0xff]
    %v1140 = vld [vmem:[%s1100 + $0x138] sm:$0xff]
    %v1141 = vld [vmem:[%s1100 + $0x140] sm:$0xff]
    %v1142 = vld [vmem:[%s1100 + $0x148] sm:$0xff]
    %v1143 = vld [vmem:[%s1100 + $0x150] sm:$0xff]
    %v1144 = vld [vmem:[%s1100 + $0x158] sm:$0xff]
    %v1145 = vld [vmem:[%s1100 + $0x160] sm:$0xff]
    %v1146 = vld [vmem:[%s1100 + $0x168] sm:$0xff]
    %v1147 = vld [vmem:[%s1100 + $0x170] sm:$0xff]
    %v1148 = vld [vmem:[%s1100 + $0x178] sm:$0xff]
    %v1149 = vld [vmem:[%s1100 + $0x180] sm:$0xff]
    %v1150 = vld [vmem:[%s1100 + $0x188] sm:$0xff]
    %v1151 = vld [vmem:[%s1100 + $0x190] sm:$0xff]
    %v1152 = vld [vmem:[%s1100 + $0x198] sm:$0xff]
    %v1153 = vld [vmem:[%s1100 + $0x1a0] sm:$0xff]
    %v1154 = vld [vmem:[%s1100 + $0x1a8] sm:$0xff]
    %v1155 = vld [vmem:[%s1100 + $0x1b0] sm:$0xff]
    %v1156 = vld [vmem:[%s1100 + $0x1b8] sm:$0xff]
    %v1157 = vld [vmem:[%s1100 + $0x1c0] sm:$0xff]
    %v1158 = vld [vmem:[%s1100 + $0x1c8] sm:$0xff]
    %v1159 = vld [vmem:[%s1100 + $0x1d0] sm:$0xff]
    %v1160 = vld [vmem:[%s1100 + $0x1d8] sm:$0xff]
    %v1161 = vld [vmem:[%s1100 + $0x1e0] sm:$0xff]
    %v1162 = vld [vmem:[%s1100 + $0x1e8] sm:$0xff]
    %v1163 = vld [vmem:[%s1100 + $0x1f0] sm:$0xff]
    %v1164 = vld [vmem:[%s1100 + $0x1f8] sm:$0xff]
    %1165 = vmatprep.subr.mxu0 %v1162
    %1166 = vmatpush1.msra.mxu0 %v1161
    %1167 = vmatprep.subr.mxu0 %v1158
    %1168 = vmatpush1.msra.mxu0 %v1157
    %1169 = vmatprep.subr.mxu0 %v1154
    %1170 = vmatpush1.msra.mxu0 %v1153
    %1171 = vmatprep.subr.mxu0 %v1150
    %1172 = vmatpush1.msra.mxu0 %v1149
    %1173 = vmatprep.subr.mxu0 %v1146
    %1174 = vmatpush1.msra.mxu0 %v1145
    %1175 = vmatprep.subr.mxu0 %v1142
    %1176 = vmatpush1.msra.mxu0 %v1141
    %1177 = vmatprep.subr.mxu0 %v1138
    %1178 = vmatpush1.msra.mxu0 %v1137
    %1179 = vmatprep.subr.mxu0 %v1134
    %1180 = vmatpush1.msra.mxu0 %v1133
    %1181 = vmatprep.subr.mxu0 %v1130
    %1182 = vmatpush1.msra.mxu0 %v1129
    %1183 = vmatprep.subr.mxu0 %v1126
    %1184 = vmatpush1.msra.mxu0 %v1125
    %1185 = vmatprep.subr.mxu0 %v1122
    %1186 = vmatpush1.msra.mxu0 %v1121
    %1187 = vmatprep.subr.mxu0 %v1118
    %1188 = vmatpush1.msra.mxu0 %v1117
    %1189 = vmatprep.subr.mxu0 %v1114
    %1190 = vmatpush1.msra.mxu0 %v1113
    %1191 = vmatprep.subr.mxu0 %v1110
    %1192 = vmatpush1.msra.mxu0 %v1109
    %1193 = vmatprep.subr.mxu0 %v1106
    %1194 = vmatpush1.msra.mxu0 %v1105
    %1195 = vmatprep.subr.mxu0 %v1102
    %1196 = vmatpush1.msra.mxu0 %v1101
    %1197 = vmatprep.subr.mxu0 0.0
    %1198 = vmatpush2.msra.mxu0 0.0
    %1199 = vmatprep.subr.mxu0 0.0
    %1200 = vmatpush2.msra.mxu0 0.0
    %1201 = vmatprep.subr.mxu0 0.0
    %1202 = vmatpush2.msra.mxu0 0.0
    %1203 = vmatprep.subr.mxu0 0.0
    %1204 = vmatpush2.msra.mxu0 0.0
    %1205 = vmatprep.subr.mxu0 0.0
    %1206 = vmatpush2.msra.mxu0 0.0
    %1207 = vmatprep.subr.mxu0 0.0
    %1208 = vmatpush2.msra.mxu0 0.0
    %1209 = vmatprep.subr.mxu0 0.0
    %1210 = vmatpush2.msra.mxu0 0.0
    %1211 = vmatprep.subr.mxu0 0.0
    %1212 = vmatpush2.msra.mxu0 0.0
    %1213 = vmatprep.subr.mxu0 0.0
    %1214 = vmatpush2.msra.mxu0 0.0
    %1215 = vmatprep.subr.mxu0 0.0
    %1216 = vmatpush2.msra.mxu0 0.0
    %1217 = vmatprep.subr.mxu0 0.0
    %1218 = vmatpush2.msra.mxu0 0.0
    %1219 = vmatprep.subr.mxu0 0.0
    %1220 = vmatpush2.msra.mxu0 0.0
    %1221 = vmatprep.subr.mxu0 0.0
    %1222 = vmatpush2.msra.mxu0 0.0
    %1223 = vmatprep.subr.mxu0 0.0
    %1224 = vmatpush2.msra.mxu0 0.0
    %1225 = vmatprep.subr.mxu0 0.0
    %1226 = vmatpush2.msra.mxu0 0.0
    %1227 = vmatprep.subr.mxu0 0.0
    %1228 = vmatpush2.msra.mxu0 0.0
    %1229 = vmatprep.mubr.f32.mxu0 0.0
    %1230 = vmatmul.mubr.f32.gmra.mxu0 %v1088
    %v1231 = vpop.f32.mrf.mxu0
    %v1232 = vadd.f32 0.0, %v1231
    %v1233 = vpop.f32.mrf.mxu0
    %v1234 = vadd.f32 0.0, %v1233
    %1235 = vmatprep.mubr.f32.mxu0 0.0
    %1236 = vmatmul.mubr.f32.gmra.mxu0 %v1090
    %v1237 = vpop.f32.mrf.mxu0
    %v1238 = vadd.f32 0.0, %v1237
    %v1239 = vpop.f32.mrf.mxu0
    %v1240 = vadd.f32 0.0, %v1239
    %1241 = vmatprep.mubr.f32.mxu0 0.0
    %1242 = vmatmul.mubr.f32.gmra.mxu0 %v1093
    %v1243 = vpop.f32.mrf.mxu0
    %v1244 = vadd.f32 0.0, %v1243
    %v1245 = vpop.f32.mrf.mxu0
    %v1246 = vadd.f32 0.0, %v1245
    %1247 = vmatprep.mubr.f32.mxu0 0.0
    %1248 = vmatmul.mubr.f32.gmra.mxu0 %v1095
    %v1249 = vpop.f32.mrf.mxu0
    %v1250 = vadd.f32 0.0, %v1249
    %v1251 = vpop.f32.mrf.mxu0
    %v1252 = vadd.f32 0.0, %v1251
    %1253 = vdwg.mxu0
    %1254 = vmatprep.subr.mxu0 %v1164
    %1255 = vmatpush1.msra.mxu0 %v1163
    %1256 = vmatprep.subr.mxu0 %v1160
    %1257 = vmatpush1.msra.mxu0 %v1159
    %1258 = vmatprep.subr.mxu0 %v1156
    %1259 = vmatpush1.msra.mxu0 %v1155
    %1260 = vmatprep.subr.mxu0 %v1152
    %1261 = vmatpush1.msra.mxu0 %v1151
    %1262 = vmatprep.subr.mxu0 %v1148
    %1263 = vmatpush1.msra.mxu0 %v1147
    %1264 = vmatprep.subr.mxu0 %v1144
    %1265 = vmatpush1.msra.mxu0 %v1143
    %1266 = vmatprep.subr.mxu0 %v1140
    %1267 = vmatpush1.msra.mxu0 %v1139
    %1268 = vmatprep.subr.mxu0 %v1136
    %1269 = vmatpush1.msra.mxu0 %v1135
    %1270 = vmatprep.subr.mxu0 %v1132
    %1271 = vmatpush1.msra.mxu0 %v1131
    %1272 = vmatprep.subr.mxu0 %v1128
    %1273 = vmatpush1.msra.mxu0 %v1127
    %1274 = vmatprep.subr.mxu0 %v1124
    %1275 = vmatpush1.msra.mxu0 %v1123
    %1276 = vmatprep.subr.mxu0 %v1120
    %1277 = vmatpush1.msra.mxu0 %v1119
    %1278 = vmatprep.subr.mxu0 %v1116
    %1279 = vmatpush1.msra.mxu0 %v1115
    %1280 = vmatprep.subr.mxu0 %v1112
    %1281 = vmatpush1.msra.mxu0 %v1111
    %1282 = vmatprep.subr.mxu0 %v1108
    %1283 = vmatpush1.msra.mxu0 %v1107
    %1284 = vmatprep.subr.mxu0 %v1104
    %1285 = vmatpush1.msra.mxu0 %v1103
    %1286 = vmatprep.subr.mxu0 0.0
    %1287 = vmatpush2.msra.mxu0 0.0
    %1288 = vmatprep.subr.mxu0 0.0
    %1289 = vmatpush2.msra.mxu0 0.0
    %1290 = vmatprep.subr.mxu0 0.0
    %1291 = vmatpush2.msra.mxu0 0.0
    %1292 = vmatprep.subr.mxu0 0.0
    %1293 = vmatpush2.msra.mxu0 0.0
    %1294 = vmatprep.subr.mxu0 0.0
    %1295 = vmatpush2.msra.mxu0 0.0
    %1296 = vmatprep.subr.mxu0 0.0
    %1297 = vmatpush2.msra.mxu0 0.0
    %1298 = vmatprep.subr.mxu0 0.0
    %1299 = vmatpush2.msra.mxu0 0.0
    %1300 = vmatprep.subr.mxu0 0.0
    %1301 = vmatpush2.msra.mxu0 0.0
    %1302 = vmatprep.subr.mxu0 0.0
    %1303 = vmatpush2.msra.mxu0 0.0
    %1304 = vmatprep.subr.mxu0 0.0
    %1305 = vmatpush2.msra.mxu0 0.0
    %1306 = vmatprep.subr.mxu0 0.0
    %1307 = vmatpush2.msra.mxu0 0.0
    %1308 = vmatprep.subr.mxu0 0.0
    %1309 = vmatpush2.msra.mxu0 0.0
    %1310 = vmatprep.subr.mxu0 0.0
    %1311 = vmatpush2.msra.mxu0 0.0
    %1312 = vmatprep.subr.mxu0 0.0
    %1313 = vmatpush2.msra.mxu0 0.0
    %1314 = vmatprep.subr.mxu0 0.0
    %1315 = vmatpush2.msra.mxu0 0.0
    %1316 = vmatprep.subr.mxu0 0.0
    %1317 = vmatpush2.msra.mxu0 0.0
    %1318 = vmatprep.mubr.f32.mxu0 0.0
    %1319 = vmatmul.mubr.f32.gmra.mxu0 %v1088
    %v1320 = vpop.f32.mrf.mxu0
    %v1321 = vadd.f32 0.0, %v1320
    %v1322 = vpop.f32.mrf.mxu0
    %v1323 = vadd.f32 0.0, %v1322
    %1324 = vmatprep.mubr.f32.mxu0 0.0
    %1325 = vmatmul.mubr.f32.gmra.mxu0 %v1090
    %v1326 = vpop.f32.mrf.mxu0
    %v1327 = vadd.f32 0.0, %v1326
    %v1328 = vpop.f32.mrf.mxu0
    %v1329 = vadd.f32 0.0, %v1328
    %1330 = vmatprep.mubr.f32.mxu0 0.0
    %1331 = vmatmul.mubr.f32.gmra.mxu0 %v1093
    %v1332 = vpop.f32.mrf.mxu0
    %v1333 = vadd.f32 0.0, %v1332
    %v1334 = vpop.f32.mrf.mxu0
    %v1335 = vadd.f32 0.0, %v1334
    %1336 = vmatprep.mubr.f32.mxu0 0.0
    %1337 = vmatmul.mubr.f32.gmra.mxu0 %v1095
    %v1338 = vpop.f32.mrf.mxu0
    %v1339 = vadd.f32 0.0, %v1338
    %v1340 = vpop.f32.mrf.mxu0
    %v1341 = vadd.f32 0.0, %v1340
    %1342 = vdwg.mxu0
    %v1343 = vadd.f32 %v1069, %v1232
    %v1344 = vadd.f32 %v1070, %v1234
    %v1345 = vadd.f32 %v1071, %v1321
    %v1346 = vadd.f32 %v1072, %v1323
    %v1347 = vadd.f32 %v1073, %v1238
    %v1348 = vadd.f32 %v1074, %v1240
    %v1349 = vadd.f32 %v1075, %v1327
    %v1350 = vadd.f32 %v1076, %v1329
    %v1351 = vadd.f32 %v1077, %v1244
    %v1352 = vadd.f32 %v1078, %v1246
    %v1353 = vadd.f32 %v1079, %v1333
    %v1354 = vadd.f32 %v1080, %v1335
    %v1355 = vadd.f32 %v1081, %v1250
    %v1356 = vadd.f32 %v1082, %v1252
    %v1357 = vadd.f32 %v1083, %v1339
    %v1358 = vadd.f32 %v1084, %v1341
    %vm1359 = vcmask 1043456
    %v1360 = vrot.slane %v303, 4
    %v1361 = vrot.slane %v293, 4
    %v1362 = vsel %vm1359, %v1360, %v1361
    %v1363 = vrot.slane %v305, 4
    %v1364 = vsel %vm1359, %v1361, %v1363
    %v1365 = vrot.slane %v304, 4
    %v1366 = vrot.slane %v296, 4
    %v1367 = vsel %vm1359, %v1365, %v1366
    %v1368 = vrot.slane %v306, 4
    %v1369 = vsel %vm1359, %v1366, %v1368
    %s1374 = scalar_lea.vmem [#allocation10], 2048
    %v1375 = vld [vmem:[%s1374] sm:$0xff]
    %v1376 = vld [vmem:[%s1374 + $0x8] sm:$0xff]
    %v1377 = vld [vmem:[%s1374 + $0x10] sm:$0xff]
    %v1378 = vld [vmem:[%s1374 + $0x18] sm:$0xff]
    %v1379 = vld [vmem:[%s1374 + $0x20] sm:$0xff]
    %v1380 = vld [vmem:[%s1374 + $0x28] sm:$0xff]
    %v1381 = vld [vmem:[%s1374 + $0x30] sm:$0xff]
    %v1382 = vld [vmem:[%s1374 + $0x38] sm:$0xff]
    %v1383 = vld [vmem:[%s1374 + $0x40] sm:$0xff]
    %v1384 = vld [vmem:[%s1374 + $0x48] sm:$0xff]
    %v1385 = vld [vmem:[%s1374 + $0x50] sm:$0xff]
    %v1386 = vld [vmem:[%s1374 + $0x58] sm:$0xff]
    %v1387 = vld [vmem:[%s1374 + $0x60] sm:$0xff]
    %v1388 = vld [vmem:[%s1374 + $0x68] sm:$0xff]
    %v1389 = vld [vmem:[%s1374 + $0x70] sm:$0xff]
    %v1390 = vld [vmem:[%s1374 + $0x78] sm:$0xff]
    %v1391 = vld [vmem:[%s1374 + $0x80] sm:$0xff]
    %v1392 = vld [vmem:[%s1374 + $0x88] sm:$0xff]
    %v1393 = vld [vmem:[%s1374 + $0x90] sm:$0xff]
    %v1394 = vld [vmem:[%s1374 + $0x98] sm:$0xff]
    %v1395 = vld [vmem:[%s1374 + $0xa0] sm:$0xff]
    %v1396 = vld [vmem:[%s1374 + $0xa8] sm:$0xff]
    %v1397 = vld [vmem:[%s1374 + $0xb0] sm:$0xff]
    %v1398 = vld [vmem:[%s1374 + $0xb8] sm:$0xff]
    %v1399 = vld [vmem:[%s1374 + $0xc0] sm:$0xff]
    %v1400 = vld [vmem:[%s1374 + $0xc8] sm:$0xff]
    %v1401 = vld [vmem:[%s1374 + $0xd0] sm:$0xff]
    %v1402 = vld [vmem:[%s1374 + $0xd8] sm:$0xff]
    %v1403 = vld [vmem:[%s1374 + $0xe0] sm:$0xff]
    %v1404 = vld [vmem:[%s1374 + $0xe8] sm:$0xff]
    %v1405 = vld [vmem:[%s1374 + $0xf0] sm:$0xff]
    %v1406 = vld [vmem:[%s1374 + $0xf8] sm:$0xff]
    %v1407 = vld [vmem:[%s1374 + $0x100] sm:$0xff]
    %v1408 = vld [vmem:[%s1374 + $0x108] sm:$0xff]
    %v1409 = vld [vmem:[%s1374 + $0x110] sm:$0xff]
    %v1410 = vld [vmem:[%s1374 + $0x118] sm:$0xff]
    %v1411 = vld [vmem:[%s1374 + $0x120] sm:$0xff]
    %v1412 = vld [vmem:[%s1374 + $0x128] sm:$0xff]
    %v1413 = vld [vmem:[%s1374 + $0x130] sm:$0xff]
    %v1414 = vld [vmem:[%s1374 + $0x138] sm:$0xff]
    %v1415 = vld [vmem:[%s1374 + $0x140] sm:$0xff]
    %v1416 = vld [vmem:[%s1374 + $0x148] sm:$0xff]
    %v1417 = vld [vmem:[%s1374 + $0x150] sm:$0xff]
    %v1418 = vld [vmem:[%s1374 + $0x158] sm:$0xff]
    %v1419 = vld [vmem:[%s1374 + $0x160] sm:$0xff]
    %v1420 = vld [vmem:[%s1374 + $0x168] sm:$0xff]
    %v1421 = vld [vmem:[%s1374 + $0x170] sm:$0xff]
    %v1422 = vld [vmem:[%s1374 + $0x178] sm:$0xff]
    %v1423 = vld [vmem:[%s1374 + $0x180] sm:$0xff]
    %v1424 = vld [vmem:[%s1374 + $0x188] sm:$0xff]
    %v1425 = vld [vmem:[%s1374 + $0x190] sm:$0xff]
    %v1426 = vld [vmem:[%s1374 + $0x198] sm:$0xff]
    %v1427 = vld [vmem:[%s1374 + $0x1a0] sm:$0xff]
    %v1428 = vld [vmem:[%s1374 + $0x1a8] sm:$0xff]
    %v1429 = vld [vmem:[%s1374 + $0x1b0] sm:$0xff]
    %v1430 = vld [vmem:[%s1374 + $0x1b8] sm:$0xff]
    %v1431 = vld [vmem:[%s1374 + $0x1c0] sm:$0xff]
    %v1432 = vld [vmem:[%s1374 + $0x1c8] sm:$0xff]
    %v1433 = vld [vmem:[%s1374 + $0x1d0] sm:$0xff]
    %v1434 = vld [vmem:[%s1374 + $0x1d8] sm:$0xff]
    %v1435 = vld [vmem:[%s1374 + $0x1e0] sm:$0xff]
    %v1436 = vld [vmem:[%s1374 + $0x1e8] sm:$0xff]
    %v1437 = vld [vmem:[%s1374 + $0x1f0] sm:$0xff]
    %v1438 = vld [vmem:[%s1374 + $0x1f8] sm:$0xff]
    %1439 = vmatprep.subr.mxu0 %v1436
    %1440 = vmatpush1.msra.mxu0 %v1435
    %1441 = vmatprep.subr.mxu0 %v1432
    %1442 = vmatpush1.msra.mxu0 %v1431
    %1443 = vmatprep.subr.mxu0 %v1428
    %1444 = vmatpush1.msra.mxu0 %v1427
    %1445 = vmatprep.subr.mxu0 %v1424
    %1446 = vmatpush1.msra.mxu0 %v1423
    %1447 = vmatprep.subr.mxu0 %v1420
    %1448 = vmatpush1.msra.mxu0 %v1419
    %1449 = vmatprep.subr.mxu0 %v1416
    %1450 = vmatpush1.msra.mxu0 %v1415
    %1451 = vmatprep.subr.mxu0 %v1412
    %1452 = vmatpush1.msra.mxu0 %v1411
    %1453 = vmatprep.subr.mxu0 %v1408
    %1454 = vmatpush1.msra.mxu0 %v1407
    %1455 = vmatprep.subr.mxu0 %v1404
    %1456 = vmatpush1.msra.mxu0 %v1403
    %1457 = vmatprep.subr.mxu0 %v1400
    %1458 = vmatpush1.msra.mxu0 %v1399
    %1459 = vmatprep.subr.mxu0 %v1396
    %1460 = vmatpush1.msra.mxu0 %v1395
    %1461 = vmatprep.subr.mxu0 %v1392
    %1462 = vmatpush1.msra.mxu0 %v1391
    %1463 = vmatprep.subr.mxu0 %v1388
    %1464 = vmatpush1.msra.mxu0 %v1387
    %1465 = vmatprep.subr.mxu0 %v1384
    %1466 = vmatpush1.msra.mxu0 %v1383
    %1467 = vmatprep.subr.mxu0 %v1380
    %1468 = vmatpush1.msra.mxu0 %v1379
    %1469 = vmatprep.subr.mxu0 %v1376
    %1470 = vmatpush1.msra.mxu0 %v1375
    %1471 = vmatprep.subr.mxu0 0.0
    %1472 = vmatpush2.msra.mxu0 0.0
    %1473 = vmatprep.subr.mxu0 0.0
    %1474 = vmatpush2.msra.mxu0 0.0
    %1475 = vmatprep.subr.mxu0 0.0
    %1476 = vmatpush2.msra.mxu0 0.0
    %1477 = vmatprep.subr.mxu0 0.0
    %1478 = vmatpush2.msra.mxu0 0.0
    %1479 = vmatprep.subr.mxu0 0.0
    %1480 = vmatpush2.msra.mxu0 0.0
    %1481 = vmatprep.subr.mxu0 0.0
    %1482 = vmatpush2.msra.mxu0 0.0
    %1483 = vmatprep.subr.mxu0 0.0
    %1484 = vmatpush2.msra.mxu0 0.0
    %1485 = vmatprep.subr.mxu0 0.0
    %1486 = vmatpush2.msra.mxu0 0.0
    %1487 = vmatprep.subr.mxu0 0.0
    %1488 = vmatpush2.msra.mxu0 0.0
    %1489 = vmatprep.subr.mxu0 0.0
    %1490 = vmatpush2.msra.mxu0 0.0
    %1491 = vmatprep.subr.mxu0 0.0
    %1492 = vmatpush2.msra.mxu0 0.0
    %1493 = vmatprep.subr.mxu0 0.0
    %1494 = vmatpush2.msra.mxu0 0.0
    %1495 = vmatprep.subr.mxu0 0.0
    %1496 = vmatpush2.msra.mxu0 0.0
    %1497 = vmatprep.subr.mxu0 0.0
    %1498 = vmatpush2.msra.mxu0 0.0
    %1499 = vmatprep.subr.mxu0 0.0
    %1500 = vmatpush2.msra.mxu0 0.0
    %1501 = vmatprep.subr.mxu0 0.0
    %1502 = vmatpush2.msra.mxu0 0.0
    %1503 = vmatprep.mubr.f32.mxu0 0.0
    %1504 = vmatmul.mubr.f32.gmra.mxu0 %v1362
    %v1505 = vpop.f32.mrf.mxu0
    %v1506 = vadd.f32 0.0, %v1505
    %v1507 = vpop.f32.mrf.mxu0
    %v1508 = vadd.f32 0.0, %v1507
    %1509 = vmatprep.mubr.f32.mxu0 0.0
    %1510 = vmatmul.mubr.f32.gmra.mxu0 %v1364
    %v1511 = vpop.f32.mrf.mxu0
    %v1512 = vadd.f32 0.0, %v1511
    %v1513 = vpop.f32.mrf.mxu0
    %v1514 = vadd.f32 0.0, %v1513
    %1515 = vmatprep.mubr.f32.mxu0 0.0
    %1516 = vmatmul.mubr.f32.gmra.mxu0 %v1367
    %v1517 = vpop.f32.mrf.mxu0
    %v1518 = vadd.f32 0.0, %v1517
    %v1519 = vpop.f32.mrf.mxu0
    %v1520 = vadd.f32 0.0, %v1519
    %1521 = vmatprep.mubr.f32.mxu0 0.0
    %1522 = vmatmul.mubr.f32.gmra.mxu0 %v1369
    %v1523 = vpop.f32.mrf.mxu0
    %v1524 = vadd.f32 0.0, %v1523
    %v1525 = vpop.f32.mrf.mxu0
    %v1526 = vadd.f32 0.0, %v1525
    %1527 = vdwg.mxu0
    %1528 = vmatprep.subr.mxu0 %v1438
    %1529 = vmatpush1.msra.mxu0 %v1437
    %1530 = vmatprep.subr.mxu0 %v1434
    %1531 = vmatpush1.msra.mxu0 %v1433
    %1532 = vmatprep.subr.mxu0 %v1430
    %1533 = vmatpush1.msra.mxu0 %v1429
    %1534 = vmatprep.subr.mxu0 %v1426
    %1535 = vmatpush1.msra.mxu0 %v1425
    %1536 = vmatprep.subr.mxu0 %v1422
    %1537 = vmatpush1.msra.mxu0 %v1421
    %1538 = vmatprep.subr.mxu0 %v1418
    %1539 = vmatpush1.msra.mxu0 %v1417
    %1540 = vmatprep.subr.mxu0 %v1414
    %1541 = vmatpush1.msra.mxu0 %v1413
    %1542 = vmatprep.subr.mxu0 %v1410
    %1543 = vmatpush1.msra.mxu0 %v1409
    %1544 = vmatprep.subr.mxu0 %v1406
    %1545 = vmatpush1.msra.mxu0 %v1405
    %1546 = vmatprep.subr.mxu0 %v1402
    %1547 = vmatpush1.msra.mxu0 %v1401
    %1548 = vmatprep.subr.mxu0 %v1398
    %1549 = vmatpush1.msra.mxu0 %v1397
    %1550 = vmatprep.subr.mxu0 %v1394
    %1551 = vmatpush1.msra.mxu0 %v1393
    %1552 = vmatprep.subr.mxu0 %v1390
    %1553 = vmatpush1.msra.mxu0 %v1389
    %1554 = vmatprep.subr.mxu0 %v1386
    %1555 = vmatpush1.msra.mxu0 %v1385
    %1556 = vmatprep.subr.mxu0 %v1382
    %1557 = vmatpush1.msra.mxu0 %v1381
    %1558 = vmatprep.subr.mxu0 %v1378
    %1559 = vmatpush1.msra.mxu0 %v1377
    %1560 = vmatprep.subr.mxu0 0.0
    %1561 = vmatpush2.msra.mxu0 0.0
    %1562 = vmatprep.subr.mxu0 0.0
    %1563 = vmatpush2.msra.mxu0 0.0
    %1564 = vmatprep.subr.mxu0 0.0
    %1565 = vmatpush2.msra.mxu0 0.0
    %1566 = vmatprep.subr.mxu0 0.0
    %1567 = vmatpush2.msra.mxu0 0.0
    %1568 = vmatprep.subr.mxu0 0.0
    %1569 = vmatpush2.msra.mxu0 0.0
    %1570 = vmatprep.subr.mxu0 0.0
    %1571 = vmatpush2.msra.mxu0 0.0
    %1572 = vmatprep.subr.mxu0 0.0
    %1573 = vmatpush2.msra.mxu0 0.0
    %1574 = vmatprep.subr.mxu0 0.0
    %1575 = vmatpush2.msra.mxu0 0.0
    %1576 = vmatprep.subr.mxu0 0.0
    %1577 = vmatpush2.msra.mxu0 0.0
    %1578 = vmatprep.subr.mxu0 0.0
    %1579 = vmatpush2.msra.mxu0 0.0
    %1580 = vmatprep.subr.mxu0 0.0
    %1581 = vmatpush2.msra.mxu0 0.0
    %1582 = vmatprep.subr.mxu0 0.0
    %1583 = vmatpush2.msra.mxu0 0.0
    %1584 = vmatprep.subr.mxu0 0.0
    %1585 = vmatpush2.msra.mxu0 0.0
    %1586 = vmatprep.subr.mxu0 0.0
    %1587 = vmatpush2.msra.mxu0 0.0
    %1588 = vmatprep.subr.mxu0 0.0
    %1589 = vmatpush2.msra.mxu0 0.0
    %1590 = vmatprep.subr.mxu0 0.0
    %1591 = vmatpush2.msra.mxu0 0.0
    %1592 = vmatprep.mubr.f32.mxu0 0.0
    %1593 = vmatmul.mubr.f32.gmra.mxu0 %v1362
    %v1594 = vpop.f32.mrf.mxu0
    %v1595 = vadd.f32 0.0, %v1594
    %v1596 = vpop.f32.mrf.mxu0
    %v1597 = vadd.f32 0.0, %v1596
    %1598 = vmatprep.mubr.f32.mxu0 0.0
    %1599 = vmatmul.mubr.f32.gmra.mxu0 %v1364
    %v1600 = vpop.f32.mrf.mxu0
    %v1601 = vadd.f32 0.0, %v1600
    %v1602 = vpop.f32.mrf.mxu0
    %v1603 = vadd.f32 0.0, %v1602
    %1604 = vmatprep.mubr.f32.mxu0 0.0
    %1605 = vmatmul.mubr.f32.gmra.mxu0 %v1367
    %v1606 = vpop.f32.mrf.mxu0
    %v1607 = vadd.f32 0.0, %v1606
    %v1608 = vpop.f32.mrf.mxu0
    %v1609 = vadd.f32 0.0, %v1608
    %1610 = vmatprep.mubr.f32.mxu0 0.0
    %1611 = vmatmul.mubr.f32.gmra.mxu0 %v1369
    %v1612 = vpop.f32.mrf.mxu0
    %v1613 = vadd.f32 0.0, %v1612
    %v1614 = vpop.f32.mrf.mxu0
    %v1615 = vadd.f32 0.0, %v1614
    %1616 = vdwg.mxu0
    %v1617 = vadd.f32 %v1343, %v1506
    %v1618 = vadd.f32 %v1344, %v1508
    %v1619 = vadd.f32 %v1345, %v1595
    %v1620 = vadd.f32 %v1346, %v1597
    %v1621 = vadd.f32 %v1347, %v1512
    %v1622 = vadd.f32 %v1348, %v1514
    %v1623 = vadd.f32 %v1349, %v1601
    %v1624 = vadd.f32 %v1350, %v1603
    %v1625 = vadd.f32 %v1351, %v1518
    %v1626 = vadd.f32 %v1352, %v1520
    %v1627 = vadd.f32 %v1353, %v1607
    %v1628 = vadd.f32 %v1354, %v1609
    %v1629 = vadd.f32 %v1355, %v1524
    %v1630 = vadd.f32 %v1356, %v1526
    %v1631 = vadd.f32 %v1357, %v1613
    %v1632 = vadd.f32 %v1358, %v1615
    %v1633 = vrot.slane %v303, 5
    %v1634 = vrot.slane %v293, 5
    %v1635 = vsel %vm290, %v1633, %v1634
    %v1636 = vrot.slane %v305, 5
    %v1637 = vsel %vm290, %v1634, %v1636
    %v1638 = vrot.slane %v304, 5
    %v1639 = vrot.slane %v296, 5
    %v1640 = vsel %vm290, %v1638, %v1639
    %v1641 = vrot.slane %v306, 5
    %v1642 = vsel %vm290, %v1639, %v1641
    %s1647 = scalar_lea.vmem [#allocation10], 2560
    %v1648 = vld [vmem:[%s1647] sm:$0xff]
    %v1649 = vld [vmem:[%s1647 + $0x8] sm:$0xff]
    %v1650 = vld [vmem:[%s1647 + $0x10] sm:$0xff]
    %v1651 = vld [vmem:[%s1647 + $0x18] sm:$0xff]
    %v1652 = vld [vmem:[%s1647 + $0x20] sm:$0xff]
    %v1653 = vld [vmem:[%s1647 + $0x28] sm:$0xff]
    %v1654 = vld [vmem:[%s1647 + $0x30] sm:$0xff]
    %v1655 = vld [vmem:[%s1647 + $0x38] sm:$0xff]
    %v1656 = vld [vmem:[%s1647 + $0x40] sm:$0xff]
    %v1657 = vld [vmem:[%s1647 + $0x48] sm:$0xff]
    %v1658 = vld [vmem:[%s1647 + $0x50] sm:$0xff]
    %v1659 = vld [vmem:[%s1647 + $0x58] sm:$0xff]
    %v1660 = vld [vmem:[%s1647 + $0x60] sm:$0xff]
    %v1661 = vld [vmem:[%s1647 + $0x68] sm:$0xff]
    %v1662 = vld [vmem:[%s1647 + $0x70] sm:$0xff]
    %v1663 = vld [vmem:[%s1647 + $0x78] sm:$0xff]
    %v1664 = vld [vmem:[%s1647 + $0x80] sm:$0xff]
    %v1665 = vld [vmem:[%s1647 + $0x88] sm:$0xff]
    %v1666 = vld [vmem:[%s1647 + $0x90] sm:$0xff]
    %v1667 = vld [vmem:[%s1647 + $0x98] sm:$0xff]
    %v1668 = vld [vmem:[%s1647 + $0xa0] sm:$0xff]
    %v1669 = vld [vmem:[%s1647 + $0xa8] sm:$0xff]
    %v1670 = vld [vmem:[%s1647 + $0xb0] sm:$0xff]
    %v1671 = vld [vmem:[%s1647 + $0xb8] sm:$0xff]
    %v1672 = vld [vmem:[%s1647 + $0xc0] sm:$0xff]
    %v1673 = vld [vmem:[%s1647 + $0xc8] sm:$0xff]
    %v1674 = vld [vmem:[%s1647 + $0xd0] sm:$0xff]
    %v1675 = vld [vmem:[%s1647 + $0xd8] sm:$0xff]
    %v1676 = vld [vmem:[%s1647 + $0xe0] sm:$0xff]
    %v1677 = vld [vmem:[%s1647 + $0xe8] sm:$0xff]
    %v1678 = vld [vmem:[%s1647 + $0xf0] sm:$0xff]
    %v1679 = vld [vmem:[%s1647 + $0xf8] sm:$0xff]
    %v1680 = vld [vmem:[%s1647 + $0x100] sm:$0xff]
    %v1681 = vld [vmem:[%s1647 + $0x108] sm:$0xff]
    %v1682 = vld [vmem:[%s1647 + $0x110] sm:$0xff]
    %v1683 = vld [vmem:[%s1647 + $0x118] sm:$0xff]
    %v1684 = vld [vmem:[%s1647 + $0x120] sm:$0xff]
    %v1685 = vld [vmem:[%s1647 + $0x128] sm:$0xff]
    %v1686 = vld [vmem:[%s1647 + $0x130] sm:$0xff]
    %v1687 = vld [vmem:[%s1647 + $0x138] sm:$0xff]
    %v1688 = vld [vmem:[%s1647 + $0x140] sm:$0xff]
    %v1689 = vld [vmem:[%s1647 + $0x148] sm:$0xff]
    %v1690 = vld [vmem:[%s1647 + $0x150] sm:$0xff]
    %v1691 = vld [vmem:[%s1647 + $0x158] sm:$0xff]
    %v1692 = vld [vmem:[%s1647 + $0x160] sm:$0xff]
    %v1693 = vld [vmem:[%s1647 + $0x168] sm:$0xff]
    %v1694 = vld [vmem:[%s1647 + $0x170] sm:$0xff]
    %v1695 = vld [vmem:[%s1647 + $0x178] sm:$0xff]
    %v1696 = vld [vmem:[%s1647 + $0x180] sm:$0xff]
    %v1697 = vld [vmem:[%s1647 + $0x188] sm:$0xff]
    %v1698 = vld [vmem:[%s1647 + $0x190] sm:$0xff]
    %v1699 = vld [vmem:[%s1647 + $0x198] sm:$0xff]
    %v1700 = vld [vmem:[%s1647 + $0x1a0] sm:$0xff]
    %v1701 = vld [vmem:[%s1647 + $0x1a8] sm:$0xff]
    %v1702 = vld [vmem:[%s1647 + $0x1b0] sm:$0xff]
    %v1703 = vld [vmem:[%s1647 + $0x1b8] sm:$0xff]
    %v1704 = vld [vmem:[%s1647 + $0x1c0] sm:$0xff]
    %v1705 = vld [vmem:[%s1647 + $0x1c8] sm:$0xff]
    %v1706 = vld [vmem:[%s1647 + $0x1d0] sm:$0xff]
    %v1707 = vld [vmem:[%s1647 + $0x1d8] sm:$0xff]
    %v1708 = vld [vmem:[%s1647 + $0x1e0] sm:$0xff]
    %v1709 = vld [vmem:[%s1647 + $0x1e8] sm:$0xff]
    %v1710 = vld [vmem:[%s1647 + $0x1f0] sm:$0xff]
    %v1711 = vld [vmem:[%s1647 + $0x1f8] sm:$0xff]
    %1712 = vmatprep.subr.mxu0 %v1709
    %1713 = vmatpush1.msra.mxu0 %v1708
    %1714 = vmatprep.subr.mxu0 %v1705
    %1715 = vmatpush1.msra.mxu0 %v1704
    %1716 = vmatprep.subr.mxu0 %v1701
    %1717 = vmatpush1.msra.mxu0 %v1700
    %1718 = vmatprep.subr.mxu0 %v1697
    %1719 = vmatpush1.msra.mxu0 %v1696
    %1720 = vmatprep.subr.mxu0 %v1693
    %1721 = vmatpush1.msra.mxu0 %v1692
    %1722 = vmatprep.subr.mxu0 %v1689
    %1723 = vmatpush1.msra.mxu0 %v1688
    %1724 = vmatprep.subr.mxu0 %v1685
    %1725 = vmatpush1.msra.mxu0 %v1684
    %1726 = vmatprep.subr.mxu0 %v1681
    %1727 = vmatpush1.msra.mxu0 %v1680
    %1728 = vmatprep.subr.mxu0 %v1677
    %1729 = vmatpush1.msra.mxu0 %v1676
    %1730 = vmatprep.subr.mxu0 %v1673
    %1731 = vmatpush1.msra.mxu0 %v1672
    %1732 = vmatprep.subr.mxu0 %v1669
    %1733 = vmatpush1.msra.mxu0 %v1668
    %1734 = vmatprep.subr.mxu0 %v1665
    %1735 = vmatpush1.msra.mxu0 %v1664
    %1736 = vmatprep.subr.mxu0 %v1661
    %1737 = vmatpush1.msra.mxu0 %v1660
    %1738 = vmatprep.subr.mxu0 %v1657
    %1739 = vmatpush1.msra.mxu0 %v1656
    %1740 = vmatprep.subr.mxu0 %v1653
    %1741 = vmatpush1.msra.mxu0 %v1652
    %1742 = vmatprep.subr.mxu0 %v1649
    %1743 = vmatpush1.msra.mxu0 %v1648
    %1744 = vmatprep.subr.mxu0 0.0
    %1745 = vmatpush2.msra.mxu0 0.0
    %1746 = vmatprep.subr.mxu0 0.0
    %1747 = vmatpush2.msra.mxu0 0.0
    %1748 = vmatprep.subr.mxu0 0.0
    %1749 = vmatpush2.msra.mxu0 0.0
    %1750 = vmatprep.subr.mxu0 0.0
    %1751 = vmatpush2.msra.mxu0 0.0
    %1752 = vmatprep.subr.mxu0 0.0
    %1753 = vmatpush2.msra.mxu0 0.0
    %1754 = vmatprep.subr.mxu0 0.0
    %1755 = vmatpush2.msra.mxu0 0.0
    %1756 = vmatprep.subr.mxu0 0.0
    %1757 = vmatpush2.msra.mxu0 0.0
    %1758 = vmatprep.subr.mxu0 0.0
    %1759 = vmatpush2.msra.mxu0 0.0
    %1760 = vmatprep.subr.mxu0 0.0
    %1761 = vmatpush2.msra.mxu0 0.0
    %1762 = vmatprep.subr.mxu0 0.0
    %1763 = vmatpush2.msra.mxu0 0.0
    %1764 = vmatprep.subr.mxu0 0.0
    %1765 = vmatpush2.msra.mxu0 0.0
    %1766 = vmatprep.subr.mxu0 0.0
    %1767 = vmatpush2.msra.mxu0 0.0
    %1768 = vmatprep.subr.mxu0 0.0
    %1769 = vmatpush2.msra.mxu0 0.0
    %1770 = vmatprep.subr.mxu0 0.0
    %1771 = vmatpush2.msra.mxu0 0.0
    %1772 = vmatprep.subr.mxu0 0.0
    %1773 = vmatpush2.msra.mxu0 0.0
    %1774 = vmatprep.subr.mxu0 0.0
    %1775 = vmatpush2.msra.mxu0 0.0
    %1776 = vmatprep.mubr.f32.mxu0 0.0
    %1777 = vmatmul.mubr.f32.gmra.mxu0 %v1635
    %v1778 = vpop.f32.mrf.mxu0
    %v1779 = vadd.f32 0.0, %v1778
    %v1780 = vpop.f32.mrf.mxu0
    %v1781 = vadd.f32 0.0, %v1780
    %1782 = vmatprep.mubr.f32.mxu0 0.0
    %1783 = vmatmul.mubr.f32.gmra.mxu0 %v1637
    %v1784 = vpop.f32.mrf.mxu0
    %v1785 = vadd.f32 0.0, %v1784
    %v1786 = vpop.f32.mrf.mxu0
    %v1787 = vadd.f32 0.0, %v1786
    %1788 = vmatprep.mubr.f32.mxu0 0.0
    %1789 = vmatmul.mubr.f32.gmra.mxu0 %v1640
    %v1790 = vpop.f32.mrf.mxu0
    %v1791 = vadd.f32 0.0, %v1790
    %v1792 = vpop.f32.mrf.mxu0
    %v1793 = vadd.f32 0.0, %v1792
    %1794 = vmatprep.mubr.f32.mxu0 0.0
    %1795 = vmatmul.mubr.f32.gmra.mxu0 %v1642
    %v1796 = vpop.f32.mrf.mxu0
    %v1797 = vadd.f32 0.0, %v1796
    %v1798 = vpop.f32.mrf.mxu0
    %v1799 = vadd.f32 0.0, %v1798
    %1800 = vdwg.mxu0
    %1801 = vmatprep.subr.mxu0 %v1711
    %1802 = vmatpush1.msra.mxu0 %v1710
    %1803 = vmatprep.subr.mxu0 %v1707
    %1804 = vmatpush1.msra.mxu0 %v1706
    %1805 = vmatprep.subr.mxu0 %v1703
    %1806 = vmatpush1.msra.mxu0 %v1702
    %1807 = vmatprep.subr.mxu0 %v1699
    %1808 = vmatpush1.msra.mxu0 %v1698
    %1809 = vmatprep.subr.mxu0 %v1695
    %1810 = vmatpush1.msra.mxu0 %v1694
    %1811 = vmatprep.subr.mxu0 %v1691
    %1812 = vmatpush1.msra.mxu0 %v1690
    %1813 = vmatprep.subr.mxu0 %v1687
    %1814 = vmatpush1.msra.mxu0 %v1686
    %1815 = vmatprep.subr.mxu0 %v1683
    %1816 = vmatpush1.msra.mxu0 %v1682
    %1817 = vmatprep.subr.mxu0 %v1679
    %1818 = vmatpush1.msra.mxu0 %v1678
    %1819 = vmatprep.subr.mxu0 %v1675
    %1820 = vmatpush1.msra.mxu0 %v1674
    %1821 = vmatprep.subr.mxu0 %v1671
    %1822 = vmatpush1.msra.mxu0 %v1670
    %1823 = vmatprep.subr.mxu0 %v1667
    %1824 = vmatpush1.msra.mxu0 %v1666
    %1825 = vmatprep.subr.mxu0 %v1663
    %1826 = vmatpush1.msra.mxu0 %v1662
    %1827 = vmatprep.subr.mxu0 %v1659
    %1828 = vmatpush1.msra.mxu0 %v1658
    %1829 = vmatprep.subr.mxu0 %v1655
    %1830 = vmatpush1.msra.mxu0 %v1654
    %1831 = vmatprep.subr.mxu0 %v1651
    %1832 = vmatpush1.msra.mxu0 %v1650
    %1833 = vmatprep.subr.mxu0 0.0
    %1834 = vmatpush2.msra.mxu0 0.0
    %1835 = vmatprep.subr.mxu0 0.0
    %1836 = vmatpush2.msra.mxu0 0.0
    %1837 = vmatprep.subr.mxu0 0.0
    %1838 = vmatpush2.msra.mxu0 0.0
    %1839 = vmatprep.subr.mxu0 0.0
    %1840 = vmatpush2.msra.mxu0 0.0
    %1841 = vmatprep.subr.mxu0 0.0
    %1842 = vmatpush2.msra.mxu0 0.0
    %1843 = vmatprep.subr.mxu0 0.0
    %1844 = vmatpush2.msra.mxu0 0.0
    %1845 = vmatprep.subr.mxu0 0.0
    %1846 = vmatpush2.msra.mxu0 0.0
    %1847 = vmatprep.subr.mxu0 0.0
    %1848 = vmatpush2.msra.mxu0 0.0
    %1849 = vmatprep.subr.mxu0 0.0
    %1850 = vmatpush2.msra.mxu0 0.0
    %1851 = vmatprep.subr.mxu0 0.0
    %1852 = vmatpush2.msra.mxu0 0.0
    %1853 = vmatprep.subr.mxu0 0.0
    %1854 = vmatpush2.msra.mxu0 0.0
    %1855 = vmatprep.subr.mxu0 0.0
    %1856 = vmatpush2.msra.mxu0 0.0
    %1857 = vmatprep.subr.mxu0 0.0
    %1858 = vmatpush2.msra.mxu0 0.0
    %1859 = vmatprep.subr.mxu0 0.0
    %1860 = vmatpush2.msra.mxu0 0.0
    %1861 = vmatprep.subr.mxu0 0.0
    %1862 = vmatpush2.msra.mxu0 0.0
    %1863 = vmatprep.subr.mxu0 0.0
    %1864 = vmatpush2.msra.mxu0 0.0
    %1865 = vmatprep.mubr.f32.mxu0 0.0
    %1866 = vmatmul.mubr.f32.gmra.mxu0 %v1635
    %v1867 = vpop.f32.mrf.mxu0
    %v1868 = vadd.f32 0.0, %v1867
    %v1869 = vpop.f32.mrf.mxu0
    %v1870 = vadd.f32 0.0, %v1869
    %1871 = vmatprep.mubr.f32.mxu0 0.0
    %1872 = vmatmul.mubr.f32.gmra.mxu0 %v1637
    %v1873 = vpop.f32.mrf.mxu0
    %v1874 = vadd.f32 0.0, %v1873
    %v1875 = vpop.f32.mrf.mxu0
    %v1876 = vadd.f32 0.0, %v1875
    %1877 = vmatprep.mubr.f32.mxu0 0.0
    %1878 = vmatmul.mubr.f32.gmra.mxu0 %v1640
    %v1879 = vpop.f32.mrf.mxu0
    %v1880 = vadd.f32 0.0, %v1879
    %v1881 = vpop.f32.mrf.mxu0
    %v1882 = vadd.f32 0.0, %v1881
    %1883 = vmatprep.mubr.f32.mxu0 0.0
    %1884 = vmatmul.mubr.f32.gmra.mxu0 %v1642
    %v1885 = vpop.f32.mrf.mxu0
    %v1886 = vadd.f32 0.0, %v1885
    %v1887 = vpop.f32.mrf.mxu0
    %v1888 = vadd.f32 0.0, %v1887
    %1889 = vdwg.mxu0
    %v1890 = vadd.f32 %v1617, %v1779
    %v1891 = vadd.f32 %v1618, %v1781
    %v1892 = vadd.f32 %v1619, %v1868
    %v1893 = vadd.f32 %v1620, %v1870
    %v1894 = vadd.f32 %v1621, %v1785
    %v1895 = vadd.f32 %v1622, %v1787
    %v1896 = vadd.f32 %v1623, %v1874
    %v1897 = vadd.f32 %v1624, %v1876
    %v1898 = vadd.f32 %v1625, %v1791
    %v1899 = vadd.f32 %v1626, %v1793
    %v1900 = vadd.f32 %v1627, %v1880
    %v1901 = vadd.f32 %v1628, %v1882
    %v1902 = vadd.f32 %v1629, %v1797
    %v1903 = vadd.f32 %v1630, %v1799
    %v1904 = vadd.f32 %v1631, %v1886
    %v1905 = vadd.f32 %v1632, %v1888
    %vm1906 = vcmask 1041408
    %v1907 = vrot.slane %v303, 6
    %v1908 = vrot.slane %v293, 6
    %v1909 = vsel %vm1906, %v1907, %v1908
    %v1910 = vrot.slane %v305, 6
    %v1911 = vsel %vm1906, %v1908, %v1910
    %v1912 = vrot.slane %v304, 6
    %v1913 = vrot.slane %v296, 6
    %v1914 = vsel %vm1906, %v1912, %v1913
    %v1915 = vrot.slane %v306, 6
    %v1916 = vsel %vm1906, %v1913, %v1915
    %s1921 = scalar_lea.vmem [#allocation10], 3072
    %v1922 = vld [vmem:[%s1921] sm:$0xff]
    %v1923 = vld [vmem:[%s1921 + $0x8] sm:$0xff]
    %v1924 = vld [vmem:[%s1921 + $0x10] sm:$0xff]
    %v1925 = vld [vmem:[%s1921 + $0x18] sm:$0xff]
    %v1926 = vld [vmem:[%s1921 + $0x20] sm:$0xff]
    %v1927 = vld [vmem:[%s1921 + $0x28] sm:$0xff]
    %v1928 = vld [vmem:[%s1921 + $0x30] sm:$0xff]
    %v1929 = vld [vmem:[%s1921 + $0x38] sm:$0xff]
    %v1930 = vld [vmem:[%s1921 + $0x40] sm:$0xff]
    %v1931 = vld [vmem:[%s1921 + $0x48] sm:$0xff]
    %v1932 = vld [vmem:[%s1921 + $0x50] sm:$0xff]
    %v1933 = vld [vmem:[%s1921 + $0x58] sm:$0xff]
    %v1934 = vld [vmem:[%s1921 + $0x60] sm:$0xff]
    %v1935 = vld [vmem:[%s1921 + $0x68] sm:$0xff]
    %v1936 = vld [vmem:[%s1921 + $0x70] sm:$0xff]
    %v1937 = vld [vmem:[%s1921 + $0x78] sm:$0xff]
    %v1938 = vld [vmem:[%s1921 + $0x80] sm:$0xff]
    %v1939 = vld [vmem:[%s1921 + $0x88] sm:$0xff]
    %v1940 = vld [vmem:[%s1921 + $0x90] sm:$0xff]
    %v1941 = vld [vmem:[%s1921 + $0x98] sm:$0xff]
    %v1942 = vld [vmem:[%s1921 + $0xa0] sm:$0xff]
    %v1943 = vld [vmem:[%s1921 + $0xa8] sm:$0xff]
    %v1944 = vld [vmem:[%s1921 + $0xb0] sm:$0xff]
    %v1945 = vld [vmem:[%s1921 + $0xb8] sm:$0xff]
    %v1946 = vld [vmem:[%s1921 + $0xc0] sm:$0xff]
    %v1947 = vld [vmem:[%s1921 + $0xc8] sm:$0xff]
    %v1948 = vld [vmem:[%s1921 + $0xd0] sm:$0xff]
    %v1949 = vld [vmem:[%s1921 + $0xd8] sm:$0xff]
    %v1950 = vld [vmem:[%s1921 + $0xe0] sm:$0xff]
    %v1951 = vld [vmem:[%s1921 + $0xe8] sm:$0xff]
    %v1952 = vld [vmem:[%s1921 + $0xf0] sm:$0xff]
    %v1953 = vld [vmem:[%s1921 + $0xf8] sm:$0xff]
    %v1954 = vld [vmem:[%s1921 + $0x100] sm:$0xff]
    %v1955 = vld [vmem:[%s1921 + $0x108] sm:$0xff]
    %v1956 = vld [vmem:[%s1921 + $0x110] sm:$0xff]
    %v1957 = vld [vmem:[%s1921 + $0x118] sm:$0xff]
    %v1958 = vld [vmem:[%s1921 + $0x120] sm:$0xff]
    %v1959 = vld [vmem:[%s1921 + $0x128] sm:$0xff]
    %v1960 = vld [vmem:[%s1921 + $0x130] sm:$0xff]
    %v1961 = vld [vmem:[%s1921 + $0x138] sm:$0xff]
    %v1962 = vld [vmem:[%s1921 + $0x140] sm:$0xff]
    %v1963 = vld [vmem:[%s1921 + $0x148] sm:$0xff]
    %v1964 = vld [vmem:[%s1921 + $0x150] sm:$0xff]
    %v1965 = vld [vmem:[%s1921 + $0x158] sm:$0xff]
    %v1966 = vld [vmem:[%s1921 + $0x160] sm:$0xff]
    %v1967 = vld [vmem:[%s1921 + $0x168] sm:$0xff]
    %v1968 = vld [vmem:[%s1921 + $0x170] sm:$0xff]
    %v1969 = vld [vmem:[%s1921 + $0x178] sm:$0xff]
    %v1970 = vld [vmem:[%s1921 + $0x180] sm:$0xff]
    %v1971 = vld [vmem:[%s1921 + $0x188] sm:$0xff]
    %v1972 = vld [vmem:[%s1921 + $0x190] sm:$0xff]
    %v1973 = vld [vmem:[%s1921 + $0x198] sm:$0xff]
    %v1974 = vld [vmem:[%s1921 + $0x1a0] sm:$0xff]
    %v1975 = vld [vmem:[%s1921 + $0x1a8] sm:$0xff]
    %v1976 = vld [vmem:[%s1921 + $0x1b0] sm:$0xff]
    %v1977 = vld [vmem:[%s1921 + $0x1b8] sm:$0xff]
    %v1978 = vld [vmem:[%s1921 + $0x1c0] sm:$0xff]
    %v1979 = vld [vmem:[%s1921 + $0x1c8] sm:$0xff]
    %v1980 = vld [vmem:[%s1921 + $0x1d0] sm:$0xff]
    %v1981 = vld [vmem:[%s1921 + $0x1d8] sm:$0xff]
    %v1982 = vld [vmem:[%s1921 + $0x1e0] sm:$0xff]
    %v1983 = vld [vmem:[%s1921 + $0x1e8] sm:$0xff]
    %v1984 = vld [vmem:[%s1921 + $0x1f0] sm:$0xff]
    %v1985 = vld [vmem:[%s1921 + $0x1f8] sm:$0xff]
    %1986 = vmatprep.subr.mxu0 %v1983
    %1987 = vmatpush1.msra.mxu0 %v1982
    %1988 = vmatprep.subr.mxu0 %v1979
    %1989 = vmatpush1.msra.mxu0 %v1978
    %1990 = vmatprep.subr.mxu0 %v1975
    %1991 = vmatpush1.msra.mxu0 %v1974
    %1992 = vmatprep.subr.mxu0 %v1971
    %1993 = vmatpush1.msra.mxu0 %v1970
    %1994 = vmatprep.subr.mxu0 %v1967
    %1995 = vmatpush1.msra.mxu0 %v1966
    %1996 = vmatprep.subr.mxu0 %v1963
    %1997 = vmatpush1.msra.mxu0 %v1962
    %1998 = vmatprep.subr.mxu0 %v1959
    %1999 = vmatpush1.msra.mxu0 %v1958
    %2000 = vmatprep.subr.mxu0 %v1955
    %2001 = vmatpush1.msra.mxu0 %v1954
    %2002 = vmatprep.subr.mxu0 %v1951
    %2003 = vmatpush1.msra.mxu0 %v1950
    %2004 = vmatprep.subr.mxu0 %v1947
    %2005 = vmatpush1.msra.mxu0 %v1946
    %2006 = vmatprep.subr.mxu0 %v1943
    %2007 = vmatpush1.msra.mxu0 %v1942
    %2008 = vmatprep.subr.mxu0 %v1939
    %2009 = vmatpush1.msra.mxu0 %v1938
    %2010 = vmatprep.subr.mxu0 %v1935
    %2011 = vmatpush1.msra.mxu0 %v1934
    %2012 = vmatprep.subr.mxu0 %v1931
    %2013 = vmatpush1.msra.mxu0 %v1930
    %2014 = vmatprep.subr.mxu0 %v1927
    %2015 = vmatpush1.msra.mxu0 %v1926
    %2016 = vmatprep.subr.mxu0 %v1923
    %2017 = vmatpush1.msra.mxu0 %v1922
    %2018 = vmatprep.subr.mxu0 0.0
    %2019 = vmatpush2.msra.mxu0 0.0
    %2020 = vmatprep.subr.mxu0 0.0
    %2021 = vmatpush2.msra.mxu0 0.0
    %2022 = vmatprep.subr.mxu0 0.0
    %2023 = vmatpush2.msra.mxu0 0.0
    %2024 = vmatprep.subr.mxu0 0.0
    %2025 = vmatpush2.msra.mxu0 0.0
    %2026 = vmatprep.subr.mxu0 0.0
    %2027 = vmatpush2.msra.mxu0 0.0
    %2028 = vmatprep.subr.mxu0 0.0
    %2029 = vmatpush2.msra.mxu0 0.0
    %2030 = vmatprep.subr.mxu0 0.0
    %2031 = vmatpush2.msra.mxu0 0.0
    %2032 = vmatprep.subr.mxu0 0.0
    %2033 = vmatpush2.msra.mxu0 0.0
    %2034 = vmatprep.subr.mxu0 0.0
    %2035 = vmatpush2.msra.mxu0 0.0
    %2036 = vmatprep.subr.mxu0 0.0
    %2037 = vmatpush2.msra.mxu0 0.0
    %2038 = vmatprep.subr.mxu0 0.0
    %2039 = vmatpush2.msra.mxu0 0.0
    %2040 = vmatprep.subr.mxu0 0.0
    %2041 = vmatpush2.msra.mxu0 0.0
    %2042 = vmatprep.subr.mxu0 0.0
    %2043 = vmatpush2.msra.mxu0 0.0
    %2044 = vmatprep.subr.mxu0 0.0
    %2045 = vmatpush2.msra.mxu0 0.0
    %2046 = vmatprep.subr.mxu0 0.0
    %2047 = vmatpush2.msra.mxu0 0.0
    %2048 = vmatprep.subr.mxu0 0.0
    %2049 = vmatpush2.msra.mxu0 0.0
    %2050 = vmatprep.mubr.f32.mxu0 0.0
    %2051 = vmatmul.mubr.f32.gmra.mxu0 %v1909
    %v2052 = vpop.f32.mrf.mxu0
    %v2053 = vadd.f32 0.0, %v2052
    %v2054 = vpop.f32.mrf.mxu0
    %v2055 = vadd.f32 0.0, %v2054
    %2056 = vmatprep.mubr.f32.mxu0 0.0
    %2057 = vmatmul.mubr.f32.gmra.mxu0 %v1911
    %v2058 = vpop.f32.mrf.mxu0
    %v2059 = vadd.f32 0.0, %v2058
    %v2060 = vpop.f32.mrf.mxu0
    %v2061 = vadd.f32 0.0, %v2060
    %2062 = vmatprep.mubr.f32.mxu0 0.0
    %2063 = vmatmul.mubr.f32.gmra.mxu0 %v1914
    %v2064 = vpop.f32.mrf.mxu0
    %v2065 = vadd.f32 0.0, %v2064
    %v2066 = vpop.f32.mrf.mxu0
    %v2067 = vadd.f32 0.0, %v2066
    %2068 = vmatprep.mubr.f32.mxu0 0.0
    %2069 = vmatmul.mubr.f32.gmra.mxu0 %v1916
    %v2070 = vpop.f32.mrf.mxu0
    %v2071 = vadd.f32 0.0, %v2070
    %v2072 = vpop.f32.mrf.mxu0
    %v2073 = vadd.f32 0.0, %v2072
    %2074 = vdwg.mxu0
    %2075 = vmatprep.subr.mxu0 %v1985
    %2076 = vmatpush1.msra.mxu0 %v1984
    %2077 = vmatprep.subr.mxu0 %v1981
    %2078 = vmatpush1.msra.mxu0 %v1980
    %2079 = vmatprep.subr.mxu0 %v1977
    %2080 = vmatpush1.msra.mxu0 %v1976
    %2081 = vmatprep.subr.mxu0 %v1973
    %2082 = vmatpush1.msra.mxu0 %v1972
    %2083 = vmatprep.subr.mxu0 %v1969
    %2084 = vmatpush1.msra.mxu0 %v1968
    %2085 = vmatprep.subr.mxu0 %v1965
    %2086 = vmatpush1.msra.mxu0 %v1964
    %2087 = vmatprep.subr.mxu0 %v1961
    %2088 = vmatpush1.msra.mxu0 %v1960
    %2089 = vmatprep.subr.mxu0 %v1957
    %2090 = vmatpush1.msra.mxu0 %v1956
    %2091 = vmatprep.subr.mxu0 %v1953
    %2092 = vmatpush1.msra.mxu0 %v1952
    %2093 = vmatprep.subr.mxu0 %v1949
    %2094 = vmatpush1.msra.mxu0 %v1948
    %2095 = vmatprep.subr.mxu0 %v1945
    %2096 = vmatpush1.msra.mxu0 %v1944
    %2097 = vmatprep.subr.mxu0 %v1941
    %2098 = vmatpush1.msra.mxu0 %v1940
    %2099 = vmatprep.subr.mxu0 %v1937
    %2100 = vmatpush1.msra.mxu0 %v1936
    %2101 = vmatprep.subr.mxu0 %v1933
    %2102 = vmatpush1.msra.mxu0 %v1932
    %2103 = vmatprep.subr.mxu0 %v1929
    %2104 = vmatpush1.msra.mxu0 %v1928
    %2105 = vmatprep.subr.mxu0 %v1925
    %2106 = vmatpush1.msra.mxu0 %v1924
    %2107 = vmatprep.subr.mxu0 0.0
    %2108 = vmatpush2.msra.mxu0 0.0
    %2109 = vmatprep.subr.mxu0 0.0
    %2110 = vmatpush2.msra.mxu0 0.0
    %2111 = vmatprep.subr.mxu0 0.0
    %2112 = vmatpush2.msra.mxu0 0.0
    %2113 = vmatprep.subr.mxu0 0.0
    %2114 = vmatpush2.msra.mxu0 0.0
    %2115 = vmatprep.subr.mxu0 0.0
    %2116 = vmatpush2.msra.mxu0 0.0
    %2117 = vmatprep.subr.mxu0 0.0
    %2118 = vmatpush2.msra.mxu0 0.0
    %2119 = vmatprep.subr.mxu0 0.0
    %2120 = vmatpush2.msra.mxu0 0.0
    %2121 = vmatprep.subr.mxu0 0.0
    %2122 = vmatpush2.msra.mxu0 0.0
    %2123 = vmatprep.subr.mxu0 0.0
    %2124 = vmatpush2.msra.mxu0 0.0
    %2125 = vmatprep.subr.mxu0 0.0
    %2126 = vmatpush2.msra.mxu0 0.0
    %2127 = vmatprep.subr.mxu0 0.0
    %2128 = vmatpush2.msra.mxu0 0.0
    %2129 = vmatprep.subr.mxu0 0.0
    %2130 = vmatpush2.msra.mxu0 0.0
    %2131 = vmatprep.subr.mxu0 0.0
    %2132 = vmatpush2.msra.mxu0 0.0
    %2133 = vmatprep.subr.mxu0 0.0
    %2134 = vmatpush2.msra.mxu0 0.0
    %2135 = vmatprep.subr.mxu0 0.0
    %2136 = vmatpush2.msra.mxu0 0.0
    %2137 = vmatprep.subr.mxu0 0.0
    %2138 = vmatpush2.msra.mxu0 0.0
    %2139 = vmatprep.mubr.f32.mxu0 0.0
    %2140 = vmatmul.mubr.f32.gmra.mxu0 %v1909
    %v2141 = vpop.f32.mrf.mxu0
    %v2142 = vadd.f32 0.0, %v2141
    %v2143 = vpop.f32.mrf.mxu0
    %v2144 = vadd.f32 0.0, %v2143
    %2145 = vmatprep.mubr.f32.mxu0 0.0
    %2146 = vmatmul.mubr.f32.gmra.mxu0 %v1911
    %v2147 = vpop.f32.mrf.mxu0
    %v2148 = vadd.f32 0.0, %v2147
    %v2149 = vpop.f32.mrf.mxu0
    %v2150 = vadd.f32 0.0, %v2149
    %2151 = vmatprep.mubr.f32.mxu0 0.0
    %2152 = vmatmul.mubr.f32.gmra.mxu0 %v1914
    %v2153 = vpop.f32.mrf.mxu0
    %v2154 = vadd.f32 0.0, %v2153
    %v2155 = vpop.f32.mrf.mxu0
    %v2156 = vadd.f32 0.0, %v2155
    %2157 = vmatprep.mubr.f32.mxu0 0.0
    %2158 = vmatmul.mubr.f32.gmra.mxu0 %v1916
    %v2159 = vpop.f32.mrf.mxu0
    %v2160 = vadd.f32 0.0, %v2159
    %v2161 = vpop.f32.mrf.mxu0
    %v2162 = vadd.f32 0.0, %v2161
    %2163 = vdwg.mxu0
    %v2164 = vadd.f32 %v1890, %v2053
    %v2165 = vadd.f32 %v1891, %v2055
    %v2166 = vadd.f32 %v1892, %v2142
    %v2167 = vadd.f32 %v1893, %v2144
    %v2168 = vadd.f32 %v1894, %v2059
    %v2169 = vadd.f32 %v1895, %v2061
    %v2170 = vadd.f32 %v1896, %v2148
    %v2171 = vadd.f32 %v1897, %v2150
    %v2172 = vadd.f32 %v1898, %v2065
    %v2173 = vadd.f32 %v1899, %v2067
    %v2174 = vadd.f32 %v1900, %v2154
    %v2175 = vadd.f32 %v1901, %v2156
    %v2176 = vadd.f32 %v1902, %v2071
    %v2177 = vadd.f32 %v1903, %v2073
    %v2178 = vadd.f32 %v1904, %v2160
    %v2179 = vadd.f32 %v1905, %v2162
    %v2180 = vld [vmem:[#allocation12] sm:$0xf]
    %v2182 = vlaneseq
    %v2183 = vshrl.u32 %v2182, 7
    %v2184 = vsub.s32 0, %v2183
    %v2185 = vrot.slane %v2180, %v2184
    %v2186 = vlaneseq
    %v2187 = vshrl.u32 %v2186, 7
    %v2188 = vsub.s32 1, %v2187
    %v2189 = vrot.slane %v2180, %v2188
    %v2190 = vlaneseq
    %v2191 = vshrl.u32 %v2190, 7
    %v2192 = vsub.s32 2, %v2191
    %v2193 = vrot.slane %v2180, %v2192
    %v2194 = vlaneseq
    %v2195 = vshrl.u32 %v2194, 7
    %v2196 = vsub.s32 3, %v2195
    %v2197 = vrot.slane %v2180, %v2196
    %v2202 = vadd.f32 %v2164, %v2185
    %v2203 = vadd.f32 %v2165, %v2189
    %v2204 = vadd.f32 %v2166, %v2193
    %v2205 = vadd.f32 %v2167, %v2197
    %v2206 = vadd.f32 %v2168, %v2185
    %v2207 = vadd.f32 %v2169, %v2189
    %v2208 = vadd.f32 %v2170, %v2193
    %v2209 = vadd.f32 %v2171, %v2197
    %v2210 = vadd.f32 %v2172, %v2185
    %v2211 = vadd.f32 %v2173, %v2189
    %v2212 = vadd.f32 %v2174, %v2193
    %v2213 = vadd.f32 %v2175, %v2197
    %v2214 = vadd.f32 %v2176, %v2185
    %v2215 = vadd.f32 %v2177, %v2189
    %v2216 = vadd.f32 %v2178, %v2193
    %v2217 = vadd.f32 %v2179, %v2197
    %v2218 = vadd.f32 %v2202, %v2206
    %v2219 = vrot.slane %v2218, 4
    %v2220 = vadd.f32 %v2218, %v2219
    %v2221 = vrot.slane %v2220, 2
    %v2222 = vadd.f32 %v2220, %v2221
    %v2223 = vrot.slane %v2222, 1
    %v2224 = vadd.f32 %v2222, %v2223
    %v2225 = vadd.f32 %v2203, %v2207
    %v2226 = vrot.slane %v2225, 4
    %v2227 = vadd.f32 %v2225, %v2226
    %v2228 = vrot.slane %v2227, 2
    %v2229 = vadd.f32 %v2227, %v2228
    %v2230 = vrot.slane %v2229, 1
    %v2231 = vadd.f32 %v2229, %v2230
    %v2232 = vadd.f32 %v2204, %v2208
    %v2233 = vrot.slane %v2232, 4
    %v2234 = vadd.f32 %v2232, %v2233
    %v2235 = vrot.slane %v2234, 2
    %v2236 = vadd.f32 %v2234, %v2235
    %v2237 = vrot.slane %v2236, 1
    %v2238 = vadd.f32 %v2236, %v2237
    %v2239 = vadd.f32 %v2205, %v2209
    %v2240 = vrot.slane %v2239, 4
    %v2241 = vadd.f32 %v2239, %v2240
    %v2242 = vrot.slane %v2241, 2
    %v2243 = vadd.f32 %v2241, %v2242
    %v2244 = vrot.slane %v2243, 1
    %v2245 = vadd.f32 %v2243, %v2244
    %v2246 = vadd.f32 %v2210, %v2214
    %v2247 = vrot.slane %v2246, 4
    %v2248 = vadd.f32 %v2246, %v2247
    %v2249 = vrot.slane %v2248, 2
    %v2250 = vadd.f32 %v2248, %v2249
    %v2251 = vrot.slane %v2250, 1
    %v2252 = vadd.f32 %v2250, %v2251
    %v2253 = vadd.f32 %v2211, %v2215
    %v2254 = vrot.slane %v2253, 4
    %v2255 = vadd.f32 %v2253, %v2254
    %v2256 = vrot.slane %v2255, 2
    %v2257 = vadd.f32 %v2255, %v2256
    %v2258 = vrot.slane %v2257, 1
    %v2259 = vadd.f32 %v2257, %v2258
    %v2260 = vadd.f32 %v2212, %v2216
    %v2261 = vrot.slane %v2260, 4
    %v2262 = vadd.f32 %v2260, %v2261
    %v2263 = vrot.slane %v2262, 2
    %v2264 = vadd.f32 %v2262, %v2263
    %v2265 = vrot.slane %v2264, 1
    %v2266 = vadd.f32 %v2264, %v2265
    %v2267 = vadd.f32 %v2213, %v2217
    %v2268 = vrot.slane %v2267, 4
    %v2269 = vadd.f32 %v2267, %v2268
    %v2270 = vrot.slane %v2269, 2
    %v2271 = vadd.f32 %v2269, %v2270
    %v2272 = vrot.slane %v2271, 1
    %v2273 = vadd.f32 %v2271, %v2272
    %v2274 = vmax.f32 %v2202, %v2206
    %v2275 = vrot.slane %v2274, 4
    %v2276 = vmax.f32 %v2274, %v2275
    %v2277 = vrot.slane %v2276, 2
    %v2278 = vmax.f32 %v2276, %v2277
    %v2279 = vrot.slane %v2278, 1
    %v2280 = vmax.f32 %v2278, %v2279
    %v2281 = vmax.f32 %v2203, %v2207
    %v2282 = vrot.slane %v2281, 4
    %v2283 = vmax.f32 %v2281, %v2282
    %v2284 = vrot.slane %v2283, 2
    %v2285 = vmax.f32 %v2283, %v2284
    %v2286 = vrot.slane %v2285, 1
    %v2287 = vmax.f32 %v2285, %v2286
    %v2288 = vmax.f32 %v2204, %v2208
    %v2289 = vrot.slane %v2288, 4
    %v2290 = vmax.f32 %v2288, %v2289
    %v2291 = vrot.slane %v2290, 2
    %v2292 = vmax.f32 %v2290, %v2291
    %v2293 = vrot.slane %v2292, 1
    %v2294 = vmax.f32 %v2292, %v2293
    %v2295 = vmax.f32 %v2205, %v2209
    %v2296 = vrot.slane %v2295, 4
    %v2297 = vmax.f32 %v2295, %v2296
    %v2298 = vrot.slane %v2297, 2
    %v2299 = vmax.f32 %v2297, %v2298
    %v2300 = vrot.slane %v2299, 1
    %v2301 = vmax.f32 %v2299, %v2300
    %v2302 = vmax.f32 %v2210, %v2214
    %v2303 = vrot.slane %v2302, 4
    %v2304 = vmax.f32 %v2302, %v2303
    %v2305 = vrot.slane %v2304, 2
    %v2306 = vmax.f32 %v2304, %v2305
    %v2307 = vrot.slane %v2306, 1
    %v2308 = vmax.f32 %v2306, %v2307
    %v2309 = vmax.f32 %v2211, %v2215
    %v2310 = vrot.slane %v2309, 4
    %v2311 = vmax.f32 %v2309, %v2310
    %v2312 = vrot.slane %v2311, 2
    %v2313 = vmax.f32 %v2311, %v2312
    %v2314 = vrot.slane %v2313, 1
    %v2315 = vmax.f32 %v2313, %v2314
    %v2316 = vmax.f32 %v2212, %v2216
    %v2317 = vrot.slane %v2316, 4
    %v2318 = vmax.f32 %v2316, %v2317
    %v2319 = vrot.slane %v2318, 2
    %v2320 = vmax.f32 %v2318, %v2319
    %v2321 = vrot.slane %v2320, 1
    %v2322 = vmax.f32 %v2320, %v2321
    %v2323 = vmax.f32 %v2213, %v2217
    %v2324 = vrot.slane %v2323, 4
    %v2325 = vmax.f32 %v2323, %v2324
    %v2326 = vrot.slane %v2325, 2
    %v2327 = vmax.f32 %v2325, %v2326
    %v2328 = vrot.slane %v2327, 1
    %v2329 = vmax.f32 %v2327, %v2328
    %2332 = vrot.lane.b32.xlu0 %v2224, 96
    %v2333 = vpop.permute.xlu0 %2332
    %2334 = vrot.lane.b32.xlu0 %v2252, 96
    %v2335 = vpop.permute.xlu0 %2334
    %2336 = vrot.lane.b32.xlu0 %v2224, 64
    %v2337 = vpop.permute.xlu0 %2336
    %2338 = vrot.lane.b32.xlu0 %v2252, 64
    %v2339 = vpop.permute.xlu0 %2338
    %2340 = vrot.lane.b32.xlu0 %v2224, 32
    %v2341 = vpop.permute.xlu0 %2340
    %2342 = vrot.lane.b32.xlu0 %v2252, 32
    %v2343 = vpop.permute.xlu0 %2342
    %2346 = vrot.lane.b32.xlu0 %v2231, 96
    %v2347 = vpop.permute.xlu0 %2346
    %2348 = vrot.lane.b32.xlu0 %v2259, 96
    %v2349 = vpop.permute.xlu0 %2348
    %2350 = vrot.lane.b32.xlu0 %v2231, 64
    %v2351 = vpop.permute.xlu0 %2350
    %2352 = vrot.lane.b32.xlu0 %v2259, 64
    %v2353 = vpop.permute.xlu0 %2352
    %2354 = vrot.lane.b32.xlu0 %v2231, 32
    %v2355 = vpop.permute.xlu0 %2354
    %2356 = vrot.lane.b32.xlu0 %v2259, 32
    %v2357 = vpop.permute.xlu0 %2356
    %2360 = vrot.lane.b32.xlu0 %v2238, 96
    %v2361 = vpop.permute.xlu0 %2360
    %2362 = vrot.lane.b32.xlu0 %v2266, 96
    %v2363 = vpop.permute.xlu0 %2362
    %2364 = vrot.lane.b32.xlu0 %v2238, 64
    %v2365 = vpop.permute.xlu0 %2364
    %2366 = vrot.lane.b32.xlu0 %v2266, 64
    %v2367 = vpop.permute.xlu0 %2366
    %2368 = vrot.lane.b32.xlu0 %v2238, 32
    %v2369 = vpop.permute.xlu0 %2368
    %2370 = vrot.lane.b32.xlu0 %v2266, 32
    %v2371 = vpop.permute.xlu0 %2370
    %2374 = vrot.lane.b32.xlu0 %v2245, 96
    %v2375 = vpop.permute.xlu0 %2374
    %2376 = vrot.lane.b32.xlu0 %v2273, 96
    %v2377 = vpop.permute.xlu0 %2376
    %2378 = vrot.lane.b32.xlu0 %v2245, 64
    %v2379 = vpop.permute.xlu0 %2378
    %2380 = vrot.lane.b32.xlu0 %v2273, 64
    %v2381 = vpop.permute.xlu0 %2380
    %2382 = vrot.lane.b32.xlu0 %v2245, 32
    %v2383 = vpop.permute.xlu0 %2382
    %2384 = vrot.lane.b32.xlu0 %v2273, 32
    %v2385 = vpop.permute.xlu0 %2384
    %v2386 = vrot.slane %v2252, 7
    %vm2387 = vcmask 1041409
    %v2388 = vsel %vm2387, %v2386, %v2224
    %v2389 = vrot.slane %v2335, 7
    %v2390 = vsel %vm2387, %v2389, %v2333
    %v2391 = vrot.slane %v2339, 7
    %v2392 = vsel %vm2387, %v2391, %v2337
    %v2393 = vrot.slane %v2343, 7
    %v2394 = vsel %vm2387, %v2393, %v2341
    %v2395 = vrot.slane %v2259, 7
    %v2396 = vsel %vm2387, %v2395, %v2231
    %v2397 = vrot.slane %v2349, 7
    %v2398 = vsel %vm2387, %v2397, %v2347
    %v2399 = vrot.slane %v2353, 7
    %v2400 = vsel %vm2387, %v2399, %v2351
    %v2401 = vrot.slane %v2357, 7
    %v2402 = vsel %vm2387, %v2401, %v2355
    %v2403 = vrot.slane %v2266, 7
    %v2404 = vsel %vm2387, %v2403, %v2238
    %v2405 = vrot.slane %v2363, 7
    %v2406 = vsel %vm2387, %v2405, %v2361
    %v2407 = vrot.slane %v2367, 7
    %v2408 = vsel %vm2387, %v2407, %v2365
    %v2409 = vrot.slane %v2371, 7
    %v2410 = vsel %vm2387, %v2409, %v2369
    %v2411 = vrot.slane %v2273, 7
    %v2412 = vsel %vm2387, %v2411, %v2245
    %v2413 = vrot.slane %v2377, 7
    %v2414 = vsel %vm2387, %v2413, %v2375
    %v2415 = vrot.slane %v2381, 7
    %v2416 = vsel %vm2387, %v2415, %v2379
    %v2417 = vrot.slane %v2385, 7
    %v2418 = vsel %vm2387, %v2417, %v2383
    %v2435 = vcombine.low %v2388, %v2392
    %v2437 = vunpack.c.l.s4 1983009808
    %v2438 = vunpack.c.0.s8 %v2437
    %v2439 = vlaneseq
    %v2440 = vshrl.u32 %v2439, 7
    %v2441 = vsub.s32 %v2438, %v2440
    %v2442 = vrot.slane %v2435, %v2441
    %v2443 = vcombine.low %v2390, %v2394
    %v2445 = vunpack.c.l.s4 1983009808
    %v2446 = vunpack.c.0.s8 %v2445
    %v2447 = vlaneseq
    %v2448 = vshrl.u32 %v2447, 7
    %v2449 = vsub.s32 %v2446, %v2448
    %v2450 = vrot.slane %v2443, %v2449
    %v2451 = vcombine.low %v2396, %v2400
    %v2453 = vunpack.c.l.s4 1983009808
    %v2454 = vunpack.c.0.s8 %v2453
    %v2455 = vlaneseq
    %v2456 = vshrl.u32 %v2455, 7
    %v2457 = vsub.s32 %v2454, %v2456
    %v2458 = vrot.slane %v2451, %v2457
    %v2459 = vcombine.low %v2398, %v2402
    %v2461 = vunpack.c.l.s4 1983009808
    %v2462 = vunpack.c.0.s8 %v2461
    %v2463 = vlaneseq
    %v2464 = vshrl.u32 %v2463, 7
    %v2465 = vsub.s32 %v2462, %v2464
    %v2466 = vrot.slane %v2459, %v2465
    %v2467 = vcombine.low %v2442, %v2450
    %v2469 = vunpack.c.l.s4 1934713408
    %v2470 = vunpack.c.0.s8 %v2469
    %v2471 = vlaneseq
    %v2472 = vshrl.u32 %v2471, 7
    %v2473 = vsub.s32 %v2470, %v2472
    %v2474 = vrot.slane %v2467, %v2473
    %v2475 = vcombine.low %v2458, %v2466
    %v2477 = vunpack.c.l.s4 1934713408
    %v2478 = vunpack.c.0.s8 %v2477
    %v2479 = vlaneseq
    %v2480 = vshrl.u32 %v2479, 7
    %v2481 = vsub.s32 %v2478, %v2480
    %v2482 = vrot.slane %v2475, %v2481
    %v2483 = vcombine.low %v2474, %v2482
    %v2484 = vcombine.high %v2474, %v2482
    %v2485 = vcombine.low %v2404, %v2408
    %v2487 = vunpack.c.l.s4 1983009808
    %v2488 = vunpack.c.0.s8 %v2487
    %v2489 = vlaneseq
    %v2490 = vshrl.u32 %v2489, 7
    %v2491 = vsub.s32 %v2488, %v2490
    %v2492 = vrot.slane %v2485, %v2491
    %v2493 = vcombine.low %v2406, %v2410
    %v2495 = vunpack.c.l.s4 1983009808
    %v2496 = vunpack.c.0.s8 %v2495
    %v2497 = vlaneseq
    %v2498 = vshrl.u32 %v2497, 7
    %v2499 = vsub.s32 %v2496, %v2498
    %v2500 = vrot.slane %v2493, %v2499
    %v2501 = vcombine.low %v2412, %v2416
    %v2503 = vunpack.c.l.s4 1983009808
    %v2504 = vunpack.c.0.s8 %v2503
    %v2505 = vlaneseq
    %v2506 = vshrl.u32 %v2505, 7
    %v2507 = vsub.s32 %v2504, %v2506
    %v2508 = vrot.slane %v2501, %v2507
    %v2509 = vcombine.low %v2414, %v2418
    %v2511 = vunpack.c.l.s4 1983009808
    %v2512 = vunpack.c.0.s8 %v2511
    %v2513 = vlaneseq
    %v2514 = vshrl.u32 %v2513, 7
    %v2515 = vsub.s32 %v2512, %v2514
    %v2516 = vrot.slane %v2509, %v2515
    %v2517 = vcombine.low %v2492, %v2500
    %v2519 = vunpack.c.l.s4 1934713408
    %v2520 = vunpack.c.0.s8 %v2519
    %v2521 = vlaneseq
    %v2522 = vshrl.u32 %v2521, 7
    %v2523 = vsub.s32 %v2520, %v2522
    %v2524 = vrot.slane %v2517, %v2523
    %v2525 = vcombine.low %v2508, %v2516
    %v2527 = vunpack.c.l.s4 1934713408
    %v2528 = vunpack.c.0.s8 %v2527
    %v2529 = vlaneseq
    %v2530 = vshrl.u32 %v2529, 7
    %v2531 = vsub.s32 %v2528, %v2530
    %v2532 = vrot.slane %v2525, %v2531
    %v2533 = vcombine.low %v2524, %v2532
    %v2534 = vcombine.high %v2524, %v2532
    %vm2535 = vcmask 261120
    %v2536 = vsel %vm2535, %v2483, 0.0
    %v2537 = vsel %vm2535, %v2533, 0.0
    %v2538 = vadd.f32 %v2536, %v2537
    %v2539 = vrot.slane %v2538, 4
    %v2540 = vadd.f32 %v2538, %v2539
    %v2541 = vrot.slane %v2540, 2
    %v2542 = vadd.f32 %v2540, %v2541
    %v2543 = vrot.slane %v2542, 1
    %v2544 = vadd.f32 %v2542, %v2543
    %v2545 = vsel %vm2535, %v2484, 0.0
    %v2546 = vsel %vm2535, %v2534, 0.0
    %v2547 = vadd.f32 %v2545, %v2546
    %v2548 = vrot.slane %v2547, 4
    %v2549 = vadd.f32 %v2547, %v2548
    %v2550 = vrot.slane %v2549, 2
    %v2551 = vadd.f32 %v2549, %v2550
    %v2552 = vrot.slane %v2551, 1
    %v2553 = vadd.f32 %v2551, %v2552
    %v2554 = vmul.f32 %v2544, 0.00390625
    %v2555 = vmul.f32 %v2553, 0.00390625
    %2558 = vrot.lane.b32.xlu0 %v2280, 96
    %v2559 = vpop.permute.xlu0 %2558
    %2560 = vrot.lane.b32.xlu0 %v2308, 96
    %v2561 = vpop.permute.xlu0 %2560
    %2562 = vrot.lane.b32.xlu0 %v2280, 64
    %v2563 = vpop.permute.xlu0 %2562
    %2564 = vrot.lane.b32.xlu0 %v2308, 64
    %v2565 = vpop.permute.xlu0 %2564
    %2566 = vrot.lane.b32.xlu0 %v2280, 32
    %v2567 = vpop.permute.xlu0 %2566
    %2568 = vrot.lane.b32.xlu0 %v2308, 32
    %v2569 = vpop.permute.xlu0 %2568
    %2572 = vrot.lane.b32.xlu0 %v2287, 96
    %v2573 = vpop.permute.xlu0 %2572
    %2574 = vrot.lane.b32.xlu0 %v2315, 96
    %v2575 = vpop.permute.xlu0 %2574
    %2576 = vrot.lane.b32.xlu0 %v2287, 64
    %v2577 = vpop.permute.xlu0 %2576
    %2578 = vrot.lane.b32.xlu0 %v2315, 64
    %v2579 = vpop.permute.xlu0 %2578
    %2580 = vrot.lane.b32.xlu0 %v2287, 32
    %v2581 = vpop.permute.xlu0 %2580
    %2582 = vrot.lane.b32.xlu0 %v2315, 32
    %v2583 = vpop.permute.xlu0 %2582
    %2586 = vrot.lane.b32.xlu0 %v2294, 96
    %v2587 = vpop.permute.xlu0 %2586
    %2588 = vrot.lane.b32.xlu0 %v2322, 96
    %v2589 = vpop.permute.xlu0 %2588
    %2590 = vrot.lane.b32.xlu0 %v2294, 64
    %v2591 = vpop.permute.xlu0 %2590
    %2592 = vrot.lane.b32.xlu0 %v2322, 64
    %v2593 = vpop.permute.xlu0 %2592
    %2594 = vrot.lane.b32.xlu0 %v2294, 32
    %v2595 = vpop.permute.xlu0 %2594
    %2596 = vrot.lane.b32.xlu0 %v2322, 32
    %v2597 = vpop.permute.xlu0 %2596
    %2600 = vrot.lane.b32.xlu0 %v2301, 96
    %v2601 = vpop.permute.xlu0 %2600
    %2602 = vrot.lane.b32.xlu0 %v2329, 96
    %v2603 = vpop.permute.xlu0 %2602
    %2604 = vrot.lane.b32.xlu0 %v2301, 64
    %v2605 = vpop.permute.xlu0 %2604
    %2606 = vrot.lane.b32.xlu0 %v2329, 64
    %v2607 = vpop.permute.xlu0 %2606
    %2608 = vrot.lane.b32.xlu0 %v2301, 32
    %v2609 = vpop.permute.xlu0 %2608
    %2610 = vrot.lane.b32.xlu0 %v2329, 32
    %v2611 = vpop.permute.xlu0 %2610
    %v2612 = vrot.slane %v2308, 7
    %v2613 = vsel %vm2387, %v2612, %v2280
    %v2614 = vrot.slane %v2561, 7
    %v2615 = vsel %vm2387, %v2614, %v2559
    %v2616 = vrot.slane %v2565, 7
    %v2617 = vsel %vm2387, %v2616, %v2563
    %v2618 = vrot.slane %v2569, 7
    %v2619 = vsel %vm2387, %v2618, %v2567
    %v2620 = vrot.slane %v2315, 7
    %v2621 = vsel %vm2387, %v2620, %v2287
    %v2622 = vrot.slane %v2575, 7
    %v2623 = vsel %vm2387, %v2622, %v2573
    %v2624 = vrot.slane %v2579, 7
    %v2625 = vsel %vm2387, %v2624, %v2577
    %v2626 = vrot.slane %v2583, 7
    %v2627 = vsel %vm2387, %v2626, %v2581
    %v2628 = vrot.slane %v2322, 7
    %v2629 = vsel %vm2387, %v2628, %v2294
    %v2630 = vrot.slane %v2589, 7
    %v2631 = vsel %vm2387, %v2630, %v2587
    %v2632 = vrot.slane %v2593, 7
    %v2633 = vsel %vm2387, %v2632, %v2591
    %v2634 = vrot.slane %v2597, 7
    %v2635 = vsel %vm2387, %v2634, %v2595
    %v2636 = vrot.slane %v2329, 7
    %v2637 = vsel %vm2387, %v2636, %v2301
    %v2638 = vrot.slane %v2603, 7
    %v2639 = vsel %vm2387, %v2638, %v2601
    %v2640 = vrot.slane %v2607, 7
    %v2641 = vsel %vm2387, %v2640, %v2605
    %v2642 = vrot.slane %v2611, 7
    %v2643 = vsel %vm2387, %v2642, %v2609
    %v2660 = vcombine.low %v2613, %v2617
    %v2662 = vunpack.c.l.s4 1983009808
    %v2663 = vunpack.c.0.s8 %v2662
    %v2664 = vlaneseq
    %v2665 = vshrl.u32 %v2664, 7
    %v2666 = vsub.s32 %v2663, %v2665
    %v2667 = vrot.slane %v2660, %v2666
    %v2668 = vcombine.low %v2615, %v2619
    %v2670 = vunpack.c.l.s4 1983009808
    %v2671 = vunpack.c.0.s8 %v2670
    %v2672 = vlaneseq
    %v2673 = vshrl.u32 %v2672, 7
    %v2674 = vsub.s32 %v2671, %v2673
    %v2675 = vrot.slane %v2668, %v2674
    %v2676 = vcombine.low %v2621, %v2625
    %v2678 = vunpack.c.l.s4 1983009808
    %v2679 = vunpack.c.0.s8 %v2678
    %v2680 = vlaneseq
    %v2681 = vshrl.u32 %v2680, 7
    %v2682 = vsub.s32 %v2679, %v2681
    %v2683 = vrot.slane %v2676, %v2682
    %v2684 = vcombine.low %v2623, %v2627
    %v2686 = vunpack.c.l.s4 1983009808
    %v2687 = vunpack.c.0.s8 %v2686
    %v2688 = vlaneseq
    %v2689 = vshrl.u32 %v2688, 7
    %v2690 = vsub.s32 %v2687, %v2689
    %v2691 = vrot.slane %v2684, %v2690
    %v2692 = vcombine.low %v2667, %v2675
    %v2694 = vunpack.c.l.s4 1934713408
    %v2695 = vunpack.c.0.s8 %v2694
    %v2696 = vlaneseq
    %v2697 = vshrl.u32 %v2696, 7
    %v2698 = vsub.s32 %v2695, %v2697
    %v2699 = vrot.slane %v2692, %v2698
    %v2700 = vcombine.low %v2683, %v2691
    %v2702 = vunpack.c.l.s4 1934713408
    %v2703 = vunpack.c.0.s8 %v2702
    %v2704 = vlaneseq
    %v2705 = vshrl.u32 %v2704, 7
    %v2706 = vsub.s32 %v2703, %v2705
    %v2707 = vrot.slane %v2700, %v2706
    %v2708 = vcombine.low %v2699, %v2707
    %v2709 = vcombine.high %v2699, %v2707
    %v2710 = vcombine.low %v2629, %v2633
    %v2712 = vunpack.c.l.s4 1983009808
    %v2713 = vunpack.c.0.s8 %v2712
    %v2714 = vlaneseq
    %v2715 = vshrl.u32 %v2714, 7
    %v2716 = vsub.s32 %v2713, %v2715
    %v2717 = vrot.slane %v2710, %v2716
    %v2718 = vcombine.low %v2631, %v2635
    %v2720 = vunpack.c.l.s4 1983009808
    %v2721 = vunpack.c.0.s8 %v2720
    %v2722 = vlaneseq
    %v2723 = vshrl.u32 %v2722, 7
    %v2724 = vsub.s32 %v2721, %v2723
    %v2725 = vrot.slane %v2718, %v2724
    %v2726 = vcombine.low %v2637, %v2641
    %v2728 = vunpack.c.l.s4 1983009808
    %v2729 = vunpack.c.0.s8 %v2728
    %v2730 = vlaneseq
    %v2731 = vshrl.u32 %v2730, 7
    %v2732 = vsub.s32 %v2729, %v2731
    %v2733 = vrot.slane %v2726, %v2732
    %v2734 = vcombine.low %v2639, %v2643
    %v2736 = vunpack.c.l.s4 1983009808
    %v2737 = vunpack.c.0.s8 %v2736
    %v2738 = vlaneseq
    %v2739 = vshrl.u32 %v2738, 7
    %v2740 = vsub.s32 %v2737, %v2739
    %v2741 = vrot.slane %v2734, %v2740
    %v2742 = vcombine.low %v2717, %v2725
    %v2744 = vunpack.c.l.s4 1934713408
    %v2745 = vunpack.c.0.s8 %v2744
    %v2746 = vlaneseq
    %v2747 = vshrl.u32 %v2746, 7
    %v2748 = vsub.s32 %v2745, %v2747
    %v2749 = vrot.slane %v2742, %v2748
    %v2750 = vcombine.low %v2733, %v2741
    %v2752 = vunpack.c.l.s4 1934713408
    %v2753 = vunpack.c.0.s8 %v2752
    %v2754 = vlaneseq
    %v2755 = vshrl.u32 %v2754, 7
    %v2756 = vsub.s32 %v2753, %v2755
    %v2757 = vrot.slane %v2750, %v2756
    %v2758 = vcombine.low %v2749, %v2757
    %v2759 = vcombine.high %v2749, %v2757
    %v2760 = vsel %vm2535, %v2708, -inf
    %v2761 = vsel %vm2535, %v2758, -inf
    %v2762 = vmax.f32 %v2760, %v2761
    %v2763 = vrot.slane %v2762, 4
    %v2764 = vmax.f32 %v2762, %v2763
    %v2765 = vrot.slane %v2764, 2
    %v2766 = vmax.f32 %v2764, %v2765
    %v2767 = vrot.slane %v2766, 1
    %v2768 = vmax.f32 %v2766, %v2767
    %v2769 = vsel %vm2535, %v2709, -inf
    %v2770 = vsel %vm2535, %v2759, -inf
    %v2771 = vmax.f32 %v2769, %v2770
    %v2772 = vrot.slane %v2771, 4
    %v2773 = vmax.f32 %v2771, %v2772
    %v2774 = vrot.slane %v2773, 2
    %v2775 = vmax.f32 %v2773, %v2774
    %v2776 = vrot.slane %v2775, 1
    %v2777 = vmax.f32 %v2775, %v2776
    %v2780 = vsel %vm2387, %v2555, %v2554
    %vm2784 = vcmask 1043459
    %v2785 = vsel %vm2784, %v2777, %v2768
    %v2787 = vsel %vm1906, %v2780, %v2785
    %v2788 = vld [vmem:[%s6] sm:$0xff]
    %v2789 = vld [vmem:[%s6 + $0x8] sm:$0xff]
    %v2790 = vld [vmem:[%s6 + $0x10] sm:$0xff]
    %v2791 = vld [vmem:[%s6 + $0x18] sm:$0xff]
    %v2792 = vld [vmem:[#allocation13] sm:$0x1]
    %v2794 = vlaneseq
    %v2795 = vshrl.u32 %v2794, 7
    %v2796 = vsub.s32 0, %v2795
    %v2797 = vrot.slane %v2792, %v2796
    %v2800 = vsel %vm2535, %v2787, 0
    %2802 = vmatprep.subr.mxu0 0.0
    %2803 = vmatpush1.msra.mxu0 0.0
    %2804 = vmatprep.subr.mxu0 0.0
    %2805 = vmatpush1.msra.mxu0 0.0
    %2806 = vmatprep.subr.mxu0 0.0
    %2807 = vmatpush1.msra.mxu0 0.0
    %2808 = vmatprep.subr.mxu0 0.0
    %2809 = vmatpush1.msra.mxu0 0.0
    %2810 = vmatprep.subr.mxu0 0.0
    %2811 = vmatpush1.msra.mxu0 0.0
    %2812 = vmatprep.subr.mxu0 0.0
    %2813 = vmatpush1.msra.mxu0 0.0
    %2814 = vmatprep.subr.mxu0 0.0
    %2815 = vmatpush1.msra.mxu0 0.0
    %2816 = vmatprep.subr.mxu0 0.0
    %2817 = vmatpush1.msra.mxu0 0.0
    %2818 = vmatprep.subr.mxu0 0.0
    %2819 = vmatpush1.msra.mxu0 0.0
    %2820 = vmatprep.subr.mxu0 0.0
    %2821 = vmatpush1.msra.mxu0 0.0
    %2822 = vmatprep.subr.mxu0 0.0
    %2823 = vmatpush1.msra.mxu0 0.0
    %2824 = vmatprep.subr.mxu0 0.0
    %2825 = vmatpush1.msra.mxu0 0.0
    %2826 = vmatprep.subr.mxu0 0.0
    %2827 = vmatpush1.msra.mxu0 %v2791
    %2828 = vmatprep.subr.mxu0 0.0
    %2829 = vmatpush1.msra.mxu0 %v2790
    %2830 = vmatprep.subr.mxu0 0.0
    %2831 = vmatpush1.msra.mxu0 %v2789
    %2832 = vmatprep.subr.mxu0 0.0
    %2833 = vmatpush1.msra.mxu0 %v2788
    %2834 = vmatprep.subr.mxu0 0.0
    %2835 = vmatpush2.msra.mxu0 0.0
    %2836 = vmatprep.subr.mxu0 0.0
    %2837 = vmatpush2.msra.mxu0 0.0
    %2838 = vmatprep.subr.mxu0 0.0
    %2839 = vmatpush2.msra.mxu0 0.0
    %2840 = vmatprep.subr.mxu0 0.0
    %2841 = vmatpush2.msra.mxu0 0.0
    %2842 = vmatprep.subr.mxu0 0.0
    %2843 = vmatpush2.msra.mxu0 0.0
    %2844 = vmatprep.subr.mxu0 0.0
    %2845 = vmatpush2.msra.mxu0 0.0
    %2846 = vmatprep.subr.mxu0 0.0
    %2847 = vmatpush2.msra.mxu0 0.0
    %2848 = vmatprep.subr.mxu0 0.0
    %2849 = vmatpush2.msra.mxu0 0.0
    %2850 = vmatprep.subr.mxu0 0.0
    %2851 = vmatpush2.msra.mxu0 0.0
    %2852 = vmatprep.subr.mxu0 0.0
    %2853 = vmatpush2.msra.mxu0 0.0
    %2854 = vmatprep.subr.mxu0 0.0
    %2855 = vmatpush2.msra.mxu0 0.0
    %2856 = vmatprep.subr.mxu0 0.0
    %2857 = vmatpush2.msra.mxu0 0.0
    %2858 = vmatprep.subr.mxu0 0.0
    %2859 = vmatpush2.msra.mxu0 0.0
    %2860 = vmatprep.subr.mxu0 0.0
    %2861 = vmatpush2.msra.mxu0 0.0
    %2862 = vmatprep.subr.mxu0 0.0
    %2863 = vmatpush2.msra.mxu0 0.0
    %2864 = vmatprep.subr.mxu0 0.0
    %2865 = vmatpush2.msra.mxu0 0.0
    %2866 = vmatprep.mubr.f32.mxu0 0.0
    %2867 = vmatmul.mubr.f32.gmra.mxu0 %v2800
    %v2868 = vpop.f32.mrf.mxu0
    %v2869 = vadd.f32 %v2797, %v2868
    %v2870 = vpop.f32.mrf.mxu0
    %2871 = vdwg.mxu0
    %v2872 = vmax.f32 %v2869, 0.0
    %v2873 = vld [vmem:[#allocation15] sm:$0xff]
    %v2874 = vld [vmem:[#allocation16] sm:$0x1]
    %v2876 = vlaneseq
    %v2877 = vshrl.u32 %v2876, 7
    %v2878 = vsub.s32 0, %v2877
    %v2879 = vrot.slane %v2874, %v2878
    %vm2881 = vcmask 64512
    %v2883 = vsel %vm2881, %v2872, 0
    %2885 = vmatprep.subr.mxu0 0.0
    %2886 = vmatpush1.msra.mxu0 0.0
    %2887 = vmatprep.subr.mxu0 0.0
    %2888 = vmatpush1.msra.mxu0 0.0
    %2889 = vmatprep.subr.mxu0 0.0
    %2890 = vmatpush1.msra.mxu0 0.0
    %2891 = vmatprep.subr.mxu0 0.0
    %2892 = vmatpush1.msra.mxu0 0.0
    %2893 = vmatprep.subr.mxu0 0.0
    %2894 = vmatpush1.msra.mxu0 0.0
    %2895 = vmatprep.subr.mxu0 0.0
    %2896 = vmatpush1.msra.mxu0 0.0
    %2897 = vmatprep.subr.mxu0 0.0
    %2898 = vmatpush1.msra.mxu0 0.0
    %2899 = vmatprep.subr.mxu0 0.0
    %2900 = vmatpush1.msra.mxu0 0.0
    %2901 = vmatprep.subr.mxu0 0.0
    %2902 = vmatpush1.msra.mxu0 0.0
    %2903 = vmatprep.subr.mxu0 0.0
    %2904 = vmatpush1.msra.mxu0 0.0
    %2905 = vmatprep.subr.mxu0 0.0
    %2906 = vmatpush1.msra.mxu0 0.0
    %2907 = vmatprep.subr.mxu0 0.0
    %2908 = vmatpush1.msra.mxu0 0.0
    %2909 = vmatprep.subr.mxu0 0.0
    %2910 = vmatpush1.msra.mxu0 0.0
    %2911 = vmatprep.subr.mxu0 0.0
    %2912 = vmatpush1.msra.mxu0 0.0
    %2913 = vmatprep.subr.mxu0 0.0
    %2914 = vmatpush1.msra.mxu0 0.0
    %2915 = vmatprep.subr.mxu0 0.0
    %2916 = vmatpush1.msra.mxu0 %v2873
    %2917 = vmatprep.subr.mxu0 0.0
    %2918 = vmatpush2.msra.mxu0 0.0
    %2919 = vmatprep.subr.mxu0 0.0
    %2920 = vmatpush2.msra.mxu0 0.0
    %2921 = vmatprep.subr.mxu0 0.0
    %2922 = vmatpush2.msra.mxu0 0.0
    %2923 = vmatprep.subr.mxu0 0.0
    %2924 = vmatpush2.msra.mxu0 0.0
    %2925 = vmatprep.subr.mxu0 0.0
    %2926 = vmatpush2.msra.mxu0 0.0
    %2927 = vmatprep.subr.mxu0 0.0
    %2928 = vmatpush2.msra.mxu0 0.0
    %2929 = vmatprep.subr.mxu0 0.0
    %2930 = vmatpush2.msra.mxu0 0.0
    %2931 = vmatprep.subr.mxu0 0.0
    %2932 = vmatpush2.msra.mxu0 0.0
    %2933 = vmatprep.subr.mxu0 0.0
    %2934 = vmatpush2.msra.mxu0 0.0
    %2935 = vmatprep.subr.mxu0 0.0
    %2936 = vmatpush2.msra.mxu0 0.0
    %2937 = vmatprep.subr.mxu0 0.0
    %2938 = vmatpush2.msra.mxu0 0.0
    %2939 = vmatprep.subr.mxu0 0.0
    %2940 = vmatpush2.msra.mxu0 0.0
    %2941 = vmatprep.subr.mxu0 0.0
    %2942 = vmatpush2.msra.mxu0 0.0
    %2943 = vmatprep.subr.mxu0 0.0
    %2944 = vmatpush2.msra.mxu0 0.0
    %2945 = vmatprep.subr.mxu0 0.0
    %2946 = vmatpush2.msra.mxu0 0.0
    %2947 = vmatprep.subr.mxu0 0.0
    %2948 = vmatpush2.msra.mxu0 0.0
    %2949 = vmatprep.mubr.f32.mxu0 0.0
    %2950 = vmatmul.mubr.f32.gmra.mxu0 %v2883
    %v2951 = vpop.f32.mrf.mxu0
    %v2952 = vadd.f32 %v2879, %v2951
    %v2953 = vpop.f32.mrf.mxu0
    %2954 = vdwg.mxu0
    %v2956 = vrot.slane %v2952, 2
    %v2958 = vadd.f32 %v2952, %v2956
    %v2959 = vxor.u32 %v2958, 2147483648
    %v2960 = vmul.f32 %v2959, 1.442695
    %v2961 = vpow.pop %v2960
    %v2962 = vadd.f32 %v2961, 1.0
    %v2963 = vrcp.pop %v2962
    %v2964 = vmul.f32 1.0, %v2963
    %2966 = vrot.lane.b32.xlu0 %v2964, 32
    %v2967 = vpop.permute.xlu0 %2966
    %2969 = vrot.lane.b32.xlu0 %v2964, 64
    %v2970 = vpop.permute.xlu0 %2969
    %2972 = vrot.lane.b32.xlu0 %v2964, 96
    %v2973 = vpop.permute.xlu0 %2972
    %v2975 = vsel %vm2535, %v2964, %v2967
    %vm2976 = vcmask 523264
    %v2977 = vsel %vm2976, %v2975, %v2970
    %vm2978 = vcmask 785408
    %v2979 = vsel %vm2978, %v2977, %v2973
    %v2981 = vcombine.low %v2979, %v2979
    %v2983 = vunpack.c.l.s4 1966171168
    %v2984 = vunpack.c.0.s8 %v2983
    %v2985 = vlaneseq
    %v2986 = vshrl.u32 %v2985, 7
    %v2987 = vsub.s32 %v2984, %v2986
    %v2988 = vrot.slane %v2981, %v2987
    %v2989 = vcombine.low %v2988, %v2988
    %v2990 = vcombine.high %v2988, %v2988
    %v2992 = vunpack.c.l.s4 1966171168
    %v2993 = vunpack.c.0.s8 %v2992
    %v2994 = vlaneseq
    %v2995 = vshrl.u32 %v2994, 7
    %v2996 = vsub.s32 %v2993, %v2995
    %v2997 = vrot.slane %v2989, %v2996
    %v2999 = vunpack.c.l.s4 1966171168
    %v3000 = vunpack.c.0.s8 %v2999
    %v3001 = vlaneseq
    %v3002 = vshrl.u32 %v3001, 7
    %v3003 = vsub.s32 %v3000, %v3002
    %v3004 = vrot.slane %v2990, %v3003
    %v3005 = vlaneseq
    %v3006 = vshrl.u32 %v3005, 7
    %v3007 = vsub.s32 0, %v3006
    %v3008 = vrot.slane %v2997, %v3007
    %v3009 = vlaneseq
    %v3010 = vshrl.u32 %v3009, 7
    %v3011 = vsub.s32 1, %v3010
    %v3012 = vrot.slane %v2997, %v3011
    %v3013 = vlaneseq
    %v3014 = vshrl.u32 %v3013, 7
    %v3015 = vsub.s32 2, %v3014
    %v3016 = vrot.slane %v2997, %v3015
    %v3017 = vlaneseq
    %v3018 = vshrl.u32 %v3017, 7
    %v3019 = vsub.s32 3, %v3018
    %v3020 = vrot.slane %v2997, %v3019
    %v3021 = vlaneseq
    %v3022 = vshrl.u32 %v3021, 7
    %v3023 = vsub.s32 0, %v3022
    %v3024 = vrot.slane %v3004, %v3023
    %v3025 = vlaneseq
    %v3026 = vshrl.u32 %v3025, 7
    %v3027 = vsub.s32 1, %v3026
    %v3028 = vrot.slane %v3004, %v3027
    %v3029 = vlaneseq
    %v3030 = vshrl.u32 %v3029, 7
    %v3031 = vsub.s32 2, %v3030
    %v3032 = vrot.slane %v3004, %v3031
    %v3033 = vlaneseq
    %v3034 = vshrl.u32 %v3033, 7
    %v3035 = vsub.s32 3, %v3034
    %v3036 = vrot.slane %v3004, %v3035
    %v3045 = vmul.f32 %v2202, %v3008
    %v3046 = vmul.f32 %v2203, %v3012
    %v3047 = vmul.f32 %v2204, %v3016
    %v3048 = vmul.f32 %v2205, %v3020
    %v3049 = vmul.f32 %v2206, %v3008
    %v3050 = vmul.f32 %v2207, %v3012
    %v3051 = vmul.f32 %v2208, %v3016
    %v3052 = vmul.f32 %v2209, %v3020
    %v3053 = vmul.f32 %v2210, %v3024
    %v3054 = vmul.f32 %v2211, %v3028
    %v3055 = vmul.f32 %v2212, %v3032
    %v3056 = vmul.f32 %v2213, %v3036
    %v3057 = vmul.f32 %v2214, %v3024
    %v3058 = vmul.f32 %v2215, %v3028
    %v3059 = vmul.f32 %v2216, %v3032
    %v3060 = vmul.f32 %v2217, %v3036
    %3065 = vrot.lane.b32.xlu0 %v3045, 96
    %v3066 = vpop.permute.xlu0 %3065
    %3067 = vrot.lane.b32.xlu0 %v3049, 96
    %v3068 = vpop.permute.xlu0 %3067
    %3069 = vrot.lane.b32.xlu0 %v3053, 96
    %v3070 = vpop.permute.xlu0 %3069
    %3071 = vrot.lane.b32.xlu0 %v3057, 96
    %v3072 = vpop.permute.xlu0 %3071
    %3077 = vrot.lane.b32.xlu0 %v3045, 64
    %v3078 = vpop.permute.xlu0 %3077
    %3079 = vrot.lane.b32.xlu0 %v3049, 64
    %v3080 = vpop.permute.xlu0 %3079
    %3081 = vrot.lane.b32.xlu0 %v3053, 64
    %v3082 = vpop.permute.xlu0 %3081
    %3083 = vrot.lane.b32.xlu0 %v3057, 64
    %v3084 = vpop.permute.xlu0 %3083
    %3089 = vrot.lane.b32.xlu0 %v3045, 32
    %v3090 = vpop.permute.xlu0 %3089
    %3091 = vrot.lane.b32.xlu0 %v3049, 32
    %v3092 = vpop.permute.xlu0 %3091
    %3093 = vrot.lane.b32.xlu0 %v3053, 32
    %v3094 = vpop.permute.xlu0 %3093
    %3095 = vrot.lane.b32.xlu0 %v3057, 32
    %v3096 = vpop.permute.xlu0 %3095
    %3105 = vrot.lane.b32.xlu0 %v3046, 96
    %v3106 = vpop.permute.xlu0 %3105
    %3107 = vrot.lane.b32.xlu0 %v3050, 96
    %v3108 = vpop.permute.xlu0 %3107
    %3109 = vrot.lane.b32.xlu0 %v3054, 96
    %v3110 = vpop.permute.xlu0 %3109
    %3111 = vrot.lane.b32.xlu0 %v3058, 96
    %v3112 = vpop.permute.xlu0 %3111
    %3117 = vrot.lane.b32.xlu0 %v3046, 64
    %v3118 = vpop.permute.xlu0 %3117
    %3119 = vrot.lane.b32.xlu0 %v3050, 64
    %v3120 = vpop.permute.xlu0 %3119
    %3121 = vrot.lane.b32.xlu0 %v3054, 64
    %v3122 = vpop.permute.xlu0 %3121
    %3123 = vrot.lane.b32.xlu0 %v3058, 64
    %v3124 = vpop.permute.xlu0 %3123
    %3129 = vrot.lane.b32.xlu0 %v3046, 32
    %v3130 = vpop.permute.xlu0 %3129
    %3131 = vrot.lane.b32.xlu0 %v3050, 32
    %v3132 = vpop.permute.xlu0 %3131
    %3133 = vrot.lane.b32.xlu0 %v3054, 32
    %v3134 = vpop.permute.xlu0 %3133
    %3135 = vrot.lane.b32.xlu0 %v3058, 32
    %v3136 = vpop.permute.xlu0 %3135
    %3145 = vrot.lane.b32.xlu0 %v3047, 96
    %v3146 = vpop.permute.xlu0 %3145
    %3147 = vrot.lane.b32.xlu0 %v3051, 96
    %v3148 = vpop.permute.xlu0 %3147
    %3149 = vrot.lane.b32.xlu0 %v3055, 96
    %v3150 = vpop.permute.xlu0 %3149
    %3151 = vrot.lane.b32.xlu0 %v3059, 96
    %v3152 = vpop.permute.xlu0 %3151
    %3157 = vrot.lane.b32.xlu0 %v3047, 64
    %v3158 = vpop.permute.xlu0 %3157
    %3159 = vrot.lane.b32.xlu0 %v3051, 64
    %v3160 = vpop.permute.xlu0 %3159
    %3161 = vrot.lane.b32.xlu0 %v3055, 64
    %v3162 = vpop.permute.xlu0 %3161
    %3163 = vrot.lane.b32.xlu0 %v3059, 64
    %v3164 = vpop.permute.xlu0 %3163
    %3169 = vrot.lane.b32.xlu0 %v3047, 32
    %v3170 = vpop.permute.xlu0 %3169
    %3171 = vrot.lane.b32.xlu0 %v3051, 32
    %v3172 = vpop.permute.xlu0 %3171
    %3173 = vrot.lane.b32.xlu0 %v3055, 32
    %v3174 = vpop.permute.xlu0 %3173
    %3175 = vrot.lane.b32.xlu0 %v3059, 32
    %v3176 = vpop.permute.xlu0 %3175
    %3185 = vrot.lane.b32.xlu0 %v3048, 96
    %v3186 = vpop.permute.xlu0 %3185
    %3187 = vrot.lane.b32.xlu0 %v3052, 96
    %v3188 = vpop.permute.xlu0 %3187
    %3189 = vrot.lane.b32.xlu0 %v3056, 96
    %v3190 = vpop.permute.xlu0 %3189
    %3191 = vrot.lane.b32.xlu0 %v3060, 96
    %v3192 = vpop.permute.xlu0 %3191
    %3197 = vrot.lane.b32.xlu0 %v3048, 64
    %v3198 = vpop.permute.xlu0 %3197
    %3199 = vrot.lane.b32.xlu0 %v3052, 64
    %v3200 = vpop.permute.xlu0 %3199
    %3201 = vrot.lane.b32.xlu0 %v3056, 64
    %v3202 = vpop.permute.xlu0 %3201
    %3203 = vrot.lane.b32.xlu0 %v3060, 64
    %v3204 = vpop.permute.xlu0 %3203
    %3209 = vrot.lane.b32.xlu0 %v3048, 32
    %v3210 = vpop.permute.xlu0 %3209
    %3211 = vrot.lane.b32.xlu0 %v3052, 32
    %v3212 = vpop.permute.xlu0 %3211
    %3213 = vrot.lane.b32.xlu0 %v3056, 32
    %v3214 = vpop.permute.xlu0 %3213
    %3215 = vrot.lane.b32.xlu0 %v3060, 32
    %v3216 = vpop.permute.xlu0 %3215
    %v3221 = vcombine.low %v3045, %v3078
    %v3222 = vcombine.high %v3045, %v3078
    %v3224 = vunpack.c.l.s4 1983009808
    %v3225 = vunpack.c.0.s8 %v3224
    %v3226 = vlaneseq
    %v3227 = vshrl.u32 %v3226, 7
    %v3228 = vsub.s32 %v3225, %v3227
    %v3229 = vrot.slane %v3221, %v3228
    %v3231 = vunpack.c.l.s4 1983009808
    %v3232 = vunpack.c.0.s8 %v3231
    %v3233 = vlaneseq
    %v3234 = vshrl.u32 %v3233, 7
    %v3235 = vsub.s32 %v3232, %v3234
    %v3236 = vrot.slane %v3222, %v3235
    %v3237 = vcombine.low %v3066, %v3090
    %v3238 = vcombine.high %v3066, %v3090
    %v3240 = vunpack.c.l.s4 1983009808
    %v3241 = vunpack.c.0.s8 %v3240
    %v3242 = vlaneseq
    %v3243 = vshrl.u32 %v3242, 7
    %v3244 = vsub.s32 %v3241, %v3243
    %v3245 = vrot.slane %v3237, %v3244
    %v3247 = vunpack.c.l.s4 1983009808
    %v3248 = vunpack.c.0.s8 %v3247
    %v3249 = vlaneseq
    %v3250 = vshrl.u32 %v3249, 7
    %v3251 = vsub.s32 %v3248, %v3250
    %v3252 = vrot.slane %v3238, %v3251
    %v3253 = vcombine.low %v3046, %v3118
    %v3254 = vcombine.high %v3046, %v3118
    %v3256 = vunpack.c.l.s4 1983009808
    %v3257 = vunpack.c.0.s8 %v3256
    %v3258 = vlaneseq
    %v3259 = vshrl.u32 %v3258, 7
    %v3260 = vsub.s32 %v3257, %v3259
    %v3261 = vrot.slane %v3253, %v3260
    %v3263 = vunpack.c.l.s4 1983009808
    %v3264 = vunpack.c.0.s8 %v3263
    %v3265 = vlaneseq
    %v3266 = vshrl.u32 %v3265, 7
    %v3267 = vsub.s32 %v3264, %v3266
    %v3268 = vrot.slane %v3254, %v3267
    %v3269 = vcombine.low %v3106, %v3130
    %v3270 = vcombine.high %v3106, %v3130
    %v3272 = vunpack.c.l.s4 1983009808
    %v3273 = vunpack.c.0.s8 %v3272
    %v3274 = vlaneseq
    %v3275 = vshrl.u32 %v3274, 7
    %v3276 = vsub.s32 %v3273, %v3275
    %v3277 = vrot.slane %v3269, %v3276
    %v3279 = vunpack.c.l.s4 1983009808
    %v3280 = vunpack.c.0.s8 %v3279
    %v3281 = vlaneseq
    %v3282 = vshrl.u32 %v3281, 7
    %v3283 = vsub.s32 %v3280, %v3282
    %v3284 = vrot.slane %v3270, %v3283
    %v3285 = vcombine.low %v3229, %v3245
    %v3286 = vcombine.high %v3229, %v3245
    %v3288 = vunpack.c.l.s4 1934713408
    %v3289 = vunpack.c.0.s8 %v3288
    %v3290 = vlaneseq
    %v3291 = vshrl.u32 %v3290, 7
    %v3292 = vsub.s32 %v3289, %v3291
    %v3293 = vrot.slane %v3285, %v3292
    %v3295 = vunpack.c.l.s4 1934713408
    %v3296 = vunpack.c.0.s8 %v3295
    %v3297 = vlaneseq
    %v3298 = vshrl.u32 %v3297, 7
    %v3299 = vsub.s32 %v3296, %v3298
    %v3300 = vrot.slane %v3286, %v3299
    %v3301 = vcombine.low %v3236, %v3252
    %v3302 = vcombine.high %v3236, %v3252
    %v3304 = vunpack.c.l.s4 1934713408
    %v3305 = vunpack.c.0.s8 %v3304
    %v3306 = vlaneseq
    %v3307 = vshrl.u32 %v3306, 7
    %v3308 = vsub.s32 %v3305, %v3307
    %v3309 = vrot.slane %v3301, %v3308
    %v3311 = vunpack.c.l.s4 1934713408
    %v3312 = vunpack.c.0.s8 %v3311
    %v3313 = vlaneseq
    %v3314 = vshrl.u32 %v3313, 7
    %v3315 = vsub.s32 %v3312, %v3314
    %v3316 = vrot.slane %v3302, %v3315
    %v3317 = vcombine.low %v3261, %v3277
    %v3318 = vcombine.high %v3261, %v3277
    %v3320 = vunpack.c.l.s4 1934713408
    %v3321 = vunpack.c.0.s8 %v3320
    %v3322 = vlaneseq
    %v3323 = vshrl.u32 %v3322, 7
    %v3324 = vsub.s32 %v3321, %v3323
    %v3325 = vrot.slane %v3317, %v3324
    %v3327 = vunpack.c.l.s4 1934713408
    %v3328 = vunpack.c.0.s8 %v3327
    %v3329 = vlaneseq
    %v3330 = vshrl.u32 %v3329, 7
    %v3331 = vsub.s32 %v3328, %v3330
    %v3332 = vrot.slane %v3318, %v3331
    %v3333 = vcombine.low %v3268, %v3284
    %v3334 = vcombine.high %v3268, %v3284
    %v3336 = vunpack.c.l.s4 1934713408
    %v3337 = vunpack.c.0.s8 %v3336
    %v3338 = vlaneseq
    %v3339 = vshrl.u32 %v3338, 7
    %v3340 = vsub.s32 %v3337, %v3339
    %v3341 = vrot.slane %v3333, %v3340
    %v3343 = vunpack.c.l.s4 1934713408
    %v3344 = vunpack.c.0.s8 %v3343
    %v3345 = vlaneseq
    %v3346 = vshrl.u32 %v3345, 7
    %v3347 = vsub.s32 %v3344, %v3346
    %v3348 = vrot.slane %v3334, %v3347
    %v3349 = vcombine.low %v3293, %v3325
    %v3350 = vcombine.high %v3293, %v3325
    %v3351 = vcombine.low %v3300, %v3332
    %v3352 = vcombine.high %v3300, %v3332
    %v3353 = vcombine.low %v3309, %v3341
    %v3354 = vcombine.high %v3309, %v3341
    %v3355 = vcombine.low %v3316, %v3348
    %v3356 = vcombine.high %v3316, %v3348
    %v3357 = vcombine.low %v3047, %v3158
    %v3358 = vcombine.high %v3047, %v3158
    %v3360 = vunpack.c.l.s4 1983009808
    %v3361 = vunpack.c.0.s8 %v3360
    %v3362 = vlaneseq
    %v3363 = vshrl.u32 %v3362, 7
    %v3364 = vsub.s32 %v3361, %v3363
    %v3365 = vrot.slane %v3357, %v3364
    %v3367 = vunpack.c.l.s4 1983009808
    %v3368 = vunpack.c.0.s8 %v3367
    %v3369 = vlaneseq
    %v3370 = vshrl.u32 %v3369, 7
    %v3371 = vsub.s32 %v3368, %v3370
    %v3372 = vrot.slane %v3358, %v3371
    %v3373 = vcombine.low %v3146, %v3170
    %v3374 = vcombine.high %v3146, %v3170
    %v3376 = vunpack.c.l.s4 1983009808
    %v3377 = vunpack.c.0.s8 %v3376
    %v3378 = vlaneseq
    %v3379 = vshrl.u32 %v3378, 7
    %v3380 = vsub.s32 %v3377, %v3379
    %v3381 = vrot.slane %v3373, %v3380
    %v3383 = vunpack.c.l.s4 1983009808
    %v3384 = vunpack.c.0.s8 %v3383
    %v3385 = vlaneseq
    %v3386 = vshrl.u32 %v3385, 7
    %v3387 = vsub.s32 %v3384, %v3386
    %v3388 = vrot.slane %v3374, %v3387
    %v3389 = vcombine.low %v3048, %v3198
    %v3390 = vcombine.high %v3048, %v3198
    %v3392 = vunpack.c.l.s4 1983009808
    %v3393 = vunpack.c.0.s8 %v3392
    %v3394 = vlaneseq
    %v3395 = vshrl.u32 %v3394, 7
    %v3396 = vsub.s32 %v3393, %v3395
    %v3397 = vrot.slane %v3389, %v3396
    %v3399 = vunpack.c.l.s4 1983009808
    %v3400 = vunpack.c.0.s8 %v3399
    %v3401 = vlaneseq
    %v3402 = vshrl.u32 %v3401, 7
    %v3403 = vsub.s32 %v3400, %v3402
    %v3404 = vrot.slane %v3390, %v3403
    %v3405 = vcombine.low %v3186, %v3210
    %v3406 = vcombine.high %v3186, %v3210
    %v3408 = vunpack.c.l.s4 1983009808
    %v3409 = vunpack.c.0.s8 %v3408
    %v3410 = vlaneseq
    %v3411 = vshrl.u32 %v3410, 7
    %v3412 = vsub.s32 %v3409, %v3411
    %v3413 = vrot.slane %v3405, %v3412
    %v3415 = vunpack.c.l.s4 1983009808
    %v3416 = vunpack.c.0.s8 %v3415
    %v3417 = vlaneseq
    %v3418 = vshrl.u32 %v3417, 7
    %v3419 = vsub.s32 %v3416, %v3418
    %v3420 = vrot.slane %v3406, %v3419
    %v3421 = vcombine.low %v3365, %v3381
    %v3422 = vcombine.high %v3365, %v3381
    %v3424 = vunpack.c.l.s4 1934713408
    %v3425 = vunpack.c.0.s8 %v3424
    %v3426 = vlaneseq
    %v3427 = vshrl.u32 %v3426, 7
    %v3428 = vsub.s32 %v3425, %v3427
    %v3429 = vrot.slane %v3421, %v3428
    %v3431 = vunpack.c.l.s4 1934713408
    %v3432 = vunpack.c.0.s8 %v3431
    %v3433 = vlaneseq
    %v3434 = vshrl.u32 %v3433, 7
    %v3435 = vsub.s32 %v3432, %v3434
    %v3436 = vrot.slane %v3422, %v3435
    %v3437 = vcombine.low %v3372, %v3388
    %v3438 = vcombine.high %v3372, %v3388
    %v3440 = vunpack.c.l.s4 1934713408
    %v3441 = vunpack.c.0.s8 %v3440
    %v3442 = vlaneseq
    %v3443 = vshrl.u32 %v3442, 7
    %v3444 = vsub.s32 %v3441, %v3443
    %v3445 = vrot.slane %v3437, %v3444
    %v3447 = vunpack.c.l.s4 1934713408
    %v3448 = vunpack.c.0.s8 %v3447
    %v3449 = vlaneseq
    %v3450 = vshrl.u32 %v3449, 7
    %v3451 = vsub.s32 %v3448, %v3450
    %v3452 = vrot.slane %v3438, %v3451
    %v3453 = vcombine.low %v3397, %v3413
    %v3454 = vcombine.high %v3397, %v3413
    %v3456 = vunpack.c.l.s4 1934713408
    %v3457 = vunpack.c.0.s8 %v3456
    %v3458 = vlaneseq
    %v3459 = vshrl.u32 %v3458, 7
    %v3460 = vsub.s32 %v3457, %v3459
    %v3461 = vrot.slane %v3453, %v3460
    %v3463 = vunpack.c.l.s4 1934713408
    %v3464 = vunpack.c.0.s8 %v3463
    %v3465 = vlaneseq
    %v3466 = vshrl.u32 %v3465, 7
    %v3467 = vsub.s32 %v3464, %v3466
    %v3468 = vrot.slane %v3454, %v3467
    %v3469 = vcombine.low %v3404, %v3420
    %v3470 = vcombine.high %v3404, %v3420
    %v3472 = vunpack.c.l.s4 1934713408
    %v3473 = vunpack.c.0.s8 %v3472
    %v3474 = vlaneseq
    %v3475 = vshrl.u32 %v3474, 7
    %v3476 = vsub.s32 %v3473, %v3475
    %v3477 = vrot.slane %v3469, %v3476
    %v3479 = vunpack.c.l.s4 1934713408
    %v3480 = vunpack.c.0.s8 %v3479
    %v3481 = vlaneseq
    %v3482 = vshrl.u32 %v3481, 7
    %v3483 = vsub.s32 %v3480, %v3482
    %v3484 = vrot.slane %v3470, %v3483
    %v3485 = vcombine.low %v3429, %v3461
    %v3486 = vcombine.high %v3429, %v3461
    %v3487 = vcombine.low %v3436, %v3468
    %v3488 = vcombine.high %v3436, %v3468
    %v3489 = vcombine.low %v3445, %v3477
    %v3490 = vcombine.high %v3445, %v3477
    %v3491 = vcombine.low %v3452, %v3484
    %v3492 = vcombine.high %v3452, %v3484
    %v3493 = vcombine.low %v3049, %v3080
    %v3494 = vcombine.high %v3049, %v3080
    %v3496 = vunpack.c.l.s4 1983009808
    %v3497 = vunpack.c.0.s8 %v3496
    %v3498 = vlaneseq
    %v3499 = vshrl.u32 %v3498, 7
    %v3500 = vsub.s32 %v3497, %v3499
    %v3501 = vrot.slane %v3493, %v3500
    %v3503 = vunpack.c.l.s4 1983009808
    %v3504 = vunpack.c.0.s8 %v3503
    %v3505 = vlaneseq
    %v3506 = vshrl.u32 %v3505, 7
    %v3507 = vsub.s32 %v3504, %v3506
    %v3508 = vrot.slane %v3494, %v3507
    %v3509 = vcombine.low %v3068, %v3092
    %v3510 = vcombine.high %v3068, %v3092
    %v3512 = vunpack.c.l.s4 1983009808
    %v3513 = vunpack.c.0.s8 %v3512
    %v3514 = vlaneseq
    %v3515 = vshrl.u32 %v3514, 7
    %v3516 = vsub.s32 %v3513, %v3515
    %v3517 = vrot.slane %v3509, %v3516
    %v3519 = vunpack.c.l.s4 1983009808
    %v3520 = vunpack.c.0.s8 %v3519
    %v3521 = vlaneseq
    %v3522 = vshrl.u32 %v3521, 7
    %v3523 = vsub.s32 %v3520, %v3522
    %v3524 = vrot.slane %v3510, %v3523
    %v3525 = vcombine.low %v3050, %v3120
    %v3526 = vcombine.high %v3050, %v3120
    %v3528 = vunpack.c.l.s4 1983009808
    %v3529 = vunpack.c.0.s8 %v3528
    %v3530 = vlaneseq
    %v3531 = vshrl.u32 %v3530, 7
    %v3532 = vsub.s32 %v3529, %v3531
    %v3533 = vrot.slane %v3525, %v3532
    %v3535 = vunpack.c.l.s4 1983009808
    %v3536 = vunpack.c.0.s8 %v3535
    %v3537 = vlaneseq
    %v3538 = vshrl.u32 %v3537, 7
    %v3539 = vsub.s32 %v3536, %v3538
    %v3540 = vrot.slane %v3526, %v3539
    %v3541 = vcombine.low %v3108, %v3132
    %v3542 = vcombine.high %v3108, %v3132
    %v3544 = vunpack.c.l.s4 1983009808
    %v3545 = vunpack.c.0.s8 %v3544
    %v3546 = vlaneseq
    %v3547 = vshrl.u32 %v3546, 7
    %v3548 = vsub.s32 %v3545, %v3547
    %v3549 = vrot.slane %v3541, %v3548
    %v3551 = vunpack.c.l.s4 1983009808
    %v3552 = vunpack.c.0.s8 %v3551
    %v3553 = vlaneseq
    %v3554 = vshrl.u32 %v3553, 7
    %v3555 = vsub.s32 %v3552, %v3554
    %v3556 = vrot.slane %v3542, %v3555
    %v3557 = vcombine.low %v3501, %v3517
    %v3558 = vcombine.high %v3501, %v3517
    %v3560 = vunpack.c.l.s4 1934713408
    %v3561 = vunpack.c.0.s8 %v3560
    %v3562 = vlaneseq
    %v3563 = vshrl.u32 %v3562, 7
    %v3564 = vsub.s32 %v3561, %v3563
    %v3565 = vrot.slane %v3557, %v3564
    %v3567 = vunpack.c.l.s4 1934713408
    %v3568 = vunpack.c.0.s8 %v3567
    %v3569 = vlaneseq
    %v3570 = vshrl.u32 %v3569, 7
    %v3571 = vsub.s32 %v3568, %v3570
    %v3572 = vrot.slane %v3558, %v3571
    %v3573 = vcombine.low %v3508, %v3524
    %v3574 = vcombine.high %v3508, %v3524
    %v3576 = vunpack.c.l.s4 1934713408
    %v3577 = vunpack.c.0.s8 %v3576
    %v3578 = vlaneseq
    %v3579 = vshrl.u32 %v3578, 7
    %v3580 = vsub.s32 %v3577, %v3579
    %v3581 = vrot.slane %v3573, %v3580
    %v3583 = vunpack.c.l.s4 1934713408
    %v3584 = vunpack.c.0.s8 %v3583
    %v3585 = vlaneseq
    %v3586 = vshrl.u32 %v3585, 7
    %v3587 = vsub.s32 %v3584, %v3586
    %v3588 = vrot.slane %v3574, %v3587
    %v3589 = vcombine.low %v3533, %v3549
    %v3590 = vcombine.high %v3533, %v3549
    %v3592 = vunpack.c.l.s4 1934713408
    %v3593 = vunpack.c.0.s8 %v3592
    %v3594 = vlaneseq
    %v3595 = vshrl.u32 %v3594, 7
    %v3596 = vsub.s32 %v3593, %v3595
    %v3597 = vrot.slane %v3589, %v3596
    %v3599 = vunpack.c.l.s4 1934713408
    %v3600 = vunpack.c.0.s8 %v3599
    %v3601 = vlaneseq
    %v3602 = vshrl.u32 %v3601, 7
    %v3603 = vsub.s32 %v3600, %v3602
    %v3604 = vrot.slane %v3590, %v3603
    %v3605 = vcombine.low %v3540, %v3556
    %v3606 = vcombine.high %v3540, %v3556
    %v3608 = vunpack.c.l.s4 1934713408
    %v3609 = vunpack.c.0.s8 %v3608
    %v3610 = vlaneseq
    %v3611 = vshrl.u32 %v3610, 7
    %v3612 = vsub.s32 %v3609, %v3611
    %v3613 = vrot.slane %v3605, %v3612
    %v3615 = vunpack.c.l.s4 1934713408
    %v3616 = vunpack.c.0.s8 %v3615
    %v3617 = vlaneseq
    %v3618 = vshrl.u32 %v3617, 7
    %v3619 = vsub.s32 %v3616, %v3618
    %v3620 = vrot.slane %v3606, %v3619
    %v3621 = vcombine.low %v3565, %v3597
    %v3622 = vcombine.high %v3565, %v3597
    %v3623 = vcombine.low %v3572, %v3604
    %v3624 = vcombine.high %v3572, %v3604
    %v3625 = vcombine.low %v3581, %v3613
    %v3626 = vcombine.high %v3581, %v3613
    %v3627 = vcombine.low %v3588, %v3620
    %v3628 = vcombine.high %v3588, %v3620
    %v3629 = vcombine.low %v3051, %v3160
    %v3630 = vcombine.high %v3051, %v3160
    %v3632 = vunpack.c.l.s4 1983009808
    %v3633 = vunpack.c.0.s8 %v3632
    %v3634 = vlaneseq
    %v3635 = vshrl.u32 %v3634, 7
    %v3636 = vsub.s32 %v3633, %v3635
    %v3637 = vrot.slane %v3629, %v3636
    %v3639 = vunpack.c.l.s4 1983009808
    %v3640 = vunpack.c.0.s8 %v3639
    %v3641 = vlaneseq
    %v3642 = vshrl.u32 %v3641, 7
    %v3643 = vsub.s32 %v3640, %v3642
    %v3644 = vrot.slane %v3630, %v3643
    %v3645 = vcombine.low %v3148, %v3172
    %v3646 = vcombine.high %v3148, %v3172
    %v3648 = vunpack.c.l.s4 1983009808
    %v3649 = vunpack.c.0.s8 %v3648
    %v3650 = vlaneseq
    %v3651 = vshrl.u32 %v3650, 7
    %v3652 = vsub.s32 %v3649, %v3651
    %v3653 = vrot.slane %v3645, %v3652
    %v3655 = vunpack.c.l.s4 1983009808
    %v3656 = vunpack.c.0.s8 %v3655
    %v3657 = vlaneseq
    %v3658 = vshrl.u32 %v3657, 7
    %v3659 = vsub.s32 %v3656, %v3658
    %v3660 = vrot.slane %v3646, %v3659
    %v3661 = vcombine.low %v3052, %v3200
    %v3662 = vcombine.high %v3052, %v3200
    %v3664 = vunpack.c.l.s4 1983009808
    %v3665 = vunpack.c.0.s8 %v3664
    %v3666 = vlaneseq
    %v3667 = vshrl.u32 %v3666, 7
    %v3668 = vsub.s32 %v3665, %v3667
    %v3669 = vrot.slane %v3661, %v3668
    %v3671 = vunpack.c.l.s4 1983009808
    %v3672 = vunpack.c.0.s8 %v3671
    %v3673 = vlaneseq
    %v3674 = vshrl.u32 %v3673, 7
    %v3675 = vsub.s32 %v3672, %v3674
    %v3676 = vrot.slane %v3662, %v3675
    %v3677 = vcombine.low %v3188, %v3212
    %v3678 = vcombine.high %v3188, %v3212
    %v3680 = vunpack.c.l.s4 1983009808
    %v3681 = vunpack.c.0.s8 %v3680
    %v3682 = vlaneseq
    %v3683 = vshrl.u32 %v3682, 7
    %v3684 = vsub.s32 %v3681, %v3683
    %v3685 = vrot.slane %v3677, %v3684
    %v3687 = vunpack.c.l.s4 1983009808
    %v3688 = vunpack.c.0.s8 %v3687
    %v3689 = vlaneseq
    %v3690 = vshrl.u32 %v3689, 7
    %v3691 = vsub.s32 %v3688, %v3690
    %v3692 = vrot.slane %v3678, %v3691
    %v3693 = vcombine.low %v3637, %v3653
    %v3694 = vcombine.high %v3637, %v3653
    %v3696 = vunpack.c.l.s4 1934713408
    %v3697 = vunpack.c.0.s8 %v3696
    %v3698 = vlaneseq
    %v3699 = vshrl.u32 %v3698, 7
    %v3700 = vsub.s32 %v3697, %v3699
    %v3701 = vrot.slane %v3693, %v3700
    %v3703 = vunpack.c.l.s4 1934713408
    %v3704 = vunpack.c.0.s8 %v3703
    %v3705 = vlaneseq
    %v3706 = vshrl.u32 %v3705, 7
    %v3707 = vsub.s32 %v3704, %v3706
    %v3708 = vrot.slane %v3694, %v3707
    %v3709 = vcombine.low %v3644, %v3660
    %v3710 = vcombine.high %v3644, %v3660
    %v3712 = vunpack.c.l.s4 1934713408
    %v3713 = vunpack.c.0.s8 %v3712
    %v3714 = vlaneseq
    %v3715 = vshrl.u32 %v3714, 7
    %v3716 = vsub.s32 %v3713, %v3715
    %v3717 = vrot.slane %v3709, %v3716
    %v3719 = vunpack.c.l.s4 1934713408
    %v3720 = vunpack.c.0.s8 %v3719
    %v3721 = vlaneseq
    %v3722 = vshrl.u32 %v3721, 7
    %v3723 = vsub.s32 %v3720, %v3722
    %v3724 = vrot.slane %v3710, %v3723
    %v3725 = vcombine.low %v3669, %v3685
    %v3726 = vcombine.high %v3669, %v3685
    %v3728 = vunpack.c.l.s4 1934713408
    %v3729 = vunpack.c.0.s8 %v3728
    %v3730 = vlaneseq
    %v3731 = vshrl.u32 %v3730, 7
    %v3732 = vsub.s32 %v3729, %v3731
    %v3733 = vrot.slane %v3725, %v3732
    %v3735 = vunpack.c.l.s4 1934713408
    %v3736 = vunpack.c.0.s8 %v3735
    %v3737 = vlaneseq
    %v3738 = vshrl.u32 %v3737, 7
    %v3739 = vsub.s32 %v3736, %v3738
    %v3740 = vrot.slane %v3726, %v3739
    %v3741 = vcombine.low %v3676, %v3692
    %v3742 = vcombine.high %v3676, %v3692
    %v3744 = vunpack.c.l.s4 1934713408
    %v3745 = vunpack.c.0.s8 %v3744
    %v3746 = vlaneseq
    %v3747 = vshrl.u32 %v3746, 7
    %v3748 = vsub.s32 %v3745, %v3747
    %v3749 = vrot.slane %v3741, %v3748
    %v3751 = vunpack.c.l.s4 1934713408
    %v3752 = vunpack.c.0.s8 %v3751
    %v3753 = vlaneseq
    %v3754 = vshrl.u32 %v3753, 7
    %v3755 = vsub.s32 %v3752, %v3754
    %v3756 = vrot.slane %v3742, %v3755
    %v3757 = vcombine.low %v3701, %v3733
    %v3758 = vcombine.high %v3701, %v3733
    %v3759 = vcombine.low %v3708, %v3740
    %v3760 = vcombine.high %v3708, %v3740
    %v3761 = vcombine.low %v3717, %v3749
    %v3762 = vcombine.high %v3717, %v3749
    %v3763 = vcombine.low %v3724, %v3756
    %v3764 = vcombine.high %v3724, %v3756
    %v3765 = vcombine.low %v3053, %v3082
    %v3766 = vcombine.high %v3053, %v3082
    %v3768 = vunpack.c.l.s4 1983009808
    %v3769 = vunpack.c.0.s8 %v3768
    %v3770 = vlaneseq
    %v3771 = vshrl.u32 %v3770, 7
    %v3772 = vsub.s32 %v3769, %v3771
    %v3773 = vrot.slane %v3765, %v3772
    %v3775 = vunpack.c.l.s4 1983009808
    %v3776 = vunpack.c.0.s8 %v3775
    %v3777 = vlaneseq
    %v3778 = vshrl.u32 %v3777, 7
    %v3779 = vsub.s32 %v3776, %v3778
    %v3780 = vrot.slane %v3766, %v3779
    %v3781 = vcombine.low %v3070, %v3094
    %v3782 = vcombine.high %v3070, %v3094
    %v3784 = vunpack.c.l.s4 1983009808
    %v3785 = vunpack.c.0.s8 %v3784
    %v3786 = vlaneseq
    %v3787 = vshrl.u32 %v3786, 7
    %v3788 = vsub.s32 %v3785, %v3787
    %v3789 = vrot.slane %v3781, %v3788
    %v3791 = vunpack.c.l.s4 1983009808
    %v3792 = vunpack.c.0.s8 %v3791
    %v3793 = vlaneseq
    %v3794 = vshrl.u32 %v3793, 7
    %v3795 = vsub.s32 %v3792, %v3794
    %v3796 = vrot.slane %v3782, %v3795
    %v3797 = vcombine.low %v3054, %v3122
    %v3798 = vcombine.high %v3054, %v3122
    %v3800 = vunpack.c.l.s4 1983009808
    %v3801 = vunpack.c.0.s8 %v3800
    %v3802 = vlaneseq
    %v3803 = vshrl.u32 %v3802, 7
    %v3804 = vsub.s32 %v3801, %v3803
    %v3805 = vrot.slane %v3797, %v3804
    %v3807 = vunpack.c.l.s4 1983009808
    %v3808 = vunpack.c.0.s8 %v3807
    %v3809 = vlaneseq
    %v3810 = vshrl.u32 %v3809, 7
    %v3811 = vsub.s32 %v3808, %v3810
    %v3812 = vrot.slane %v3798, %v3811
    %v3813 = vcombine.low %v3110, %v3134
    %v3814 = vcombine.high %v3110, %v3134
    %v3816 = vunpack.c.l.s4 1983009808
    %v3817 = vunpack.c.0.s8 %v3816
    %v3818 = vlaneseq
    %v3819 = vshrl.u32 %v3818, 7
    %v3820 = vsub.s32 %v3817, %v3819
    %v3821 = vrot.slane %v3813, %v3820
    %v3823 = vunpack.c.l.s4 1983009808
    %v3824 = vunpack.c.0.s8 %v3823
    %v3825 = vlaneseq
    %v3826 = vshrl.u32 %v3825, 7
    %v3827 = vsub.s32 %v3824, %v3826
    %v3828 = vrot.slane %v3814, %v3827
    %v3829 = vcombine.low %v3773, %v3789
    %v3830 = vcombine.high %v3773, %v3789
    %v3832 = vunpack.c.l.s4 1934713408
    %v3833 = vunpack.c.0.s8 %v3832
    %v3834 = vlaneseq
    %v3835 = vshrl.u32 %v3834, 7
    %v3836 = vsub.s32 %v3833, %v3835
    %v3837 = vrot.slane %v3829, %v3836
    %v3839 = vunpack.c.l.s4 1934713408
    %v3840 = vunpack.c.0.s8 %v3839
    %v3841 = vlaneseq
    %v3842 = vshrl.u32 %v3841, 7
    %v3843 = vsub.s32 %v3840, %v3842
    %v3844 = vrot.slane %v3830, %v3843
    %v3845 = vcombine.low %v3780, %v3796
    %v3846 = vcombine.high %v3780, %v3796
    %v3848 = vunpack.c.l.s4 1934713408
    %v3849 = vunpack.c.0.s8 %v3848
    %v3850 = vlaneseq
    %v3851 = vshrl.u32 %v3850, 7
    %v3852 = vsub.s32 %v3849, %v3851
    %v3853 = vrot.slane %v3845, %v3852
    %v3855 = vunpack.c.l.s4 1934713408
    %v3856 = vunpack.c.0.s8 %v3855
    %v3857 = vlaneseq
    %v3858 = vshrl.u32 %v3857, 7
    %v3859 = vsub.s32 %v3856, %v3858
    %v3860 = vrot.slane %v3846, %v3859
    %v3861 = vcombine.low %v3805, %v3821
    %v3862 = vcombine.high %v3805, %v3821
    %v3864 = vunpack.c.l.s4 1934713408
    %v3865 = vunpack.c.0.s8 %v3864
    %v3866 = vlaneseq
    %v3867 = vshrl.u32 %v3866, 7
    %v3868 = vsub.s32 %v3865, %v3867
    %v3869 = vrot.slane %v3861, %v3868
    %v3871 = vunpack.c.l.s4 1934713408
    %v3872 = vunpack.c.0.s8 %v3871
    %v3873 = vlaneseq
    %v3874 = vshrl.u32 %v3873, 7
    %v3875 = vsub.s32 %v3872, %v3874
    %v3876 = vrot.slane %v3862, %v3875
    %v3877 = vcombine.low %v3812, %v3828
    %v3878 = vcombine.high %v3812, %v3828
    %v3880 = vunpack.c.l.s4 1934713408
    %v3881 = vunpack.c.0.s8 %v3880
    %v3882 = vlaneseq
    %v3883 = vshrl.u32 %v3882, 7
    %v3884 = vsub.s32 %v3881, %v3883
    %v3885 = vrot.slane %v3877, %v3884
    %v3887 = vunpack.c.l.s4 1934713408
    %v3888 = vunpack.c.0.s8 %v3887
    %v3889 = vlaneseq
    %v3890 = vshrl.u32 %v3889, 7
    %v3891 = vsub.s32 %v3888, %v3890
    %v3892 = vrot.slane %v3878, %v3891
    %v3893 = vcombine.low %v3837, %v3869
    %v3894 = vcombine.high %v3837, %v3869
    %v3895 = vcombine.low %v3844, %v3876
    %v3896 = vcombine.high %v3844, %v3876
    %v3897 = vcombine.low %v3853, %v3885
    %v3898 = vcombine.high %v3853, %v3885
    %v3899 = vcombine.low %v3860, %v3892
    %v3900 = vcombine.high %v3860, %v3892
    %v3901 = vcombine.low %v3055, %v3162
    %v3902 = vcombine.high %v3055, %v3162
    %v3904 = vunpack.c.l.s4 1983009808
    %v3905 = vunpack.c.0.s8 %v3904
    %v3906 = vlaneseq
    %v3907 = vshrl.u32 %v3906, 7
    %v3908 = vsub.s32 %v3905, %v3907
    %v3909 = vrot.slane %v3901, %v3908
    %v3911 = vunpack.c.l.s4 1983009808
    %v3912 = vunpack.c.0.s8 %v3911
    %v3913 = vlaneseq
    %v3914 = vshrl.u32 %v3913, 7
    %v3915 = vsub.s32 %v3912, %v3914
    %v3916 = vrot.slane %v3902, %v3915
    %v3917 = vcombine.low %v3150, %v3174
    %v3918 = vcombine.high %v3150, %v3174
    %v3920 = vunpack.c.l.s4 1983009808
    %v3921 = vunpack.c.0.s8 %v3920
    %v3922 = vlaneseq
    %v3923 = vshrl.u32 %v3922, 7
    %v3924 = vsub.s32 %v3921, %v3923
    %v3925 = vrot.slane %v3917, %v3924
    %v3927 = vunpack.c.l.s4 1983009808
    %v3928 = vunpack.c.0.s8 %v3927
    %v3929 = vlaneseq
    %v3930 = vshrl.u32 %v3929, 7
    %v3931 = vsub.s32 %v3928, %v3930
    %v3932 = vrot.slane %v3918, %v3931
    %v3933 = vcombine.low %v3056, %v3202
    %v3934 = vcombine.high %v3056, %v3202
    %v3936 = vunpack.c.l.s4 1983009808
    %v3937 = vunpack.c.0.s8 %v3936
    %v3938 = vlaneseq
    %v3939 = vshrl.u32 %v3938, 7
    %v3940 = vsub.s32 %v3937, %v3939
    %v3941 = vrot.slane %v3933, %v3940
    %v3943 = vunpack.c.l.s4 1983009808
    %v3944 = vunpack.c.0.s8 %v3943
    %v3945 = vlaneseq
    %v3946 = vshrl.u32 %v3945, 7
    %v3947 = vsub.s32 %v3944, %v3946
    %v3948 = vrot.slane %v3934, %v3947
    %v3949 = vcombine.low %v3190, %v3214
    %v3950 = vcombine.high %v3190, %v3214
    %v3952 = vunpack.c.l.s4 1983009808
    %v3953 = vunpack.c.0.s8 %v3952
    %v3954 = vlaneseq
    %v3955 = vshrl.u32 %v3954, 7
    %v3956 = vsub.s32 %v3953, %v3955
    %v3957 = vrot.slane %v3949, %v3956
    %v3959 = vunpack.c.l.s4 1983009808
    %v3960 = vunpack.c.0.s8 %v3959
    %v3961 = vlaneseq
    %v3962 = vshrl.u32 %v3961, 7
    %v3963 = vsub.s32 %v3960, %v3962
    %v3964 = vrot.slane %v3950, %v3963
    %v3965 = vcombine.low %v3909, %v3925
    %v3966 = vcombine.high %v3909, %v3925
    %v3968 = vunpack.c.l.s4 1934713408
    %v3969 = vunpack.c.0.s8 %v3968
    %v3970 = vlaneseq
    %v3971 = vshrl.u32 %v3970, 7
    %v3972 = vsub.s32 %v3969, %v3971
    %v3973 = vrot.slane %v3965, %v3972
    %v3975 = vunpack.c.l.s4 1934713408
    %v3976 = vunpack.c.0.s8 %v3975
    %v3977 = vlaneseq
    %v3978 = vshrl.u32 %v3977, 7
    %v3979 = vsub.s32 %v3976, %v3978
    %v3980 = vrot.slane %v3966, %v3979
    %v3981 = vcombine.low %v3916, %v3932
    %v3982 = vcombine.high %v3916, %v3932
    %v3984 = vunpack.c.l.s4 1934713408
    %v3985 = vunpack.c.0.s8 %v3984
    %v3986 = vlaneseq
    %v3987 = vshrl.u32 %v3986, 7
    %v3988 = vsub.s32 %v3985, %v3987
    %v3989 = vrot.slane %v3981, %v3988
    %v3991 = vunpack.c.l.s4 1934713408
    %v3992 = vunpack.c.0.s8 %v3991
    %v3993 = vlaneseq
    %v3994 = vshrl.u32 %v3993, 7
    %v3995 = vsub.s32 %v3992, %v3994
    %v3996 = vrot.slane %v3982, %v3995
    %v3997 = vcombine.low %v3941, %v3957
    %v3998 = vcombine.high %v3941, %v3957
    %v4000 = vunpack.c.l.s4 1934713408
    %v4001 = vunpack.c.0.s8 %v4000
    %v4002 = vlaneseq
    %v4003 = vshrl.u32 %v4002, 7
    %v4004 = vsub.s32 %v4001, %v4003
    %v4005 = vrot.slane %v3997, %v4004
    %v4007 = vunpack.c.l.s4 1934713408
    %v4008 = vunpack.c.0.s8 %v4007
    %v4009 = vlaneseq
    %v4010 = vshrl.u32 %v4009, 7
    %v4011 = vsub.s32 %v4008, %v4010
    %v4012 = vrot.slane %v3998, %v4011
    %v4013 = vcombine.low %v3948, %v3964
    %v4014 = vcombine.high %v3948, %v3964
    %v4016 = vunpack.c.l.s4 1934713408
    %v4017 = vunpack.c.0.s8 %v4016
    %v4018 = vlaneseq
    %v4019 = vshrl.u32 %v4018, 7
    %v4020 = vsub.s32 %v4017, %v4019
    %v4021 = vrot.slane %v4013, %v4020
    %v4023 = vunpack.c.l.s4 1934713408
    %v4024 = vunpack.c.0.s8 %v4023
    %v4025 = vlaneseq
    %v4026 = vshrl.u32 %v4025, 7
    %v4027 = vsub.s32 %v4024, %v4026
    %v4028 = vrot.slane %v4014, %v4027
    %v4029 = vcombine.low %v3973, %v4005
    %v4030 = vcombine.high %v3973, %v4005
    %v4031 = vcombine.low %v3980, %v4012
    %v4032 = vcombine.high %v3980, %v4012
    %v4033 = vcombine.low %v3989, %v4021
    %v4034 = vcombine.high %v3989, %v4021
    %v4035 = vcombine.low %v3996, %v4028
    %v4036 = vcombine.high %v3996, %v4028
    %v4037 = vcombine.low %v3057, %v3084
    %v4038 = vcombine.high %v3057, %v3084
    %v4040 = vunpack.c.l.s4 1983009808
    %v4041 = vunpack.c.0.s8 %v4040
    %v4042 = vlaneseq
    %v4043 = vshrl.u32 %v4042, 7
    %v4044 = vsub.s32 %v4041, %v4043
    %v4045 = vrot.slane %v4037, %v4044
    %v4047 = vunpack.c.l.s4 1983009808
    %v4048 = vunpack.c.0.s8 %v4047
    %v4049 = vlaneseq
    %v4050 = vshrl.u32 %v4049, 7
    %v4051 = vsub.s32 %v4048, %v4050
    %v4052 = vrot.slane %v4038, %v4051
    %v4053 = vcombine.low %v3072, %v3096
    %v4054 = vcombine.high %v3072, %v3096
    %v4056 = vunpack.c.l.s4 1983009808
    %v4057 = vunpack.c.0.s8 %v4056
    %v4058 = vlaneseq
    %v4059 = vshrl.u32 %v4058, 7
    %v4060 = vsub.s32 %v4057, %v4059
    %v4061 = vrot.slane %v4053, %v4060
    %v4063 = vunpack.c.l.s4 1983009808
    %v4064 = vunpack.c.0.s8 %v4063
    %v4065 = vlaneseq
    %v4066 = vshrl.u32 %v4065, 7
    %v4067 = vsub.s32 %v4064, %v4066
    %v4068 = vrot.slane %v4054, %v4067
    %v4069 = vcombine.low %v3058, %v3124
    %v4070 = vcombine.high %v3058, %v3124
    %v4072 = vunpack.c.l.s4 1983009808
    %v4073 = vunpack.c.0.s8 %v4072
    %v4074 = vlaneseq
    %v4075 = vshrl.u32 %v4074, 7
    %v4076 = vsub.s32 %v4073, %v4075
    %v4077 = vrot.slane %v4069, %v4076
    %v4079 = vunpack.c.l.s4 1983009808
    %v4080 = vunpack.c.0.s8 %v4079
    %v4081 = vlaneseq
    %v4082 = vshrl.u32 %v4081, 7
    %v4083 = vsub.s32 %v4080, %v4082
    %v4084 = vrot.slane %v4070, %v4083
    %v4085 = vcombine.low %v3112, %v3136
    %v4086 = vcombine.high %v3112, %v3136
    %v4088 = vunpack.c.l.s4 1983009808
    %v4089 = vunpack.c.0.s8 %v4088
    %v4090 = vlaneseq
    %v4091 = vshrl.u32 %v4090, 7
    %v4092 = vsub.s32 %v4089, %v4091
    %v4093 = vrot.slane %v4085, %v4092
    %v4095 = vunpack.c.l.s4 1983009808
    %v4096 = vunpack.c.0.s8 %v4095
    %v4097 = vlaneseq
    %v4098 = vshrl.u32 %v4097, 7
    %v4099 = vsub.s32 %v4096, %v4098
    %v4100 = vrot.slane %v4086, %v4099
    %v4101 = vcombine.low %v4045, %v4061
    %v4102 = vcombine.high %v4045, %v4061
    %v4104 = vunpack.c.l.s4 1934713408
    %v4105 = vunpack.c.0.s8 %v4104
    %v4106 = vlaneseq
    %v4107 = vshrl.u32 %v4106, 7
    %v4108 = vsub.s32 %v4105, %v4107
    %v4109 = vrot.slane %v4101, %v4108
    %v4111 = vunpack.c.l.s4 1934713408
    %v4112 = vunpack.c.0.s8 %v4111
    %v4113 = vlaneseq
    %v4114 = vshrl.u32 %v4113, 7
    %v4115 = vsub.s32 %v4112, %v4114
    %v4116 = vrot.slane %v4102, %v4115
    %v4117 = vcombine.low %v4052, %v4068
    %v4118 = vcombine.high %v4052, %v4068
    %v4120 = vunpack.c.l.s4 1934713408
    %v4121 = vunpack.c.0.s8 %v4120
    %v4122 = vlaneseq
    %v4123 = vshrl.u32 %v4122, 7
    %v4124 = vsub.s32 %v4121, %v4123
    %v4125 = vrot.slane %v4117, %v4124
    %v4127 = vunpack.c.l.s4 1934713408
    %v4128 = vunpack.c.0.s8 %v4127
    %v4129 = vlaneseq
    %v4130 = vshrl.u32 %v4129, 7
    %v4131 = vsub.s32 %v4128, %v4130
    %v4132 = vrot.slane %v4118, %v4131
    %v4133 = vcombine.low %v4077, %v4093
    %v4134 = vcombine.high %v4077, %v4093
    %v4136 = vunpack.c.l.s4 1934713408
    %v4137 = vunpack.c.0.s8 %v4136
    %v4138 = vlaneseq
    %v4139 = vshrl.u32 %v4138, 7
    %v4140 = vsub.s32 %v4137, %v4139
    %v4141 = vrot.slane %v4133, %v4140
    %v4143 = vunpack.c.l.s4 1934713408
    %v4144 = vunpack.c.0.s8 %v4143
    %v4145 = vlaneseq
    %v4146 = vshrl.u32 %v4145, 7
    %v4147 = vsub.s32 %v4144, %v4146
    %v4148 = vrot.slane %v4134, %v4147
    %v4149 = vcombine.low %v4084, %v4100
    %v4150 = vcombine.high %v4084, %v4100
    %v4152 = vunpack.c.l.s4 1934713408
    %v4153 = vunpack.c.0.s8 %v4152
    %v4154 = vlaneseq
    %v4155 = vshrl.u32 %v4154, 7
    %v4156 = vsub.s32 %v4153, %v4155
    %v4157 = vrot.slane %v4149, %v4156
    %v4159 = vunpack.c.l.s4 1934713408
    %v4160 = vunpack.c.0.s8 %v4159
    %v4161 = vlaneseq
    %v4162 = vshrl.u32 %v4161, 7
    %v4163 = vsub.s32 %v4160, %v4162
    %v4164 = vrot.slane %v4150, %v4163
    %v4165 = vcombine.low %v4109, %v4141
    %v4166 = vcombine.high %v4109, %v4141
    %v4167 = vcombine.low %v4116, %v4148
    %v4168 = vcombine.high %v4116, %v4148
    %v4169 = vcombine.low %v4125, %v4157
    %v4170 = vcombine.high %v4125, %v4157
    %v4171 = vcombine.low %v4132, %v4164
    %v4172 = vcombine.high %v4132, %v4164
    %v4173 = vcombine.low %v3059, %v3164
    %v4174 = vcombine.high %v3059, %v3164
    %v4176 = vunpack.c.l.s4 1983009808
    %v4177 = vunpack.c.0.s8 %v4176
    %v4178 = vlaneseq
    %v4179 = vshrl.u32 %v4178, 7
    %v4180 = vsub.s32 %v4177, %v4179
    %v4181 = vrot.slane %v4173, %v4180
    %v4183 = vunpack.c.l.s4 1983009808
    %v4184 = vunpack.c.0.s8 %v4183
    %v4185 = vlaneseq
    %v4186 = vshrl.u32 %v4185, 7
    %v4187 = vsub.s32 %v4184, %v4186
    %v4188 = vrot.slane %v4174, %v4187
    %v4189 = vcombine.low %v3152, %v3176
    %v4190 = vcombine.high %v3152, %v3176
    %v4192 = vunpack.c.l.s4 1983009808
    %v4193 = vunpack.c.0.s8 %v4192
    %v4194 = vlaneseq
    %v4195 = vshrl.u32 %v4194, 7
    %v4196 = vsub.s32 %v4193, %v4195
    %v4197 = vrot.slane %v4189, %v4196
    %v4199 = vunpack.c.l.s4 1983009808
    %v4200 = vunpack.c.0.s8 %v4199
    %v4201 = vlaneseq
    %v4202 = vshrl.u32 %v4201, 7
    %v4203 = vsub.s32 %v4200, %v4202
    %v4204 = vrot.slane %v4190, %v4203
    %v4205 = vcombine.low %v3060, %v3204
    %v4206 = vcombine.high %v3060, %v3204
    %v4208 = vunpack.c.l.s4 1983009808
    %v4209 = vunpack.c.0.s8 %v4208
    %v4210 = vlaneseq
    %v4211 = vshrl.u32 %v4210, 7
    %v4212 = vsub.s32 %v4209, %v4211
    %v4213 = vrot.slane %v4205, %v4212
    %v4215 = vunpack.c.l.s4 1983009808
    %v4216 = vunpack.c.0.s8 %v4215
    %v4217 = vlaneseq
    %v4218 = vshrl.u32 %v4217, 7
    %v4219 = vsub.s32 %v4216, %v4218
    %v4220 = vrot.slane %v4206, %v4219
    %v4221 = vcombine.low %v3192, %v3216
    %v4222 = vcombine.high %v3192, %v3216
    %v4224 = vunpack.c.l.s4 1983009808
    %v4225 = vunpack.c.0.s8 %v4224
    %v4226 = vlaneseq
    %v4227 = vshrl.u32 %v4226, 7
    %v4228 = vsub.s32 %v4225, %v4227
    %v4229 = vrot.slane %v4221, %v4228
    %v4231 = vunpack.c.l.s4 1983009808
    %v4232 = vunpack.c.0.s8 %v4231
    %v4233 = vlaneseq
    %v4234 = vshrl.u32 %v4233, 7
    %v4235 = vsub.s32 %v4232, %v4234
    %v4236 = vrot.slane %v4222, %v4235
    %v4237 = vcombine.low %v4181, %v4197
    %v4238 = vcombine.high %v4181, %v4197
    %v4240 = vunpack.c.l.s4 1934713408
    %v4241 = vunpack.c.0.s8 %v4240
    %v4242 = vlaneseq
    %v4243 = vshrl.u32 %v4242, 7
    %v4244 = vsub.s32 %v4241, %v4243
    %v4245 = vrot.slane %v4237, %v4244
    %v4247 = vunpack.c.l.s4 1934713408
    %v4248 = vunpack.c.0.s8 %v4247
    %v4249 = vlaneseq
    %v4250 = vshrl.u32 %v4249, 7
    %v4251 = vsub.s32 %v4248, %v4250
    %v4252 = vrot.slane %v4238, %v4251
    %v4253 = vcombine.low %v4188, %v4204
    %v4254 = vcombine.high %v4188, %v4204
    %v4256 = vunpack.c.l.s4 1934713408
    %v4257 = vunpack.c.0.s8 %v4256
    %v4258 = vlaneseq
    %v4259 = vshrl.u32 %v4258, 7
    %v4260 = vsub.s32 %v4257, %v4259
    %v4261 = vrot.slane %v4253, %v4260
    %v4263 = vunpack.c.l.s4 1934713408
    %v4264 = vunpack.c.0.s8 %v4263
    %v4265 = vlaneseq
    %v4266 = vshrl.u32 %v4265, 7
    %v4267 = vsub.s32 %v4264, %v4266
    %v4268 = vrot.slane %v4254, %v4267
    %v4269 = vcombine.low %v4213, %v4229
    %v4270 = vcombine.high %v4213, %v4229
    %v4272 = vunpack.c.l.s4 1934713408
    %v4273 = vunpack.c.0.s8 %v4272
    %v4274 = vlaneseq
    %v4275 = vshrl.u32 %v4274, 7
    %v4276 = vsub.s32 %v4273, %v4275
    %v4277 = vrot.slane %v4269, %v4276
    %v4279 = vunpack.c.l.s4 1934713408
    %v4280 = vunpack.c.0.s8 %v4279
    %v4281 = vlaneseq
    %v4282 = vshrl.u32 %v4281, 7
    %v4283 = vsub.s32 %v4280, %v4282
    %v4284 = vrot.slane %v4270, %v4283
    %v4285 = vcombine.low %v4220, %v4236
    %v4286 = vcombine.high %v4220, %v4236
    %v4288 = vunpack.c.l.s4 1934713408
    %v4289 = vunpack.c.0.s8 %v4288
    %v4290 = vlaneseq
    %v4291 = vshrl.u32 %v4290, 7
    %v4292 = vsub.s32 %v4289, %v4291
    %v4293 = vrot.slane %v4285, %v4292
    %v4295 = vunpack.c.l.s4 1934713408
    %v4296 = vunpack.c.0.s8 %v4295
    %v4297 = vlaneseq
    %v4298 = vshrl.u32 %v4297, 7
    %v4299 = vsub.s32 %v4296, %v4298
    %v4300 = vrot.slane %v4286, %v4299
    %v4301 = vcombine.low %v4245, %v4277
    %v4302 = vcombine.high %v4245, %v4277
    %v4303 = vcombine.low %v4252, %v4284
    %v4304 = vcombine.high %v4252, %v4284
    %v4305 = vcombine.low %v4261, %v4293
    %v4306 = vcombine.high %v4261, %v4293
    %v4307 = vcombine.low %v4268, %v4300
    %v4308 = vcombine.high %v4268, %v4300
    %v4309 = vsel %vm2535, %v3349, 0.0
    %4310 = vadd.xlane.f32.xlu0 %v4309
    %v4311 = vpop.xlane.xlu0 %4310
    %v4312 = vsel %vm2535, %v3485, 0.0
    %4313 = vadd.xlane.f32.xlu0 %v4312
    %v4314 = vpop.xlane.xlu0 %4313
    %v4315 = vsel %vm2535, %v3350, 0.0
    %4316 = vadd.xlane.f32.xlu0 %v4315
    %v4317 = vpop.xlane.xlu0 %4316
    %v4318 = vsel %vm2535, %v3486, 0.0
    %4319 = vadd.xlane.f32.xlu0 %v4318
    %v4320 = vpop.xlane.xlu0 %4319
    %v4321 = vsel %vm2535, %v3351, 0.0
    %4322 = vadd.xlane.f32.xlu0 %v4321
    %v4323 = vpop.xlane.xlu0 %4322
    %v4324 = vsel %vm2535, %v3487, 0.0
    %4325 = vadd.xlane.f32.xlu0 %v4324
    %v4326 = vpop.xlane.xlu0 %4325
    %v4327 = vsel %vm2535, %v3352, 0.0
    %4328 = vadd.xlane.f32.xlu0 %v4327
    %v4329 = vpop.xlane.xlu0 %4328
    %v4330 = vsel %vm2535, %v3488, 0.0
    %4331 = vadd.xlane.f32.xlu0 %v4330
    %v4332 = vpop.xlane.xlu0 %4331
    %v4333 = vsel %vm2535, %v3353, 0.0
    %4334 = vadd.xlane.f32.xlu0 %v4333
    %v4335 = vpop.xlane.xlu0 %4334
    %v4336 = vsel %vm2535, %v3489, 0.0
    %4337 = vadd.xlane.f32.xlu0 %v4336
    %v4338 = vpop.xlane.xlu0 %4337
    %v4339 = vsel %vm2535, %v3354, 0.0
    %4340 = vadd.xlane.f32.xlu0 %v4339
    %v4341 = vpop.xlane.xlu0 %4340
    %v4342 = vsel %vm2535, %v3490, 0.0
    %4343 = vadd.xlane.f32.xlu0 %v4342
    %v4344 = vpop.xlane.xlu0 %4343
    %v4345 = vsel %vm2535, %v3355, 0.0
    %4346 = vadd.xlane.f32.xlu0 %v4345
    %v4347 = vpop.xlane.xlu0 %4346
    %v4348 = vsel %vm2535, %v3491, 0.0
    %4349 = vadd.xlane.f32.xlu0 %v4348
    %v4350 = vpop.xlane.xlu0 %4349
    %v4351 = vsel %vm2535, %v3356, 0.0
    %4352 = vadd.xlane.f32.xlu0 %v4351
    %v4353 = vpop.xlane.xlu0 %4352
    %v4354 = vsel %vm2535, %v3492, 0.0
    %4355 = vadd.xlane.f32.xlu0 %v4354
    %v4356 = vpop.xlane.xlu0 %4355
    %v4357 = vsel %vm2535, %v3621, 0.0
    %4358 = vadd.xlane.f32.xlu0 %v4357
    %v4359 = vpop.xlane.xlu0 %4358
    %v4360 = vsel %vm2535, %v3757, 0.0
    %4361 = vadd.xlane.f32.xlu0 %v4360
    %v4362 = vpop.xlane.xlu0 %4361
    %v4363 = vsel %vm2535, %v3622, 0.0
    %4364 = vadd.xlane.f32.xlu0 %v4363
    %v4365 = vpop.xlane.xlu0 %4364
    %v4366 = vsel %vm2535, %v3758, 0.0
    %4367 = vadd.xlane.f32.xlu0 %v4366
    %v4368 = vpop.xlane.xlu0 %4367
    %v4369 = vsel %vm2535, %v3623, 0.0
    %4370 = vadd.xlane.f32.xlu0 %v4369
    %v4371 = vpop.xlane.xlu0 %4370
    %v4372 = vsel %vm2535, %v3759, 0.0
    %4373 = vadd.xlane.f32.xlu0 %v4372
    %v4374 = vpop.xlane.xlu0 %4373
    %v4375 = vsel %vm2535, %v3624, 0.0
    %4376 = vadd.xlane.f32.xlu0 %v4375
    %v4377 = vpop.xlane.xlu0 %4376
    %v4378 = vsel %vm2535, %v3760, 0.0
    %4379 = vadd.xlane.f32.xlu0 %v4378
    %v4380 = vpop.xlane.xlu0 %4379
    %v4381 = vsel %vm2535, %v3625, 0.0
    %4382 = vadd.xlane.f32.xlu0 %v4381
    %v4383 = vpop.xlane.xlu0 %4382
    %v4384 = vsel %vm2535, %v3761, 0.0
    %4385 = vadd.xlane.f32.xlu0 %v4384
    %v4386 = vpop.xlane.xlu0 %4385
    %v4387 = vsel %vm2535, %v3626, 0.0
    %4388 = vadd.xlane.f32.xlu0 %v4387
    %v4389 = vpop.xlane.xlu0 %4388
    %v4390 = vsel %vm2535, %v3762, 0.0
    %4391 = vadd.xlane.f32.xlu0 %v4390
    %v4392 = vpop.xlane.xlu0 %4391
    %v4393 = vsel %vm2535, %v3627, 0.0
    %4394 = vadd.xlane.f32.xlu0 %v4393
    %v4395 = vpop.xlane.xlu0 %4394
    %v4396 = vsel %vm2535, %v3763, 0.0
    %4397 = vadd.xlane.f32.xlu0 %v4396
    %v4398 = vpop.xlane.xlu0 %4397
    %v4399 = vsel %vm2535, %v3628, 0.0
    %4400 = vadd.xlane.f32.xlu0 %v4399
    %v4401 = vpop.xlane.xlu0 %4400
    %v4402 = vsel %vm2535, %v3764, 0.0
    %4403 = vadd.xlane.f32.xlu0 %v4402
    %v4404 = vpop.xlane.xlu0 %4403
    %v4405 = vsel %vm2535, %v3893, 0.0
    %4406 = vadd.xlane.f32.xlu0 %v4405
    %v4407 = vpop.xlane.xlu0 %4406
    %v4408 = vsel %vm2535, %v4029, 0.0
    %4409 = vadd.xlane.f32.xlu0 %v4408
    %v4410 = vpop.xlane.xlu0 %4409
    %v4411 = vsel %vm2535, %v3894, 0.0
    %4412 = vadd.xlane.f32.xlu0 %v4411
    %v4413 = vpop.xlane.xlu0 %4412
    %v4414 = vsel %vm2535, %v4030, 0.0
    %4415 = vadd.xlane.f32.xlu0 %v4414
    %v4416 = vpop.xlane.xlu0 %4415
    %v4417 = vsel %vm2535, %v3895, 0.0
    %4418 = vadd.xlane.f32.xlu0 %v4417
    %v4419 = vpop.xlane.xlu0 %4418
    %v4420 = vsel %vm2535, %v4031, 0.0
    %4421 = vadd.xlane.f32.xlu0 %v4420
    %v4422 = vpop.xlane.xlu0 %4421
    %v4423 = vsel %vm2535, %v3896, 0.0
    %4424 = vadd.xlane.f32.xlu0 %v4423
    %v4425 = vpop.xlane.xlu0 %4424
    %v4426 = vsel %vm2535, %v4032, 0.0
    %4427 = vadd.xlane.f32.xlu0 %v4426
    %v4428 = vpop.xlane.xlu0 %4427
    %v4429 = vsel %vm2535, %v3897, 0.0
    %4430 = vadd.xlane.f32.xlu0 %v4429
    %v4431 = vpop.xlane.xlu0 %4430
    %v4432 = vsel %vm2535, %v4033, 0.0
    %4433 = vadd.xlane.f32.xlu0 %v4432
    %v4434 = vpop.xlane.xlu0 %4433
    %v4435 = vsel %vm2535, %v3898, 0.0
    %4436 = vadd.xlane.f32.xlu0 %v4435
    %v4437 = vpop.xlane.xlu0 %4436
    %v4438 = vsel %vm2535, %v4034, 0.0
    %4439 = vadd.xlane.f32.xlu0 %v4438
    %v4440 = vpop.xlane.xlu0 %4439
    %v4441 = vsel %vm2535, %v3899, 0.0
    %4442 = vadd.xlane.f32.xlu0 %v4441
    %v4443 = vpop.xlane.xlu0 %4442
    %v4444 = vsel %vm2535, %v4035, 0.0
    %4445 = vadd.xlane.f32.xlu0 %v4444
    %v4446 = vpop.xlane.xlu0 %4445
    %v4447 = vsel %vm2535, %v3900, 0.0
    %4448 = vadd.xlane.f32.xlu0 %v4447
    %v4449 = vpop.xlane.xlu0 %4448
    %v4450 = vsel %vm2535, %v4036, 0.0
    %4451 = vadd.xlane.f32.xlu0 %v4450
    %v4452 = vpop.xlane.xlu0 %4451
    %v4453 = vsel %vm2535, %v4165, 0.0
    %4454 = vadd.xlane.f32.xlu0 %v4453
    %v4455 = vpop.xlane.xlu0 %4454
    %v4456 = vsel %vm2535, %v4301, 0.0
    %4457 = vadd.xlane.f32.xlu0 %v4456
    %v4458 = vpop.xlane.xlu0 %4457
    %v4459 = vsel %vm2535, %v4166, 0.0
    %4460 = vadd.xlane.f32.xlu0 %v4459
    %v4461 = vpop.xlane.xlu0 %4460
    %v4462 = vsel %vm2535, %v4302, 0.0
    %4463 = vadd.xlane.f32.xlu0 %v4462
    %v4464 = vpop.xlane.xlu0 %4463
    %v4465 = vsel %vm2535, %v4167, 0.0
    %4466 = vadd.xlane.f32.xlu0 %v4465
    %v4467 = vpop.xlane.xlu0 %4466
    %v4468 = vsel %vm2535, %v4303, 0.0
    %4469 = vadd.xlane.f32.xlu0 %v4468
    %v4470 = vpop.xlane.xlu0 %4469
    %v4471 = vsel %vm2535, %v4168, 0.0
    %4472 = vadd.xlane.f32.xlu0 %v4471
    %v4473 = vpop.xlane.xlu0 %4472
    %v4474 = vsel %vm2535, %v4304, 0.0
    %4475 = vadd.xlane.f32.xlu0 %v4474
    %v4476 = vpop.xlane.xlu0 %4475
    %v4477 = vsel %vm2535, %v4169, 0.0
    %4478 = vadd.xlane.f32.xlu0 %v4477
    %v4479 = vpop.xlane.xlu0 %4478
    %v4480 = vsel %vm2535, %v4305, 0.0
    %4481 = vadd.xlane.f32.xlu0 %v4480
    %v4482 = vpop.xlane.xlu0 %4481
    %v4483 = vsel %vm2535, %v4170, 0.0
    %4484 = vadd.xlane.f32.xlu0 %v4483
    %v4485 = vpop.xlane.xlu0 %4484
    %v4486 = vsel %vm2535, %v4306, 0.0
    %4487 = vadd.xlane.f32.xlu0 %v4486
    %v4488 = vpop.xlane.xlu0 %4487
    %v4489 = vsel %vm2535, %v4171, 0.0
    %4490 = vadd.xlane.f32.xlu0 %v4489
    %v4491 = vpop.xlane.xlu0 %4490
    %v4492 = vsel %vm2535, %v4307, 0.0
    %4493 = vadd.xlane.f32.xlu0 %v4492
    %v4494 = vpop.xlane.xlu0 %4493
    %v4495 = vsel %vm2535, %v4172, 0.0
    %4496 = vadd.xlane.f32.xlu0 %v4495
    %v4497 = vpop.xlane.xlu0 %4496
    %v4498 = vsel %vm2535, %v4308, 0.0
    %4499 = vadd.xlane.f32.xlu0 %v4498
    %v4500 = vpop.xlane.xlu0 %4499
    %v4501 = vrcp.pop 32.0
    %v4502 = vmul.f32 %v4311, %v4501
    %v4503 = vmul.f32 %v4314, %v4501
    %v4504 = vmul.f32 %v4317, %v4501
    %v4505 = vmul.f32 %v4320, %v4501
    %v4506 = vmul.f32 %v4323, %v4501
    %v4507 = vmul.f32 %v4326, %v4501
    %v4508 = vmul.f32 %v4329, %v4501
    %v4509 = vmul.f32 %v4332, %v4501
    %v4510 = vmul.f32 %v4335, %v4501
    %v4511 = vmul.f32 %v4338, %v4501
    %v4512 = vmul.f32 %v4341, %v4501
    %v4513 = vmul.f32 %v4344, %v4501
    %v4514 = vmul.f32 %v4347, %v4501
    %v4515 = vmul.f32 %v4350, %v4501
    %v4516 = vmul.f32 %v4353, %v4501
    %v4517 = vmul.f32 %v4356, %v4501
    %v4518 = vmul.f32 %v4359, %v4501
    %v4519 = vmul.f32 %v4362, %v4501
    %v4520 = vmul.f32 %v4365, %v4501
    %v4521 = vmul.f32 %v4368, %v4501
    %v4522 = vmul.f32 %v4371, %v4501
    %v4523 = vmul.f32 %v4374, %v4501
    %v4524 = vmul.f32 %v4377, %v4501
    %v4525 = vmul.f32 %v4380, %v4501
    %v4526 = vmul.f32 %v4383, %v4501
    %v4527 = vmul.f32 %v4386, %v4501
    %v4528 = vmul.f32 %v4389, %v4501
    %v4529 = vmul.f32 %v4392, %v4501
    %v4530 = vmul.f32 %v4395, %v4501
    %v4531 = vmul.f32 %v4398, %v4501
    %v4532 = vmul.f32 %v4401, %v4501
    %v4533 = vmul.f32 %v4404, %v4501
    %v4534 = vmul.f32 %v4407, %v4501
    %v4535 = vmul.f32 %v4410, %v4501
    %v4536 = vmul.f32 %v4413, %v4501
    %v4537 = vmul.f32 %v4416, %v4501
    %v4538 = vmul.f32 %v4419, %v4501
    %v4539 = vmul.f32 %v4422, %v4501
    %v4540 = vmul.f32 %v4425, %v4501
    %v4541 = vmul.f32 %v4428, %v4501
    %v4542 = vmul.f32 %v4431, %v4501
    %v4543 = vmul.f32 %v4434, %v4501
    %v4544 = vmul.f32 %v4437, %v4501
    %v4545 = vmul.f32 %v4440, %v4501
    %v4546 = vmul.f32 %v4443, %v4501
    %v4547 = vmul.f32 %v4446, %v4501
    %v4548 = vmul.f32 %v4449, %v4501
    %v4549 = vmul.f32 %v4452, %v4501
    %v4550 = vmul.f32 %v4455, %v4501
    %v4551 = vmul.f32 %v4458, %v4501
    %v4552 = vmul.f32 %v4461, %v4501
    %v4553 = vmul.f32 %v4464, %v4501
    %v4554 = vmul.f32 %v4467, %v4501
    %v4555 = vmul.f32 %v4470, %v4501
    %v4556 = vmul.f32 %v4473, %v4501
    %v4557 = vmul.f32 %v4476, %v4501
    %v4558 = vmul.f32 %v4479, %v4501
    %v4559 = vmul.f32 %v4482, %v4501
    %v4560 = vmul.f32 %v4485, %v4501
    %v4561 = vmul.f32 %v4488, %v4501
    %v4562 = vmul.f32 %v4491, %v4501
    %v4563 = vmul.f32 %v4494, %v4501
    %v4564 = vmul.f32 %v4497, %v4501
    %v4565 = vmul.f32 %v4500, %v4501
    %v4566 = vsel %vm2535, %v3349, -inf
    %4567 = vmax.xlane.f32.xlu0 %v4566
    %v4568 = vpop.xlane.xlu0 %4567
    %v4569 = vsel %vm2535, %v3485, -inf
    %4570 = vmax.xlane.f32.xlu0 %v4569
    %v4571 = vpop.xlane.xlu0 %4570
    %v4572 = vsel %vm2535, %v3350, -inf
    %4573 = vmax.xlane.f32.xlu0 %v4572
    %v4574 = vpop.xlane.xlu0 %4573
    %v4575 = vsel %vm2535, %v3486, -inf
    %4576 = vmax.xlane.f32.xlu0 %v4575
    %v4577 = vpop.xlane.xlu0 %4576
    %v4578 = vsel %vm2535, %v3351, -inf
    %4579 = vmax.xlane.f32.xlu0 %v4578
    %v4580 = vpop.xlane.xlu0 %4579
    %v4581 = vsel %vm2535, %v3487, -inf
    %4582 = vmax.xlane.f32.xlu0 %v4581
    %v4583 = vpop.xlane.xlu0 %4582
    %v4584 = vsel %vm2535, %v3352, -inf
    %4585 = vmax.xlane.f32.xlu0 %v4584
    %v4586 = vpop.xlane.xlu0 %4585
    %v4587 = vsel %vm2535, %v3488, -inf
    %4588 = vmax.xlane.f32.xlu0 %v4587
    %v4589 = vpop.xlane.xlu0 %4588
    %v4590 = vsel %vm2535, %v3353, -inf
    %4591 = vmax.xlane.f32.xlu0 %v4590
    %v4592 = vpop.xlane.xlu0 %4591
    %v4593 = vsel %vm2535, %v3489, -inf
    %4594 = vmax.xlane.f32.xlu0 %v4593
    %v4595 = vpop.xlane.xlu0 %4594
    %v4596 = vsel %vm2535, %v3354, -inf
    %4597 = vmax.xlane.f32.xlu0 %v4596
    %v4598 = vpop.xlane.xlu0 %4597
    %v4599 = vsel %vm2535, %v3490, -inf
    %4600 = vmax.xlane.f32.xlu0 %v4599
    %v4601 = vpop.xlane.xlu0 %4600
    %v4602 = vsel %vm2535, %v3355, -inf
    %4603 = vmax.xlane.f32.xlu0 %v4602
    %v4604 = vpop.xlane.xlu0 %4603
    %v4605 = vsel %vm2535, %v3491, -inf
    %4606 = vmax.xlane.f32.xlu0 %v4605
    %v4607 = vpop.xlane.xlu0 %4606
    %v4608 = vsel %vm2535, %v3356, -inf
    %4609 = vmax.xlane.f32.xlu0 %v4608
    %v4610 = vpop.xlane.xlu0 %4609
    %v4611 = vsel %vm2535, %v3492, -inf
    %4612 = vmax.xlane.f32.xlu0 %v4611
    %v4613 = vpop.xlane.xlu0 %4612
    %v4614 = vsel %vm2535, %v3621, -inf
    %4615 = vmax.xlane.f32.xlu0 %v4614
    %v4616 = vpop.xlane.xlu0 %4615
    %v4617 = vsel %vm2535, %v3757, -inf
    %4618 = vmax.xlane.f32.xlu0 %v4617
    %v4619 = vpop.xlane.xlu0 %4618
    %v4620 = vsel %vm2535, %v3622, -inf
    %4621 = vmax.xlane.f32.xlu0 %v4620
    %v4622 = vpop.xlane.xlu0 %4621
    %v4623 = vsel %vm2535, %v3758, -inf
    %4624 = vmax.xlane.f32.xlu0 %v4623
    %v4625 = vpop.xlane.xlu0 %4624
    %v4626 = vsel %vm2535, %v3623, -inf
    %4627 = vmax.xlane.f32.xlu0 %v4626
    %v4628 = vpop.xlane.xlu0 %4627
    %v4629 = vsel %vm2535, %v3759, -inf
    %4630 = vmax.xlane.f32.xlu0 %v4629
    %v4631 = vpop.xlane.xlu0 %4630
    %v4632 = vsel %vm2535, %v3624, -inf
    %4633 = vmax.xlane.f32.xlu0 %v4632
    %v4634 = vpop.xlane.xlu0 %4633
    %v4635 = vsel %vm2535, %v3760, -inf
    %4636 = vmax.xlane.f32.xlu0 %v4635
    %v4637 = vpop.xlane.xlu0 %4636
    %v4638 = vsel %vm2535, %v3625, -inf
    %4639 = vmax.xlane.f32.xlu0 %v4638
    %v4640 = vpop.xlane.xlu0 %4639
    %v4641 = vsel %vm2535, %v3761, -inf
    %4642 = vmax.xlane.f32.xlu0 %v4641
    %v4643 = vpop.xlane.xlu0 %4642
    %v4644 = vsel %vm2535, %v3626, -inf
    %4645 = vmax.xlane.f32.xlu0 %v4644
    %v4646 = vpop.xlane.xlu0 %4645
    %v4647 = vsel %vm2535, %v3762, -inf
    %4648 = vmax.xlane.f32.xlu0 %v4647
    %v4649 = vpop.xlane.xlu0 %4648
    %v4650 = vsel %vm2535, %v3627, -inf
    %4651 = vmax.xlane.f32.xlu0 %v4650
    %v4652 = vpop.xlane.xlu0 %4651
    %v4653 = vsel %vm2535, %v3763, -inf
    %4654 = vmax.xlane.f32.xlu0 %v4653
    %v4655 = vpop.xlane.xlu0 %4654
    %v4656 = vsel %vm2535, %v3628, -inf
    %4657 = vmax.xlane.f32.xlu0 %v4656
    %v4658 = vpop.xlane.xlu0 %4657
    %v4659 = vsel %vm2535, %v3764, -inf
    %4660 = vmax.xlane.f32.xlu0 %v4659
    %v4661 = vpop.xlane.xlu0 %4660
    %v4662 = vsel %vm2535, %v3893, -inf
    %4663 = vmax.xlane.f32.xlu0 %v4662
    %v4664 = vpop.xlane.xlu0 %4663
    %v4665 = vsel %vm2535, %v4029, -inf
    %4666 = vmax.xlane.f32.xlu0 %v4665
    %v4667 = vpop.xlane.xlu0 %4666
    %v4668 = vsel %vm2535, %v3894, -inf
    %4669 = vmax.xlane.f32.xlu0 %v4668
    %v4670 = vpop.xlane.xlu0 %4669
    %v4671 = vsel %vm2535, %v4030, -inf
    %4672 = vmax.xlane.f32.xlu0 %v4671
    %v4673 = vpop.xlane.xlu0 %4672
    %v4674 = vsel %vm2535, %v3895, -inf
    %4675 = vmax.xlane.f32.xlu0 %v4674
    %v4676 = vpop.xlane.xlu0 %4675
    %v4677 = vsel %vm2535, %v4031, -inf
    %4678 = vmax.xlane.f32.xlu0 %v4677
    %v4679 = vpop.xlane.xlu0 %4678
    %v4680 = vsel %vm2535, %v3896, -inf
    %4681 = vmax.xlane.f32.xlu0 %v4680
    %v4682 = vpop.xlane.xlu0 %4681
    %v4683 = vsel %vm2535, %v4032, -inf
    %4684 = vmax.xlane.f32.xlu0 %v4683
    %v4685 = vpop.xlane.xlu0 %4684
    %v4686 = vsel %vm2535, %v3897, -inf
    %4687 = vmax.xlane.f32.xlu0 %v4686
    %v4688 = vpop.xlane.xlu0 %4687
    %v4689 = vsel %vm2535, %v4033, -inf
    %4690 = vmax.xlane.f32.xlu0 %v4689
    %v4691 = vpop.xlane.xlu0 %4690
    %v4692 = vsel %vm2535, %v3898, -inf
    %4693 = vmax.xlane.f32.xlu0 %v4692
    %v4694 = vpop.xlane.xlu0 %4693
    %v4695 = vsel %vm2535, %v4034, -inf
    %4696 = vmax.xlane.f32.xlu0 %v4695
    %v4697 = vpop.xlane.xlu0 %4696
    %v4698 = vsel %vm2535, %v3899, -inf
    %4699 = vmax.xlane.f32.xlu0 %v4698
    %v4700 = vpop.xlane.xlu0 %4699
    %v4701 = vsel %vm2535, %v4035, -inf
    %4702 = vmax.xlane.f32.xlu0 %v4701
    %v4703 = vpop.xlane.xlu0 %4702
    %v4704 = vsel %vm2535, %v3900, -inf
    %4705 = vmax.xlane.f32.xlu0 %v4704
    %v4706 = vpop.xlane.xlu0 %4705
    %v4707 = vsel %vm2535, %v4036, -inf
    %4708 = vmax.xlane.f32.xlu0 %v4707
    %v4709 = vpop.xlane.xlu0 %4708
    %v4710 = vsel %vm2535, %v4165, -inf
    %4711 = vmax.xlane.f32.xlu0 %v4710
    %v4712 = vpop.xlane.xlu0 %4711
    %v4713 = vsel %vm2535, %v4301, -inf
    %4714 = vmax.xlane.f32.xlu0 %v4713
    %v4715 = vpop.xlane.xlu0 %4714
    %v4716 = vsel %vm2535, %v4166, -inf
    %4717 = vmax.xlane.f32.xlu0 %v4716
    %v4718 = vpop.xlane.xlu0 %4717
    %v4719 = vsel %vm2535, %v4302, -inf
    %4720 = vmax.xlane.f32.xlu0 %v4719
    %v4721 = vpop.xlane.xlu0 %4720
    %v4722 = vsel %vm2535, %v4167, -inf
    %4723 = vmax.xlane.f32.xlu0 %v4722
    %v4724 = vpop.xlane.xlu0 %4723
    %v4725 = vsel %vm2535, %v4303, -inf
    %4726 = vmax.xlane.f32.xlu0 %v4725
    %v4727 = vpop.xlane.xlu0 %4726
    %v4728 = vsel %vm2535, %v4168, -inf
    %4729 = vmax.xlane.f32.xlu0 %v4728
    %v4730 = vpop.xlane.xlu0 %4729
    %v4731 = vsel %vm2535, %v4304, -inf
    %4732 = vmax.xlane.f32.xlu0 %v4731
    %v4733 = vpop.xlane.xlu0 %4732
    %v4734 = vsel %vm2535, %v4169, -inf
    %4735 = vmax.xlane.f32.xlu0 %v4734
    %v4736 = vpop.xlane.xlu0 %4735
    %v4737 = vsel %vm2535, %v4305, -inf
    %4738 = vmax.xlane.f32.xlu0 %v4737
    %v4739 = vpop.xlane.xlu0 %4738
    %v4740 = vsel %vm2535, %v4170, -inf
    %4741 = vmax.xlane.f32.xlu0 %v4740
    %v4742 = vpop.xlane.xlu0 %4741
    %v4743 = vsel %vm2535, %v4306, -inf
    %4744 = vmax.xlane.f32.xlu0 %v4743
    %v4745 = vpop.xlane.xlu0 %4744
    %v4746 = vsel %vm2535, %v4171, -inf
    %4747 = vmax.xlane.f32.xlu0 %v4746
    %v4748 = vpop.xlane.xlu0 %4747
    %v4749 = vsel %vm2535, %v4307, -inf
    %4750 = vmax.xlane.f32.xlu0 %v4749
    %v4751 = vpop.xlane.xlu0 %4750
    %v4752 = vsel %vm2535, %v4172, -inf
    %4753 = vmax.xlane.f32.xlu0 %v4752
    %v4754 = vpop.xlane.xlu0 %4753
    %v4755 = vsel %vm2535, %v4308, -inf
    %4756 = vmax.xlane.f32.xlu0 %v4755
    %v4757 = vpop.xlane.xlu0 %4756
    %v4822 = vlaneseq
    %v4823 = vand.u32 %v4822, 127
    %v4824 = vlaneseq
    %v4825 = vshrl.u32 %v4824, 7
    %v4826 = vsub.s32 %v4823, %v4825
    %v4827 = vrot.slane %v4502, %v4826
    %v4828 = vadd.s32 %v4823, 4294967288
    %v4829 = vlaneseq
    %v4830 = vshrl.u32 %v4829, 7
    %v4831 = vsub.s32 %v4828, %v4830
    %v4832 = vrot.slane %v4503, %v4831
    %vm4833 = vcmask 130112
    %v4834 = vsel %vm4833, %v4832, %v4827
    %v4835 = vlaneseq
    %v4836 = vshrl.u32 %v4835, 7
    %v4837 = vsub.s32 %v4823, %v4836
    %v4838 = vrot.slane %v4504, %v4837
    %v4839 = vlaneseq
    %v4840 = vshrl.u32 %v4839, 7
    %v4841 = vsub.s32 %v4828, %v4840
    %v4842 = vrot.slane %v4505, %v4841
    %v4843 = vsel %vm4833, %v4842, %v4838
    %v4844 = vlaneseq
    %v4845 = vshrl.u32 %v4844, 7
    %v4846 = vsub.s32 %v4823, %v4845
    %v4847 = vrot.slane %v4506, %v4846
    %v4848 = vlaneseq
    %v4849 = vshrl.u32 %v4848, 7
    %v4850 = vsub.s32 %v4828, %v4849
    %v4851 = vrot.slane %v4507, %v4850
    %v4852 = vsel %vm4833, %v4851, %v4847
    %v4853 = vlaneseq
    %v4854 = vshrl.u32 %v4853, 7
    %v4855 = vsub.s32 %v4823, %v4854
    %v4856 = vrot.slane %v4508, %v4855
    %v4857 = vlaneseq
    %v4858 = vshrl.u32 %v4857, 7
    %v4859 = vsub.s32 %v4828, %v4858
    %v4860 = vrot.slane %v4509, %v4859
    %v4861 = vsel %vm4833, %v4860, %v4856
    %v4862 = vlaneseq
    %v4863 = vshrl.u32 %v4862, 7
    %v4864 = vsub.s32 %v4823, %v4863
    %v4865 = vrot.slane %v4510, %v4864
    %v4866 = vlaneseq
    %v4867 = vshrl.u32 %v4866, 7
    %v4868 = vsub.s32 %v4828, %v4867
    %v4869 = vrot.slane %v4511, %v4868
    %v4870 = vsel %vm4833, %v4869, %v4865
    %v4871 = vlaneseq
    %v4872 = vshrl.u32 %v4871, 7
    %v4873 = vsub.s32 %v4823, %v4872
    %v4874 = vrot.slane %v4512, %v4873
    %v4875 = vlaneseq
    %v4876 = vshrl.u32 %v4875, 7
    %v4877 = vsub.s32 %v4828, %v4876
    %v4878 = vrot.slane %v4513, %v4877
    %v4879 = vsel %vm4833, %v4878, %v4874
    %v4880 = vlaneseq
    %v4881 = vshrl.u32 %v4880, 7
    %v4882 = vsub.s32 %v4823, %v4881
    %v4883 = vrot.slane %v4514, %v4882
    %v4884 = vlaneseq
    %v4885 = vshrl.u32 %v4884, 7
    %v4886 = vsub.s32 %v4828, %v4885
    %v4887 = vrot.slane %v4515, %v4886
    %v4888 = vsel %vm4833, %v4887, %v4883
    %v4889 = vlaneseq
    %v4890 = vshrl.u32 %v4889, 7
    %v4891 = vsub.s32 %v4823, %v4890
    %v4892 = vrot.slane %v4516, %v4891
    %v4893 = vlaneseq
    %v4894 = vshrl.u32 %v4893, 7
    %v4895 = vsub.s32 %v4828, %v4894
    %v4896 = vrot.slane %v4517, %v4895
    %v4897 = vsel %vm4833, %v4896, %v4892
    %v4898 = vlaneseq
    %v4899 = vshrl.u32 %v4898, 7
    %v4900 = vsub.s32 %v4823, %v4899
    %v4901 = vrot.slane %v4518, %v4900
    %v4902 = vlaneseq
    %v4903 = vshrl.u32 %v4902, 7
    %v4904 = vsub.s32 %v4828, %v4903
    %v4905 = vrot.slane %v4519, %v4904
    %v4906 = vsel %vm4833, %v4905, %v4901
    %v4907 = vlaneseq
    %v4908 = vshrl.u32 %v4907, 7
    %v4909 = vsub.s32 %v4823, %v4908
    %v4910 = vrot.slane %v4520, %v4909
    %v4911 = vlaneseq
    %v4912 = vshrl.u32 %v4911, 7
    %v4913 = vsub.s32 %v4828, %v4912
    %v4914 = vrot.slane %v4521, %v4913
    %v4915 = vsel %vm4833, %v4914, %v4910
    %v4916 = vlaneseq
    %v4917 = vshrl.u32 %v4916, 7
    %v4918 = vsub.s32 %v4823, %v4917
    %v4919 = vrot.slane %v4522, %v4918
    %v4920 = vlaneseq
    %v4921 = vshrl.u32 %v4920, 7
    %v4922 = vsub.s32 %v4828, %v4921
    %v4923 = vrot.slane %v4523, %v4922
    %v4924 = vsel %vm4833, %v4923, %v4919
    %v4925 = vlaneseq
    %v4926 = vshrl.u32 %v4925, 7
    %v4927 = vsub.s32 %v4823, %v4926
    %v4928 = vrot.slane %v4524, %v4927
    %v4929 = vlaneseq
    %v4930 = vshrl.u32 %v4929, 7
    %v4931 = vsub.s32 %v4828, %v4930
    %v4932 = vrot.slane %v4525, %v4931
    %v4933 = vsel %vm4833, %v4932, %v4928
    %v4934 = vlaneseq
    %v4935 = vshrl.u32 %v4934, 7
    %v4936 = vsub.s32 %v4823, %v4935
    %v4937 = vrot.slane %v4526, %v4936
    %v4938 = vlaneseq
    %v4939 = vshrl.u32 %v4938, 7
    %v4940 = vsub.s32 %v4828, %v4939
    %v4941 = vrot.slane %v4527, %v4940
    %v4942 = vsel %vm4833, %v4941, %v4937
    %v4943 = vlaneseq
    %v4944 = vshrl.u32 %v4943, 7
    %v4945 = vsub.s32 %v4823, %v4944
    %v4946 = vrot.slane %v4528, %v4945
    %v4947 = vlaneseq
    %v4948 = vshrl.u32 %v4947, 7
    %v4949 = vsub.s32 %v4828, %v4948
    %v4950 = vrot.slane %v4529, %v4949
    %v4951 = vsel %vm4833, %v4950, %v4946
    %v4952 = vlaneseq
    %v4953 = vshrl.u32 %v4952, 7
    %v4954 = vsub.s32 %v4823, %v4953
    %v4955 = vrot.slane %v4530, %v4954
    %v4956 = vlaneseq
    %v4957 = vshrl.u32 %v4956, 7
    %v4958 = vsub.s32 %v4828, %v4957
    %v4959 = vrot.slane %v4531, %v4958
    %v4960 = vsel %vm4833, %v4959, %v4955
    %v4961 = vlaneseq
    %v4962 = vshrl.u32 %v4961, 7
    %v4963 = vsub.s32 %v4823, %v4962
    %v4964 = vrot.slane %v4532, %v4963
    %v4965 = vlaneseq
    %v4966 = vshrl.u32 %v4965, 7
    %v4967 = vsub.s32 %v4828, %v4966
    %v4968 = vrot.slane %v4533, %v4967
    %v4969 = vsel %vm4833, %v4968, %v4964
    %v4970 = vlaneseq
    %v4971 = vshrl.u32 %v4970, 7
    %v4972 = vsub.s32 %v4823, %v4971
    %v4973 = vrot.slane %v4534, %v4972
    %v4974 = vlaneseq
    %v4975 = vshrl.u32 %v4974, 7
    %v4976 = vsub.s32 %v4828, %v4975
    %v4977 = vrot.slane %v4535, %v4976
    %v4978 = vsel %vm4833, %v4977, %v4973
    %v4979 = vlaneseq
    %v4980 = vshrl.u32 %v4979, 7
    %v4981 = vsub.s32 %v4823, %v4980
    %v4982 = vrot.slane %v4536, %v4981
    %v4983 = vlaneseq
    %v4984 = vshrl.u32 %v4983, 7
    %v4985 = vsub.s32 %v4828, %v4984
    %v4986 = vrot.slane %v4537, %v4985
    %v4987 = vsel %vm4833, %v4986, %v4982
    %v4988 = vlaneseq
    %v4989 = vshrl.u32 %v4988, 7
    %v4990 = vsub.s32 %v4823, %v4989
    %v4991 = vrot.slane %v4538, %v4990
    %v4992 = vlaneseq
    %v4993 = vshrl.u32 %v4992, 7
    %v4994 = vsub.s32 %v4828, %v4993
    %v4995 = vrot.slane %v4539, %v4994
    %v4996 = vsel %vm4833, %v4995, %v4991
    %v4997 = vlaneseq
    %v4998 = vshrl.u32 %v4997, 7
    %v4999 = vsub.s32 %v4823, %v4998
    %v5000 = vrot.slane %v4540, %v4999
    %v5001 = vlaneseq
    %v5002 = vshrl.u32 %v5001, 7
    %v5003 = vsub.s32 %v4828, %v5002
    %v5004 = vrot.slane %v4541, %v5003
    %v5005 = vsel %vm4833, %v5004, %v5000
    %v5006 = vlaneseq
    %v5007 = vshrl.u32 %v5006, 7
    %v5008 = vsub.s32 %v4823, %v5007
    %v5009 = vrot.slane %v4542, %v5008
    %v5010 = vlaneseq
    %v5011 = vshrl.u32 %v5010, 7
    %v5012 = vsub.s32 %v4828, %v5011
    %v5013 = vrot.slane %v4543, %v5012
    %v5014 = vsel %vm4833, %v5013, %v5009
    %v5015 = vlaneseq
    %v5016 = vshrl.u32 %v5015, 7
    %v5017 = vsub.s32 %v4823, %v5016
    %v5018 = vrot.slane %v4544, %v5017
    %v5019 = vlaneseq
    %v5020 = vshrl.u32 %v5019, 7
    %v5021 = vsub.s32 %v4828, %v5020
    %v5022 = vrot.slane %v4545, %v5021
    %v5023 = vsel %vm4833, %v5022, %v5018
    %v5024 = vlaneseq
    %v5025 = vshrl.u32 %v5024, 7
    %v5026 = vsub.s32 %v4823, %v5025
    %v5027 = vrot.slane %v4546, %v5026
    %v5028 = vlaneseq
    %v5029 = vshrl.u32 %v5028, 7
    %v5030 = vsub.s32 %v4828, %v5029
    %v5031 = vrot.slane %v4547, %v5030
    %v5032 = vsel %vm4833, %v5031, %v5027
    %v5033 = vlaneseq
    %v5034 = vshrl.u32 %v5033, 7
    %v5035 = vsub.s32 %v4823, %v5034
    %v5036 = vrot.slane %v4548, %v5035
    %v5037 = vlaneseq
    %v5038 = vshrl.u32 %v5037, 7
    %v5039 = vsub.s32 %v4828, %v5038
    %v5040 = vrot.slane %v4549, %v5039
    %v5041 = vsel %vm4833, %v5040, %v5036
    %v5042 = vlaneseq
    %v5043 = vshrl.u32 %v5042, 7
    %v5044 = vsub.s32 %v4823, %v5043
    %v5045 = vrot.slane %v4550, %v5044
    %v5046 = vlaneseq
    %v5047 = vshrl.u32 %v5046, 7
    %v5048 = vsub.s32 %v4828, %v5047
    %v5049 = vrot.slane %v4551, %v5048
    %v5050 = vsel %vm4833, %v5049, %v5045
    %v5051 = vlaneseq
    %v5052 = vshrl.u32 %v5051, 7
    %v5053 = vsub.s32 %v4823, %v5052
    %v5054 = vrot.slane %v4552, %v5053
    %v5055 = vlaneseq
    %v5056 = vshrl.u32 %v5055, 7
    %v5057 = vsub.s32 %v4828, %v5056
    %v5058 = vrot.slane %v4553, %v5057
    %v5059 = vsel %vm4833, %v5058, %v5054
    %v5060 = vlaneseq
    %v5061 = vshrl.u32 %v5060, 7
    %v5062 = vsub.s32 %v4823, %v5061
    %v5063 = vrot.slane %v4554, %v5062
    %v5064 = vlaneseq
    %v5065 = vshrl.u32 %v5064, 7
    %v5066 = vsub.s32 %v4828, %v5065
    %v5067 = vrot.slane %v4555, %v5066
    %v5068 = vsel %vm4833, %v5067, %v5063
    %v5069 = vlaneseq
    %v5070 = vshrl.u32 %v5069, 7
    %v5071 = vsub.s32 %v4823, %v5070
    %v5072 = vrot.slane %v4556, %v5071
    %v5073 = vlaneseq
    %v5074 = vshrl.u32 %v5073, 7
    %v5075 = vsub.s32 %v4828, %v5074
    %v5076 = vrot.slane %v4557, %v5075
    %v5077 = vsel %vm4833, %v5076, %v5072
    %v5078 = vlaneseq
    %v5079 = vshrl.u32 %v5078, 7
    %v5080 = vsub.s32 %v4823, %v5079
    %v5081 = vrot.slane %v4558, %v5080
    %v5082 = vlaneseq
    %v5083 = vshrl.u32 %v5082, 7
    %v5084 = vsub.s32 %v4828, %v5083
    %v5085 = vrot.slane %v4559, %v5084
    %v5086 = vsel %vm4833, %v5085, %v5081
    %v5087 = vlaneseq
    %v5088 = vshrl.u32 %v5087, 7
    %v5089 = vsub.s32 %v4823, %v5088
    %v5090 = vrot.slane %v4560, %v5089
    %v5091 = vlaneseq
    %v5092 = vshrl.u32 %v5091, 7
    %v5093 = vsub.s32 %v4828, %v5092
    %v5094 = vrot.slane %v4561, %v5093
    %v5095 = vsel %vm4833, %v5094, %v5090
    %v5096 = vlaneseq
    %v5097 = vshrl.u32 %v5096, 7
    %v5098 = vsub.s32 %v4823, %v5097
    %v5099 = vrot.slane %v4562, %v5098
    %v5100 = vlaneseq
    %v5101 = vshrl.u32 %v5100, 7
    %v5102 = vsub.s32 %v4828, %v5101
    %v5103 = vrot.slane %v4563, %v5102
    %v5104 = vsel %vm4833, %v5103, %v5099
    %v5105 = vlaneseq
    %v5106 = vshrl.u32 %v5105, 7
    %v5107 = vsub.s32 %v4823, %v5106
    %v5108 = vrot.slane %v4564, %v5107
    %v5109 = vlaneseq
    %v5110 = vshrl.u32 %v5109, 7
    %v5111 = vsub.s32 %v4828, %v5110
    %v5112 = vrot.slane %v4565, %v5111
    %v5113 = vsel %vm4833, %v5112, %v5108
    %v5114 = vsel %vm2387, %v4843, %v4834
    %vm5115 = vcmask 1042434
    %v5116 = vsel %vm5115, %v4852, %v5114
    %v5117 = vsel %vm2784, %v4861, %v5116
    %vm5118 = vcmask 1044484
    %v5119 = vsel %vm5118, %v4870, %v5117
    %vm5120 = vcmask 1045509
    %v5121 = vsel %vm5120, %v4879, %v5119
    %vm5122 = vcmask 1046534
    %v5123 = vsel %vm5122, %v4888, %v5121
    %vm5124 = vcmask 1047559
    %v5125 = vsel %vm5124, %v4897, %v5123
    %v5126 = vsel %vm2387, %v4915, %v4906
    %v5127 = vsel %vm5115, %v4924, %v5126
    %v5128 = vsel %vm2784, %v4933, %v5127
    %v5129 = vsel %vm5118, %v4942, %v5128
    %v5130 = vsel %vm5120, %v4951, %v5129
    %v5131 = vsel %vm5122, %v4960, %v5130
    %v5132 = vsel %vm5124, %v4969, %v5131
    %v5133 = vsel %vm2387, %v4987, %v4978
    %v5134 = vsel %vm5115, %v4996, %v5133
    %v5135 = vsel %vm2784, %v5005, %v5134
    %v5136 = vsel %vm5118, %v5014, %v5135
    %v5137 = vsel %vm5120, %v5023, %v5136
    %v5138 = vsel %vm5122, %v5032, %v5137
    %v5139 = vsel %vm5124, %v5041, %v5138
    %v5140 = vsel %vm2387, %v5059, %v5050
    %v5141 = vsel %vm5115, %v5068, %v5140
    %v5142 = vsel %vm2784, %v5077, %v5141
    %v5143 = vsel %vm5118, %v5086, %v5142
    %v5144 = vsel %vm5120, %v5095, %v5143
    %v5145 = vsel %vm5122, %v5104, %v5144
    %v5146 = vsel %vm5124, %v5113, %v5145
    %v5215 = vadd.s32 %v4823, 4294967280
    %v5216 = vlaneseq
    %v5217 = vshrl.u32 %v5216, 7
    %v5218 = vsub.s32 %v5215, %v5217
    %v5219 = vrot.slane %v4568, %v5218
    %v5220 = vadd.s32 %v4823, 4294967272
    %v5221 = vlaneseq
    %v5222 = vshrl.u32 %v5221, 7
    %v5223 = vsub.s32 %v5220, %v5222
    %v5224 = vrot.slane %v4571, %v5223
    %vm5225 = vcmask 261312
    %v5226 = vsel %vm5225, %v5224, %v5219
    %v5227 = vlaneseq
    %v5228 = vshrl.u32 %v5227, 7
    %v5229 = vsub.s32 %v5215, %v5228
    %v5230 = vrot.slane %v4574, %v5229
    %v5231 = vlaneseq
    %v5232 = vshrl.u32 %v5231, 7
    %v5233 = vsub.s32 %v5220, %v5232
    %v5234 = vrot.slane %v4577, %v5233
    %v5235 = vsel %vm5225, %v5234, %v5230
    %v5236 = vlaneseq
    %v5237 = vshrl.u32 %v5236, 7
    %v5238 = vsub.s32 %v5215, %v5237
    %v5239 = vrot.slane %v4580, %v5238
    %v5240 = vlaneseq
    %v5241 = vshrl.u32 %v5240, 7
    %v5242 = vsub.s32 %v5220, %v5241
    %v5243 = vrot.slane %v4583, %v5242
    %v5244 = vsel %vm5225, %v5243, %v5239
    %v5245 = vlaneseq
    %v5246 = vshrl.u32 %v5245, 7
    %v5247 = vsub.s32 %v5215, %v5246
    %v5248 = vrot.slane %v4586, %v5247
    %v5249 = vlaneseq
    %v5250 = vshrl.u32 %v5249, 7
    %v5251 = vsub.s32 %v5220, %v5250
    %v5252 = vrot.slane %v4589, %v5251
    %v5253 = vsel %vm5225, %v5252, %v5248
    %v5254 = vlaneseq
    %v5255 = vshrl.u32 %v5254, 7
    %v5256 = vsub.s32 %v5215, %v5255
    %v5257 = vrot.slane %v4592, %v5256
    %v5258 = vlaneseq
    %v5259 = vshrl.u32 %v5258, 7
    %v5260 = vsub.s32 %v5220, %v5259
    %v5261 = vrot.slane %v4595, %v5260
    %v5262 = vsel %vm5225, %v5261, %v5257
    %v5263 = vlaneseq
    %v5264 = vshrl.u32 %v5263, 7
    %v5265 = vsub.s32 %v5215, %v5264
    %v5266 = vrot.slane %v4598, %v5265
    %v5267 = vlaneseq
    %v5268 = vshrl.u32 %v5267, 7
    %v5269 = vsub.s32 %v5220, %v5268
    %v5270 = vrot.slane %v4601, %v5269
    %v5271 = vsel %vm5225, %v5270, %v5266
    %v5272 = vlaneseq
    %v5273 = vshrl.u32 %v5272, 7
    %v5274 = vsub.s32 %v5215, %v5273
    %v5275 = vrot.slane %v4604, %v5274
    %v5276 = vlaneseq
    %v5277 = vshrl.u32 %v5276, 7
    %v5278 = vsub.s32 %v5220, %v5277
    %v5279 = vrot.slane %v4607, %v5278
    %v5280 = vsel %vm5225, %v5279, %v5275
    %v5281 = vlaneseq
    %v5282 = vshrl.u32 %v5281, 7
    %v5283 = vsub.s32 %v5215, %v5282
    %v5284 = vrot.slane %v4610, %v5283
    %v5285 = vlaneseq
    %v5286 = vshrl.u32 %v5285, 7
    %v5287 = vsub.s32 %v5220, %v5286
    %v5288 = vrot.slane %v4613, %v5287
    %v5289 = vsel %vm5225, %v5288, %v5284
    %v5290 = vlaneseq
    %v5291 = vshrl.u32 %v5290, 7
    %v5292 = vsub.s32 %v5215, %v5291
    %v5293 = vrot.slane %v4616, %v5292
    %v5294 = vlaneseq
    %v5295 = vshrl.u32 %v5294, 7
    %v5296 = vsub.s32 %v5220, %v5295
    %v5297 = vrot.slane %v4619, %v5296
    %v5298 = vsel %vm5225, %v5297, %v5293
    %v5299 = vlaneseq
    %v5300 = vshrl.u32 %v5299, 7
    %v5301 = vsub.s32 %v5215, %v5300
    %v5302 = vrot.slane %v4622, %v5301
    %v5303 = vlaneseq
    %v5304 = vshrl.u32 %v5303, 7
    %v5305 = vsub.s32 %v5220, %v5304
    %v5306 = vrot.slane %v4625, %v5305
    %v5307 = vsel %vm5225, %v5306, %v5302
    %v5308 = vlaneseq
    %v5309 = vshrl.u32 %v5308, 7
    %v5310 = vsub.s32 %v5215, %v5309
    %v5311 = vrot.slane %v4628, %v5310
    %v5312 = vlaneseq
    %v5313 = vshrl.u32 %v5312, 7
    %v5314 = vsub.s32 %v5220, %v5313
    %v5315 = vrot.slane %v4631, %v5314
    %v5316 = vsel %vm5225, %v5315, %v5311
    %v5317 = vlaneseq
    %v5318 = vshrl.u32 %v5317, 7
    %v5319 = vsub.s32 %v5215, %v5318
    %v5320 = vrot.slane %v4634, %v5319
    %v5321 = vlaneseq
    %v5322 = vshrl.u32 %v5321, 7
    %v5323 = vsub.s32 %v5220, %v5322
    %v5324 = vrot.slane %v4637, %v5323
    %v5325 = vsel %vm5225, %v5324, %v5320
    %v5326 = vlaneseq
    %v5327 = vshrl.u32 %v5326, 7
    %v5328 = vsub.s32 %v5215, %v5327
    %v5329 = vrot.slane %v4640, %v5328
    %v5330 = vlaneseq
    %v5331 = vshrl.u32 %v5330, 7
    %v5332 = vsub.s32 %v5220, %v5331
    %v5333 = vrot.slane %v4643, %v5332
    %v5334 = vsel %vm5225, %v5333, %v5329
    %v5335 = vlaneseq
    %v5336 = vshrl.u32 %v5335, 7
    %v5337 = vsub.s32 %v5215, %v5336
    %v5338 = vrot.slane %v4646, %v5337
    %v5339 = vlaneseq
    %v5340 = vshrl.u32 %v5339, 7
    %v5341 = vsub.s32 %v5220, %v5340
    %v5342 = vrot.slane %v4649, %v5341
    %v5343 = vsel %vm5225, %v5342, %v5338
    %v5344 = vlaneseq
    %v5345 = vshrl.u32 %v5344, 7
    %v5346 = vsub.s32 %v5215, %v5345
    %v5347 = vrot.slane %v4652, %v5346
    %v5348 = vlaneseq
    %v5349 = vshrl.u32 %v5348, 7
    %v5350 = vsub.s32 %v5220, %v5349
    %v5351 = vrot.slane %v4655, %v5350
    %v5352 = vsel %vm5225, %v5351, %v5347
    %v5353 = vlaneseq
    %v5354 = vshrl.u32 %v5353, 7
    %v5355 = vsub.s32 %v5215, %v5354
    %v5356 = vrot.slane %v4658, %v5355
    %v5357 = vlaneseq
    %v5358 = vshrl.u32 %v5357, 7
    %v5359 = vsub.s32 %v5220, %v5358
    %v5360 = vrot.slane %v4661, %v5359
    %v5361 = vsel %vm5225, %v5360, %v5356
    %v5362 = vlaneseq
    %v5363 = vshrl.u32 %v5362, 7
    %v5364 = vsub.s32 %v5215, %v5363
    %v5365 = vrot.slane %v4664, %v5364
    %v5366 = vlaneseq
    %v5367 = vshrl.u32 %v5366, 7
    %v5368 = vsub.s32 %v5220, %v5367
    %v5369 = vrot.slane %v4667, %v5368
    %v5370 = vsel %vm5225, %v5369, %v5365
    %v5371 = vlaneseq
    %v5372 = vshrl.u32 %v5371, 7
    %v5373 = vsub.s32 %v5215, %v5372
    %v5374 = vrot.slane %v4670, %v5373
    %v5375 = vlaneseq
    %v5376 = vshrl.u32 %v5375, 7
    %v5377 = vsub.s32 %v5220, %v5376
    %v5378 = vrot.slane %v4673, %v5377
    %v5379 = vsel %vm5225, %v5378, %v5374
    %v5380 = vlaneseq
    %v5381 = vshrl.u32 %v5380, 7
    %v5382 = vsub.s32 %v5215, %v5381
    %v5383 = vrot.slane %v4676, %v5382
    %v5384 = vlaneseq
    %v5385 = vshrl.u32 %v5384, 7
    %v5386 = vsub.s32 %v5220, %v5385
    %v5387 = vrot.slane %v4679, %v5386
    %v5388 = vsel %vm5225, %v5387, %v5383
    %v5389 = vlaneseq
    %v5390 = vshrl.u32 %v5389, 7
    %v5391 = vsub.s32 %v5215, %v5390
    %v5392 = vrot.slane %v4682, %v5391
    %v5393 = vlaneseq
    %v5394 = vshrl.u32 %v5393, 7
    %v5395 = vsub.s32 %v5220, %v5394
    %v5396 = vrot.slane %v4685, %v5395
    %v5397 = vsel %vm5225, %v5396, %v5392
    %v5398 = vlaneseq
    %v5399 = vshrl.u32 %v5398, 7
    %v5400 = vsub.s32 %v5215, %v5399
    %v5401 = vrot.slane %v4688, %v5400
    %v5402 = vlaneseq
    %v5403 = vshrl.u32 %v5402, 7
    %v5404 = vsub.s32 %v5220, %v5403
    %v5405 = vrot.slane %v4691, %v5404
    %v5406 = vsel %vm5225, %v5405, %v5401
    %v5407 = vlaneseq
    %v5408 = vshrl.u32 %v5407, 7
    %v5409 = vsub.s32 %v5215, %v5408
    %v5410 = vrot.slane %v4694, %v5409
    %v5411 = vlaneseq
    %v5412 = vshrl.u32 %v5411, 7
    %v5413 = vsub.s32 %v5220, %v5412
    %v5414 = vrot.slane %v4697, %v5413
    %v5415 = vsel %vm5225, %v5414, %v5410
    %v5416 = vlaneseq
    %v5417 = vshrl.u32 %v5416, 7
    %v5418 = vsub.s32 %v5215, %v5417
    %v5419 = vrot.slane %v4700, %v5418
    %v5420 = vlaneseq
    %v5421 = vshrl.u32 %v5420, 7
    %v5422 = vsub.s32 %v5220, %v5421
    %v5423 = vrot.slane %v4703, %v5422
    %v5424 = vsel %vm5225, %v5423, %v5419
    %v5425 = vlaneseq
    %v5426 = vshrl.u32 %v5425, 7
    %v5427 = vsub.s32 %v5215, %v5426
    %v5428 = vrot.slane %v4706, %v5427
    %v5429 = vlaneseq
    %v5430 = vshrl.u32 %v5429, 7
    %v5431 = vsub.s32 %v5220, %v5430
    %v5432 = vrot.slane %v4709, %v5431
    %v5433 = vsel %vm5225, %v5432, %v5428
    %v5434 = vlaneseq
    %v5435 = vshrl.u32 %v5434, 7
    %v5436 = vsub.s32 %v5215, %v5435
    %v5437 = vrot.slane %v4712, %v5436
    %v5438 = vlaneseq
    %v5439 = vshrl.u32 %v5438, 7
    %v5440 = vsub.s32 %v5220, %v5439
    %v5441 = vrot.slane %v4715, %v5440
    %v5442 = vsel %vm5225, %v5441, %v5437
    %v5443 = vlaneseq
    %v5444 = vshrl.u32 %v5443, 7
    %v5445 = vsub.s32 %v5215, %v5444
    %v5446 = vrot.slane %v4718, %v5445
    %v5447 = vlaneseq
    %v5448 = vshrl.u32 %v5447, 7
    %v5449 = vsub.s32 %v5220, %v5448
    %v5450 = vrot.slane %v4721, %v5449
    %v5451 = vsel %vm5225, %v5450, %v5446
    %v5452 = vlaneseq
    %v5453 = vshrl.u32 %v5452, 7
    %v5454 = vsub.s32 %v5215, %v5453
    %v5455 = vrot.slane %v4724, %v5454
    %v5456 = vlaneseq
    %v5457 = vshrl.u32 %v5456, 7
    %v5458 = vsub.s32 %v5220, %v5457
    %v5459 = vrot.slane %v4727, %v5458
    %v5460 = vsel %vm5225, %v5459, %v5455
    %v5461 = vlaneseq
    %v5462 = vshrl.u32 %v5461, 7
    %v5463 = vsub.s32 %v5215, %v5462
    %v5464 = vrot.slane %v4730, %v5463
    %v5465 = vlaneseq
    %v5466 = vshrl.u32 %v5465, 7
    %v5467 = vsub.s32 %v5220, %v5466
    %v5468 = vrot.slane %v4733, %v5467
    %v5469 = vsel %vm5225, %v5468, %v5464
    %v5470 = vlaneseq
    %v5471 = vshrl.u32 %v5470, 7
    %v5472 = vsub.s32 %v5215, %v5471
    %v5473 = vrot.slane %v4736, %v5472
    %v5474 = vlaneseq
    %v5475 = vshrl.u32 %v5474, 7
    %v5476 = vsub.s32 %v5220, %v5475
    %v5477 = vrot.slane %v4739, %v5476
    %v5478 = vsel %vm5225, %v5477, %v5473
    %v5479 = vlaneseq
    %v5480 = vshrl.u32 %v5479, 7
    %v5481 = vsub.s32 %v5215, %v5480
    %v5482 = vrot.slane %v4742, %v5481
    %v5483 = vlaneseq
    %v5484 = vshrl.u32 %v5483, 7
    %v5485 = vsub.s32 %v5220, %v5484
    %v5486 = vrot.slane %v4745, %v5485
    %v5487 = vsel %vm5225, %v5486, %v5482
    %v5488 = vlaneseq
    %v5489 = vshrl.u32 %v5488, 7
    %v5490 = vsub.s32 %v5215, %v5489
    %v5491 = vrot.slane %v4748, %v5490
    %v5492 = vlaneseq
    %v5493 = vshrl.u32 %v5492, 7
    %v5494 = vsub.s32 %v5220, %v5493
    %v5495 = vrot.slane %v4751, %v5494
    %v5496 = vsel %vm5225, %v5495, %v5491
    %v5497 = vlaneseq
    %v5498 = vshrl.u32 %v5497, 7
    %v5499 = vsub.s32 %v5215, %v5498
    %v5500 = vrot.slane %v4754, %v5499
    %v5501 = vlaneseq
    %v5502 = vshrl.u32 %v5501, 7
    %v5503 = vsub.s32 %v5220, %v5502
    %v5504 = vrot.slane %v4757, %v5503
    %v5505 = vsel %vm5225, %v5504, %v5500
    %v5506 = vsel %vm2387, %v5235, %v5226
    %v5507 = vsel %vm5115, %v5244, %v5506
    %v5508 = vsel %vm2784, %v5253, %v5507
    %v5509 = vsel %vm5118, %v5262, %v5508
    %v5510 = vsel %vm5120, %v5271, %v5509
    %v5511 = vsel %vm5122, %v5280, %v5510
    %v5512 = vsel %vm5124, %v5289, %v5511
    %v5513 = vsel %vm2387, %v5307, %v5298
    %v5514 = vsel %vm5115, %v5316, %v5513
    %v5515 = vsel %vm2784, %v5325, %v5514
    %v5516 = vsel %vm5118, %v5334, %v5515
    %v5517 = vsel %vm5120, %v5343, %v5516
    %v5518 = vsel %vm5122, %v5352, %v5517
    %v5519 = vsel %vm5124, %v5361, %v5518
    %v5520 = vsel %vm2387, %v5379, %v5370
    %v5521 = vsel %vm5115, %v5388, %v5520
    %v5522 = vsel %vm2784, %v5397, %v5521
    %v5523 = vsel %vm5118, %v5406, %v5522
    %v5524 = vsel %vm5120, %v5415, %v5523
    %v5525 = vsel %vm5122, %v5424, %v5524
    %v5526 = vsel %vm5124, %v5433, %v5525
    %v5527 = vsel %vm2387, %v5451, %v5442
    %v5528 = vsel %vm5115, %v5460, %v5527
    %v5529 = vsel %vm2784, %v5469, %v5528
    %v5530 = vsel %vm5118, %v5478, %v5529
    %v5531 = vsel %vm5120, %v5487, %v5530
    %v5532 = vsel %vm5122, %v5496, %v5531
    %v5533 = vsel %vm5124, %v5505, %v5532
    %vm5538 = vcmask 130048
    %v5539 = vsel %vm5538, %v5125, %v5512
    %v5540 = vsel %vm5538, %v5132, %v5519
    %v5541 = vsel %vm5538, %v5139, %v5526
    %v5542 = vsel %vm5538, %v5146, %v5533
    %v5547 = vrot.slane %v5539, 5
    %v5548 = vrot.slane %v5540, 5
    %v5549 = vsel %vm290, %v5547, %v5548
    %v5550 = vrot.slane %v5541, 5
    %v5551 = vrot.slane %v5542, 5
    %v5552 = vsel %vm290, %v5550, %v5551
    %v5557 = vsel %vm290, 0.0, %v5547
    %v5558 = vsel %vm290, 0.0, %v5550
    %v5559 = vsel %vm290, %v5548, 0.0
    %v5560 = vsel %vm290, %v5551, 0.0
    %v5561 = vld [vmem:[#allocation18] sm:$0xff]
    %v5562 = vld [vmem:[#allocation18 + $0x8] sm:$0xff]
    %v5563 = vld [vmem:[#allocation18 + $0x10] sm:$0xff]
    %v5564 = vld [vmem:[#allocation18 + $0x18] sm:$0xff]
    %v5565 = vld [vmem:[#allocation18 + $0x20] sm:$0xff]
    %v5566 = vld [vmem:[#allocation18 + $0x28] sm:$0xff]
    %v5567 = vld [vmem:[#allocation18 + $0x30] sm:$0xff]
    %v5568 = vld [vmem:[#allocation18 + $0x38] sm:$0xff]
    %v5569 = vld [vmem:[#allocation18 + $0x40] sm:$0xff]
    %v5570 = vld [vmem:[#allocation18 + $0x48] sm:$0xff]
    %v5571 = vld [vmem:[#allocation18 + $0x50] sm:$0xff]
    %v5572 = vld [vmem:[#allocation18 + $0x58] sm:$0xff]
    %v5573 = vld [vmem:[#allocation18 + $0x60] sm:$0xff]
    %v5574 = vld [vmem:[#allocation18 + $0x68] sm:$0xff]
    %v5575 = vld [vmem:[#allocation18 + $0x70] sm:$0xff]
    %v5576 = vld [vmem:[#allocation18 + $0x78] sm:$0xff]
    %v5581 = vrot.slane %v5557, 1
    %v5582 = vrot.slane %v5549, 1
    %v5583 = vsel %vm375, %v5581, %v5582
    %v5584 = vrot.slane %v5559, 1
    %v5585 = vsel %vm375, %v5582, %v5584
    %v5586 = vrot.slane %v5558, 1
    %v5587 = vrot.slane %v5552, 1
    %v5588 = vsel %vm375, %v5586, %v5587
    %v5589 = vrot.slane %v5560, 1
    %v5590 = vsel %vm375, %v5587, %v5589
    %s5591 = scalar_lea.vmem [#allocation18], 128
    %v5592 = vld [vmem:[%s5591] sm:$0xff]
    %v5593 = vld [vmem:[%s5591 + $0x8] sm:$0xff]
    %v5594 = vld [vmem:[%s5591 + $0x10] sm:$0xff]
    %v5595 = vld [vmem:[%s5591 + $0x18] sm:$0xff]
    %v5596 = vld [vmem:[%s5591 + $0x20] sm:$0xff]
    %v5597 = vld [vmem:[%s5591 + $0x28] sm:$0xff]
    %v5598 = vld [vmem:[%s5591 + $0x30] sm:$0xff]
    %v5599 = vld [vmem:[%s5591 + $0x38] sm:$0xff]
    %v5600 = vld [vmem:[%s5591 + $0x40] sm:$0xff]
    %v5601 = vld [vmem:[%s5591 + $0x48] sm:$0xff]
    %v5602 = vld [vmem:[%s5591 + $0x50] sm:$0xff]
    %v5603 = vld [vmem:[%s5591 + $0x58] sm:$0xff]
    %v5604 = vld [vmem:[%s5591 + $0x60] sm:$0xff]
    %v5605 = vld [vmem:[%s5591 + $0x68] sm:$0xff]
    %v5606 = vld [vmem:[%s5591 + $0x70] sm:$0xff]
    %v5607 = vld [vmem:[%s5591 + $0x78] sm:$0xff]
    %v5608 = vsel %vm2535, %v5583, 0
    %v5610 = vsel %vm2535, %v5585, 0
    %v5612 = vsel %vm2535, %v5588, 0
    %v5614 = vsel %vm2535, %v5590, 0
    %5616 = vmatprep.subr.mxu0 0.0
    %5617 = vmatpush1.msra.mxu0 0.0
    %5618 = vmatprep.subr.mxu0 0.0
    %5619 = vmatpush1.msra.mxu0 0.0
    %5620 = vmatprep.subr.mxu0 0.0
    %5621 = vmatpush1.msra.mxu0 0.0
    %5622 = vmatprep.subr.mxu0 0.0
    %5623 = vmatpush1.msra.mxu0 0.0
    %5624 = vmatprep.subr.mxu0 0.0
    %5625 = vmatpush1.msra.mxu0 0.0
    %5626 = vmatprep.subr.mxu0 0.0
    %5627 = vmatpush1.msra.mxu0 0.0
    %5628 = vmatprep.subr.mxu0 0.0
    %5629 = vmatpush1.msra.mxu0 0.0
    %5630 = vmatprep.subr.mxu0 0.0
    %5631 = vmatpush1.msra.mxu0 0.0
    %5632 = vmatprep.subr.mxu0 0.0
    %5633 = vmatpush1.msra.mxu0 0.0
    %5634 = vmatprep.subr.mxu0 0.0
    %5635 = vmatpush1.msra.mxu0 0.0
    %5636 = vmatprep.subr.mxu0 0.0
    %5637 = vmatpush1.msra.mxu0 0.0
    %5638 = vmatprep.subr.mxu0 0.0
    %5639 = vmatpush1.msra.mxu0 0.0
    %5640 = vmatprep.subr.mxu0 %v5605
    %5641 = vmatpush1.msra.mxu0 %v5604
    %5642 = vmatprep.subr.mxu0 %v5601
    %5643 = vmatpush1.msra.mxu0 %v5600
    %5644 = vmatprep.subr.mxu0 %v5597
    %5645 = vmatpush1.msra.mxu0 %v5596
    %5646 = vmatprep.subr.mxu0 %v5593
    %5647 = vmatpush1.msra.mxu0 %v5592
    %5648 = vmatprep.subr.mxu0 0.0
    %5649 = vmatpush2.msra.mxu0 0.0
    %5650 = vmatprep.subr.mxu0 0.0
    %5651 = vmatpush2.msra.mxu0 0.0
    %5652 = vmatprep.subr.mxu0 0.0
    %5653 = vmatpush2.msra.mxu0 0.0
    %5654 = vmatprep.subr.mxu0 0.0
    %5655 = vmatpush2.msra.mxu0 0.0
    %5656 = vmatprep.subr.mxu0 0.0
    %5657 = vmatpush2.msra.mxu0 0.0
    %5658 = vmatprep.subr.mxu0 0.0
    %5659 = vmatpush2.msra.mxu0 0.0
    %5660 = vmatprep.subr.mxu0 0.0
    %5661 = vmatpush2.msra.mxu0 0.0
    %5662 = vmatprep.subr.mxu0 0.0
    %5663 = vmatpush2.msra.mxu0 0.0
    %5664 = vmatprep.subr.mxu0 0.0
    %5665 = vmatpush2.msra.mxu0 0.0
    %5666 = vmatprep.subr.mxu0 0.0
    %5667 = vmatpush2.msra.mxu0 0.0
    %5668 = vmatprep.subr.mxu0 0.0
    %5669 = vmatpush2.msra.mxu0 0.0
    %5670 = vmatprep.subr.mxu0 0.0
    %5671 = vmatpush2.msra.mxu0 0.0
    %5672 = vmatprep.subr.mxu0 0.0
    %5673 = vmatpush2.msra.mxu0 0.0
    %5674 = vmatprep.subr.mxu0 0.0
    %5675 = vmatpush2.msra.mxu0 0.0
    %5676 = vmatprep.subr.mxu0 0.0
    %5677 = vmatpush2.msra.mxu0 0.0
    %5678 = vmatprep.subr.mxu0 0.0
    %5679 = vmatpush2.msra.mxu0 0.0
    %5680 = vmatprep.mubr.f32.mxu0 0.0
    %5681 = vmatmul.mubr.f32.gmra.mxu0 %v5608
    %v5682 = vpop.f32.mrf.mxu0
    %v5683 = vadd.f32 0.0, %v5682
    %v5684 = vpop.f32.mrf.mxu0
    %v5685 = vadd.f32 0.0, %v5684
    %5686 = vmatprep.mubr.f32.mxu0 0.0
    %5687 = vmatmul.mubr.f32.gmra.mxu0 %v5610
    %v5688 = vpop.f32.mrf.mxu0
    %v5689 = vadd.f32 0.0, %v5688
    %v5690 = vpop.f32.mrf.mxu0
    %v5691 = vadd.f32 0.0, %v5690
    %5692 = vmatprep.mubr.f32.mxu0 0.0
    %5693 = vmatmul.mubr.f32.gmra.mxu0 %v5612
    %v5694 = vpop.f32.mrf.mxu0
    %v5695 = vadd.f32 0.0, %v5694
    %v5696 = vpop.f32.mrf.mxu0
    %v5697 = vadd.f32 0.0, %v5696
    %5698 = vmatprep.mubr.f32.mxu0 0.0
    %5699 = vmatmul.mubr.f32.gmra.mxu0 %v5614
    %v5700 = vpop.f32.mrf.mxu0
    %v5701 = vadd.f32 0.0, %v5700
    %v5702 = vpop.f32.mrf.mxu0
    %v5703 = vadd.f32 0.0, %v5702
    %5704 = vdwg.mxu0
    %5705 = vmatprep.subr.mxu0 0.0
    %5706 = vmatpush1.msra.mxu0 0.0
    %5707 = vmatprep.subr.mxu0 0.0
    %5708 = vmatpush1.msra.mxu0 0.0
    %5709 = vmatprep.subr.mxu0 0.0
    %5710 = vmatpush1.msra.mxu0 0.0
    %5711 = vmatprep.subr.mxu0 0.0
    %5712 = vmatpush1.msra.mxu0 0.0
    %5713 = vmatprep.subr.mxu0 0.0
    %5714 = vmatpush1.msra.mxu0 0.0
    %5715 = vmatprep.subr.mxu0 0.0
    %5716 = vmatpush1.msra.mxu0 0.0
    %5717 = vmatprep.subr.mxu0 0.0
    %5718 = vmatpush1.msra.mxu0 0.0
    %5719 = vmatprep.subr.mxu0 0.0
    %5720 = vmatpush1.msra.mxu0 0.0
    %5721 = vmatprep.subr.mxu0 0.0
    %5722 = vmatpush1.msra.mxu0 0.0
    %5723 = vmatprep.subr.mxu0 0.0
    %5724 = vmatpush1.msra.mxu0 0.0
    %5725 = vmatprep.subr.mxu0 0.0
    %5726 = vmatpush1.msra.mxu0 0.0
    %5727 = vmatprep.subr.mxu0 0.0
    %5728 = vmatpush1.msra.mxu0 0.0
    %5729 = vmatprep.subr.mxu0 %v5607
    %5730 = vmatpush1.msra.mxu0 %v5606
    %5731 = vmatprep.subr.mxu0 %v5603
    %5732 = vmatpush1.msra.mxu0 %v5602
    %5733 = vmatprep.subr.mxu0 %v5599
    %5734 = vmatpush1.msra.mxu0 %v5598
    %5735 = vmatprep.subr.mxu0 %v5595
    %5736 = vmatpush1.msra.mxu0 %v5594
    %5737 = vmatprep.subr.mxu0 0.0
    %5738 = vmatpush2.msra.mxu0 0.0
    %5739 = vmatprep.subr.mxu0 0.0
    %5740 = vmatpush2.msra.mxu0 0.0
    %5741 = vmatprep.subr.mxu0 0.0
    %5742 = vmatpush2.msra.mxu0 0.0
    %5743 = vmatprep.subr.mxu0 0.0
    %5744 = vmatpush2.msra.mxu0 0.0
    %5745 = vmatprep.subr.mxu0 0.0
    %5746 = vmatpush2.msra.mxu0 0.0
    %5747 = vmatprep.subr.mxu0 0.0
    %5748 = vmatpush2.msra.mxu0 0.0
    %5749 = vmatprep.subr.mxu0 0.0
    %5750 = vmatpush2.msra.mxu0 0.0
    %5751 = vmatprep.subr.mxu0 0.0
    %5752 = vmatpush2.msra.mxu0 0.0
    %5753 = vmatprep.subr.mxu0 0.0
    %5754 = vmatpush2.msra.mxu0 0.0
    %5755 = vmatprep.subr.mxu0 0.0
    %5756 = vmatpush2.msra.mxu0 0.0
    %5757 = vmatprep.subr.mxu0 0.0
    %5758 = vmatpush2.msra.mxu0 0.0
    %5759 = vmatprep.subr.mxu0 0.0
    %5760 = vmatpush2.msra.mxu0 0.0
    %5761 = vmatprep.subr.mxu0 0.0
    %5762 = vmatpush2.msra.mxu0 0.0
    %5763 = vmatprep.subr.mxu0 0.0
    %5764 = vmatpush2.msra.mxu0 0.0
    %5765 = vmatprep.subr.mxu0 0.0
    %5766 = vmatpush2.msra.mxu0 0.0
    %5767 = vmatprep.subr.mxu0 0.0
    %5768 = vmatpush2.msra.mxu0 0.0
    %5769 = vmatprep.mubr.f32.mxu0 0.0
    %5770 = vmatmul.mubr.f32.gmra.mxu0 %v5608
    %v5771 = vpop.f32.mrf.mxu0
    %v5772 = vadd.f32 0.0, %v5771
    %v5773 = vpop.f32.mrf.mxu0
    %v5774 = vadd.f32 0.0, %v5773
    %5775 = vmatprep.mubr.f32.mxu0 0.0
    %5776 = vmatmul.mubr.f32.gmra.mxu0 %v5610
    %v5777 = vpop.f32.mrf.mxu0
    %v5778 = vadd.f32 0.0, %v5777
    %v5779 = vpop.f32.mrf.mxu0
    %v5780 = vadd.f32 0.0, %v5779
    %5781 = vmatprep.mubr.f32.mxu0 0.0
    %5782 = vmatmul.mubr.f32.gmra.mxu0 %v5612
    %v5783 = vpop.f32.mrf.mxu0
    %v5784 = vadd.f32 0.0, %v5783
    %v5785 = vpop.f32.mrf.mxu0
    %v5786 = vadd.f32 0.0, %v5785
    %5787 = vmatprep.mubr.f32.mxu0 0.0
    %5788 = vmatmul.mubr.f32.gmra.mxu0 %v5614
    %v5789 = vpop.f32.mrf.mxu0
    %v5790 = vadd.f32 0.0, %v5789
    %v5791 = vpop.f32.mrf.mxu0
    %v5792 = vadd.f32 0.0, %v5791
    %5793 = vdwg.mxu0
    %v5794 = vsel %vm2535, %v5557, 0
    %v5796 = vsel %vm2535, %v5549, 0
    %v5798 = vsel %vm2535, %v5558, 0
    %v5800 = vsel %vm2535, %v5552, 0
    %5802 = vmatprep.subr.mxu0 0.0
    %5803 = vmatpush1.msra.mxu0 0.0
    %5804 = vmatprep.subr.mxu0 0.0
    %5805 = vmatpush1.msra.mxu0 0.0
    %5806 = vmatprep.subr.mxu0 0.0
    %5807 = vmatpush1.msra.mxu0 0.0
    %5808 = vmatprep.subr.mxu0 0.0
    %5809 = vmatpush1.msra.mxu0 0.0
    %5810 = vmatprep.subr.mxu0 0.0
    %5811 = vmatpush1.msra.mxu0 0.0
    %5812 = vmatprep.subr.mxu0 0.0
    %5813 = vmatpush1.msra.mxu0 0.0
    %5814 = vmatprep.subr.mxu0 0.0
    %5815 = vmatpush1.msra.mxu0 0.0
    %5816 = vmatprep.subr.mxu0 0.0
    %5817 = vmatpush1.msra.mxu0 0.0
    %5818 = vmatprep.subr.mxu0 0.0
    %5819 = vmatpush1.msra.mxu0 0.0
    %5820 = vmatprep.subr.mxu0 0.0
    %5821 = vmatpush1.msra.mxu0 0.0
    %5822 = vmatprep.subr.mxu0 0.0
    %5823 = vmatpush1.msra.mxu0 0.0
    %5824 = vmatprep.subr.mxu0 0.0
    %5825 = vmatpush1.msra.mxu0 0.0
    %5826 = vmatprep.subr.mxu0 %v5574
    %5827 = vmatpush1.msra.mxu0 %v5573
    %5828 = vmatprep.subr.mxu0 %v5570
    %5829 = vmatpush1.msra.mxu0 %v5569
    %5830 = vmatprep.subr.mxu0 %v5566
    %5831 = vmatpush1.msra.mxu0 %v5565
    %5832 = vmatprep.subr.mxu0 %v5562
    %5833 = vmatpush1.msra.mxu0 %v5561
    %5834 = vmatprep.subr.mxu0 0.0
    %5835 = vmatpush2.msra.mxu0 0.0
    %5836 = vmatprep.subr.mxu0 0.0
    %5837 = vmatpush2.msra.mxu0 0.0
    %5838 = vmatprep.subr.mxu0 0.0
    %5839 = vmatpush2.msra.mxu0 0.0
    %5840 = vmatprep.subr.mxu0 0.0
    %5841 = vmatpush2.msra.mxu0 0.0
    %5842 = vmatprep.subr.mxu0 0.0
    %5843 = vmatpush2.msra.mxu0 0.0
    %5844 = vmatprep.subr.mxu0 0.0
    %5845 = vmatpush2.msra.mxu0 0.0
    %5846 = vmatprep.subr.mxu0 0.0
    %5847 = vmatpush2.msra.mxu0 0.0
    %5848 = vmatprep.subr.mxu0 0.0
    %5849 = vmatpush2.msra.mxu0 0.0
    %5850 = vmatprep.subr.mxu0 0.0
    %5851 = vmatpush2.msra.mxu0 0.0
    %5852 = vmatprep.subr.mxu0 0.0
    %5853 = vmatpush2.msra.mxu0 0.0
    %5854 = vmatprep.subr.mxu0 0.0
    %5855 = vmatpush2.msra.mxu0 0.0
    %5856 = vmatprep.subr.mxu0 0.0
    %5857 = vmatpush2.msra.mxu0 0.0
    %5858 = vmatprep.subr.mxu0 0.0
    %5859 = vmatpush2.msra.mxu0 0.0
    %5860 = vmatprep.subr.mxu0 0.0
    %5861 = vmatpush2.msra.mxu0 0.0
    %5862 = vmatprep.subr.mxu0 0.0
    %5863 = vmatpush2.msra.mxu0 0.0
    %5864 = vmatprep.subr.mxu0 0.0
    %5865 = vmatpush2.msra.mxu0 0.0
    %5866 = vmatprep.mubr.f32.mxu0 0.0
    %5867 = vmatmul.mubr.f32.gmra.mxu0 %v5794
    %v5868 = vpop.f32.mrf.mxu0
    %v5869 = vadd.f32 %v5683, %v5868
    %v5870 = vpop.f32.mrf.mxu0
    %v5871 = vadd.f32 %v5685, %v5870
    %5872 = vmatprep.mubr.f32.mxu0 0.0
    %5873 = vmatmul.mubr.f32.gmra.mxu0 %v5796
    %v5874 = vpop.f32.mrf.mxu0
    %v5875 = vadd.f32 %v5689, %v5874
    %v5876 = vpop.f32.mrf.mxu0
    %v5877 = vadd.f32 %v5691, %v5876
    %5878 = vmatprep.mubr.f32.mxu0 0.0
    %5879 = vmatmul.mubr.f32.gmra.mxu0 %v5798
    %v5880 = vpop.f32.mrf.mxu0
    %v5881 = vadd.f32 %v5695, %v5880
    %v5882 = vpop.f32.mrf.mxu0
    %v5883 = vadd.f32 %v5697, %v5882
    %5884 = vmatprep.mubr.f32.mxu0 0.0
    %5885 = vmatmul.mubr.f32.gmra.mxu0 %v5800
    %v5886 = vpop.f32.mrf.mxu0
    %v5887 = vadd.f32 %v5701, %v5886
    %v5888 = vpop.f32.mrf.mxu0
    %v5889 = vadd.f32 %v5703, %v5888
    %5890 = vdwg.mxu0
    %5891 = vmatprep.subr.mxu0 0.0
    %5892 = vmatpush1.msra.mxu0 0.0
    %5893 = vmatprep.subr.mxu0 0.0
    %5894 = vmatpush1.msra.mxu0 0.0
    %5895 = vmatprep.subr.mxu0 0.0
    %5896 = vmatpush1.msra.mxu0 0.0
    %5897 = vmatprep.subr.mxu0 0.0
    %5898 = vmatpush1.msra.mxu0 0.0
    %5899 = vmatprep.subr.mxu0 0.0
    %5900 = vmatpush1.msra.mxu0 0.0
    %5901 = vmatprep.subr.mxu0 0.0
    %5902 = vmatpush1.msra.mxu0 0.0
    %5903 = vmatprep.subr.mxu0 0.0
    %5904 = vmatpush1.msra.mxu0 0.0
    %5905 = vmatprep.subr.mxu0 0.0
    %5906 = vmatpush1.msra.mxu0 0.0
    %5907 = vmatprep.subr.mxu0 0.0
    %5908 = vmatpush1.msra.mxu0 0.0
    %5909 = vmatprep.subr.mxu0 0.0
    %5910 = vmatpush1.msra.mxu0 0.0
    %5911 = vmatprep.subr.mxu0 0.0
    %5912 = vmatpush1.msra.mxu0 0.0
    %5913 = vmatprep.subr.mxu0 0.0
    %5914 = vmatpush1.msra.mxu0 0.0
    %5915 = vmatprep.subr.mxu0 %v5576
    %5916 = vmatpush1.msra.mxu0 %v5575
    %5917 = vmatprep.subr.mxu0 %v5572
    %5918 = vmatpush1.msra.mxu0 %v5571
    %5919 = vmatprep.subr.mxu0 %v5568
    %5920 = vmatpush1.msra.mxu0 %v5567
    %5921 = vmatprep.subr.mxu0 %v5564
    %5922 = vmatpush1.msra.mxu0 %v5563
    %5923 = vmatprep.subr.mxu0 0.0
    %5924 = vmatpush2.msra.mxu0 0.0
    %5925 = vmatprep.subr.mxu0 0.0
    %5926 = vmatpush2.msra.mxu0 0.0
    %5927 = vmatprep.subr.mxu0 0.0
    %5928 = vmatpush2.msra.mxu0 0.0
    %5929 = vmatprep.subr.mxu0 0.0
    %5930 = vmatpush2.msra.mxu0 0.0
    %5931 = vmatprep.subr.mxu0 0.0
    %5932 = vmatpush2.msra.mxu0 0.0
    %5933 = vmatprep.subr.mxu0 0.0
    %5934 = vmatpush2.msra.mxu0 0.0
    %5935 = vmatprep.subr.mxu0 0.0
    %5936 = vmatpush2.msra.mxu0 0.0
    %5937 = vmatprep.subr.mxu0 0.0
    %5938 = vmatpush2.msra.mxu0 0.0
    %5939 = vmatprep.subr.mxu0 0.0
    %5940 = vmatpush2.msra.mxu0 0.0
    %5941 = vmatprep.subr.mxu0 0.0
    %5942 = vmatpush2.msra.mxu0 0.0
    %5943 = vmatprep.subr.mxu0 0.0
    %5944 = vmatpush2.msra.mxu0 0.0
    %5945 = vmatprep.subr.mxu0 0.0
    %5946 = vmatpush2.msra.mxu0 0.0
    %5947 = vmatprep.subr.mxu0 0.0
    %5948 = vmatpush2.msra.mxu0 0.0
    %5949 = vmatprep.subr.mxu0 0.0
    %5950 = vmatpush2.msra.mxu0 0.0
    %5951 = vmatprep.subr.mxu0 0.0
    %5952 = vmatpush2.msra.mxu0 0.0
    %5953 = vmatprep.subr.mxu0 0.0
    %5954 = vmatpush2.msra.mxu0 0.0
    %5955 = vmatprep.mubr.f32.mxu0 0.0
    %5956 = vmatmul.mubr.f32.gmra.mxu0 %v5794
    %v5957 = vpop.f32.mrf.mxu0
    %v5958 = vadd.f32 %v5772, %v5957
    %v5959 = vpop.f32.mrf.mxu0
    %v5960 = vadd.f32 %v5774, %v5959
    %5961 = vmatprep.mubr.f32.mxu0 0.0
    %5962 = vmatmul.mubr.f32.gmra.mxu0 %v5796
    %v5963 = vpop.f32.mrf.mxu0
    %v5964 = vadd.f32 %v5778, %v5963
    %v5965 = vpop.f32.mrf.mxu0
    %v5966 = vadd.f32 %v5780, %v5965
    %5967 = vmatprep.mubr.f32.mxu0 0.0
    %5968 = vmatmul.mubr.f32.gmra.mxu0 %v5798
    %v5969 = vpop.f32.mrf.mxu0
    %v5970 = vadd.f32 %v5784, %v5969
    %v5971 = vpop.f32.mrf.mxu0
    %v5972 = vadd.f32 %v5786, %v5971
    %5973 = vmatprep.mubr.f32.mxu0 0.0
    %5974 = vmatmul.mubr.f32.gmra.mxu0 %v5800
    %v5975 = vpop.f32.mrf.mxu0
    %v5976 = vadd.f32 %v5790, %v5975
    %v5977 = vpop.f32.mrf.mxu0
    %v5978 = vadd.f32 %v5792, %v5977
    %5979 = vdwg.mxu0
    %v5980 = vrot.slane %v5557, 2
    %v5981 = vrot.slane %v5549, 2
    %v5982 = vsel %vm811, %v5980, %v5981
    %v5983 = vrot.slane %v5559, 2
    %v5984 = vsel %vm811, %v5981, %v5983
    %v5985 = vrot.slane %v5558, 2
    %v5986 = vrot.slane %v5552, 2
    %v5987 = vsel %vm811, %v5985, %v5986
    %v5988 = vrot.slane %v5560, 2
    %v5989 = vsel %vm811, %v5986, %v5988
    %s5990 = scalar_lea.vmem [#allocation18], 256
    %v5991 = vld [vmem:[%s5990] sm:$0xff]
    %v5992 = vld [vmem:[%s5990 + $0x8] sm:$0xff]
    %v5993 = vld [vmem:[%s5990 + $0x10] sm:$0xff]
    %v5994 = vld [vmem:[%s5990 + $0x18] sm:$0xff]
    %v5995 = vld [vmem:[%s5990 + $0x20] sm:$0xff]
    %v5996 = vld [vmem:[%s5990 + $0x28] sm:$0xff]
    %v5997 = vld [vmem:[%s5990 + $0x30] sm:$0xff]
    %v5998 = vld [vmem:[%s5990 + $0x38] sm:$0xff]
    %v5999 = vld [vmem:[%s5990 + $0x40] sm:$0xff]
    %v6000 = vld [vmem:[%s5990 + $0x48] sm:$0xff]
    %v6001 = vld [vmem:[%s5990 + $0x50] sm:$0xff]
    %v6002 = vld [vmem:[%s5990 + $0x58] sm:$0xff]
    %v6003 = vld [vmem:[%s5990 + $0x60] sm:$0xff]
    %v6004 = vld [vmem:[%s5990 + $0x68] sm:$0xff]
    %v6005 = vld [vmem:[%s5990 + $0x70] sm:$0xff]
    %v6006 = vld [vmem:[%s5990 + $0x78] sm:$0xff]
    %v6007 = vsel %vm2535, %v5982, 0
    %v6009 = vsel %vm2535, %v5984, 0
    %v6011 = vsel %vm2535, %v5987, 0
    %v6013 = vsel %vm2535, %v5989, 0
    %6015 = vmatprep.subr.mxu0 0.0
    %6016 = vmatpush1.msra.mxu0 0.0
    %6017 = vmatprep.subr.mxu0 0.0
    %6018 = vmatpush1.msra.mxu0 0.0
    %6019 = vmatprep.subr.mxu0 0.0
    %6020 = vmatpush1.msra.mxu0 0.0
    %6021 = vmatprep.subr.mxu0 0.0
    %6022 = vmatpush1.msra.mxu0 0.0
    %6023 = vmatprep.subr.mxu0 0.0
    %6024 = vmatpush1.msra.mxu0 0.0
    %6025 = vmatprep.subr.mxu0 0.0
    %6026 = vmatpush1.msra.mxu0 0.0
    %6027 = vmatprep.subr.mxu0 0.0
    %6028 = vmatpush1.msra.mxu0 0.0
    %6029 = vmatprep.subr.mxu0 0.0
    %6030 = vmatpush1.msra.mxu0 0.0
    %6031 = vmatprep.subr.mxu0 0.0
    %6032 = vmatpush1.msra.mxu0 0.0
    %6033 = vmatprep.subr.mxu0 0.0
    %6034 = vmatpush1.msra.mxu0 0.0
    %6035 = vmatprep.subr.mxu0 0.0
    %6036 = vmatpush1.msra.mxu0 0.0
    %6037 = vmatprep.subr.mxu0 0.0
    %6038 = vmatpush1.msra.mxu0 0.0
    %6039 = vmatprep.subr.mxu0 %v6004
    %6040 = vmatpush1.msra.mxu0 %v6003
    %6041 = vmatprep.subr.mxu0 %v6000
    %6042 = vmatpush1.msra.mxu0 %v5999
    %6043 = vmatprep.subr.mxu0 %v5996
    %6044 = vmatpush1.msra.mxu0 %v5995
    %6045 = vmatprep.subr.mxu0 %v5992
    %6046 = vmatpush1.msra.mxu0 %v5991
    %6047 = vmatprep.subr.mxu0 0.0
    %6048 = vmatpush2.msra.mxu0 0.0
    %6049 = vmatprep.subr.mxu0 0.0
    %6050 = vmatpush2.msra.mxu0 0.0
    %6051 = vmatprep.subr.mxu0 0.0
    %6052 = vmatpush2.msra.mxu0 0.0
    %6053 = vmatprep.subr.mxu0 0.0
    %6054 = vmatpush2.msra.mxu0 0.0
    %6055 = vmatprep.subr.mxu0 0.0
    %6056 = vmatpush2.msra.mxu0 0.0
    %6057 = vmatprep.subr.mxu0 0.0
    %6058 = vmatpush2.msra.mxu0 0.0
    %6059 = vmatprep.subr.mxu0 0.0
    %6060 = vmatpush2.msra.mxu0 0.0
    %6061 = vmatprep.subr.mxu0 0.0
    %6062 = vmatpush2.msra.mxu0 0.0
    %6063 = vmatprep.subr.mxu0 0.0
    %6064 = vmatpush2.msra.mxu0 0.0
    %6065 = vmatprep.subr.mxu0 0.0
    %6066 = vmatpush2.msra.mxu0 0.0
    %6067 = vmatprep.subr.mxu0 0.0
    %6068 = vmatpush2.msra.mxu0 0.0
    %6069 = vmatprep.subr.mxu0 0.0
    %6070 = vmatpush2.msra.mxu0 0.0
    %6071 = vmatprep.subr.mxu0 0.0
    %6072 = vmatpush2.msra.mxu0 0.0
    %6073 = vmatprep.subr.mxu0 0.0
    %6074 = vmatpush2.msra.mxu0 0.0
    %6075 = vmatprep.subr.mxu0 0.0
    %6076 = vmatpush2.msra.mxu0 0.0
    %6077 = vmatprep.subr.mxu0 0.0
    %6078 = vmatpush2.msra.mxu0 0.0
    %6079 = vmatprep.mubr.f32.mxu0 0.0
    %6080 = vmatmul.mubr.f32.gmra.mxu0 %v6007
    %v6081 = vpop.f32.mrf.mxu0
    %v6082 = vadd.f32 0.0, %v6081
    %v6083 = vpop.f32.mrf.mxu0
    %v6084 = vadd.f32 0.0, %v6083
    %6085 = vmatprep.mubr.f32.mxu0 0.0
    %6086 = vmatmul.mubr.f32.gmra.mxu0 %v6009
    %v6087 = vpop.f32.mrf.mxu0
    %v6088 = vadd.f32 0.0, %v6087
    %v6089 = vpop.f32.mrf.mxu0
    %v6090 = vadd.f32 0.0, %v6089
    %6091 = vmatprep.mubr.f32.mxu0 0.0
    %6092 = vmatmul.mubr.f32.gmra.mxu0 %v6011
    %v6093 = vpop.f32.mrf.mxu0
    %v6094 = vadd.f32 0.0, %v6093
    %v6095 = vpop.f32.mrf.mxu0
    %v6096 = vadd.f32 0.0, %v6095
    %6097 = vmatprep.mubr.f32.mxu0 0.0
    %6098 = vmatmul.mubr.f32.gmra.mxu0 %v6013
    %v6099 = vpop.f32.mrf.mxu0
    %v6100 = vadd.f32 0.0, %v6099
    %v6101 = vpop.f32.mrf.mxu0
    %v6102 = vadd.f32 0.0, %v6101
    %6103 = vdwg.mxu0
    %6104 = vmatprep.subr.mxu0 0.0
    %6105 = vmatpush1.msra.mxu0 0.0
    %6106 = vmatprep.subr.mxu0 0.0
    %6107 = vmatpush1.msra.mxu0 0.0
    %6108 = vmatprep.subr.mxu0 0.0
    %6109 = vmatpush1.msra.mxu0 0.0
    %6110 = vmatprep.subr.mxu0 0.0
    %6111 = vmatpush1.msra.mxu0 0.0
    %6112 = vmatprep.subr.mxu0 0.0
    %6113 = vmatpush1.msra.mxu0 0.0
    %6114 = vmatprep.subr.mxu0 0.0
    %6115 = vmatpush1.msra.mxu0 0.0
    %6116 = vmatprep.subr.mxu0 0.0
    %6117 = vmatpush1.msra.mxu0 0.0
    %6118 = vmatprep.subr.mxu0 0.0
    %6119 = vmatpush1.msra.mxu0 0.0
    %6120 = vmatprep.subr.mxu0 0.0
    %6121 = vmatpush1.msra.mxu0 0.0
    %6122 = vmatprep.subr.mxu0 0.0
    %6123 = vmatpush1.msra.mxu0 0.0
    %6124 = vmatprep.subr.mxu0 0.0
    %6125 = vmatpush1.msra.mxu0 0.0
    %6126 = vmatprep.subr.mxu0 0.0
    %6127 = vmatpush1.msra.mxu0 0.0
    %6128 = vmatprep.subr.mxu0 %v6006
    %6129 = vmatpush1.msra.mxu0 %v6005
    %6130 = vmatprep.subr.mxu0 %v6002
    %6131 = vmatpush1.msra.mxu0 %v6001
    %6132 = vmatprep.subr.mxu0 %v5998
    %6133 = vmatpush1.msra.mxu0 %v5997
    %6134 = vmatprep.subr.mxu0 %v5994
    %6135 = vmatpush1.msra.mxu0 %v5993
    %6136 = vmatprep.subr.mxu0 0.0
    %6137 = vmatpush2.msra.mxu0 0.0
    %6138 = vmatprep.subr.mxu0 0.0
    %6139 = vmatpush2.msra.mxu0 0.0
    %6140 = vmatprep.subr.mxu0 0.0
    %6141 = vmatpush2.msra.mxu0 0.0
    %6142 = vmatprep.subr.mxu0 0.0
    %6143 = vmatpush2.msra.mxu0 0.0
    %6144 = vmatprep.subr.mxu0 0.0
    %6145 = vmatpush2.msra.mxu0 0.0
    %6146 = vmatprep.subr.mxu0 0.0
    %6147 = vmatpush2.msra.mxu0 0.0
    %6148 = vmatprep.subr.mxu0 0.0
    %6149 = vmatpush2.msra.mxu0 0.0
    %6150 = vmatprep.subr.mxu0 0.0
    %6151 = vmatpush2.msra.mxu0 0.0
    %6152 = vmatprep.subr.mxu0 0.0
    %6153 = vmatpush2.msra.mxu0 0.0
    %6154 = vmatprep.subr.mxu0 0.0
    %6155 = vmatpush2.msra.mxu0 0.0
    %6156 = vmatprep.subr.mxu0 0.0
    %6157 = vmatpush2.msra.mxu0 0.0
    %6158 = vmatprep.subr.mxu0 0.0
    %6159 = vmatpush2.msra.mxu0 0.0
    %6160 = vmatprep.subr.mxu0 0.0
    %6161 = vmatpush2.msra.mxu0 0.0
    %6162 = vmatprep.subr.mxu0 0.0
    %6163 = vmatpush2.msra.mxu0 0.0
    %6164 = vmatprep.subr.mxu0 0.0
    %6165 = vmatpush2.msra.mxu0 0.0
    %6166 = vmatprep.subr.mxu0 0.0
    %6167 = vmatpush2.msra.mxu0 0.0
    %6168 = vmatprep.mubr.f32.mxu0 0.0
    %6169 = vmatmul.mubr.f32.gmra.mxu0 %v6007
    %v6170 = vpop.f32.mrf.mxu0
    %v6171 = vadd.f32 0.0, %v6170
    %v6172 = vpop.f32.mrf.mxu0
    %v6173 = vadd.f32 0.0, %v6172
    %6174 = vmatprep.mubr.f32.mxu0 0.0
    %6175 = vmatmul.mubr.f32.gmra.mxu0 %v6009
    %v6176 = vpop.f32.mrf.mxu0
    %v6177 = vadd.f32 0.0, %v6176
    %v6178 = vpop.f32.mrf.mxu0
    %v6179 = vadd.f32 0.0, %v6178
    %6180 = vmatprep.mubr.f32.mxu0 0.0
    %6181 = vmatmul.mubr.f32.gmra.mxu0 %v6011
    %v6182 = vpop.f32.mrf.mxu0
    %v6183 = vadd.f32 0.0, %v6182
    %v6184 = vpop.f32.mrf.mxu0
    %v6185 = vadd.f32 0.0, %v6184
    %6186 = vmatprep.mubr.f32.mxu0 0.0
    %6187 = vmatmul.mubr.f32.gmra.mxu0 %v6013
    %v6188 = vpop.f32.mrf.mxu0
    %v6189 = vadd.f32 0.0, %v6188
    %v6190 = vpop.f32.mrf.mxu0
    %v6191 = vadd.f32 0.0, %v6190
    %6192 = vdwg.mxu0
    %v6193 = vadd.f32 %v5869, %v6082
    %v6194 = vadd.f32 %v5871, %v6084
    %v6195 = vadd.f32 %v5958, %v6171
    %v6196 = vadd.f32 %v5960, %v6173
    %v6197 = vadd.f32 %v5875, %v6088
    %v6198 = vadd.f32 %v5877, %v6090
    %v6199 = vadd.f32 %v5964, %v6177
    %v6200 = vadd.f32 %v5966, %v6179
    %v6201 = vadd.f32 %v5881, %v6094
    %v6202 = vadd.f32 %v5883, %v6096
    %v6203 = vadd.f32 %v5970, %v6183
    %v6204 = vadd.f32 %v5972, %v6185
    %v6205 = vadd.f32 %v5887, %v6100
    %v6206 = vadd.f32 %v5889, %v6102
    %v6207 = vadd.f32 %v5976, %v6189
    %v6208 = vadd.f32 %v5978, %v6191
    %v6209 = vrot.slane %v5557, 3
    %v6210 = vrot.slane %v5549, 3
    %v6211 = vsel %vm1085, %v6209, %v6210
    %v6212 = vrot.slane %v5559, 3
    %v6213 = vsel %vm1085, %v6210, %v6212
    %v6214 = vrot.slane %v5558, 3
    %v6215 = vrot.slane %v5552, 3
    %v6216 = vsel %vm1085, %v6214, %v6215
    %v6217 = vrot.slane %v5560, 3
    %v6218 = vsel %vm1085, %v6215, %v6217
    %s6219 = scalar_lea.vmem [#allocation18], 384
    %v6220 = vld [vmem:[%s6219] sm:$0xff]
    %v6221 = vld [vmem:[%s6219 + $0x8] sm:$0xff]
    %v6222 = vld [vmem:[%s6219 + $0x10] sm:$0xff]
    %v6223 = vld [vmem:[%s6219 + $0x18] sm:$0xff]
    %v6224 = vld [vmem:[%s6219 + $0x20] sm:$0xff]
    %v6225 = vld [vmem:[%s6219 + $0x28] sm:$0xff]
    %v6226 = vld [vmem:[%s6219 + $0x30] sm:$0xff]
    %v6227 = vld [vmem:[%s6219 + $0x38] sm:$0xff]
    %v6228 = vld [vmem:[%s6219 + $0x40] sm:$0xff]
    %v6229 = vld [vmem:[%s6219 + $0x48] sm:$0xff]
    %v6230 = vld [vmem:[%s6219 + $0x50] sm:$0xff]
    %v6231 = vld [vmem:[%s6219 + $0x58] sm:$0xff]
    %v6232 = vld [vmem:[%s6219 + $0x60] sm:$0xff]
    %v6233 = vld [vmem:[%s6219 + $0x68] sm:$0xff]
    %v6234 = vld [vmem:[%s6219 + $0x70] sm:$0xff]
    %v6235 = vld [vmem:[%s6219 + $0x78] sm:$0xff]
    %v6236 = vsel %vm2535, %v6211, 0
    %v6238 = vsel %vm2535, %v6213, 0
    %v6240 = vsel %vm2535, %v6216, 0
    %v6242 = vsel %vm2535, %v6218, 0
    %6244 = vmatprep.subr.mxu0 0.0
    %6245 = vmatpush1.msra.mxu0 0.0
    %6246 = vmatprep.subr.mxu0 0.0
    %6247 = vmatpush1.msra.mxu0 0.0
    %6248 = vmatprep.subr.mxu0 0.0
    %6249 = vmatpush1.msra.mxu0 0.0
    %6250 = vmatprep.subr.mxu0 0.0
    %6251 = vmatpush1.msra.mxu0 0.0
    %6252 = vmatprep.subr.mxu0 0.0
    %6253 = vmatpush1.msra.mxu0 0.0
    %6254 = vmatprep.subr.mxu0 0.0
    %6255 = vmatpush1.msra.mxu0 0.0
    %6256 = vmatprep.subr.mxu0 0.0
    %6257 = vmatpush1.msra.mxu0 0.0
    %6258 = vmatprep.subr.mxu0 0.0
    %6259 = vmatpush1.msra.mxu0 0.0
    %6260 = vmatprep.subr.mxu0 0.0
    %6261 = vmatpush1.msra.mxu0 0.0
    %6262 = vmatprep.subr.mxu0 0.0
    %6263 = vmatpush1.msra.mxu0 0.0
    %6264 = vmatprep.subr.mxu0 0.0
    %6265 = vmatpush1.msra.mxu0 0.0
    %6266 = vmatprep.subr.mxu0 0.0
    %6267 = vmatpush1.msra.mxu0 0.0
    %6268 = vmatprep.subr.mxu0 %v6233
    %6269 = vmatpush1.msra.mxu0 %v6232
    %6270 = vmatprep.subr.mxu0 %v6229
    %6271 = vmatpush1.msra.mxu0 %v6228
    %6272 = vmatprep.subr.mxu0 %v6225
    %6273 = vmatpush1.msra.mxu0 %v6224
    %6274 = vmatprep.subr.mxu0 %v6221
    %6275 = vmatpush1.msra.mxu0 %v6220
    %6276 = vmatprep.subr.mxu0 0.0
    %6277 = vmatpush2.msra.mxu0 0.0
    %6278 = vmatprep.subr.mxu0 0.0
    %6279 = vmatpush2.msra.mxu0 0.0
    %6280 = vmatprep.subr.mxu0 0.0
    %6281 = vmatpush2.msra.mxu0 0.0
    %6282 = vmatprep.subr.mxu0 0.0
    %6283 = vmatpush2.msra.mxu0 0.0
    %6284 = vmatprep.subr.mxu0 0.0
    %6285 = vmatpush2.msra.mxu0 0.0
    %6286 = vmatprep.subr.mxu0 0.0
    %6287 = vmatpush2.msra.mxu0 0.0
    %6288 = vmatprep.subr.mxu0 0.0
    %6289 = vmatpush2.msra.mxu0 0.0
    %6290 = vmatprep.subr.mxu0 0.0
    %6291 = vmatpush2.msra.mxu0 0.0
    %6292 = vmatprep.subr.mxu0 0.0
    %6293 = vmatpush2.msra.mxu0 0.0
    %6294 = vmatprep.subr.mxu0 0.0
    %6295 = vmatpush2.msra.mxu0 0.0
    %6296 = vmatprep.subr.mxu0 0.0
    %6297 = vmatpush2.msra.mxu0 0.0
    %6298 = vmatprep.subr.mxu0 0.0
    %6299 = vmatpush2.msra.mxu0 0.0
    %6300 = vmatprep.subr.mxu0 0.0
    %6301 = vmatpush2.msra.mxu0 0.0
    %6302 = vmatprep.subr.mxu0 0.0
    %6303 = vmatpush2.msra.mxu0 0.0
    %6304 = vmatprep.subr.mxu0 0.0
    %6305 = vmatpush2.msra.mxu0 0.0
    %6306 = vmatprep.subr.mxu0 0.0
    %6307 = vmatpush2.msra.mxu0 0.0
    %6308 = vmatprep.mubr.f32.mxu0 0.0
    %6309 = vmatmul.mubr.f32.gmra.mxu0 %v6236
    %v6310 = vpop.f32.mrf.mxu0
    %v6311 = vadd.f32 0.0, %v6310
    %v6312 = vpop.f32.mrf.mxu0
    %v6313 = vadd.f32 0.0, %v6312
    %6314 = vmatprep.mubr.f32.mxu0 0.0
    %6315 = vmatmul.mubr.f32.gmra.mxu0 %v6238
    %v6316 = vpop.f32.mrf.mxu0
    %v6317 = vadd.f32 0.0, %v6316
    %v6318 = vpop.f32.mrf.mxu0
    %v6319 = vadd.f32 0.0, %v6318
    %6320 = vmatprep.mubr.f32.mxu0 0.0
    %6321 = vmatmul.mubr.f32.gmra.mxu0 %v6240
    %v6322 = vpop.f32.mrf.mxu0
    %v6323 = vadd.f32 0.0, %v6322
    %v6324 = vpop.f32.mrf.mxu0
    %v6325 = vadd.f32 0.0, %v6324
    %6326 = vmatprep.mubr.f32.mxu0 0.0
    %6327 = vmatmul.mubr.f32.gmra.mxu0 %v6242
    %v6328 = vpop.f32.mrf.mxu0
    %v6329 = vadd.f32 0.0, %v6328
    %v6330 = vpop.f32.mrf.mxu0
    %v6331 = vadd.f32 0.0, %v6330
    %6332 = vdwg.mxu0
    %6333 = vmatprep.subr.mxu0 0.0
    %6334 = vmatpush1.msra.mxu0 0.0
    %6335 = vmatprep.subr.mxu0 0.0
    %6336 = vmatpush1.msra.mxu0 0.0
    %6337 = vmatprep.subr.mxu0 0.0
    %6338 = vmatpush1.msra.mxu0 0.0
    %6339 = vmatprep.subr.mxu0 0.0
    %6340 = vmatpush1.msra.mxu0 0.0
    %6341 = vmatprep.subr.mxu0 0.0
    %6342 = vmatpush1.msra.mxu0 0.0
    %6343 = vmatprep.subr.mxu0 0.0
    %6344 = vmatpush1.msra.mxu0 0.0
    %6345 = vmatprep.subr.mxu0 0.0
    %6346 = vmatpush1.msra.mxu0 0.0
    %6347 = vmatprep.subr.mxu0 0.0
    %6348 = vmatpush1.msra.mxu0 0.0
    %6349 = vmatprep.subr.mxu0 0.0
    %6350 = vmatpush1.msra.mxu0 0.0
    %6351 = vmatprep.subr.mxu0 0.0
    %6352 = vmatpush1.msra.mxu0 0.0
    %6353 = vmatprep.subr.mxu0 0.0
    %6354 = vmatpush1.msra.mxu0 0.0
    %6355 = vmatprep.subr.mxu0 0.0
    %6356 = vmatpush1.msra.mxu0 0.0
    %6357 = vmatprep.subr.mxu0 %v6235
    %6358 = vmatpush1.msra.mxu0 %v6234
    %6359 = vmatprep.subr.mxu0 %v6231
    %6360 = vmatpush1.msra.mxu0 %v6230
    %6361 = vmatprep.subr.mxu0 %v6227
    %6362 = vmatpush1.msra.mxu0 %v6226
    %6363 = vmatprep.subr.mxu0 %v6223
    %6364 = vmatpush1.msra.mxu0 %v6222
    %6365 = vmatprep.subr.mxu0 0.0
    %6366 = vmatpush2.msra.mxu0 0.0
    %6367 = vmatprep.subr.mxu0 0.0
    %6368 = vmatpush2.msra.mxu0 0.0
    %6369 = vmatprep.subr.mxu0 0.0
    %6370 = vmatpush2.msra.mxu0 0.0
    %6371 = vmatprep.subr.mxu0 0.0
    %6372 = vmatpush2.msra.mxu0 0.0
    %6373 = vmatprep.subr.mxu0 0.0
    %6374 = vmatpush2.msra.mxu0 0.0
    %6375 = vmatprep.subr.mxu0 0.0
    %6376 = vmatpush2.msra.mxu0 0.0
    %6377 = vmatprep.subr.mxu0 0.0
    %6378 = vmatpush2.msra.mxu0 0.0
    %6379 = vmatprep.subr.mxu0 0.0
    %6380 = vmatpush2.msra.mxu0 0.0
    %6381 = vmatprep.subr.mxu0 0.0
    %6382 = vmatpush2.msra.mxu0 0.0
    %6383 = vmatprep.subr.mxu0 0.0
    %6384 = vmatpush2.msra.mxu0 0.0
    %6385 = vmatprep.subr.mxu0 0.0
    %6386 = vmatpush2.msra.mxu0 0.0
    %6387 = vmatprep.subr.mxu0 0.0
    %6388 = vmatpush2.msra.mxu0 0.0
    %6389 = vmatprep.subr.mxu0 0.0
    %6390 = vmatpush2.msra.mxu0 0.0
    %6391 = vmatprep.subr.mxu0 0.0
    %6392 = vmatpush2.msra.mxu0 0.0
    %6393 = vmatprep.subr.mxu0 0.0
    %6394 = vmatpush2.msra.mxu0 0.0
    %6395 = vmatprep.subr.mxu0 0.0
    %6396 = vmatpush2.msra.mxu0 0.0
    %6397 = vmatprep.mubr.f32.mxu0 0.0
    %6398 = vmatmul.mubr.f32.gmra.mxu0 %v6236
    %v6399 = vpop.f32.mrf.mxu0
    %v6400 = vadd.f32 0.0, %v6399
    %v6401 = vpop.f32.mrf.mxu0
    %v6402 = vadd.f32 0.0, %v6401
    %6403 = vmatprep.mubr.f32.mxu0 0.0
    %6404 = vmatmul.mubr.f32.gmra.mxu0 %v6238
    %v6405 = vpop.f32.mrf.mxu0
    %v6406 = vadd.f32 0.0, %v6405
    %v6407 = vpop.f32.mrf.mxu0
    %v6408 = vadd.f32 0.0, %v6407
    %6409 = vmatprep.mubr.f32.mxu0 0.0
    %6410 = vmatmul.mubr.f32.gmra.mxu0 %v6240
    %v6411 = vpop.f32.mrf.mxu0
    %v6412 = vadd.f32 0.0, %v6411
    %v6413 = vpop.f32.mrf.mxu0
    %v6414 = vadd.f32 0.0, %v6413
    %6415 = vmatprep.mubr.f32.mxu0 0.0
    %6416 = vmatmul.mubr.f32.gmra.mxu0 %v6242
    %v6417 = vpop.f32.mrf.mxu0
    %v6418 = vadd.f32 0.0, %v6417
    %v6419 = vpop.f32.mrf.mxu0
    %v6420 = vadd.f32 0.0, %v6419
    %6421 = vdwg.mxu0
    %v6422 = vadd.f32 %v6193, %v6311
    %v6423 = vadd.f32 %v6194, %v6313
    %v6424 = vadd.f32 %v6195, %v6400
    %v6425 = vadd.f32 %v6196, %v6402
    %v6426 = vadd.f32 %v6197, %v6317
    %v6427 = vadd.f32 %v6198, %v6319
    %v6428 = vadd.f32 %v6199, %v6406
    %v6429 = vadd.f32 %v6200, %v6408
    %v6430 = vadd.f32 %v6201, %v6323
    %v6431 = vadd.f32 %v6202, %v6325
    %v6432 = vadd.f32 %v6203, %v6412
    %v6433 = vadd.f32 %v6204, %v6414
    %v6434 = vadd.f32 %v6205, %v6329
    %v6435 = vadd.f32 %v6206, %v6331
    %v6436 = vadd.f32 %v6207, %v6418
    %v6437 = vadd.f32 %v6208, %v6420
    %v6438 = vrot.slane %v5557, 4
    %v6439 = vrot.slane %v5549, 4
    %v6440 = vsel %vm1359, %v6438, %v6439
    %v6441 = vrot.slane %v5559, 4
    %v6442 = vsel %vm1359, %v6439, %v6441
    %v6443 = vrot.slane %v5558, 4
    %v6444 = vrot.slane %v5552, 4
    %v6445 = vsel %vm1359, %v6443, %v6444
    %v6446 = vrot.slane %v5560, 4
    %v6447 = vsel %vm1359, %v6444, %v6446
    %s6448 = scalar_lea.vmem [#allocation18], 512
    %v6449 = vld [vmem:[%s6448] sm:$0xff]
    %v6450 = vld [vmem:[%s6448 + $0x8] sm:$0xff]
    %v6451 = vld [vmem:[%s6448 + $0x10] sm:$0xff]
    %v6452 = vld [vmem:[%s6448 + $0x18] sm:$0xff]
    %v6453 = vld [vmem:[%s6448 + $0x20] sm:$0xff]
    %v6454 = vld [vmem:[%s6448 + $0x28] sm:$0xff]
    %v6455 = vld [vmem:[%s6448 + $0x30] sm:$0xff]
    %v6456 = vld [vmem:[%s6448 + $0x38] sm:$0xff]
    %v6457 = vld [vmem:[%s6448 + $0x40] sm:$0xff]
    %v6458 = vld [vmem:[%s6448 + $0x48] sm:$0xff]
    %v6459 = vld [vmem:[%s6448 + $0x50] sm:$0xff]
    %v6460 = vld [vmem:[%s6448 + $0x58] sm:$0xff]
    %v6461 = vld [vmem:[%s6448 + $0x60] sm:$0xff]
    %v6462 = vld [vmem:[%s6448 + $0x68] sm:$0xff]
    %v6463 = vld [vmem:[%s6448 + $0x70] sm:$0xff]
    %v6464 = vld [vmem:[%s6448 + $0x78] sm:$0xff]
    %v6465 = vsel %vm2535, %v6440, 0
    %v6467 = vsel %vm2535, %v6442, 0
    %v6469 = vsel %vm2535, %v6445, 0
    %v6471 = vsel %vm2535, %v6447, 0
    %6473 = vmatprep.subr.mxu0 0.0
    %6474 = vmatpush1.msra.mxu0 0.0
    %6475 = vmatprep.subr.mxu0 0.0
    %6476 = vmatpush1.msra.mxu0 0.0
    %6477 = vmatprep.subr.mxu0 0.0
    %6478 = vmatpush1.msra.mxu0 0.0
    %6479 = vmatprep.subr.mxu0 0.0
    %6480 = vmatpush1.msra.mxu0 0.0
    %6481 = vmatprep.subr.mxu0 0.0
    %6482 = vmatpush1.msra.mxu0 0.0
    %6483 = vmatprep.subr.mxu0 0.0
    %6484 = vmatpush1.msra.mxu0 0.0
    %6485 = vmatprep.subr.mxu0 0.0
    %6486 = vmatpush1.msra.mxu0 0.0
    %6487 = vmatprep.subr.mxu0 0.0
    %6488 = vmatpush1.msra.mxu0 0.0
    %6489 = vmatprep.subr.mxu0 0.0
    %6490 = vmatpush1.msra.mxu0 0.0
    %6491 = vmatprep.subr.mxu0 0.0
    %6492 = vmatpush1.msra.mxu0 0.0
    %6493 = vmatprep.subr.mxu0 0.0
    %6494 = vmatpush1.msra.mxu0 0.0
    %6495 = vmatprep.subr.mxu0 0.0
    %6496 = vmatpush1.msra.mxu0 0.0
    %6497 = vmatprep.subr.mxu0 %v6462
    %6498 = vmatpush1.msra.mxu0 %v6461
    %6499 = vmatprep.subr.mxu0 %v6458
    %6500 = vmatpush1.msra.mxu0 %v6457
    %6501 = vmatprep.subr.mxu0 %v6454
    %6502 = vmatpush1.msra.mxu0 %v6453
    %6503 = vmatprep.subr.mxu0 %v6450
    %6504 = vmatpush1.msra.mxu0 %v6449
    %6505 = vmatprep.subr.mxu0 0.0
    %6506 = vmatpush2.msra.mxu0 0.0
    %6507 = vmatprep.subr.mxu0 0.0
    %6508 = vmatpush2.msra.mxu0 0.0
    %6509 = vmatprep.subr.mxu0 0.0
    %6510 = vmatpush2.msra.mxu0 0.0
    %6511 = vmatprep.subr.mxu0 0.0
    %6512 = vmatpush2.msra.mxu0 0.0
    %6513 = vmatprep.subr.mxu0 0.0
    %6514 = vmatpush2.msra.mxu0 0.0
    %6515 = vmatprep.subr.mxu0 0.0
    %6516 = vmatpush2.msra.mxu0 0.0
    %6517 = vmatprep.subr.mxu0 0.0
    %6518 = vmatpush2.msra.mxu0 0.0
    %6519 = vmatprep.subr.mxu0 0.0
    %6520 = vmatpush2.msra.mxu0 0.0
    %6521 = vmatprep.subr.mxu0 0.0
    %6522 = vmatpush2.msra.mxu0 0.0
    %6523 = vmatprep.subr.mxu0 0.0
    %6524 = vmatpush2.msra.mxu0 0.0
    %6525 = vmatprep.subr.mxu0 0.0
    %6526 = vmatpush2.msra.mxu0 0.0
    %6527 = vmatprep.subr.mxu0 0.0
    %6528 = vmatpush2.msra.mxu0 0.0
    %6529 = vmatprep.subr.mxu0 0.0
    %6530 = vmatpush2.msra.mxu0 0.0
    %6531 = vmatprep.subr.mxu0 0.0
    %6532 = vmatpush2.msra.mxu0 0.0
    %6533 = vmatprep.subr.mxu0 0.0
    %6534 = vmatpush2.msra.mxu0 0.0
    %6535 = vmatprep.subr.mxu0 0.0
    %6536 = vmatpush2.msra.mxu0 0.0
    %6537 = vmatprep.mubr.f32.mxu0 0.0
    %6538 = vmatmul.mubr.f32.gmra.mxu0 %v6465
    %v6539 = vpop.f32.mrf.mxu0
    %v6540 = vadd.f32 0.0, %v6539
    %v6541 = vpop.f32.mrf.mxu0
    %v6542 = vadd.f32 0.0, %v6541
    %6543 = vmatprep.mubr.f32.mxu0 0.0
    %6544 = vmatmul.mubr.f32.gmra.mxu0 %v6467
    %v6545 = vpop.f32.mrf.mxu0
    %v6546 = vadd.f32 0.0, %v6545
    %v6547 = vpop.f32.mrf.mxu0
    %v6548 = vadd.f32 0.0, %v6547
    %6549 = vmatprep.mubr.f32.mxu0 0.0
    %6550 = vmatmul.mubr.f32.gmra.mxu0 %v6469
    %v6551 = vpop.f32.mrf.mxu0
    %v6552 = vadd.f32 0.0, %v6551
    %v6553 = vpop.f32.mrf.mxu0
    %v6554 = vadd.f32 0.0, %v6553
    %6555 = vmatprep.mubr.f32.mxu0 0.0
    %6556 = vmatmul.mubr.f32.gmra.mxu0 %v6471
    %v6557 = vpop.f32.mrf.mxu0
    %v6558 = vadd.f32 0.0, %v6557
    %v6559 = vpop.f32.mrf.mxu0
    %v6560 = vadd.f32 0.0, %v6559
    %6561 = vdwg.mxu0
    %6562 = vmatprep.subr.mxu0 0.0
    %6563 = vmatpush1.msra.mxu0 0.0
    %6564 = vmatprep.subr.mxu0 0.0
    %6565 = vmatpush1.msra.mxu0 0.0
    %6566 = vmatprep.subr.mxu0 0.0
    %6567 = vmatpush1.msra.mxu0 0.0
    %6568 = vmatprep.subr.mxu0 0.0
    %6569 = vmatpush1.msra.mxu0 0.0
    %6570 = vmatprep.subr.mxu0 0.0
    %6571 = vmatpush1.msra.mxu0 0.0
    %6572 = vmatprep.subr.mxu0 0.0
    %6573 = vmatpush1.msra.mxu0 0.0
    %6574 = vmatprep.subr.mxu0 0.0
    %6575 = vmatpush1.msra.mxu0 0.0
    %6576 = vmatprep.subr.mxu0 0.0
    %6577 = vmatpush1.msra.mxu0 0.0
    %6578 = vmatprep.subr.mxu0 0.0
    %6579 = vmatpush1.msra.mxu0 0.0
    %6580 = vmatprep.subr.mxu0 0.0
    %6581 = vmatpush1.msra.mxu0 0.0
    %6582 = vmatprep.subr.mxu0 0.0
    %6583 = vmatpush1.msra.mxu0 0.0
    %6584 = vmatprep.subr.mxu0 0.0
    %6585 = vmatpush1.msra.mxu0 0.0
    %6586 = vmatprep.subr.mxu0 %v6464
    %6587 = vmatpush1.msra.mxu0 %v6463
    %6588 = vmatprep.subr.mxu0 %v6460
    %6589 = vmatpush1.msra.mxu0 %v6459
    %6590 = vmatprep.subr.mxu0 %v6456
    %6591 = vmatpush1.msra.mxu0 %v6455
    %6592 = vmatprep.subr.mxu0 %v6452
    %6593 = vmatpush1.msra.mxu0 %v6451
    %6594 = vmatprep.subr.mxu0 0.0
    %6595 = vmatpush2.msra.mxu0 0.0
    %6596 = vmatprep.subr.mxu0 0.0
    %6597 = vmatpush2.msra.mxu0 0.0
    %6598 = vmatprep.subr.mxu0 0.0
    %6599 = vmatpush2.msra.mxu0 0.0
    %6600 = vmatprep.subr.mxu0 0.0
    %6601 = vmatpush2.msra.mxu0 0.0
    %6602 = vmatprep.subr.mxu0 0.0
    %6603 = vmatpush2.msra.mxu0 0.0
    %6604 = vmatprep.subr.mxu0 0.0
    %6605 = vmatpush2.msra.mxu0 0.0
    %6606 = vmatprep.subr.mxu0 0.0
    %6607 = vmatpush2.msra.mxu0 0.0
    %6608 = vmatprep.subr.mxu0 0.0
    %6609 = vmatpush2.msra.mxu0 0.0
    %6610 = vmatprep.subr.mxu0 0.0
    %6611 = vmatpush2.msra.mxu0 0.0
    %6612 = vmatprep.subr.mxu0 0.0
    %6613 = vmatpush2.msra.mxu0 0.0
    %6614 = vmatprep.subr.mxu0 0.0
    %6615 = vmatpush2.msra.mxu0 0.0
    %6616 = vmatprep.subr.mxu0 0.0
    %6617 = vmatpush2.msra.mxu0 0.0
    %6618 = vmatprep.subr.mxu0 0.0
    %6619 = vmatpush2.msra.mxu0 0.0
    %6620 = vmatprep.subr.mxu0 0.0
    %6621 = vmatpush2.msra.mxu0 0.0
    %6622 = vmatprep.subr.mxu0 0.0
    %6623 = vmatpush2.msra.mxu0 0.0
    %6624 = vmatprep.subr.mxu0 0.0
    %6625 = vmatpush2.msra.mxu0 0.0
    %6626 = vmatprep.mubr.f32.mxu0 0.0
    %6627 = vmatmul.mubr.f32.gmra.mxu0 %v6465
    %v6628 = vpop.f32.mrf.mxu0
    %v6629 = vadd.f32 0.0, %v6628
    %v6630 = vpop.f32.mrf.mxu0
    %v6631 = vadd.f32 0.0, %v6630
    %6632 = vmatprep.mubr.f32.mxu0 0.0
    %6633 = vmatmul.mubr.f32.gmra.mxu0 %v6467
    %v6634 = vpop.f32.mrf.mxu0
    %v6635 = vadd.f32 0.0, %v6634
    %v6636 = vpop.f32.mrf.mxu0
    %v6637 = vadd.f32 0.0, %v6636
    %6638 = vmatprep.mubr.f32.mxu0 0.0
    %6639 = vmatmul.mubr.f32.gmra.mxu0 %v6469
    %v6640 = vpop.f32.mrf.mxu0
    %v6641 = vadd.f32 0.0, %v6640
    %v6642 = vpop.f32.mrf.mxu0
    %v6643 = vadd.f32 0.0, %v6642
    %6644 = vmatprep.mubr.f32.mxu0 0.0
    %6645 = vmatmul.mubr.f32.gmra.mxu0 %v6471
    %v6646 = vpop.f32.mrf.mxu0
    %v6647 = vadd.f32 0.0, %v6646
    %v6648 = vpop.f32.mrf.mxu0
    %v6649 = vadd.f32 0.0, %v6648
    %6650 = vdwg.mxu0
    %v6651 = vadd.f32 %v6422, %v6540
    %v6652 = vadd.f32 %v6423, %v6542
    %v6653 = vadd.f32 %v6424, %v6629
    %v6654 = vadd.f32 %v6425, %v6631
    %v6655 = vadd.f32 %v6426, %v6546
    %v6656 = vadd.f32 %v6427, %v6548
    %v6657 = vadd.f32 %v6428, %v6635
    %v6658 = vadd.f32 %v6429, %v6637
    %v6659 = vadd.f32 %v6430, %v6552
    %v6660 = vadd.f32 %v6431, %v6554
    %v6661 = vadd.f32 %v6432, %v6641
    %v6662 = vadd.f32 %v6433, %v6643
    %v6663 = vadd.f32 %v6434, %v6558
    %v6664 = vadd.f32 %v6435, %v6560
    %v6665 = vadd.f32 %v6436, %v6647
    %v6666 = vadd.f32 %v6437, %v6649
    %v6667 = vrot.slane %v5557, 5
    %v6668 = vrot.slane %v5549, 5
    %v6669 = vsel %vm290, %v6667, %v6668
    %v6670 = vrot.slane %v5559, 5
    %v6671 = vsel %vm290, %v6668, %v6670
    %v6672 = vrot.slane %v5558, 5
    %v6673 = vrot.slane %v5552, 5
    %v6674 = vsel %vm290, %v6672, %v6673
    %v6675 = vrot.slane %v5560, 5
    %v6676 = vsel %vm290, %v6673, %v6675
    %s6677 = scalar_lea.vmem [#allocation18], 640
    %v6678 = vld [vmem:[%s6677] sm:$0xff]
    %v6679 = vld [vmem:[%s6677 + $0x8] sm:$0xff]
    %v6680 = vld [vmem:[%s6677 + $0x10] sm:$0xff]
    %v6681 = vld [vmem:[%s6677 + $0x18] sm:$0xff]
    %v6682 = vld [vmem:[%s6677 + $0x20] sm:$0xff]
    %v6683 = vld [vmem:[%s6677 + $0x28] sm:$0xff]
    %v6684 = vld [vmem:[%s6677 + $0x30] sm:$0xff]
    %v6685 = vld [vmem:[%s6677 + $0x38] sm:$0xff]
    %v6686 = vld [vmem:[%s6677 + $0x40] sm:$0xff]
    %v6687 = vld [vmem:[%s6677 + $0x48] sm:$0xff]
    %v6688 = vld [vmem:[%s6677 + $0x50] sm:$0xff]
    %v6689 = vld [vmem:[%s6677 + $0x58] sm:$0xff]
    %v6690 = vld [vmem:[%s6677 + $0x60] sm:$0xff]
    %v6691 = vld [vmem:[%s6677 + $0x68] sm:$0xff]
    %v6692 = vld [vmem:[%s6677 + $0x70] sm:$0xff]
    %v6693 = vld [vmem:[%s6677 + $0x78] sm:$0xff]
    %v6694 = vsel %vm2535, %v6669, 0
    %v6696 = vsel %vm2535, %v6671, 0
    %v6698 = vsel %vm2535, %v6674, 0
    %v6700 = vsel %vm2535, %v6676, 0
    %6702 = vmatprep.subr.mxu0 0.0
    %6703 = vmatpush1.msra.mxu0 0.0
    %6704 = vmatprep.subr.mxu0 0.0
    %6705 = vmatpush1.msra.mxu0 0.0
    %6706 = vmatprep.subr.mxu0 0.0
    %6707 = vmatpush1.msra.mxu0 0.0
    %6708 = vmatprep.subr.mxu0 0.0
    %6709 = vmatpush1.msra.mxu0 0.0
    %6710 = vmatprep.subr.mxu0 0.0
    %6711 = vmatpush1.msra.mxu0 0.0
    %6712 = vmatprep.subr.mxu0 0.0
    %6713 = vmatpush1.msra.mxu0 0.0
    %6714 = vmatprep.subr.mxu0 0.0
    %6715 = vmatpush1.msra.mxu0 0.0
    %6716 = vmatprep.subr.mxu0 0.0
    %6717 = vmatpush1.msra.mxu0 0.0
    %6718 = vmatprep.subr.mxu0 0.0
    %6719 = vmatpush1.msra.mxu0 0.0
    %6720 = vmatprep.subr.mxu0 0.0
    %6721 = vmatpush1.msra.mxu0 0.0
    %6722 = vmatprep.subr.mxu0 0.0
    %6723 = vmatpush1.msra.mxu0 0.0
    %6724 = vmatprep.subr.mxu0 0.0
    %6725 = vmatpush1.msra.mxu0 0.0
    %6726 = vmatprep.subr.mxu0 %v6691
    %6727 = vmatpush1.msra.mxu0 %v6690
    %6728 = vmatprep.subr.mxu0 %v6687
    %6729 = vmatpush1.msra.mxu0 %v6686
    %6730 = vmatprep.subr.mxu0 %v6683
    %6731 = vmatpush1.msra.mxu0 %v6682
    %6732 = vmatprep.subr.mxu0 %v6679
    %6733 = vmatpush1.msra.mxu0 %v6678
    %6734 = vmatprep.subr.mxu0 0.0
    %6735 = vmatpush2.msra.mxu0 0.0
    %6736 = vmatprep.subr.mxu0 0.0
    %6737 = vmatpush2.msra.mxu0 0.0
    %6738 = vmatprep.subr.mxu0 0.0
    %6739 = vmatpush2.msra.mxu0 0.0
    %6740 = vmatprep.subr.mxu0 0.0
    %6741 = vmatpush2.msra.mxu0 0.0
    %6742 = vmatprep.subr.mxu0 0.0
    %6743 = vmatpush2.msra.mxu0 0.0
    %6744 = vmatprep.subr.mxu0 0.0
    %6745 = vmatpush2.msra.mxu0 0.0
    %6746 = vmatprep.subr.mxu0 0.0
    %6747 = vmatpush2.msra.mxu0 0.0
    %6748 = vmatprep.subr.mxu0 0.0
    %6749 = vmatpush2.msra.mxu0 0.0
    %6750 = vmatprep.subr.mxu0 0.0
    %6751 = vmatpush2.msra.mxu0 0.0
    %6752 = vmatprep.subr.mxu0 0.0
    %6753 = vmatpush2.msra.mxu0 0.0
    %6754 = vmatprep.subr.mxu0 0.0
    %6755 = vmatpush2.msra.mxu0 0.0
    %6756 = vmatprep.subr.mxu0 0.0
    %6757 = vmatpush2.msra.mxu0 0.0
    %6758 = vmatprep.subr.mxu0 0.0
    %6759 = vmatpush2.msra.mxu0 0.0
    %6760 = vmatprep.subr.mxu0 0.0
    %6761 = vmatpush2.msra.mxu0 0.0
    %6762 = vmatprep.subr.mxu0 0.0
    %6763 = vmatpush2.msra.mxu0 0.0
    %6764 = vmatprep.subr.mxu0 0.0
    %6765 = vmatpush2.msra.mxu0 0.0
    %6766 = vmatprep.mubr.f32.mxu0 0.0
    %6767 = vmatmul.mubr.f32.gmra.mxu0 %v6694
    %v6768 = vpop.f32.mrf.mxu0
    %v6769 = vadd.f32 0.0, %v6768
    %v6770 = vpop.f32.mrf.mxu0
    %v6771 = vadd.f32 0.0, %v6770
    %6772 = vmatprep.mubr.f32.mxu0 0.0
    %6773 = vmatmul.mubr.f32.gmra.mxu0 %v6696
    %v6774 = vpop.f32.mrf.mxu0
    %v6775 = vadd.f32 0.0, %v6774
    %v6776 = vpop.f32.mrf.mxu0
    %v6777 = vadd.f32 0.0, %v6776
    %6778 = vmatprep.mubr.f32.mxu0 0.0
    %6779 = vmatmul.mubr.f32.gmra.mxu0 %v6698
    %v6780 = vpop.f32.mrf.mxu0
    %v6781 = vadd.f32 0.0, %v6780
    %v6782 = vpop.f32.mrf.mxu0
    %v6783 = vadd.f32 0.0, %v6782
    %6784 = vmatprep.mubr.f32.mxu0 0.0
    %6785 = vmatmul.mubr.f32.gmra.mxu0 %v6700
    %v6786 = vpop.f32.mrf.mxu0
    %v6787 = vadd.f32 0.0, %v6786
    %v6788 = vpop.f32.mrf.mxu0
    %v6789 = vadd.f32 0.0, %v6788
    %6790 = vdwg.mxu0
    %6791 = vmatprep.subr.mxu0 0.0
    %6792 = vmatpush1.msra.mxu0 0.0
    %6793 = vmatprep.subr.mxu0 0.0
    %6794 = vmatpush1.msra.mxu0 0.0
    %6795 = vmatprep.subr.mxu0 0.0
    %6796 = vmatpush1.msra.mxu0 0.0
    %6797 = vmatprep.subr.mxu0 0.0
    %6798 = vmatpush1.msra.mxu0 0.0
    %6799 = vmatprep.subr.mxu0 0.0
    %6800 = vmatpush1.msra.mxu0 0.0
    %6801 = vmatprep.subr.mxu0 0.0
    %6802 = vmatpush1.msra.mxu0 0.0
    %6803 = vmatprep.subr.mxu0 0.0
    %6804 = vmatpush1.msra.mxu0 0.0
    %6805 = vmatprep.subr.mxu0 0.0
    %6806 = vmatpush1.msra.mxu0 0.0
    %6807 = vmatprep.subr.mxu0 0.0
    %6808 = vmatpush1.msra.mxu0 0.0
    %6809 = vmatprep.subr.mxu0 0.0
    %6810 = vmatpush1.msra.mxu0 0.0
    %6811 = vmatprep.subr.mxu0 0.0
    %6812 = vmatpush1.msra.mxu0 0.0
    %6813 = vmatprep.subr.mxu0 0.0
    %6814 = vmatpush1.msra.mxu0 0.0
    %6815 = vmatprep.subr.mxu0 %v6693
    %6816 = vmatpush1.msra.mxu0 %v6692
    %6817 = vmatprep.subr.mxu0 %v6689
    %6818 = vmatpush1.msra.mxu0 %v6688
    %6819 = vmatprep.subr.mxu0 %v6685
    %6820 = vmatpush1.msra.mxu0 %v6684
    %6821 = vmatprep.subr.mxu0 %v6681
    %6822 = vmatpush1.msra.mxu0 %v6680
    %6823 = vmatprep.subr.mxu0 0.0
    %6824 = vmatpush2.msra.mxu0 0.0
    %6825 = vmatprep.subr.mxu0 0.0
    %6826 = vmatpush2.msra.mxu0 0.0
    %6827 = vmatprep.subr.mxu0 0.0
    %6828 = vmatpush2.msra.mxu0 0.0
    %6829 = vmatprep.subr.mxu0 0.0
    %6830 = vmatpush2.msra.mxu0 0.0
    %6831 = vmatprep.subr.mxu0 0.0
    %6832 = vmatpush2.msra.mxu0 0.0
    %6833 = vmatprep.subr.mxu0 0.0
    %6834 = vmatpush2.msra.mxu0 0.0
    %6835 = vmatprep.subr.mxu0 0.0
    %6836 = vmatpush2.msra.mxu0 0.0
    %6837 = vmatprep.subr.mxu0 0.0
    %6838 = vmatpush2.msra.mxu0 0.0
    %6839 = vmatprep.subr.mxu0 0.0
    %6840 = vmatpush2.msra.mxu0 0.0
    %6841 = vmatprep.subr.mxu0 0.0
    %6842 = vmatpush2.msra.mxu0 0.0
    %6843 = vmatprep.subr.mxu0 0.0
    %6844 = vmatpush2.msra.mxu0 0.0
    %6845 = vmatprep.subr.mxu0 0.0
    %6846 = vmatpush2.msra.mxu0 0.0
    %6847 = vmatprep.subr.mxu0 0.0
    %6848 = vmatpush2.msra.mxu0 0.0
    %6849 = vmatprep.subr.mxu0 0.0
    %6850 = vmatpush2.msra.mxu0 0.0
    %6851 = vmatprep.subr.mxu0 0.0
    %6852 = vmatpush2.msra.mxu0 0.0
    %6853 = vmatprep.subr.mxu0 0.0
    %6854 = vmatpush2.msra.mxu0 0.0
    %6855 = vmatprep.mubr.f32.mxu0 0.0
    %6856 = vmatmul.mubr.f32.gmra.mxu0 %v6694
    %v6857 = vpop.f32.mrf.mxu0
    %v6858 = vadd.f32 0.0, %v6857
    %v6859 = vpop.f32.mrf.mxu0
    %v6860 = vadd.f32 0.0, %v6859
    %6861 = vmatprep.mubr.f32.mxu0 0.0
    %6862 = vmatmul.mubr.f32.gmra.mxu0 %v6696
    %v6863 = vpop.f32.mrf.mxu0
    %v6864 = vadd.f32 0.0, %v6863
    %v6865 = vpop.f32.mrf.mxu0
    %v6866 = vadd.f32 0.0, %v6865
    %6867 = vmatprep.mubr.f32.mxu0 0.0
    %6868 = vmatmul.mubr.f32.gmra.mxu0 %v6698
    %v6869 = vpop.f32.mrf.mxu0
    %v6870 = vadd.f32 0.0, %v6869
    %v6871 = vpop.f32.mrf.mxu0
    %v6872 = vadd.f32 0.0, %v6871
    %6873 = vmatprep.mubr.f32.mxu0 0.0
    %6874 = vmatmul.mubr.f32.gmra.mxu0 %v6700
    %v6875 = vpop.f32.mrf.mxu0
    %v6876 = vadd.f32 0.0, %v6875
    %v6877 = vpop.f32.mrf.mxu0
    %v6878 = vadd.f32 0.0, %v6877
    %6879 = vdwg.mxu0
    %v6880 = vadd.f32 %v6651, %v6769
    %v6881 = vadd.f32 %v6652, %v6771
    %v6882 = vadd.f32 %v6653, %v6858
    %v6883 = vadd.f32 %v6654, %v6860
    %v6884 = vadd.f32 %v6655, %v6775
    %v6885 = vadd.f32 %v6656, %v6777
    %v6886 = vadd.f32 %v6657, %v6864
    %v6887 = vadd.f32 %v6658, %v6866
    %v6888 = vadd.f32 %v6659, %v6781
    %v6889 = vadd.f32 %v6660, %v6783
    %v6890 = vadd.f32 %v6661, %v6870
    %v6891 = vadd.f32 %v6662, %v6872
    %v6892 = vadd.f32 %v6663, %v6787
    %v6893 = vadd.f32 %v6664, %v6789
    %v6894 = vadd.f32 %v6665, %v6876
    %v6895 = vadd.f32 %v6666, %v6878
    %v6896 = vrot.slane %v5557, 6
    %v6897 = vrot.slane %v5549, 6
    %v6898 = vsel %vm1906, %v6896, %v6897
    %v6899 = vrot.slane %v5559, 6
    %v6900 = vsel %vm1906, %v6897, %v6899
    %v6901 = vrot.slane %v5558, 6
    %v6902 = vrot.slane %v5552, 6
    %v6903 = vsel %vm1906, %v6901, %v6902
    %v6904 = vrot.slane %v5560, 6
    %v6905 = vsel %vm1906, %v6902, %v6904
    %s6906 = scalar_lea.vmem [#allocation18], 768
    %v6907 = vld [vmem:[%s6906] sm:$0xff]
    %v6908 = vld [vmem:[%s6906 + $0x8] sm:$0xff]
    %v6909 = vld [vmem:[%s6906 + $0x10] sm:$0xff]
    %v6910 = vld [vmem:[%s6906 + $0x18] sm:$0xff]
    %v6911 = vld [vmem:[%s6906 + $0x20] sm:$0xff]
    %v6912 = vld [vmem:[%s6906 + $0x28] sm:$0xff]
    %v6913 = vld [vmem:[%s6906 + $0x30] sm:$0xff]
    %v6914 = vld [vmem:[%s6906 + $0x38] sm:$0xff]
    %v6915 = vld [vmem:[%s6906 + $0x40] sm:$0xff]
    %v6916 = vld [vmem:[%s6906 + $0x48] sm:$0xff]
    %v6917 = vld [vmem:[%s6906 + $0x50] sm:$0xff]
    %v6918 = vld [vmem:[%s6906 + $0x58] sm:$0xff]
    %v6919 = vld [vmem:[%s6906 + $0x60] sm:$0xff]
    %v6920 = vld [vmem:[%s6906 + $0x68] sm:$0xff]
    %v6921 = vld [vmem:[%s6906 + $0x70] sm:$0xff]
    %v6922 = vld [vmem:[%s6906 + $0x78] sm:$0xff]
    %v6923 = vsel %vm2535, %v6898, 0
    %v6925 = vsel %vm2535, %v6900, 0
    %v6927 = vsel %vm2535, %v6903, 0
    %v6929 = vsel %vm2535, %v6905, 0
    %6931 = vmatprep.subr.mxu0 0.0
    %6932 = vmatpush1.msra.mxu0 0.0
    %6933 = vmatprep.subr.mxu0 0.0
    %6934 = vmatpush1.msra.mxu0 0.0
    %6935 = vmatprep.subr.mxu0 0.0
    %6936 = vmatpush1.msra.mxu0 0.0
    %6937 = vmatprep.subr.mxu0 0.0
    %6938 = vmatpush1.msra.mxu0 0.0
    %6939 = vmatprep.subr.mxu0 0.0
    %6940 = vmatpush1.msra.mxu0 0.0
    %6941 = vmatprep.subr.mxu0 0.0
    %6942 = vmatpush1.msra.mxu0 0.0
    %6943 = vmatprep.subr.mxu0 0.0
    %6944 = vmatpush1.msra.mxu0 0.0
    %6945 = vmatprep.subr.mxu0 0.0
    %6946 = vmatpush1.msra.mxu0 0.0
    %6947 = vmatprep.subr.mxu0 0.0
    %6948 = vmatpush1.msra.mxu0 0.0
    %6949 = vmatprep.subr.mxu0 0.0
    %6950 = vmatpush1.msra.mxu0 0.0
    %6951 = vmatprep.subr.mxu0 0.0
    %6952 = vmatpush1.msra.mxu0 0.0
    %6953 = vmatprep.subr.mxu0 0.0
    %6954 = vmatpush1.msra.mxu0 0.0
    %6955 = vmatprep.subr.mxu0 %v6920
    %6956 = vmatpush1.msra.mxu0 %v6919
    %6957 = vmatprep.subr.mxu0 %v6916
    %6958 = vmatpush1.msra.mxu0 %v6915
    %6959 = vmatprep.subr.mxu0 %v6912
    %6960 = vmatpush1.msra.mxu0 %v6911
    %6961 = vmatprep.subr.mxu0 %v6908
    %6962 = vmatpush1.msra.mxu0 %v6907
    %6963 = vmatprep.subr.mxu0 0.0
    %6964 = vmatpush2.msra.mxu0 0.0
    %6965 = vmatprep.subr.mxu0 0.0
    %6966 = vmatpush2.msra.mxu0 0.0
    %6967 = vmatprep.subr.mxu0 0.0
    %6968 = vmatpush2.msra.mxu0 0.0
    %6969 = vmatprep.subr.mxu0 0.0
    %6970 = vmatpush2.msra.mxu0 0.0
    %6971 = vmatprep.subr.mxu0 0.0
    %6972 = vmatpush2.msra.mxu0 0.0
    %6973 = vmatprep.subr.mxu0 0.0
    %6974 = vmatpush2.msra.mxu0 0.0
    %6975 = vmatprep.subr.mxu0 0.0
    %6976 = vmatpush2.msra.mxu0 0.0
    %6977 = vmatprep.subr.mxu0 0.0
    %6978 = vmatpush2.msra.mxu0 0.0
    %6979 = vmatprep.subr.mxu0 0.0
    %6980 = vmatpush2.msra.mxu0 0.0
    %6981 = vmatprep.subr.mxu0 0.0
    %6982 = vmatpush2.msra.mxu0 0.0
    %6983 = vmatprep.subr.mxu0 0.0
    %6984 = vmatpush2.msra.mxu0 0.0
    %6985 = vmatprep.subr.mxu0 0.0
    %6986 = vmatpush2.msra.mxu0 0.0
    %6987 = vmatprep.subr.mxu0 0.0
    %6988 = vmatpush2.msra.mxu0 0.0
    %6989 = vmatprep.subr.mxu0 0.0
    %6990 = vmatpush2.msra.mxu0 0.0
    %6991 = vmatprep.subr.mxu0 0.0
    %6992 = vmatpush2.msra.mxu0 0.0
    %6993 = vmatprep.subr.mxu0 0.0
    %6994 = vmatpush2.msra.mxu0 0.0
    %6995 = vmatprep.mubr.f32.mxu0 0.0
    %6996 = vmatmul.mubr.f32.gmra.mxu0 %v6923
    %v6997 = vpop.f32.mrf.mxu0
    %v6998 = vadd.f32 0.0, %v6997
    %v6999 = vpop.f32.mrf.mxu0
    %v7000 = vadd.f32 0.0, %v6999
    %7001 = vmatprep.mubr.f32.mxu0 0.0
    %7002 = vmatmul.mubr.f32.gmra.mxu0 %v6925
    %v7003 = vpop.f32.mrf.mxu0
    %v7004 = vadd.f32 0.0, %v7003
    %v7005 = vpop.f32.mrf.mxu0
    %v7006 = vadd.f32 0.0, %v7005
    %7007 = vmatprep.mubr.f32.mxu0 0.0
    %7008 = vmatmul.mubr.f32.gmra.mxu0 %v6927
    %v7009 = vpop.f32.mrf.mxu0
    %v7010 = vadd.f32 0.0, %v7009
    %v7011 = vpop.f32.mrf.mxu0
    %v7012 = vadd.f32 0.0, %v7011
    %7013 = vmatprep.mubr.f32.mxu0 0.0
    %7014 = vmatmul.mubr.f32.gmra.mxu0 %v6929
    %v7015 = vpop.f32.mrf.mxu0
    %v7016 = vadd.f32 0.0, %v7015
    %v7017 = vpop.f32.mrf.mxu0
    %v7018 = vadd.f32 0.0, %v7017
    %7019 = vdwg.mxu0
    %7020 = vmatprep.subr.mxu0 0.0
    %7021 = vmatpush1.msra.mxu0 0.0
    %7022 = vmatprep.subr.mxu0 0.0
    %7023 = vmatpush1.msra.mxu0 0.0
    %7024 = vmatprep.subr.mxu0 0.0
    %7025 = vmatpush1.msra.mxu0 0.0
    %7026 = vmatprep.subr.mxu0 0.0
    %7027 = vmatpush1.msra.mxu0 0.0
    %7028 = vmatprep.subr.mxu0 0.0
    %7029 = vmatpush1.msra.mxu0 0.0
    %7030 = vmatprep.subr.mxu0 0.0
    %7031 = vmatpush1.msra.mxu0 0.0
    %7032 = vmatprep.subr.mxu0 0.0
    %7033 = vmatpush1.msra.mxu0 0.0
    %7034 = vmatprep.subr.mxu0 0.0
    %7035 = vmatpush1.msra.mxu0 0.0
    %7036 = vmatprep.subr.mxu0 0.0
    %7037 = vmatpush1.msra.mxu0 0.0
    %7038 = vmatprep.subr.mxu0 0.0
    %7039 = vmatpush1.msra.mxu0 0.0
    %7040 = vmatprep.subr.mxu0 0.0
    %7041 = vmatpush1.msra.mxu0 0.0
    %7042 = vmatprep.subr.mxu0 0.0
    %7043 = vmatpush1.msra.mxu0 0.0
    %7044 = vmatprep.subr.mxu0 %v6922
    %7045 = vmatpush1.msra.mxu0 %v6921
    %7046 = vmatprep.subr.mxu0 %v6918
    %7047 = vmatpush1.msra.mxu0 %v6917
    %7048 = vmatprep.subr.mxu0 %v6914
    %7049 = vmatpush1.msra.mxu0 %v6913
    %7050 = vmatprep.subr.mxu0 %v6910
    %7051 = vmatpush1.msra.mxu0 %v6909
    %7052 = vmatprep.subr.mxu0 0.0
    %7053 = vmatpush2.msra.mxu0 0.0
    %7054 = vmatprep.subr.mxu0 0.0
    %7055 = vmatpush2.msra.mxu0 0.0
    %7056 = vmatprep.subr.mxu0 0.0
    %7057 = vmatpush2.msra.mxu0 0.0
    %7058 = vmatprep.subr.mxu0 0.0
    %7059 = vmatpush2.msra.mxu0 0.0
    %7060 = vmatprep.subr.mxu0 0.0
    %7061 = vmatpush2.msra.mxu0 0.0
    %7062 = vmatprep.subr.mxu0 0.0
    %7063 = vmatpush2.msra.mxu0 0.0
    %7064 = vmatprep.subr.mxu0 0.0
    %7065 = vmatpush2.msra.mxu0 0.0
    %7066 = vmatprep.subr.mxu0 0.0
    %7067 = vmatpush2.msra.mxu0 0.0
    %7068 = vmatprep.subr.mxu0 0.0
    %7069 = vmatpush2.msra.mxu0 0.0
    %7070 = vmatprep.subr.mxu0 0.0
    %7071 = vmatpush2.msra.mxu0 0.0
    %7072 = vmatprep.subr.mxu0 0.0
    %7073 = vmatpush2.msra.mxu0 0.0
    %7074 = vmatprep.subr.mxu0 0.0
    %7075 = vmatpush2.msra.mxu0 0.0
    %7076 = vmatprep.subr.mxu0 0.0
    %7077 = vmatpush2.msra.mxu0 0.0
    %7078 = vmatprep.subr.mxu0 0.0
    %7079 = vmatpush2.msra.mxu0 0.0
    %7080 = vmatprep.subr.mxu0 0.0
    %7081 = vmatpush2.msra.mxu0 0.0
    %7082 = vmatprep.subr.mxu0 0.0
    %7083 = vmatpush2.msra.mxu0 0.0
    %7084 = vmatprep.mubr.f32.mxu0 0.0
    %7085 = vmatmul.mubr.f32.gmra.mxu0 %v6923
    %v7086 = vpop.f32.mrf.mxu0
    %v7087 = vadd.f32 0.0, %v7086
    %v7088 = vpop.f32.mrf.mxu0
    %v7089 = vadd.f32 0.0, %v7088
    %7090 = vmatprep.mubr.f32.mxu0 0.0
    %7091 = vmatmul.mubr.f32.gmra.mxu0 %v6925
    %v7092 = vpop.f32.mrf.mxu0
    %v7093 = vadd.f32 0.0, %v7092
    %v7094 = vpop.f32.mrf.mxu0
    %v7095 = vadd.f32 0.0, %v7094
    %7096 = vmatprep.mubr.f32.mxu0 0.0
    %7097 = vmatmul.mubr.f32.gmra.mxu0 %v6927
    %v7098 = vpop.f32.mrf.mxu0
    %v7099 = vadd.f32 0.0, %v7098
    %v7100 = vpop.f32.mrf.mxu0
    %v7101 = vadd.f32 0.0, %v7100
    %7102 = vmatprep.mubr.f32.mxu0 0.0
    %7103 = vmatmul.mubr.f32.gmra.mxu0 %v6929
    %v7104 = vpop.f32.mrf.mxu0
    %v7105 = vadd.f32 0.0, %v7104
    %v7106 = vpop.f32.mrf.mxu0
    %v7107 = vadd.f32 0.0, %v7106
    %7108 = vdwg.mxu0
    %v7109 = vadd.f32 %v6880, %v6998
    %v7110 = vadd.f32 %v6881, %v7000
    %v7111 = vadd.f32 %v6882, %v7087
    %v7112 = vadd.f32 %v6883, %v7089
    %v7113 = vadd.f32 %v6884, %v7004
    %v7114 = vadd.f32 %v6885, %v7006
    %v7115 = vadd.f32 %v6886, %v7093
    %v7116 = vadd.f32 %v6887, %v7095
    %v7117 = vadd.f32 %v6888, %v7010
    %v7118 = vadd.f32 %v6889, %v7012
    %v7119 = vadd.f32 %v6890, %v7099
    %v7120 = vadd.f32 %v6891, %v7101
    %v7121 = vadd.f32 %v6892, %v7016
    %v7122 = vadd.f32 %v6893, %v7018
    %v7123 = vadd.f32 %v6894, %v7105
    %v7124 = vadd.f32 %v6895, %v7107
    %s7125 = sld [smem:[#allocation3]]
    %v7126 = vstv %s7125
    %v7127 = vadd.f32 %v7109, %v7126
    %v7128 = vadd.f32 %v7110, %v7126
    %v7129 = vadd.f32 %v7111, %v7126
    %v7130 = vadd.f32 %v7112, %v7126
    %v7131 = vadd.f32 %v7113, %v7126
    %v7132 = vadd.f32 %v7114, %v7126
    %v7133 = vadd.f32 %v7115, %v7126
    %v7134 = vadd.f32 %v7116, %v7126
    %v7135 = vadd.f32 %v7117, %v7126
    %v7136 = vadd.f32 %v7118, %v7126
    %v7137 = vadd.f32 %v7119, %v7126
    %v7138 = vadd.f32 %v7120, %v7126
    %v7139 = vadd.f32 %v7121, %v7126
    %v7140 = vadd.f32 %v7122, %v7126
    %v7141 = vadd.f32 %v7123, %v7126
    %v7142 = vadd.f32 %v7124, %v7126
    %v7143 = vxor.u32 %v7127, 2147483648
    %v7144 = vxor.u32 %v7128, 2147483648
    %v7145 = vxor.u32 %v7129, 2147483648
    %v7146 = vxor.u32 %v7130, 2147483648
    %v7147 = vxor.u32 %v7131, 2147483648
    %v7148 = vxor.u32 %v7132, 2147483648
    %v7149 = vxor.u32 %v7133, 2147483648
    %v7150 = vxor.u32 %v7134, 2147483648
    %v7151 = vxor.u32 %v7135, 2147483648
    %v7152 = vxor.u32 %v7136, 2147483648
    %v7153 = vxor.u32 %v7137, 2147483648
    %v7154 = vxor.u32 %v7138, 2147483648
    %v7155 = vxor.u32 %v7139, 2147483648
    %v7156 = vxor.u32 %v7140, 2147483648
    %v7157 = vxor.u32 %v7141, 2147483648
    %v7158 = vxor.u32 %v7142, 2147483648
    %v7159 = vmul.f32 %v7143, 1.442695
    %v7160 = vpow.pop %v7159
    %v7161 = vmul.f32 %v7144, 1.442695
    %v7162 = vpow.pop %v7161
    %v7163 = vmul.f32 %v7145, 1.442695
    %v7164 = vpow.pop %v7163
    %v7165 = vmul.f32 %v7146, 1.442695
    %v7166 = vpow.pop %v7165
    %v7167 = vmul.f32 %v7147, 1.442695
    %v7168 = vpow.pop %v7167
    %v7169 = vmul.f32 %v7148, 1.442695
    %v7170 = vpow.pop %v7169
    %v7171 = vmul.f32 %v7149, 1.442695
    %v7172 = vpow.pop %v7171
    %v7173 = vmul.f32 %v7150, 1.442695
    %v7174 = vpow.pop %v7173
    %v7175 = vmul.f32 %v7151, 1.442695
    %v7176 = vpow.pop %v7175
    %v7177 = vmul.f32 %v7152, 1.442695
    %v7178 = vpow.pop %v7177
    %v7179 = vmul.f32 %v7153, 1.442695
    %v7180 = vpow.pop %v7179
    %v7181 = vmul.f32 %v7154, 1.442695
    %v7182 = vpow.pop %v7181
    %v7183 = vmul.f32 %v7155, 1.442695
    %v7184 = vpow.pop %v7183
    %v7185 = vmul.f32 %v7156, 1.442695
    %v7186 = vpow.pop %v7185
    %v7187 = vmul.f32 %v7157, 1.442695
    %v7188 = vpow.pop %v7187
    %v7189 = vmul.f32 %v7158, 1.442695
    %v7190 = vpow.pop %v7189
    %v7191 = vadd.f32 %v7160, 1.0
    %v7192 = vadd.f32 %v7162, 1.0
    %v7193 = vadd.f32 %v7164, 1.0
    %v7194 = vadd.f32 %v7166, 1.0
    %v7195 = vadd.f32 %v7168, 1.0
    %v7196 = vadd.f32 %v7170, 1.0
    %v7197 = vadd.f32 %v7172, 1.0
    %v7198 = vadd.f32 %v7174, 1.0
    %v7199 = vadd.f32 %v7176, 1.0
    %v7200 = vadd.f32 %v7178, 1.0
    %v7201 = vadd.f32 %v7180, 1.0
    %v7202 = vadd.f32 %v7182, 1.0
    %v7203 = vadd.f32 %v7184, 1.0
    %v7204 = vadd.f32 %v7186, 1.0
    %v7205 = vadd.f32 %v7188, 1.0
    %v7206 = vadd.f32 %v7190, 1.0
    %v7207 = vrcp.pop %v7191
    %v7208 = vmul.f32 1.0, %v7207
    %v7209 = vrcp.pop %v7192
    %v7210 = vmul.f32 1.0, %v7209
    %v7211 = vrcp.pop %v7193
    %v7212 = vmul.f32 1.0, %v7211
    %v7213 = vrcp.pop %v7194
    %v7214 = vmul.f32 1.0, %v7213
    %v7215 = vrcp.pop %v7195
    %v7216 = vmul.f32 1.0, %v7215
    %v7217 = vrcp.pop %v7196
    %v7218 = vmul.f32 1.0, %v7217
    %v7219 = vrcp.pop %v7197
    %v7220 = vmul.f32 1.0, %v7219
    %v7221 = vrcp.pop %v7198
    %v7222 = vmul.f32 1.0, %v7221
    %v7223 = vrcp.pop %v7199
    %v7224 = vmul.f32 1.0, %v7223
    %v7225 = vrcp.pop %v7200
    %v7226 = vmul.f32 1.0, %v7225
    %v7227 = vrcp.pop %v7201
    %v7228 = vmul.f32 1.0, %v7227
    %v7229 = vrcp.pop %v7202
    %v7230 = vmul.f32 1.0, %v7229
    %v7231 = vrcp.pop %v7203
    %v7232 = vmul.f32 1.0, %v7231
    %v7233 = vrcp.pop %v7204
    %v7234 = vmul.f32 1.0, %v7233
    %v7235 = vrcp.pop %v7205
    %v7236 = vmul.f32 1.0, %v7235
    %v7237 = vrcp.pop %v7206
    %v7238 = vmul.f32 1.0, %v7237
    %v7239 = vmul.f32 %v3045, %v7208
    %v7240 = vmul.f32 %v3046, %v7210
    %v7241 = vmul.f32 %v3047, %v7212
    %v7242 = vmul.f32 %v3048, %v7214
    %v7243 = vmul.f32 %v3049, %v7216
    %v7244 = vmul.f32 %v3050, %v7218
    %v7245 = vmul.f32 %v3051, %v7220
    %v7246 = vmul.f32 %v3052, %v7222
    %v7247 = vmul.f32 %v3053, %v7224
    %v7248 = vmul.f32 %v3054, %v7226
    %v7249 = vmul.f32 %v3055, %v7228
    %v7250 = vmul.f32 %v3056, %v7230
    %v7251 = vmul.f32 %v3057, %v7232
    %v7252 = vmul.f32 %v3058, %v7234
    %v7253 = vmul.f32 %v3059, %v7236
    %v7254 = vmul.f32 %v3060, %v7238
    %7255 = vst [vmem:[#allocation19] sm:$0xff] %v7239
    %7256 = vst [vmem:[#allocation19 + $0x8] sm:$0xff] %v7240
    %7257 = vst [vmem:[#allocation19 + $0x10] sm:$0xff] %v7241
    %7258 = vst [vmem:[#allocation19 + $0x18] sm:$0xff] %v7242
    %7259 = vst [vmem:[#allocation19 + $0x20] sm:$0xff] %v7243
    %7260 = vst [vmem:[#allocation19 + $0x28] sm:$0xff] %v7244
    %7261 = vst [vmem:[#allocation19 + $0x30] sm:$0xff] %v7245
    %7262 = vst [vmem:[#allocation19 + $0x38] sm:$0xff] %v7246
    %7263 = vst [vmem:[#allocation19 + $0x40] sm:$0xff] %v7247
    %7264 = vst [vmem:[#allocation19 + $0x48] sm:$0xff] %v7248
    %7265 = vst [vmem:[#allocation19 + $0x50] sm:$0xff] %v7249
    %7266 = vst [vmem:[#allocation19 + $0x58] sm:$0xff] %v7250
    %7267 = vst [vmem:[#allocation19 + $0x60] sm:$0xff] %v7251
    %7268 = vst [vmem:[#allocation19 + $0x68] sm:$0xff] %v7252
    %7269 = vst [vmem:[#allocation19 + $0x70] sm:$0xff] %v7253
    %7270 = vst [vmem:[#allocation19 + $0x78] sm:$0xff] %v7254
    // Predicated region
    $region86: #{tpu_custom_call.1} parent=1 // pred_check
      _
    $region87: #{tpu_custom_call.1} parent=1 // pred_check_branch
      %7272 = sbr.rel (0) target = $region89
    $region88: #{tpu_custom_call.1} parent=1 // pred_region
      %s7274 = ssub.s32 2048, 2048
      %7275 = vsyncadd [#allocation6], %s7274
      %s7276 = sshll.u32 [#allocation19], 4
      %s7277 = int_to_ptr.vmem [resolvable:$true] %s7276
      %7282 = dma.vmem_to_hbm [thread:$0]  %s7277, 2048, %s12, [#allocation6], 512, 512, 32
    $region89: #{tpu_custom_call.1} parent=1 // pred_fallthru
      _
    // Predicated region
    $region90: #{tpu_custom_call.1} parent=1 // pred_check
      _
    $region91: #{tpu_custom_call.1} parent=1 // pred_check_branch
      %7284 = sbr.rel (0) target = $region93
    $region92: #{tpu_custom_call.1} parent=1 // pred_region
      %7285 = dma.done [#allocation6], 2048
    $region93: #{tpu_custom_call.1} parent=1 // pred_fallthru
      _
    %7286 = vsyncpa [#allocation5], 1
    %7287 = vsyncpa [#allocation8], 1
    %7288 = vsyncpa [#allocation11], 1
    %7289 = vsyncpa [#allocation14], 1
    %7290 = vsyncpa [#allocation17], 1
    %7291 = vsyncpa [#allocation6], 1

</llo_original>
